<compile_context>
chip_gen: v7x
topology: tpu7x:2x2x1
jax: 0.10.0
libtpu: 0.0.40
codegen_flags: <defaults>
</compile_context>

<pallas_src>
import functools
import math

import jax
import jax.numpy as jnp
from jax import lax
from jax.experimental import pallas as pl
from jax.experimental.pallas import tpu as pltpu


# ----------------------------------------------------------------------------
# Fused kernel: dwconv3x3+BN+ReLU  ->  MHA+LN1+FFN+LN2, one batch per grid step.
# ----------------------------------------------------------------------------
def fused_encoder_kernel(x_ref, pos_ref,
                         dww_ref, bns_ref, bnb_ref,
                         wq_ref, wk_ref, wv_ref, bq_ref, bk_ref, bv_ref,
                         wout_ref, bout_ref,
                         g1_ref, be1_ref,
                         w1_ref, b1_ref, w2_ref, b2_ref,
                         g2_ref, be2_ref,
                         o_ref, *, nhead, W):
    f32 = jnp.float32
    bf16 = jnp.bfloat16
    C, S = x_ref.shape[1], x_ref.shape[2]
    hd = C // nhead

    # ---- depthwise 3x3 conv + BN(eval) + ReLU in (C, S) layout --------------
    x_cs = x_ref[0].astype(f32)                        # (C, S), spatial on lanes
    w9 = dww_ref[...]                                  # (C, 9) f32 tap weights
    tok = lax.broadcasted_iota(jnp.int32, (1, S), 1)   # token index 0..S-1
    if W & (W - 1) == 0:                               # power-of-two fast path
        colv = jnp.bitwise_and(tok, W - 1)
    else:
        colv = tok % W                                 # general W

    acc = jnp.zeros((C, S), f32)
    for dy in (-1, 0, 1):
        for dx in (-1, 0, 1):
            kk = dy * W + dx
            shifted = x_cs if kk == 0 else pltpu.roll(x_cs, shift=(-kk) % S, axis=1)
            valid = None
            if dy == -1:
                valid = tok >= W                       # not the first image row
            elif dy == 1:
                valid = tok < S - W                    # not the last image row
            if dx == -1:
                cm = colv >= 1
                valid = cm if valid is None else jnp.logical_and(valid, cm)
            elif dx == 1:
                cm = colv <= W - 2
                valid = cm if valid is None else jnp.logical_and(valid, cm)
            if valid is not None:
                shifted = jnp.where(valid, shifted, 0.0)
            j = (dy + 1) * 3 + (dx + 1)
            acc = acc + shifted * w9[:, j:j + 1]       # (C,1) broadcast over lanes

    y_cs = jnp.maximum(acc * bns_ref[...] + bnb_ref[...], 0.0)   # (C, S)

    # ---- tokens (S, C) -------------------------------------------------------
    x_tok = y_cs.T                                     # (S, C) f32
    pos = pos_ref[0].astype(f32)                       # (S, C)
    qk_in = (x_tok + pos).astype(bf16)
    x_b = x_tok.astype(bf16)

    # QKV projections (scale already folded into wq/bq). bf16 in, f32 acc.
    q = jnp.dot(qk_in, wq_ref[...], preferred_element_type=f32) + bq_ref[...]
    k_ = jnp.dot(qk_in, wk_ref[...], preferred_element_type=f32) + bk_ref[...]
    v = jnp.dot(x_b, wv_ref[...], preferred_element_type=f32) + bv_ref[...]

    # Per-head attention, accumulated through the output projection (no concat).
    wout = wout_ref[...]                               # (C, C) bf16
    attn = jnp.zeros((S, C), f32)
    for h in range(nhead):
        lo, hi = h * hd, (h + 1) * hd
        qh = q[:, lo:hi].astype(bf16)
        kh = k_[:, lo:hi].astype(bf16)
        vh = v[:, lo:hi].astype(bf16)
        s = jnp.dot(qh, kh.T, preferred_element_type=f32)          # (S, S)
        s = s - jnp.max(s, axis=-1, keepdims=True)
        p = jnp.exp(s)
        p = p * pl.reciprocal(jnp.sum(p, axis=-1, keepdims=True), approx=True)
        hv = jnp.dot(p.astype(bf16), vh, preferred_element_type=f32)   # (S, hd)
        attn = attn + jnp.dot(hv.astype(bf16), wout[lo:hi, :],
                              preferred_element_type=f32)
    attn = attn + bout_ref[...]

    # residual + LayerNorm1
    src = x_tok + attn
    mu = jnp.mean(src, axis=-1, keepdims=True)
    var = jnp.mean(jnp.square(src - mu), axis=-1, keepdims=True)
    src = (src - mu) * lax.rsqrt(var + 1e-5)
    src = src * g1_ref[...] + be1_ref[...]

    # FFN (relu)
    h1 = jnp.dot(src.astype(bf16), w1_ref[...], preferred_element_type=f32) + b1_ref[...]
    h1 = jnp.maximum(h1, 0.0)
    ffn = jnp.dot(h1.astype(bf16), w2_ref[...], preferred_element_type=f32) + b2_ref[...]

    # residual + LayerNorm2
    src = src + ffn
    mu = jnp.mean(src, axis=-1, keepdims=True)
    var = jnp.mean(jnp.square(src - mu), axis=-1, keepdims=True)
    src = (src - mu) * lax.rsqrt(var + 1e-5)
    src = src * g2_ref[...] + be2_ref[...]

    # store directly in the final (C, S) layout (lane-dense last dim = S)
    o_ref[0] = src.T.astype(o_ref.dtype)


# ----------------------------------------------------------------------------
# Parameter preparation: PyTorch-style params -> kernel layout (bf16 weights,
# folded attention scale, depthwise taps as (C, 9), BN affine as (C, 1)).
# ----------------------------------------------------------------------------
def prepare_params(raw, nhead):
    C = raw["out_proj_w"].shape[0]
    scale = 1.0 / math.sqrt(C // nhead)
    bf = jnp.bfloat16
    Wi = raw["in_proj_w"]            # (3C, C)
    bi = raw["in_proj_b"]            # (3C,)
    return dict(
        dw_w=jnp.transpose(raw["dw_w"], (2, 0, 1)).reshape(C, 9).astype(jnp.float32),
        bn_scale=raw["bn_scale"].reshape(C, 1).astype(jnp.float32),
        bn_bias=raw["bn_bias"].reshape(C, 1).astype(jnp.float32),
        wq_t=(Wi[:C].T * scale).astype(bf),
        wk_t=Wi[C:2 * C].T.astype(bf),
        wv_t=Wi[2 * C:].T.astype(bf),
        bq=(bi[:C] * scale).reshape(1, C).astype(jnp.float32),
        bk=bi[C:2 * C].reshape(1, C).astype(jnp.float32),
        bv=bi[2 * C:].reshape(1, C).astype(jnp.float32),
        wout_t=raw["out_proj_w"].T.astype(bf),
        bout=raw["out_proj_b"].reshape(1, C).astype(jnp.float32),
        ln1_g=raw["ln1_g"].reshape(1, C).astype(jnp.float32),
        ln1_b=raw["ln1_b"].reshape(1, C).astype(jnp.float32),
        w1_t=raw["lin1_w"].T.astype(bf),
        b1=raw["lin1_b"].reshape(1, -1).astype(jnp.float32),
        w2_t=raw["lin2_w"].T.astype(bf),
        b2=raw["lin2_b"].reshape(1, C).astype(jnp.float32),
        ln2_g=raw["ln2_g"].reshape(1, C).astype(jnp.float32),
        ln2_b=raw["ln2_b"].reshape(1, C).astype(jnp.float32),
    )


# ----------------------------------------------------------------------------
# Wrapper
# ----------------------------------------------------------------------------
def transformer_dwconv_encoder_layer(src_nchw, pos_sbc, params, nhead):
    B, C, H, W = src_nchw.shape
    S = H * W

    x_flat = src_nchw.reshape(B, C, S)            # flatten(2) of NCHW (no copy)
    pos_b = jnp.transpose(pos_sbc, (1, 0, 2))     # (S,B,C) -> (B,S,C)

    def full(a):
        nd = a.ndim
        return pl.BlockSpec(a.shape, lambda b: (0,) * nd)

    weights = (params["dw_w"], params["bn_scale"], params["bn_bias"],
               params["wq_t"], params["wk_t"], params["wv_t"],
               params["bq"], params["bk"], params["bv"],
               params["wout_t"], params["bout"],
               params["ln1_g"], params["ln1_b"],
               params["w1_t"], params["b1"], params["w2_t"], params["b2"],
               params["ln2_g"], params["ln2_b"])

    out = pl.pallas_call(
        functools.partial(fused_encoder_kernel, nhead=nhead, W=W),
        out_shape=jax.ShapeDtypeStruct((B, C, S), jnp.float32),
        grid=(B,),
        in_specs=[pl.BlockSpec((1, C, S), lambda b: (b, 0, 0)),
                  pl.BlockSpec((1, S, C), lambda b: (b, 0, 0))]
                 + [full(w) for w in weights],
        out_specs=pl.BlockSpec((1, C, S), lambda b: (b, 0, 0)),
        compiler_params=pltpu.CompilerParams(
            dimension_semantics=("parallel",),
            vmem_limit_bytes=32 * 1024 * 1024),
    )(x_flat, pos_b, *weights)

    return out.reshape(B, C, H, W)


# ----------------------------------------------------------------------------
# Pure-JAX f32 reference (uses the raw PyTorch-style params)
# ----------------------------------------------------------------------------
def reference(src_nchw, pos_sbc, raw, nhead):
    B, C, H, W = src_nchw.shape
    S = H * W
    x = jnp.transpose(src_nchw, (0, 2, 3, 1))                    # (B,H,W,C)
    xp = jnp.pad(x, ((0, 0), (1, 1), (1, 1), (0, 0)))
    acc = jnp.zeros_like(x)
    for dy in range(3):
        for dx in range(3):
            acc = acc + xp[:, dy:dy + H, dx:dx + W, :] * raw["dw_w"][dy, dx]
    x = jnp.maximum(acc * raw["bn_scale"] + raw["bn_bias"], 0.0)
    x = x.reshape(B, S, C)
    pos = jnp.transpose(pos_sbc, (1, 0, 2))
    hd = C // nhead
    qk = x + pos
    Wi, bi = raw["in_proj_w"], raw["in_proj_b"]
    q = qk @ Wi[:C].T + bi[:C]
    k = qk @ Wi[C:2 * C].T + bi[C:2 * C]
    v = x @ Wi[2 * C:].T + bi[2 * C:]
    q = q.reshape(B, S, nhead, hd).transpose(0, 2, 1, 3) / math.sqrt(hd)
    k = k.reshape(B, S, nhead, hd).transpose(0, 2, 1, 3)
    v = v.reshape(B, S, nhead, hd).transpose(0, 2, 1, 3)
    att = jax.nn.softmax(q @ k.transpose(0, 1, 3, 2), axis=-1) @ v
    att = att.transpose(0, 2, 1, 3).reshape(B, S, C)
    att = att @ raw["out_proj_w"].T + raw["out_proj_b"]

    def ln(z, g, b):
        mu = z.mean(-1, keepdims=True)
        var = ((z - mu) ** 2).mean(-1, keepdims=True)
        return (z - mu) / jnp.sqrt(var + 1e-5) * g + b

    s = ln(x + att, raw["ln1_g"], raw["ln1_b"])
    f = jnp.maximum(s @ raw["lin1_w"].T + raw["lin1_b"], 0.0)
    f = f @ raw["lin2_w"].T + raw["lin2_b"]
    s = ln(s + f, raw["ln2_g"], raw["ln2_b"])
    return jnp.transpose(s, (0, 2, 1)).reshape(B, C, H, W)


# ----------------------------------------------------------------------------
if __name__ == "__main__":
    B, C, H, W = 2, 32, 16, 16          # d_model = 32, S = 256 (lane-dense)
    nhead = 4
    dff = 64
    S = H * W

    key = jax.random.PRNGKey(0)
    ks = jax.random.split(key, 20)
    nrm = lambda k, shp, s=0.05: (s * jax.random.normal(k, shp)).astype(jnp.float32)

    # dwconv block params: depthwise (C,1,3,3) stored as (3,3,C) + BN(eval) folded
    dw_w = nrm(ks[0], (3, 3, C), 0.2)
    bn_gamma = 1.0 + nrm(ks[1], (C,), 0.1)
    bn_beta = nrm(ks[2], (C,), 0.1)
    bn_mean = nrm(ks[3], (C,), 0.1)
    bn_var = 1.0 + 0.1 * jnp.abs(jax.random.normal(ks[4], (C,))).astype(jnp.float32)
    bn_scale = bn_gamma / jnp.sqrt(bn_var + 1e-5)
    bn_bias = bn_beta - bn_mean * bn_scale

    raw = dict(
        dw_w=dw_w, bn_scale=bn_scale, bn_bias=bn_bias,
        in_proj_w=nrm(ks[5], (3 * C, C)), in_proj_b=nrm(ks[6], (3 * C,)),
        out_proj_w=nrm(ks[7], (C, C)), out_proj_b=nrm(ks[8], (C,)),
        ln1_g=1.0 + nrm(ks[9], (C,), 0.1), ln1_b=nrm(ks[10], (C,)),
        lin1_w=nrm(ks[11], (dff, C)), lin1_b=nrm(ks[12], (dff,)),
        lin2_w=nrm(ks[13], (C, dff)), lin2_b=nrm(ks[14], (C,)),
        ln2_g=1.0 + nrm(ks[15], (1, C), 0.1).reshape(C), ln2_b=nrm(ks[16], (C,)),
    )

    src = jax.random.normal(ks[17], (B, C, H, W), jnp.float32)
    pos = 0.1 * jax.random.normal(ks[18], (S, B, C), jnp.float32)

    params = prepare_params(raw, nhead)
    out = transformer_dwconv_encoder_layer(src, pos, params, nhead)
    out = jax.block_until_ready(out)

    ref = reference(src, pos, raw, nhead)
    assert out.shape == (B, C, H, W)
    err = float(jnp.max(jnp.abs(out - ref)))
    # bf16 matmul inputs + approx reciprocal -> loosened tolerance vs f32 ref.
    assert err < 5e-2, err

    print("KERNEL_OK")
</pallas_src>

<mosaic_0001>
module attributes {stable_mosaic.version = 11 : i64} {
  func.func @fused_encoder_kernel(%arg0: i32, %arg1: memref<1x32x256xf32, #tpu.memory_space<vmem>>, %arg2: memref<1x256x32xf32, #tpu.memory_space<vmem>>, %arg3: memref<32x9xf32, #tpu.memory_space<vmem>>, %arg4: memref<32x1xf32, #tpu.memory_space<vmem>>, %arg5: memref<32x1xf32, #tpu.memory_space<vmem>>, %arg6: memref<32x32xbf16, #tpu.memory_space<vmem>>, %arg7: memref<32x32xbf16, #tpu.memory_space<vmem>>, %arg8: memref<32x32xbf16, #tpu.memory_space<vmem>>, %arg9: memref<1x32xf32, #tpu.memory_space<vmem>>, %arg10: memref<1x32xf32, #tpu.memory_space<vmem>>, %arg11: memref<1x32xf32, #tpu.memory_space<vmem>>, %arg12: memref<32x32xbf16, #tpu.memory_space<vmem>>, %arg13: memref<1x32xf32, #tpu.memory_space<vmem>>, %arg14: memref<1x32xf32, #tpu.memory_space<vmem>>, %arg15: memref<1x32xf32, #tpu.memory_space<vmem>>, %arg16: memref<32x64xbf16, #tpu.memory_space<vmem>>, %arg17: memref<1x64xf32, #tpu.memory_space<vmem>>, %arg18: memref<64x32xbf16, #tpu.memory_space<vmem>>, %arg19: memref<1x32xf32, #tpu.memory_space<vmem>>, %arg20: memref<1x32xf32, #tpu.memory_space<vmem>>, %arg21: memref<1x32xf32, #tpu.memory_space<vmem>>, %arg22: memref<1x32x256xf32, #tpu.memory_space<vmem>>) attributes {dimension_semantics = [#tpu.dimension_semantics<parallel>], iteration_bounds = array<i64: 2>, scalar_prefetch = 0 : i64, scratch_operands = 0 : i64, tpu.core_type = #tpu.core_type<tc>, window_params = [{transform_indices = @transform_0, window_bounds = array<i64: 1, 32, 256>}, {transform_indices = @transform_1, window_bounds = array<i64: 1, 256, 32>}, {pipeline_mode = #tpu.pipeline_mode<synchronous>, transform_indices = @transform_2, window_bounds = array<i64: 32, 9>}, {pipeline_mode = #tpu.pipeline_mode<synchronous>, transform_indices = @transform_3, window_bounds = array<i64: 32, 1>}, {pipeline_mode = #tpu.pipeline_mode<synchronous>, transform_indices = @transform_4, window_bounds = array<i64: 32, 1>}, {pipeline_mode = #tpu.pipeline_mode<synchronous>, transform_indices = @transform_5, window_bounds = array<i64: 32, 32>}, {pipeline_mode = #tpu.pipeline_mode<synchronous>, transform_indices = @transform_6, window_bounds = array<i64: 32, 32>}, {pipeline_mode = #tpu.pipeline_mode<synchronous>, transform_indices = @transform_7, window_bounds = array<i64: 32, 32>}, {pipeline_mode = #tpu.pipeline_mode<synchronous>, transform_indices = @transform_8, window_bounds = array<i64: 1, 32>}, {pipeline_mode = #tpu.pipeline_mode<synchronous>, transform_indices = @transform_9, window_bounds = array<i64: 1, 32>}, {pipeline_mode = #tpu.pipeline_mode<synchronous>, transform_indices = @transform_10, window_bounds = array<i64: 1, 32>}, {pipeline_mode = #tpu.pipeline_mode<synchronous>, transform_indices = @transform_11, window_bounds = array<i64: 32, 32>}, {pipeline_mode = #tpu.pipeline_mode<synchronous>, transform_indices = @transform_12, window_bounds = array<i64: 1, 32>}, {pipeline_mode = #tpu.pipeline_mode<synchronous>, transform_indices = @transform_13, window_bounds = array<i64: 1, 32>}, {pipeline_mode = #tpu.pipeline_mode<synchronous>, transform_indices = @transform_14, window_bounds = array<i64: 1, 32>}, {pipeline_mode = #tpu.pipeline_mode<synchronous>, transform_indices = @transform_15, window_bounds = array<i64: 32, 64>}, {pipeline_mode = #tpu.pipeline_mode<synchronous>, transform_indices = @transform_16, window_bounds = array<i64: 1, 64>}, {pipeline_mode = #tpu.pipeline_mode<synchronous>, transform_indices = @transform_17, window_bounds = array<i64: 64, 32>}, {pipeline_mode = #tpu.pipeline_mode<synchronous>, transform_indices = @transform_18, window_bounds = array<i64: 1, 32>}, {pipeline_mode = #tpu.pipeline_mode<synchronous>, transform_indices = @transform_19, window_bounds = array<i64: 1, 32>}, {pipeline_mode = #tpu.pipeline_mode<synchronous>, transform_indices = @transform_20, window_bounds = array<i64: 1, 32>}, {transform_indices = @transform_21, window_bounds = array<i64: 1, 32, 256>}]} {
    %c0 = arith.constant 0 : index
    %c0_0 = arith.constant 0 : index
    %c0_1 = arith.constant 0 : index
    %0 = vector.load %arg1[%c0, %c0_0, %c0_1] : memref<1x32x256xf32, #tpu.memory_space<vmem>>, vector<1x32x256xf32>
    %1 = vector.shape_cast %0 : vector<1x32x256xf32> to vector<32x256xf32>
    %c0_2 = arith.constant 0 : index
    %c0_3 = arith.constant 0 : index
    %2 = vector.load %arg3[%c0_2, %c0_3] : memref<32x9xf32, #tpu.memory_space<vmem>>, vector<32x9xf32>
    %3 = tpu.iota {dimensions = array<i32: 1>} : vector<1x256xi32>
    %c15_i32 = arith.constant 15 : i32
    %4 = vector.broadcast %c15_i32 : i32 to vector<1x256xi32>
    %5 = arith.andi %3, %4 : vector<1x256xi32>
    %cst = arith.constant 0.000000e+00 : f32
    %6 = vector.broadcast %cst : f32 to vector<32x256xf32>
    %c17_i32 = arith.constant 17 : i32
    %7 = tpu.dynamic_rotate %1 by %c17_i32 dim 1 : vector<32x256xf32>, i32 -> vector<32x256xf32>
    %c16_i32 = arith.constant 16 : i32
    %8 = vector.broadcast %c16_i32 : i32 to vector<1x256xi32>
    %9 = arith.cmpi sge, %3, %8 : vector<1x256xi32>
    %c1_i32 = arith.constant 1 : i32
    %10 = vector.broadcast %c1_i32 : i32 to vector<1x256xi32>
    %11 = arith.cmpi sge, %5, %10 : vector<1x256xi32>
    %12 = arith.andi %9, %11 : vector<1x256xi1>
    %cst_4 = arith.constant 0.000000e+00 : f32
    %13 = vector.shape_cast %12 : vector<1x256xi1> to vector<1x256xi1>
    %14 = vector.broadcast %13 : vector<1x256xi1> to vector<32x256xi1>
    %15 = vector.broadcast %cst_4 : f32 to vector<32x256xf32>
    %16 = arith.select %14, %7, %15 : vector<32x256xi1>, vector<32x256xf32>
    %17 = vector.extract_strided_slice %2 {offsets = [0, 0], sizes = [32, 1], strides = [1, 1]} : vector<32x9xf32> to vector<32x1xf32>
    %18 = vector.broadcast %17 : vector<32x1xf32> to vector<32x256xf32>
    %19 = arith.mulf %16, %18 : vector<32x256xf32>
    %20 = arith.addf %6, %19 : vector<32x256xf32>
    %c16_i32_5 = arith.constant 16 : i32
    %21 = tpu.dynamic_rotate %1 by %c16_i32_5 dim 1 : vector<32x256xf32>, i32 -> vector<32x256xf32>
    %c16_i32_6 = arith.constant 16 : i32
    %22 = vector.broadcast %c16_i32_6 : i32 to vector<1x256xi32>
    %23 = arith.cmpi sge, %3, %22 : vector<1x256xi32>
    %cst_7 = arith.constant 0.000000e+00 : f32
    %24 = vector.shape_cast %23 : vector<1x256xi1> to vector<1x256xi1>
    %25 = vector.broadcast %24 : vector<1x256xi1> to vector<32x256xi1>
    %26 = vector.broadcast %cst_7 : f32 to vector<32x256xf32>
    %27 = arith.select %25, %21, %26 : vector<32x256xi1>, vector<32x256xf32>
    %28 = vector.extract_strided_slice %2 {offsets = [0, 1], sizes = [32, 1], strides = [1, 1]} : vector<32x9xf32> to vector<32x1xf32>
    %29 = vector.broadcast %28 : vector<32x1xf32> to vector<32x256xf32>
    %30 = arith.mulf %27, %29 : vector<32x256xf32>
    %31 = arith.addf %20, %30 : vector<32x256xf32>
    %c15_i32_8 = arith.constant 15 : i32
    %32 = tpu.dynamic_rotate %1 by %c15_i32_8 dim 1 : vector<32x256xf32>, i32 -> vector<32x256xf32>
    %c16_i32_9 = arith.constant 16 : i32
    %33 = vector.broadcast %c16_i32_9 : i32 to vector<1x256xi32>
    %34 = arith.cmpi sge, %3, %33 : vector<1x256xi32>
    %c14_i32 = arith.constant 14 : i32
    %35 = vector.broadcast %c14_i32 : i32 to vector<1x256xi32>
    %36 = arith.cmpi sle, %5, %35 : vector<1x256xi32>
    %37 = arith.andi %34, %36 : vector<1x256xi1>
    %cst_10 = arith.constant 0.000000e+00 : f32
    %38 = vector.shape_cast %37 : vector<1x256xi1> to vector<1x256xi1>
    %39 = vector.broadcast %38 : vector<1x256xi1> to vector<32x256xi1>
    %40 = vector.broadcast %cst_10 : f32 to vector<32x256xf32>
    %41 = arith.select %39, %32, %40 : vector<32x256xi1>, vector<32x256xf32>
    %42 = vector.extract_strided_slice %2 {offsets = [0, 2], sizes = [32, 1], strides = [1, 1]} : vector<32x9xf32> to vector<32x1xf32>
    %43 = vector.broadcast %42 : vector<32x1xf32> to vector<32x256xf32>
    %44 = arith.mulf %41, %43 : vector<32x256xf32>
    %45 = arith.addf %31, %44 : vector<32x256xf32>
    %c1_i32_11 = arith.constant 1 : i32
    %46 = tpu.dynamic_rotate %1 by %c1_i32_11 dim 1 : vector<32x256xf32>, i32 -> vector<32x256xf32>
    %c1_i32_12 = arith.constant 1 : i32
    %47 = vector.broadcast %c1_i32_12 : i32 to vector<1x256xi32>
    %48 = arith.cmpi sge, %5, %47 : vector<1x256xi32>
    %cst_13 = arith.constant 0.000000e+00 : f32
    %49 = vector.shape_cast %48 : vector<1x256xi1> to vector<1x256xi1>
    %50 = vector.broadcast %49 : vector<1x256xi1> to vector<32x256xi1>
    %51 = vector.broadcast %cst_13 : f32 to vector<32x256xf32>
    %52 = arith.select %50, %46, %51 : vector<32x256xi1>, vector<32x256xf32>
    %53 = vector.extract_strided_slice %2 {offsets = [0, 3], sizes = [32, 1], strides = [1, 1]} : vector<32x9xf32> to vector<32x1xf32>
    %54 = vector.broadcast %53 : vector<32x1xf32> to vector<32x256xf32>
    %55 = arith.mulf %52, %54 : vector<32x256xf32>
    %56 = arith.addf %45, %55 : vector<32x256xf32>
    %57 = vector.extract_strided_slice %2 {offsets = [0, 4], sizes = [32, 1], strides = [1, 1]} : vector<32x9xf32> to vector<32x1xf32>
    %58 = vector.broadcast %57 : vector<32x1xf32> to vector<32x256xf32>
    %59 = arith.mulf %1, %58 : vector<32x256xf32>
    %60 = arith.addf %56, %59 : vector<32x256xf32>
    %c255_i32 = arith.constant 255 : i32
    %61 = tpu.dynamic_rotate %1 by %c255_i32 dim 1 : vector<32x256xf32>, i32 -> vector<32x256xf32>
    %c14_i32_14 = arith.constant 14 : i32
    %62 = vector.broadcast %c14_i32_14 : i32 to vector<1x256xi32>
    %63 = arith.cmpi sle, %5, %62 : vector<1x256xi32>
    %cst_15 = arith.constant 0.000000e+00 : f32
    %64 = vector.shape_cast %63 : vector<1x256xi1> to vector<1x256xi1>
    %65 = vector.broadcast %64 : vector<1x256xi1> to vector<32x256xi1>
    %66 = vector.broadcast %cst_15 : f32 to vector<32x256xf32>
    %67 = arith.select %65, %61, %66 : vector<32x256xi1>, vector<32x256xf32>
    %68 = vector.extract_strided_slice %2 {offsets = [0, 5], sizes = [32, 1], strides = [1, 1]} : vector<32x9xf32> to vector<32x1xf32>
    %69 = vector.broadcast %68 : vector<32x1xf32> to vector<32x256xf32>
    %70 = arith.mulf %67, %69 : vector<32x256xf32>
    %71 = arith.addf %60, %70 : vector<32x256xf32>
    %c241_i32 = arith.constant 241 : i32
    %72 = tpu.dynamic_rotate %1 by %c241_i32 dim 1 : vector<32x256xf32>, i32 -> vector<32x256xf32>
    %c240_i32 = arith.constant 240 : i32
    %73 = vector.broadcast %c240_i32 : i32 to vector<1x256xi32>
    %74 = arith.cmpi slt, %3, %73 : vector<1x256xi32>
    %c1_i32_16 = arith.constant 1 : i32
    %75 = vector.broadcast %c1_i32_16 : i32 to vector<1x256xi32>
    %76 = arith.cmpi sge, %5, %75 : vector<1x256xi32>
    %77 = arith.andi %74, %76 : vector<1x256xi1>
    %cst_17 = arith.constant 0.000000e+00 : f32
    %78 = vector.shape_cast %77 : vector<1x256xi1> to vector<1x256xi1>
    %79 = vector.broadcast %78 : vector<1x256xi1> to vector<32x256xi1>
    %80 = vector.broadcast %cst_17 : f32 to vector<32x256xf32>
    %81 = arith.select %79, %72, %80 : vector<32x256xi1>, vector<32x256xf32>
    %82 = vector.extract_strided_slice %2 {offsets = [0, 6], sizes = [32, 1], strides = [1, 1]} : vector<32x9xf32> to vector<32x1xf32>
    %83 = vector.broadcast %82 : vector<32x1xf32> to vector<32x256xf32>
    %84 = arith.mulf %81, %83 : vector<32x256xf32>
    %85 = arith.addf %71, %84 : vector<32x256xf32>
    %c240_i32_18 = arith.constant 240 : i32
    %86 = tpu.dynamic_rotate %1 by %c240_i32_18 dim 1 : vector<32x256xf32>, i32 -> vector<32x256xf32>
    %c240_i32_19 = arith.constant 240 : i32
    %87 = vector.broadcast %c240_i32_19 : i32 to vector<1x256xi32>
    %88 = arith.cmpi slt, %3, %87 : vector<1x256xi32>
    %cst_20 = arith.constant 0.000000e+00 : f32
    %89 = vector.shape_cast %88 : vector<1x256xi1> to vector<1x256xi1>
    %90 = vector.broadcast %89 : vector<1x256xi1> to vector<32x256xi1>
    %91 = vector.broadcast %cst_20 : f32 to vector<32x256xf32>
    %92 = arith.select %90, %86, %91 : vector<32x256xi1>, vector<32x256xf32>
    %93 = vector.extract_strided_slice %2 {offsets = [0, 7], sizes = [32, 1], strides = [1, 1]} : vector<32x9xf32> to vector<32x1xf32>
    %94 = vector.broadcast %93 : vector<32x1xf32> to vector<32x256xf32>
    %95 = arith.mulf %92, %94 : vector<32x256xf32>
    %96 = arith.addf %85, %95 : vector<32x256xf32>
    %c239_i32 = arith.constant 239 : i32
    %97 = tpu.dynamic_rotate %1 by %c239_i32 dim 1 : vector<32x256xf32>, i32 -> vector<32x256xf32>
    %c240_i32_21 = arith.constant 240 : i32
    %98 = vector.broadcast %c240_i32_21 : i32 to vector<1x256xi32>
    %99 = arith.cmpi slt, %3, %98 : vector<1x256xi32>
    %c14_i32_22 = arith.constant 14 : i32
    %100 = vector.broadcast %c14_i32_22 : i32 to vector<1x256xi32>
    %101 = arith.cmpi sle, %5, %100 : vector<1x256xi32>
    %102 = arith.andi %99, %101 : vector<1x256xi1>
    %cst_23 = arith.constant 0.000000e+00 : f32
    %103 = vector.shape_cast %102 : vector<1x256xi1> to vector<1x256xi1>
    %104 = vector.broadcast %103 : vector<1x256xi1> to vector<32x256xi1>
    %105 = vector.broadcast %cst_23 : f32 to vector<32x256xf32>
    %106 = arith.select %104, %97, %105 : vector<32x256xi1>, vector<32x256xf32>
    %107 = vector.extract_strided_slice %2 {offsets = [0, 8], sizes = [32, 1], strides = [1, 1]} : vector<32x9xf32> to vector<32x1xf32>
    %108 = vector.broadcast %107 : vector<32x1xf32> to vector<32x256xf32>
    %109 = arith.mulf %106, %108 : vector<32x256xf32>
    %110 = arith.addf %96, %109 : vector<32x256xf32>
    %c0_24 = arith.constant 0 : index
    %c0_25 = arith.constant 0 : index
    %111 = vector.load %arg4[%c0_24, %c0_25] : memref<32x1xf32, #tpu.memory_space<vmem>>, vector<32x1xf32>
    %112 = vector.broadcast %111 : vector<32x1xf32> to vector<32x256xf32>
    %113 = arith.mulf %110, %112 : vector<32x256xf32>
    %c0_26 = arith.constant 0 : index
    %c0_27 = arith.constant 0 : index
    %114 = vector.load %arg5[%c0_26, %c0_27] : memref<32x1xf32, #tpu.memory_space<vmem>>, vector<32x1xf32>
    %115 = vector.broadcast %114 : vector<32x1xf32> to vector<32x256xf32>
    %116 = arith.addf %113, %115 : vector<32x256xf32>
    %cst_28 = arith.constant 0.000000e+00 : f32
    %117 = vector.broadcast %cst_28 : f32 to vector<32x256xf32>
    %118 = arith.maximumf %116, %117 : vector<32x256xf32>
    %119 = tpu.transpose %118, [1, 0] : vector<32x256xf32> -> vector<256x32xf32>
    %c0_29 = arith.constant 0 : index
    %c0_30 = arith.constant 0 : index
    %c0_31 = arith.constant 0 : index
    %120 = vector.load %arg2[%c0_29, %c0_30, %c0_31] : memref<1x256x32xf32, #tpu.memory_space<vmem>>, vector<1x256x32xf32>
    %121 = vector.shape_cast %120 : vector<1x256x32xf32> to vector<256x32xf32>
    %122 = arith.addf %119, %121 : vector<256x32xf32>
    %123 = arith.truncf %122 : vector<256x32xf32> to vector<256x32xbf16>
    %124 = arith.truncf %119 : vector<256x32xf32> to vector<256x32xbf16>
    %c0_32 = arith.constant 0 : index
    %c0_33 = arith.constant 0 : index
    %125 = vector.load %arg6[%c0_32, %c0_33] : memref<32x32xbf16, #tpu.memory_space<vmem>>, vector<32x32xbf16>
    %cst_34 = arith.constant dense<0.000000e+00> : vector<256x32xf32>
    %126 = tpu.matmul %123, %125, %cst_34 {dimension_numbers = #tpu.dot_dimension_numbers<[1], [0], [0], [1], [0, 0, 1, 1], [], []>} : vector<256x32xbf16>, vector<32x32xbf16>, vector<256x32xf32> -> vector<256x32xf32>
    %c0_35 = arith.constant 0 : index
    %c0_36 = arith.constant 0 : index
    %127 = vector.load %arg9[%c0_35, %c0_36] : memref<1x32xf32, #tpu.memory_space<vmem>>, vector<1x32xf32>
    %128 = vector.broadcast %127 : vector<1x32xf32> to vector<256x32xf32>
    %129 = arith.addf %126, %128 : vector<256x32xf32>
    %c0_37 = arith.constant 0 : index
    %c0_38 = arith.constant 0 : index
    %130 = vector.load %arg7[%c0_37, %c0_38] : memref<32x32xbf16, #tpu.memory_space<vmem>>, vector<32x32xbf16>
    %cst_39 = arith.constant dense<0.000000e+00> : vector<256x32xf32>
    %131 = tpu.matmul %123, %130, %cst_39 {dimension_numbers = #tpu.dot_dimension_numbers<[1], [0], [0], [1], [0, 0, 1, 1], [], []>} : vector<256x32xbf16>, vector<32x32xbf16>, vector<256x32xf32> -> vector<256x32xf32>
    %c0_40 = arith.constant 0 : index
    %c0_41 = arith.constant 0 : index
    %132 = vector.load %arg10[%c0_40, %c0_41] : memref<1x32xf32, #tpu.memory_space<vmem>>, vector<1x32xf32>
    %133 = vector.broadcast %132 : vector<1x32xf32> to vector<256x32xf32>
    %134 = arith.addf %131, %133 : vector<256x32xf32>
    %c0_42 = arith.constant 0 : index
    %c0_43 = arith.constant 0 : index
    %135 = vector.load %arg8[%c0_42, %c0_43] : memref<32x32xbf16, #tpu.memory_space<vmem>>, vector<32x32xbf16>
    %cst_44 = arith.constant dense<0.000000e+00> : vector<256x32xf32>
    %136 = tpu.matmul %124, %135, %cst_44 {dimension_numbers = #tpu.dot_dimension_numbers<[1], [0], [0], [1], [0, 0, 1, 1], [], []>} : vector<256x32xbf16>, vector<32x32xbf16>, vector<256x32xf32> -> vector<256x32xf32>
    %c0_45 = arith.constant 0 : index
    %c0_46 = arith.constant 0 : index
    %137 = vector.load %arg11[%c0_45, %c0_46] : memref<1x32xf32, #tpu.memory_space<vmem>>, vector<1x32xf32>
    %138 = vector.broadcast %137 : vector<1x32xf32> to vector<256x32xf32>
    %139 = arith.addf %136, %138 : vector<256x32xf32>
    %c0_47 = arith.constant 0 : index
    %c0_48 = arith.constant 0 : index
    %140 = vector.load %arg12[%c0_47, %c0_48] : memref<32x32xbf16, #tpu.memory_space<vmem>>, vector<32x32xbf16>
    %cst_49 = arith.constant 0.000000e+00 : f32
    %141 = vector.broadcast %cst_49 : f32 to vector<256x32xf32>
    %142 = vector.extract_strided_slice %129 {offsets = [0, 0], sizes = [256, 8], strides = [1, 1]} : vector<256x32xf32> to vector<256x8xf32>
    %143 = arith.truncf %142 : vector<256x8xf32> to vector<256x8xbf16>
    %144 = vector.extract_strided_slice %134 {offsets = [0, 0], sizes = [256, 8], strides = [1, 1]} : vector<256x32xf32> to vector<256x8xf32>
    %145 = arith.truncf %144 : vector<256x8xf32> to vector<256x8xbf16>
    %146 = vector.extract_strided_slice %139 {offsets = [0, 0], sizes = [256, 8], strides = [1, 1]} : vector<256x32xf32> to vector<256x8xf32>
    %147 = arith.truncf %146 : vector<256x8xf32> to vector<256x8xbf16>
    %148 = tpu.transpose %145, [1, 0] : vector<256x8xbf16> -> vector<8x256xbf16>
    %cst_50 = arith.constant dense<0.000000e+00> : vector<256x256xf32>
    %149 = tpu.matmul %143, %148, %cst_50 {dimension_numbers = #tpu.dot_dimension_numbers<[1], [0], [0], [1], [0, 0, 1, 1], [], []>} : vector<256x8xbf16>, vector<8x256xbf16>, vector<256x256xf32> -> vector<256x256xf32>
    %cst_51 = arith.constant dense<0xFF800000> : vector<256xf32>
    %150 = vector.multi_reduction <maximumf>, %149, %cst_51 [1] : vector<256x256xf32> to vector<256xf32>
    %151 = vector.shape_cast %150 : vector<256xf32> to vector<256x1xf32>
    %152 = vector.broadcast %151 : vector<256x1xf32> to vector<256x256xf32>
    %153 = arith.subf %149, %152 : vector<256x256xf32>
    %154 = math.exp %153 : vector<256x256xf32>
    %cst_52 = arith.constant dense<0.000000e+00> : vector<256xf32>
    %155 = vector.multi_reduction <add>, %154, %cst_52 [1] : vector<256x256xf32> to vector<256xf32>
    %156 = vector.shape_cast %155 : vector<256xf32> to vector<256x1xf32>
    %157 = tpu.reciprocal %156 {approx = true} : vector<256x1xf32> -> vector<256x1xf32>
    %158 = vector.broadcast %157 : vector<256x1xf32> to vector<256x256xf32>
    %159 = arith.mulf %154, %158 : vector<256x256xf32>
    %160 = arith.truncf %159 : vector<256x256xf32> to vector<256x256xbf16>
    %cst_53 = arith.constant dense<0.000000e+00> : vector<256x8xf32>
    %161 = tpu.matmul %160, %147, %cst_53 {dimension_numbers = #tpu.dot_dimension_numbers<[1], [0], [0], [1], [0, 0, 1, 1], [], []>} : vector<256x256xbf16>, vector<256x8xbf16>, vector<256x8xf32> -> vector<256x8xf32>
    %162 = arith.truncf %161 : vector<256x8xf32> to vector<256x8xbf16>
    %163 = vector.extract_strided_slice %140 {offsets = [0, 0], sizes = [8, 32], strides = [1, 1]} : vector<32x32xbf16> to vector<8x32xbf16>
    %cst_54 = arith.constant dense<0.000000e+00> : vector<256x32xf32>
    %164 = tpu.matmul %162, %163, %cst_54 {dimension_numbers = #tpu.dot_dimension_numbers<[1], [0], [0], [1], [0, 0, 1, 1], [], []>} : vector<256x8xbf16>, vector<8x32xbf16>, vector<256x32xf32> -> vector<256x32xf32>
    %165 = arith.addf %141, %164 : vector<256x32xf32>
    %166 = vector.extract_strided_slice %129 {offsets = [0, 8], sizes = [256, 8], strides = [1, 1]} : vector<256x32xf32> to vector<256x8xf32>
    %167 = arith.truncf %166 : vector<256x8xf32> to vector<256x8xbf16>
    %168 = vector.extract_strided_slice %134 {offsets = [0, 8], sizes = [256, 8], strides = [1, 1]} : vector<256x32xf32> to vector<256x8xf32>
    %169 = arith.truncf %168 : vector<256x8xf32> to vector<256x8xbf16>
    %170 = vector.extract_strided_slice %139 {offsets = [0, 8], sizes = [256, 8], strides = [1, 1]} : vector<256x32xf32> to vector<256x8xf32>
    %171 = arith.truncf %170 : vector<256x8xf32> to vector<256x8xbf16>
    %172 = tpu.transpose %169, [1, 0] : vector<256x8xbf16> -> vector<8x256xbf16>
    %cst_55 = arith.constant dense<0.000000e+00> : vector<256x256xf32>
    %173 = tpu.matmul %167, %172, %cst_55 {dimension_numbers = #tpu.dot_dimension_numbers<[1], [0], [0], [1], [0, 0, 1, 1], [], []>} : vector<256x8xbf16>, vector<8x256xbf16>, vector<256x256xf32> -> vector<256x256xf32>
    %cst_56 = arith.constant dense<0xFF800000> : vector<256xf32>
    %174 = vector.multi_reduction <maximumf>, %173, %cst_56 [1] : vector<256x256xf32> to vector<256xf32>
    %175 = vector.shape_cast %174 : vector<256xf32> to vector<256x1xf32>
    %176 = vector.broadcast %175 : vector<256x1xf32> to vector<256x256xf32>
    %177 = arith.subf %173, %176 : vector<256x256xf32>
    %178 = math.exp %177 : vector<256x256xf32>
    %cst_57 = arith.constant dense<0.000000e+00> : vector<256xf32>
    %179 = vector.multi_reduction <add>, %178, %cst_57 [1] : vector<256x256xf32> to vector<256xf32>
    %180 = vector.shape_cast %179 : vector<256xf32> to vector<256x1xf32>
    %181 = tpu.reciprocal %180 {approx = true} : vector<256x1xf32> -> vector<256x1xf32>
    %182 = vector.broadcast %181 : vector<256x1xf32> to vector<256x256xf32>
    %183 = arith.mulf %178, %182 : vector<256x256xf32>
    %184 = arith.truncf %183 : vector<256x256xf32> to vector<256x256xbf16>
    %cst_58 = arith.constant dense<0.000000e+00> : vector<256x8xf32>
    %185 = tpu.matmul %184, %171, %cst_58 {dimension_numbers = #tpu.dot_dimension_numbers<[1], [0], [0], [1], [0, 0, 1, 1], [], []>} : vector<256x256xbf16>, vector<256x8xbf16>, vector<256x8xf32> -> vector<256x8xf32>
    %186 = arith.truncf %185 : vector<256x8xf32> to vector<256x8xbf16>
    %187 = vector.extract_strided_slice %140 {offsets = [8, 0], sizes = [8, 32], strides = [1, 1]} : vector<32x32xbf16> to vector<8x32xbf16>
    %cst_59 = arith.constant dense<0.000000e+00> : vector<256x32xf32>
    %188 = tpu.matmul %186, %187, %cst_59 {dimension_numbers = #tpu.dot_dimension_numbers<[1], [0], [0], [1], [0, 0, 1, 1], [], []>} : vector<256x8xbf16>, vector<8x32xbf16>, vector<256x32xf32> -> vector<256x32xf32>
    %189 = arith.addf %165, %188 : vector<256x32xf32>
    %190 = vector.extract_strided_slice %129 {offsets = [0, 16], sizes = [256, 8], strides = [1, 1]} : vector<256x32xf32> to vector<256x8xf32>
    %191 = arith.truncf %190 : vector<256x8xf32> to vector<256x8xbf16>
    %192 = vector.extract_strided_slice %134 {offsets = [0, 16], sizes = [256, 8], strides = [1, 1]} : vector<256x32xf32> to vector<256x8xf32>
    %193 = arith.truncf %192 : vector<256x8xf32> to vector<256x8xbf16>
    %194 = vector.extract_strided_slice %139 {offsets = [0, 16], sizes = [256, 8], strides = [1, 1]} : vector<256x32xf32> to vector<256x8xf32>
    %195 = arith.truncf %194 : vector<256x8xf32> to vector<256x8xbf16>
    %196 = tpu.transpose %193, [1, 0] : vector<256x8xbf16> -> vector<8x256xbf16>
    %cst_60 = arith.constant dense<0.000000e+00> : vector<256x256xf32>
    %197 = tpu.matmul %191, %196, %cst_60 {dimension_numbers = #tpu.dot_dimension_numbers<[1], [0], [0], [1], [0, 0, 1, 1], [], []>} : vector<256x8xbf16>, vector<8x256xbf16>, vector<256x256xf32> -> vector<256x256xf32>
    %cst_61 = arith.constant dense<0xFF800000> : vector<256xf32>
    %198 = vector.multi_reduction <maximumf>, %197, %cst_61 [1] : vector<256x256xf32> to vector<256xf32>
    %199 = vector.shape_cast %198 : vector<256xf32> to vector<256x1xf32>
    %200 = vector.broadcast %199 : vector<256x1xf32> to vector<256x256xf32>
    %201 = arith.subf %197, %200 : vector<256x256xf32>
    %202 = math.exp %201 : vector<256x256xf32>
    %cst_62 = arith.constant dense<0.000000e+00> : vector<256xf32>
    %203 = vector.multi_reduction <add>, %202, %cst_62 [1] : vector<256x256xf32> to vector<256xf32>
    %204 = vector.shape_cast %203 : vector<256xf32> to vector<256x1xf32>
    %205 = tpu.reciprocal %204 {approx = true} : vector<256x1xf32> -> vector<256x1xf32>
    %206 = vector.broadcast %205 : vector<256x1xf32> to vector<256x256xf32>
    %207 = arith.mulf %202, %206 : vector<256x256xf32>
    %208 = arith.truncf %207 : vector<256x256xf32> to vector<256x256xbf16>
    %cst_63 = arith.constant dense<0.000000e+00> : vector<256x8xf32>
    %209 = tpu.matmul %208, %195, %cst_63 {dimension_numbers = #tpu.dot_dimension_numbers<[1], [0], [0], [1], [0, 0, 1, 1], [], []>} : vector<256x256xbf16>, vector<256x8xbf16>, vector<256x8xf32> -> vector<256x8xf32>
    %210 = arith.truncf %209 : vector<256x8xf32> to vector<256x8xbf16>
    %211 = vector.extract_strided_slice %140 {offsets = [16, 0], sizes = [8, 32], strides = [1, 1]} : vector<32x32xbf16> to vector<8x32xbf16>
    %cst_64 = arith.constant dense<0.000000e+00> : vector<256x32xf32>
    %212 = tpu.matmul %210, %211, %cst_64 {dimension_numbers = #tpu.dot_dimension_numbers<[1], [0], [0], [1], [0, 0, 1, 1], [], []>} : vector<256x8xbf16>, vector<8x32xbf16>, vector<256x32xf32> -> vector<256x32xf32>
    %213 = arith.addf %189, %212 : vector<256x32xf32>
    %214 = vector.extract_strided_slice %129 {offsets = [0, 24], sizes = [256, 8], strides = [1, 1]} : vector<256x32xf32> to vector<256x8xf32>
    %215 = arith.truncf %214 : vector<256x8xf32> to vector<256x8xbf16>
    %216 = vector.extract_strided_slice %134 {offsets = [0, 24], sizes = [256, 8], strides = [1, 1]} : vector<256x32xf32> to vector<256x8xf32>
    %217 = arith.truncf %216 : vector<256x8xf32> to vector<256x8xbf16>
    %218 = vector.extract_strided_slice %139 {offsets = [0, 24], sizes = [256, 8], strides = [1, 1]} : vector<256x32xf32> to vector<256x8xf32>
    %219 = arith.truncf %218 : vector<256x8xf32> to vector<256x8xbf16>
    %220 = tpu.transpose %217, [1, 0] : vector<256x8xbf16> -> vector<8x256xbf16>
    %cst_65 = arith.constant dense<0.000000e+00> : vector<256x256xf32>
    %221 = tpu.matmul %215, %220, %cst_65 {dimension_numbers = #tpu.dot_dimension_numbers<[1], [0], [0], [1], [0, 0, 1, 1], [], []>} : vector<256x8xbf16>, vector<8x256xbf16>, vector<256x256xf32> -> vector<256x256xf32>
    %cst_66 = arith.constant dense<0xFF800000> : vector<256xf32>
    %222 = vector.multi_reduction <maximumf>, %221, %cst_66 [1] : vector<256x256xf32> to vector<256xf32>
    %223 = vector.shape_cast %222 : vector<256xf32> to vector<256x1xf32>
    %224 = vector.broadcast %223 : vector<256x1xf32> to vector<256x256xf32>
    %225 = arith.subf %221, %224 : vector<256x256xf32>
    %226 = math.exp %225 : vector<256x256xf32>
    %cst_67 = arith.constant dense<0.000000e+00> : vector<256xf32>
    %227 = vector.multi_reduction <add>, %226, %cst_67 [1] : vector<256x256xf32> to vector<256xf32>
    %228 = vector.shape_cast %227 : vector<256xf32> to vector<256x1xf32>
    %229 = tpu.reciprocal %228 {approx = true} : vector<256x1xf32> -> vector<256x1xf32>
    %230 = vector.broadcast %229 : vector<256x1xf32> to vector<256x256xf32>
    %231 = arith.mulf %226, %230 : vector<256x256xf32>
    %232 = arith.truncf %231 : vector<256x256xf32> to vector<256x256xbf16>
    %cst_68 = arith.constant dense<0.000000e+00> : vector<256x8xf32>
    %233 = tpu.matmul %232, %219, %cst_68 {dimension_numbers = #tpu.dot_dimension_numbers<[1], [0], [0], [1], [0, 0, 1, 1], [], []>} : vector<256x256xbf16>, vector<256x8xbf16>, vector<256x8xf32> -> vector<256x8xf32>
    %234 = arith.truncf %233 : vector<256x8xf32> to vector<256x8xbf16>
    %235 = vector.extract_strided_slice %140 {offsets = [24, 0], sizes = [8, 32], strides = [1, 1]} : vector<32x32xbf16> to vector<8x32xbf16>
    %cst_69 = arith.constant dense<0.000000e+00> : vector<256x32xf32>
    %236 = tpu.matmul %234, %235, %cst_69 {dimension_numbers = #tpu.dot_dimension_numbers<[1], [0], [0], [1], [0, 0, 1, 1], [], []>} : vector<256x8xbf16>, vector<8x32xbf16>, vector<256x32xf32> -> vector<256x32xf32>
    %237 = arith.addf %213, %236 : vector<256x32xf32>
    %c0_70 = arith.constant 0 : index
    %c0_71 = arith.constant 0 : index
    %238 = vector.load %arg13[%c0_70, %c0_71] : memref<1x32xf32, #tpu.memory_space<vmem>>, vector<1x32xf32>
    %239 = vector.broadcast %238 : vector<1x32xf32> to vector<256x32xf32>
    %240 = arith.addf %237, %239 : vector<256x32xf32>
    %241 = arith.addf %119, %240 : vector<256x32xf32>
    %cst_72 = arith.constant dense<0.000000e+00> : vector<256xf32>
    %242 = vector.multi_reduction <add>, %241, %cst_72 [1] : vector<256x32xf32> to vector<256xf32>
    %243 = vector.shape_cast %242 : vector<256xf32> to vector<256x1xf32>
    %cst_73 = arith.constant 3.200000e+01 : f32
    %244 = vector.broadcast %cst_73 : f32 to vector<256x1xf32>
    %245 = arith.divf %243, %244 : vector<256x1xf32>
    %246 = vector.broadcast %245 : vector<256x1xf32> to vector<256x32xf32>
    %247 = arith.subf %241, %246 : vector<256x32xf32>
    %248 = arith.mulf %247, %247 : vector<256x32xf32>
    %cst_74 = arith.constant dense<0.000000e+00> : vector<256xf32>
    %249 = vector.multi_reduction <add>, %248, %cst_74 [1] : vector<256x32xf32> to vector<256xf32>
    %250 = vector.shape_cast %249 : vector<256xf32> to vector<256x1xf32>
    %cst_75 = arith.constant 3.200000e+01 : f32
    %251 = vector.broadcast %cst_75 : f32 to vector<256x1xf32>
    %252 = arith.divf %250, %251 : vector<256x1xf32>
    %253 = vector.broadcast %245 : vector<256x1xf32> to vector<256x32xf32>
    %254 = arith.subf %241, %253 : vector<256x32xf32>
    %cst_76 = arith.constant 9.99999974E-6 : f32
    %255 = vector.broadcast %cst_76 : f32 to vector<256x1xf32>
    %256 = arith.addf %252, %255 : vector<256x1xf32>
    %257 = math.rsqrt %256 : vector<256x1xf32>
    %258 = vector.broadcast %257 : vector<256x1xf32> to vector<256x32xf32>
    %259 = arith.mulf %254, %258 : vector<256x32xf32>
    %c0_77 = arith.constant 0 : index
    %c0_78 = arith.constant 0 : index
    %260 = vector.load %arg14[%c0_77, %c0_78] : memref<1x32xf32, #tpu.memory_space<vmem>>, vector<1x32xf32>
    %261 = vector.broadcast %260 : vector<1x32xf32> to vector<256x32xf32>
    %262 = arith.mulf %259, %261 : vector<256x32xf32>
    %c0_79 = arith.constant 0 : index
    %c0_80 = arith.constant 0 : index
    %263 = vector.load %arg15[%c0_79, %c0_80] : memref<1x32xf32, #tpu.memory_space<vmem>>, vector<1x32xf32>
    %264 = vector.broadcast %263 : vector<1x32xf32> to vector<256x32xf32>
    %265 = arith.addf %262, %264 : vector<256x32xf32>
    %266 = arith.truncf %265 : vector<256x32xf32> to vector<256x32xbf16>
    %c0_81 = arith.constant 0 : index
    %c0_82 = arith.constant 0 : index
    %267 = vector.load %arg16[%c0_81, %c0_82] : memref<32x64xbf16, #tpu.memory_space<vmem>>, vector<32x64xbf16>
    %cst_83 = arith.constant dense<0.000000e+00> : vector<256x64xf32>
    %268 = tpu.matmul %266, %267, %cst_83 {dimension_numbers = #tpu.dot_dimension_numbers<[1], [0], [0], [1], [0, 0, 1, 1], [], []>} : vector<256x32xbf16>, vector<32x64xbf16>, vector<256x64xf32> -> vector<256x64xf32>
    %c0_84 = arith.constant 0 : index
    %c0_85 = arith.constant 0 : index
    %269 = vector.load %arg17[%c0_84, %c0_85] : memref<1x64xf32, #tpu.memory_space<vmem>>, vector<1x64xf32>
    %270 = vector.broadcast %269 : vector<1x64xf32> to vector<256x64xf32>
    %271 = arith.addf %268, %270 : vector<256x64xf32>
    %cst_86 = arith.constant 0.000000e+00 : f32
    %272 = vector.broadcast %cst_86 : f32 to vector<256x64xf32>
    %273 = arith.maximumf %271, %272 : vector<256x64xf32>
    %274 = arith.truncf %273 : vector<256x64xf32> to vector<256x64xbf16>
    %c0_87 = arith.constant 0 : index
    %c0_88 = arith.constant 0 : index
    %275 = vector.load %arg18[%c0_87, %c0_88] : memref<64x32xbf16, #tpu.memory_space<vmem>>, vector<64x32xbf16>
    %cst_89 = arith.constant dense<0.000000e+00> : vector<256x32xf32>
    %276 = tpu.matmul %274, %275, %cst_89 {dimension_numbers = #tpu.dot_dimension_numbers<[1], [0], [0], [1], [0, 0, 1, 1], [], []>} : vector<256x64xbf16>, vector<64x32xbf16>, vector<256x32xf32> -> vector<256x32xf32>
    %c0_90 = arith.constant 0 : index
    %c0_91 = arith.constant 0 : index
    %277 = vector.load %arg19[%c0_90, %c0_91] : memref<1x32xf32, #tpu.memory_space<vmem>>, vector<1x32xf32>
    %278 = vector.broadcast %277 : vector<1x32xf32> to vector<256x32xf32>
    %279 = arith.addf %276, %278 : vector<256x32xf32>
    %280 = arith.addf %265, %279 : vector<256x32xf32>
    %cst_92 = arith.constant dense<0.000000e+00> : vector<256xf32>
    %281 = vector.multi_reduction <add>, %280, %cst_92 [1] : vector<256x32xf32> to vector<256xf32>
    %282 = vector.shape_cast %281 : vector<256xf32> to vector<256x1xf32>
    %cst_93 = arith.constant 3.200000e+01 : f32
    %283 = vector.broadcast %cst_93 : f32 to vector<256x1xf32>
    %284 = arith.divf %282, %283 : vector<256x1xf32>
    %285 = vector.broadcast %284 : vector<256x1xf32> to vector<256x32xf32>
    %286 = arith.subf %280, %285 : vector<256x32xf32>
    %287 = arith.mulf %286, %286 : vector<256x32xf32>
    %cst_94 = arith.constant dense<0.000000e+00> : vector<256xf32>
    %288 = vector.multi_reduction <add>, %287, %cst_94 [1] : vector<256x32xf32> to vector<256xf32>
    %289 = vector.shape_cast %288 : vector<256xf32> to vector<256x1xf32>
    %cst_95 = arith.constant 3.200000e+01 : f32
    %290 = vector.broadcast %cst_95 : f32 to vector<256x1xf32>
    %291 = arith.divf %289, %290 : vector<256x1xf32>
    %292 = vector.broadcast %284 : vector<256x1xf32> to vector<256x32xf32>
    %293 = arith.subf %280, %292 : vector<256x32xf32>
    %cst_96 = arith.constant 9.99999974E-6 : f32
    %294 = vector.broadcast %cst_96 : f32 to vector<256x1xf32>
    %295 = arith.addf %291, %294 : vector<256x1xf32>
    %296 = math.rsqrt %295 : vector<256x1xf32>
    %297 = vector.broadcast %296 : vector<256x1xf32> to vector<256x32xf32>
    %298 = arith.mulf %293, %297 : vector<256x32xf32>
    %c0_97 = arith.constant 0 : index
    %c0_98 = arith.constant 0 : index
    %299 = vector.load %arg20[%c0_97, %c0_98] : memref<1x32xf32, #tpu.memory_space<vmem>>, vector<1x32xf32>
    %300 = vector.broadcast %299 : vector<1x32xf32> to vector<256x32xf32>
    %301 = arith.mulf %298, %300 : vector<256x32xf32>
    %c0_99 = arith.constant 0 : index
    %c0_100 = arith.constant 0 : index
    %302 = vector.load %arg21[%c0_99, %c0_100] : memref<1x32xf32, #tpu.memory_space<vmem>>, vector<1x32xf32>
    %303 = vector.broadcast %302 : vector<1x32xf32> to vector<256x32xf32>
    %304 = arith.addf %301, %303 : vector<256x32xf32>
    %305 = tpu.transpose %304, [1, 0] : vector<256x32xf32> -> vector<32x256xf32>
    %c0_101 = arith.constant 0 : index
    %c0_102 = arith.constant 0 : index
    %c0_103 = arith.constant 0 : index
    %306 = vector.load %arg22[%c0_101, %c0_102, %c0_103] : memref<1x32x256xf32, #tpu.memory_space<vmem>>, vector<1x32x256xf32>
    %307 = vector.shape_cast %306 : vector<1x32x256xf32> to vector<32x256xf32>
    %308 = vector.shape_cast %305 : vector<32x256xf32> to vector<1x32x256xf32>
    tpu.vector_store %arg22[%c0_101, %c0_102, %c0_103], %308 {strides = array<i32>} : memref<1x32x256xf32, #tpu.memory_space<vmem>>, vector<1x32x256xf32>,
    return
  }
  func.func @transform_0(%arg0: i32) -> (i32, i32, i32) {
    %c0_i32 = arith.constant 0 : i32
    %c0_i32_0 = arith.constant 0 : i32
    %c0_i32_1 = arith.constant 0 : i32
    return %arg0, %c0_i32, %c0_i32_0 : i32, i32, i32
  }
  func.func @transform_1(%arg0: i32) -> (i32, i32, i32) {
    %c0_i32 = arith.constant 0 : i32
    %c0_i32_0 = arith.constant 0 : i32
    %c0_i32_1 = arith.constant 0 : i32
    return %arg0, %c0_i32, %c0_i32_0 : i32, i32, i32
  }
  func.func @transform_2(%arg0: i32) -> (i32, i32) {
    %c0_i32 = arith.constant 0 : i32
    %c0_i32_0 = arith.constant 0 : i32
    %c0_i32_1 = arith.constant 0 : i32
    return %c0_i32, %c0_i32_0 : i32, i32
  }
  func.func @transform_3(%arg0: i32) -> (i32, i32) {
    %c0_i32 = arith.constant 0 : i32
    %c0_i32_0 = arith.constant 0 : i32
    %c0_i32_1 = arith.constant 0 : i32
    return %c0_i32, %c0_i32_0 : i32, i32
  }
  func.func @transform_4(%arg0: i32) -> (i32, i32) {
    %c0_i32 = arith.constant 0 : i32
    %c0_i32_0 = arith.constant 0 : i32
    %c0_i32_1 = arith.constant 0 : i32
    return %c0_i32, %c0_i32_0 : i32, i32
  }
  func.func @transform_5(%arg0: i32) -> (i32, i32) {
    %c0_i32 = arith.constant 0 : i32
    %c0_i32_0 = arith.constant 0 : i32
    %c0_i32_1 = arith.constant 0 : i32
    return %c0_i32, %c0_i32_0 : i32, i32
  }
  func.func @transform_6(%arg0: i32) -> (i32, i32) {
    %c0_i32 = arith.constant 0 : i32
    %c0_i32_0 = arith.constant 0 : i32
    %c0_i32_1 = arith.constant 0 : i32
    return %c0_i32, %c0_i32_0 : i32, i32
  }
  func.func @transform_7(%arg0: i32) -> (i32, i32) {
    %c0_i32 = arith.constant 0 : i32
    %c0_i32_0 = arith.constant 0 : i32
    %c0_i32_1 = arith.constant 0 : i32
    return %c0_i32, %c0_i32_0 : i32, i32
  }
  func.func @transform_8(%arg0: i32) -> (i32, i32) {
    %c0_i32 = arith.constant 0 : i32
    %c0_i32_0 = arith.constant 0 : i32
    %c0_i32_1 = arith.constant 0 : i32
    return %c0_i32, %c0_i32_0 : i32, i32
  }
  func.func @transform_9(%arg0: i32) -> (i32, i32) {
    %c0_i32 = arith.constant 0 : i32
    %c0_i32_0 = arith.constant 0 : i32
    %c0_i32_1 = arith.constant 0 : i32
    return %c0_i32, %c0_i32_0 : i32, i32
  }
  func.func @transform_10(%arg0: i32) -> (i32, i32) {
    %c0_i32 = arith.constant 0 : i32
    %c0_i32_0 = arith.constant 0 : i32
    %c0_i32_1 = arith.constant 0 : i32
    return %c0_i32, %c0_i32_0 : i32, i32
  }
  func.func @transform_11(%arg0: i32) -> (i32, i32) {
    %c0_i32 = arith.constant 0 : i32
    %c0_i32_0 = arith.constant 0 : i32
    %c0_i32_1 = arith.constant 0 : i32
    return %c0_i32, %c0_i32_0 : i32, i32
  }
  func.func @transform_12(%arg0: i32) -> (i32, i32) {
    %c0_i32 = arith.constant 0 : i32
    %c0_i32_0 = arith.constant 0 : i32
    %c0_i32_1 = arith.constant 0 : i32
    return %c0_i32, %c0_i32_0 : i32, i32
  }
  func.func @transform_13(%arg0: i32) -> (i32, i32) {
    %c0_i32 = arith.constant 0 : i32
    %c0_i32_0 = arith.constant 0 : i32
    %c0_i32_1 = arith.constant 0 : i32
    return %c0_i32, %c0_i32_0 : i32, i32
  }
  func.func @transform_14(%arg0: i32) -> (i32, i32) {
    %c0_i32 = arith.constant 0 : i32
    %c0_i32_0 = arith.constant 0 : i32
    %c0_i32_1 = arith.constant 0 : i32
    return %c0_i32, %c0_i32_0 : i32, i32
  }
  func.func @transform_15(%arg0: i32) -> (i32, i32) {
    %c0_i32 = arith.constant 0 : i32
    %c0_i32_0 = arith.constant 0 : i32
    %c0_i32_1 = arith.constant 0 : i32
    return %c0_i32, %c0_i32_0 : i32, i32
  }
  func.func @transform_16(%arg0: i32) -> (i32, i32) {
    %c0_i32 = arith.constant 0 : i32
    %c0_i32_0 = arith.constant 0 : i32
    %c0_i32_1 = arith.constant 0 : i32
    return %c0_i32, %c0_i32_0 : i32, i32
  }
  func.func @transform_17(%arg0: i32) -> (i32, i32) {
    %c0_i32 = arith.constant 0 : i32
    %c0_i32_0 = arith.constant 0 : i32
    %c0_i32_1 = arith.constant 0 : i32
    return %c0_i32, %c0_i32_0 : i32, i32
  }
  func.func @transform_18(%arg0: i32) -> (i32, i32) {
    %c0_i32 = arith.constant 0 : i32
    %c0_i32_0 = arith.constant 0 : i32
    %c0_i32_1 = arith.constant 0 : i32
    return %c0_i32, %c0_i32_0 : i32, i32
  }
  func.func @transform_19(%arg0: i32) -> (i32, i32) {
    %c0_i32 = arith.constant 0 : i32
    %c0_i32_0 = arith.constant 0 : i32
    %c0_i32_1 = arith.constant 0 : i32
    return %c0_i32, %c0_i32_0 : i32, i32
  }
  func.func @transform_20(%arg0: i32) -> (i32, i32) {
    %c0_i32 = arith.constant 0 : i32
    %c0_i32_0 = arith.constant 0 : i32
    %c0_i32_1 = arith.constant 0 : i32
    return %c0_i32, %c0_i32_0 : i32, i32
  }
  func.func @transform_21(%arg0: i32) -> (i32, i32, i32) {
    %c0_i32 = arith.constant 0 : i32
    %c0_i32_0 = arith.constant 0 : i32
    %c0_i32_1 = arith.constant 0 : i32
    return %arg0, %c0_i32, %c0_i32_0 : i32, i32, i32
  }
}

</mosaic_0001>

<llo_original>
// kernel: tpu_custom_call.1
$region0: #{tpu_custom_call.1}
  #allocation0 [shape = 'u32[]', space=smem, size = 0x4, offset = 0x4, fixed_abs, tag = 'smem constant byte address 0x4 - core index']
  #allocation1 [shape = 'u32[144,128]{1,0:T(1,128)}', space=vmem, size = 0x12000, scoped, tag = 'internal scratch']
  %s0 = inlined_call_operand.vmem [shape: f32[2,32,256], index: 0, kind: input, shape index: {}]
  %s1 = inlined_call_operand.vmem [shape: f32[2,256,32], index: 1, kind: input, shape index: {}]
  %s2 = inlined_call_operand.vmem [shape: f32[32,9], index: 2, kind: input, shape index: {}]
  %s3 = inlined_call_operand.vmem [shape: f32[32,1], index: 3, kind: input, shape index: {}]
  %s4 = inlined_call_operand.vmem [shape: f32[32,1], index: 4, kind: input, shape index: {}]
  %s5 = inlined_call_operand.vmem [shape: bf16[32,32], index: 5, kind: input, shape index: {}]
  %s6 = inlined_call_operand.vmem [shape: bf16[32,32], index: 6, kind: input, shape index: {}]
  %s7 = inlined_call_operand.vmem [shape: bf16[32,32], index: 7, kind: input, shape index: {}]
  %s8 = inlined_call_operand.vmem [shape: f32[1,32], index: 8, kind: input, shape index: {}]
  %s9 = inlined_call_operand.vmem [shape: f32[1,32], index: 9, kind: input, shape index: {}]
  %s10 = inlined_call_operand.vmem [shape: f32[1,32], index: 10, kind: input, shape index: {}]
  %s11 = inlined_call_operand.vmem [shape: bf16[32,32], index: 11, kind: input, shape index: {}]
  %s12 = inlined_call_operand.vmem [shape: f32[1,32], index: 12, kind: input, shape index: {}]
  %s13 = inlined_call_operand.vmem [shape: f32[1,32], index: 13, kind: input, shape index: {}]
  %s14 = inlined_call_operand.vmem [shape: f32[1,32], index: 14, kind: input, shape index: {}]
  %s15 = inlined_call_operand.vmem [shape: bf16[32,64], index: 15, kind: input, shape index: {}]
  %s16 = inlined_call_operand.vmem [shape: f32[1,64], index: 16, kind: input, shape index: {}]
  %s17 = inlined_call_operand.vmem [shape: bf16[64,32], index: 17, kind: input, shape index: {}]
  %s18 = inlined_call_operand.vmem [shape: f32[1,32], index: 18, kind: input, shape index: {}]
  %s19 = inlined_call_operand.vmem [shape: f32[1,32], index: 19, kind: input, shape index: {}]
  %s20 = inlined_call_operand.vmem [shape: f32[1,32], index: 20, kind: input, shape index: {}]
  %s21 = inlined_call_operand.hbm [shape: f32[2,32,256], index: 21, kind: output, shape index: {}]
  %s22 = sld [smem:[#allocation0]]
  $region117: #{tpu_custom_call.1} parent=0
    _
  %s24 = ssub.s32 1, %s22
  %s25 = scalar_select 0, %s24, %s22
  $region1: #{tpu_custom_call.1} parent=0
    #allocation2 [shape = 'u8[65536]{0}', space=vmem, size = 0x10000, scoped, tag = 'output window, operand 0']
    #allocation3 [shape = 's32[2]{0}', space=sflag, size = 0x8, scoped, tag = 'scoped memory for tpu_custom_call.1']
    %26 = vsyncpa [#allocation3], 0
    %s27 = scalar_lea.sflag [#allocation3], 1
    %28 = vsyncpa %s27, 0
    loop: start=0, step=1, limit=4
    $region2: #{tpu_custom_call.1} parent=1 // loop_pre_header
      _
    $region3: #{tpu_custom_call.1} parent=1 // loop_header
      %s30 = sphi 0, %s34
      %p31 = scmp.ge.s32.totalorder %s30, 4
      %s40 = sphi 0, %s42
      %s43 = sphi 0, %s40
      %s44 = sphi 0, %s43
      %s60 = sphi 0, %s44
      %s66 = sphi 0, %s68
      %s69 = sphi 0, %s66
      %s70 = sphi 0, %s69
      %s86 = sphi 0, %s70
      %s90 = sphi 0, %s90
      %s92 = sphi 0, %s90
      %s93 = sphi 0, %s92
      %s107 = sphi 0, %s93
      %s111 = sphi 0, %s111
      %s113 = sphi 0, %s111
      %s114 = sphi 0, %s113
      %s128 = sphi 0, %s114
      %s132 = sphi 0, %s132
      %s134 = sphi 0, %s132
      %s135 = sphi 0, %s134
      %s149 = sphi 0, %s135
      %s153 = sphi 0, %s153
      %s155 = sphi 0, %s153
      %s156 = sphi 0, %s155
      %s170 = sphi 0, %s156
      %s174 = sphi 0, %s174
      %s176 = sphi 0, %s174
      %s177 = sphi 0, %s176
      %s191 = sphi 0, %s177
      %s195 = sphi 0, %s195
      %s197 = sphi 0, %s195
      %s198 = sphi 0, %s197
      %s212 = sphi 0, %s198
      %s216 = sphi 0, %s216
      %s218 = sphi 0, %s216
      %s219 = sphi 0, %s218
      %s233 = sphi 0, %s219
      %s237 = sphi 0, %s237
      %s239 = sphi 0, %s237
      %s240 = sphi 0, %s239
      %s254 = sphi 0, %s240
      %s258 = sphi 0, %s258
      %s260 = sphi 0, %s258
      %s261 = sphi 0, %s260
      %s275 = sphi 0, %s261
      %s279 = sphi 0, %s279
      %s281 = sphi 0, %s279
      %s282 = sphi 0, %s281
      %s296 = sphi 0, %s282
      %s300 = sphi 0, %s300
      %s302 = sphi 0, %s300
      %s303 = sphi 0, %s302
      %s317 = sphi 0, %s303
      %s321 = sphi 0, %s321
      %s323 = sphi 0, %s321
      %s324 = sphi 0, %s323
      %s338 = sphi 0, %s324
      %s342 = sphi 0, %s342
      %s344 = sphi 0, %s342
      %s345 = sphi 0, %s344
      %s359 = sphi 0, %s345
      %s363 = sphi 0, %s363
      %s365 = sphi 0, %s363
      %s366 = sphi 0, %s365
      %s380 = sphi 0, %s366
      %s384 = sphi 0, %s384
      %s386 = sphi 0, %s384
      %s387 = sphi 0, %s386
      %s401 = sphi 0, %s387
      %s405 = sphi 0, %s405
      %s407 = sphi 0, %s405
      %s408 = sphi 0, %s407
      %s422 = sphi 0, %s408
      %s426 = sphi 0, %s426
      %s428 = sphi 0, %s426
      %s429 = sphi 0, %s428
      %s443 = sphi 0, %s429
      %s447 = sphi 0, %s447
      %s449 = sphi 0, %s447
      %s450 = sphi 0, %s449
      %s464 = sphi 0, %s450
      %s468 = sphi 0, %s468
      %s470 = sphi 0, %s468
      %s471 = sphi 0, %s470
      %s485 = sphi 0, %s471
      %s491 = sphi 0, %s493
      %s494 = sphi 0, %s491
      %s495 = sphi 0, %s494
      %s511 = sphi 0, %s495
    $region4: #{tpu_custom_call.1} parent=1 // loop_header_branch
      %33 = sbr.rel (%p31) target = $region8
    $region5: #{tpu_custom_call.1} parent=1 // loop_body
      %s35 = ssub.s32 %s30, 1
      %s36 = ssub.s32 %s30, 2
      %s37 = sadd.s32 %s30, 1
      %s38 = ssub.s32 %s30, %s37
      %p39 = scmp.eq.s32.totalorder %s38, 0
      %s41 = sadd.s32 %s40, 1
      %s42 = scalar_select %p39, %s40, %s41
      %p45 = pneg %p39
      %p46 = scmp.eq.s32.totalorder %s30, 1
      %p47 = por %p45, %p46
      %p48 = scmp.ne.s32.totalorder %s40, %s43
      %p49 = scmp.eq.s32.totalorder %s30, 0
      %p50 = por %p48, %p49
      %p51 = scmp.ne.s32.totalorder %s40, %s43
      %p52 = scmp.eq.s32.totalorder %s35, 1
      %p53 = por %p51, %p52
      %p54 = scmp.ne.s32.totalorder %s43, %s44
      %p55 = scmp.eq.s32.totalorder %s35, 0
      %p56 = por %p54, %p55
      %p57 = scmp.ne.s32.totalorder %s43, %s44
      %p58 = scmp.eq.s32.totalorder %s36, 1
      %p59 = por %p57, %p58
      %p61 = scmp.ne.s32.totalorder %s44, %s60
      %p62 = scmp.eq.s32.totalorder %s36, 0
      %p63 = por %p61, %p62
      %s64 = ssub.s32 %s30, %s37
      %p65 = scmp.eq.s32.totalorder %s64, 0
      %s67 = sadd.s32 %s66, 1
      %s68 = scalar_select %p65, %s66, %s67
      %p71 = pneg %p65
      %p72 = scmp.eq.s32.totalorder %s30, 1
      %p73 = por %p71, %p72
      %p74 = scmp.ne.s32.totalorder %s66, %s69
      %p75 = scmp.eq.s32.totalorder %s30, 0
      %p76 = por %p74, %p75
      %p77 = scmp.ne.s32.totalorder %s66, %s69
      %p78 = scmp.eq.s32.totalorder %s35, 1
      %p79 = por %p77, %p78
      %p80 = scmp.ne.s32.totalorder %s69, %s70
      %p81 = scmp.eq.s32.totalorder %s35, 0
      %p82 = por %p80, %p81
      %p83 = scmp.ne.s32.totalorder %s69, %s70
      %p84 = scmp.eq.s32.totalorder %s36, 1
      %p85 = por %p83, %p84
      %p87 = scmp.ne.s32.totalorder %s70, %s86
      %p88 = scmp.eq.s32.totalorder %s36, 0
      %p89 = por %p87, %p88
      %s91 = sadd.s32 %s90, 1
      %p94 = scmp.eq.s32.totalorder %s30, 1
      %p95 = scmp.ne.s32.totalorder %s90, %s92
      %p96 = scmp.eq.s32.totalorder %s30, 0
      %p97 = por %p95, %p96
      %p98 = scmp.ne.s32.totalorder %s90, %s92
      %p99 = scmp.eq.s32.totalorder %s35, 1
      %p100 = por %p98, %p99
      %p101 = scmp.ne.s32.totalorder %s92, %s93
      %p102 = scmp.eq.s32.totalorder %s35, 0
      %p103 = por %p101, %p102
      %p104 = scmp.ne.s32.totalorder %s92, %s93
      %p105 = scmp.eq.s32.totalorder %s36, 1
      %p106 = por %p104, %p105
      %p108 = scmp.ne.s32.totalorder %s93, %s107
      %p109 = scmp.eq.s32.totalorder %s36, 0
      %p110 = por %p108, %p109
      %s112 = sadd.s32 %s111, 1
      %p115 = scmp.eq.s32.totalorder %s30, 1
      %p116 = scmp.ne.s32.totalorder %s111, %s113
      %p117 = scmp.eq.s32.totalorder %s30, 0
      %p118 = por %p116, %p117
      %p119 = scmp.ne.s32.totalorder %s111, %s113
      %p120 = scmp.eq.s32.totalorder %s35, 1
      %p121 = por %p119, %p120
      %p122 = scmp.ne.s32.totalorder %s113, %s114
      %p123 = scmp.eq.s32.totalorder %s35, 0
      %p124 = por %p122, %p123
      %p125 = scmp.ne.s32.totalorder %s113, %s114
      %p126 = scmp.eq.s32.totalorder %s36, 1
      %p127 = por %p125, %p126
      %p129 = scmp.ne.s32.totalorder %s114, %s128
      %p130 = scmp.eq.s32.totalorder %s36, 0
      %p131 = por %p129, %p130
      %s133 = sadd.s32 %s132, 1
      %p136 = scmp.eq.s32.totalorder %s30, 1
      %p137 = scmp.ne.s32.totalorder %s132, %s134
      %p138 = scmp.eq.s32.totalorder %s30, 0
      %p139 = por %p137, %p138
      %p140 = scmp.ne.s32.totalorder %s132, %s134
      %p141 = scmp.eq.s32.totalorder %s35, 1
      %p142 = por %p140, %p141
      %p143 = scmp.ne.s32.totalorder %s134, %s135
      %p144 = scmp.eq.s32.totalorder %s35, 0
      %p145 = por %p143, %p144
      %p146 = scmp.ne.s32.totalorder %s134, %s135
      %p147 = scmp.eq.s32.totalorder %s36, 1
      %p148 = por %p146, %p147
      %p150 = scmp.ne.s32.totalorder %s135, %s149
      %p151 = scmp.eq.s32.totalorder %s36, 0
      %p152 = por %p150, %p151
      %s154 = sadd.s32 %s153, 1
      %p157 = scmp.eq.s32.totalorder %s30, 1
      %p158 = scmp.ne.s32.totalorder %s153, %s155
      %p159 = scmp.eq.s32.totalorder %s30, 0
      %p160 = por %p158, %p159
      %p161 = scmp.ne.s32.totalorder %s153, %s155
      %p162 = scmp.eq.s32.totalorder %s35, 1
      %p163 = por %p161, %p162
      %p164 = scmp.ne.s32.totalorder %s155, %s156
      %p165 = scmp.eq.s32.totalorder %s35, 0
      %p166 = por %p164, %p165
      %p167 = scmp.ne.s32.totalorder %s155, %s156
      %p168 = scmp.eq.s32.totalorder %s36, 1
      %p169 = por %p167, %p168
      %p171 = scmp.ne.s32.totalorder %s156, %s170
      %p172 = scmp.eq.s32.totalorder %s36, 0
      %p173 = por %p171, %p172
      %s175 = sadd.s32 %s174, 1
      %p178 = scmp.eq.s32.totalorder %s30, 1
      %p179 = scmp.ne.s32.totalorder %s174, %s176
      %p180 = scmp.eq.s32.totalorder %s30, 0
      %p181 = por %p179, %p180
      %p182 = scmp.ne.s32.totalorder %s174, %s176
      %p183 = scmp.eq.s32.totalorder %s35, 1
      %p184 = por %p182, %p183
      %p185 = scmp.ne.s32.totalorder %s176, %s177
      %p186 = scmp.eq.s32.totalorder %s35, 0
      %p187 = por %p185, %p186
      %p188 = scmp.ne.s32.totalorder %s176, %s177
      %p189 = scmp.eq.s32.totalorder %s36, 1
      %p190 = por %p188, %p189
      %p192 = scmp.ne.s32.totalorder %s177, %s191
      %p193 = scmp.eq.s32.totalorder %s36, 0
      %p194 = por %p192, %p193
      %s196 = sadd.s32 %s195, 1
      %p199 = scmp.eq.s32.totalorder %s30, 1
      %p200 = scmp.ne.s32.totalorder %s195, %s197
      %p201 = scmp.eq.s32.totalorder %s30, 0
      %p202 = por %p200, %p201
      %p203 = scmp.ne.s32.totalorder %s195, %s197
      %p204 = scmp.eq.s32.totalorder %s35, 1
      %p205 = por %p203, %p204
      %p206 = scmp.ne.s32.totalorder %s197, %s198
      %p207 = scmp.eq.s32.totalorder %s35, 0
      %p208 = por %p206, %p207
      %p209 = scmp.ne.s32.totalorder %s197, %s198
      %p210 = scmp.eq.s32.totalorder %s36, 1
      %p211 = por %p209, %p210
      %p213 = scmp.ne.s32.totalorder %s198, %s212
      %p214 = scmp.eq.s32.totalorder %s36, 0
      %p215 = por %p213, %p214
      %s217 = sadd.s32 %s216, 1
      %p220 = scmp.eq.s32.totalorder %s30, 1
      %p221 = scmp.ne.s32.totalorder %s216, %s218
      %p222 = scmp.eq.s32.totalorder %s30, 0
      %p223 = por %p221, %p222
      %p224 = scmp.ne.s32.totalorder %s216, %s218
      %p225 = scmp.eq.s32.totalorder %s35, 1
      %p226 = por %p224, %p225
      %p227 = scmp.ne.s32.totalorder %s218, %s219
      %p228 = scmp.eq.s32.totalorder %s35, 0
      %p229 = por %p227, %p228
      %p230 = scmp.ne.s32.totalorder %s218, %s219
      %p231 = scmp.eq.s32.totalorder %s36, 1
      %p232 = por %p230, %p231
      %p234 = scmp.ne.s32.totalorder %s219, %s233
      %p235 = scmp.eq.s32.totalorder %s36, 0
      %p236 = por %p234, %p235
      %s238 = sadd.s32 %s237, 1
      %p241 = scmp.eq.s32.totalorder %s30, 1
      %p242 = scmp.ne.s32.totalorder %s237, %s239
      %p243 = scmp.eq.s32.totalorder %s30, 0
      %p244 = por %p242, %p243
      %p245 = scmp.ne.s32.totalorder %s237, %s239
      %p246 = scmp.eq.s32.totalorder %s35, 1
      %p247 = por %p245, %p246
      %p248 = scmp.ne.s32.totalorder %s239, %s240
      %p249 = scmp.eq.s32.totalorder %s35, 0
      %p250 = por %p248, %p249
      %p251 = scmp.ne.s32.totalorder %s239, %s240
      %p252 = scmp.eq.s32.totalorder %s36, 1
      %p253 = por %p251, %p252
      %p255 = scmp.ne.s32.totalorder %s240, %s254
      %p256 = scmp.eq.s32.totalorder %s36, 0
      %p257 = por %p255, %p256
      %s259 = sadd.s32 %s258, 1
      %p262 = scmp.eq.s32.totalorder %s30, 1
      %p263 = scmp.ne.s32.totalorder %s258, %s260
      %p264 = scmp.eq.s32.totalorder %s30, 0
      %p265 = por %p263, %p264
      %p266 = scmp.ne.s32.totalorder %s258, %s260
      %p267 = scmp.eq.s32.totalorder %s35, 1
      %p268 = por %p266, %p267
      %p269 = scmp.ne.s32.totalorder %s260, %s261
      %p270 = scmp.eq.s32.totalorder %s35, 0
      %p271 = por %p269, %p270
      %p272 = scmp.ne.s32.totalorder %s260, %s261
      %p273 = scmp.eq.s32.totalorder %s36, 1
      %p274 = por %p272, %p273
      %p276 = scmp.ne.s32.totalorder %s261, %s275
      %p277 = scmp.eq.s32.totalorder %s36, 0
      %p278 = por %p276, %p277
      %s280 = sadd.s32 %s279, 1
      %p283 = scmp.eq.s32.totalorder %s30, 1
      %p284 = scmp.ne.s32.totalorder %s279, %s281
      %p285 = scmp.eq.s32.totalorder %s30, 0
      %p286 = por %p284, %p285
      %p287 = scmp.ne.s32.totalorder %s279, %s281
      %p288 = scmp.eq.s32.totalorder %s35, 1
      %p289 = por %p287, %p288
      %p290 = scmp.ne.s32.totalorder %s281, %s282
      %p291 = scmp.eq.s32.totalorder %s35, 0
      %p292 = por %p290, %p291
      %p293 = scmp.ne.s32.totalorder %s281, %s282
      %p294 = scmp.eq.s32.totalorder %s36, 1
      %p295 = por %p293, %p294
      %p297 = scmp.ne.s32.totalorder %s282, %s296
      %p298 = scmp.eq.s32.totalorder %s36, 0
      %p299 = por %p297, %p298
      %s301 = sadd.s32 %s300, 1
      %p304 = scmp.eq.s32.totalorder %s30, 1
      %p305 = scmp.ne.s32.totalorder %s300, %s302
      %p306 = scmp.eq.s32.totalorder %s30, 0
      %p307 = por %p305, %p306
      %p308 = scmp.ne.s32.totalorder %s300, %s302
      %p309 = scmp.eq.s32.totalorder %s35, 1
      %p310 = por %p308, %p309
      %p311 = scmp.ne.s32.totalorder %s302, %s303
      %p312 = scmp.eq.s32.totalorder %s35, 0
      %p313 = por %p311, %p312
      %p314 = scmp.ne.s32.totalorder %s302, %s303
      %p315 = scmp.eq.s32.totalorder %s36, 1
      %p316 = por %p314, %p315
      %p318 = scmp.ne.s32.totalorder %s303, %s317
      %p319 = scmp.eq.s32.totalorder %s36, 0
      %p320 = por %p318, %p319
      %s322 = sadd.s32 %s321, 1
      %p325 = scmp.eq.s32.totalorder %s30, 1
      %p326 = scmp.ne.s32.totalorder %s321, %s323
      %p327 = scmp.eq.s32.totalorder %s30, 0
      %p328 = por %p326, %p327
      %p329 = scmp.ne.s32.totalorder %s321, %s323
      %p330 = scmp.eq.s32.totalorder %s35, 1
      %p331 = por %p329, %p330
      %p332 = scmp.ne.s32.totalorder %s323, %s324
      %p333 = scmp.eq.s32.totalorder %s35, 0
      %p334 = por %p332, %p333
      %p335 = scmp.ne.s32.totalorder %s323, %s324
      %p336 = scmp.eq.s32.totalorder %s36, 1
      %p337 = por %p335, %p336
      %p339 = scmp.ne.s32.totalorder %s324, %s338
      %p340 = scmp.eq.s32.totalorder %s36, 0
      %p341 = por %p339, %p340
      %s343 = sadd.s32 %s342, 1
      %p346 = scmp.eq.s32.totalorder %s30, 1
      %p347 = scmp.ne.s32.totalorder %s342, %s344
      %p348 = scmp.eq.s32.totalorder %s30, 0
      %p349 = por %p347, %p348
      %p350 = scmp.ne.s32.totalorder %s342, %s344
      %p351 = scmp.eq.s32.totalorder %s35, 1
      %p352 = por %p350, %p351
      %p353 = scmp.ne.s32.totalorder %s344, %s345
      %p354 = scmp.eq.s32.totalorder %s35, 0
      %p355 = por %p353, %p354
      %p356 = scmp.ne.s32.totalorder %s344, %s345
      %p357 = scmp.eq.s32.totalorder %s36, 1
      %p358 = por %p356, %p357
      %p360 = scmp.ne.s32.totalorder %s345, %s359
      %p361 = scmp.eq.s32.totalorder %s36, 0
      %p362 = por %p360, %p361
      %s364 = sadd.s32 %s363, 1
      %p367 = scmp.eq.s32.totalorder %s30, 1
      %p368 = scmp.ne.s32.totalorder %s363, %s365
      %p369 = scmp.eq.s32.totalorder %s30, 0
      %p370 = por %p368, %p369
      %p371 = scmp.ne.s32.totalorder %s363, %s365
      %p372 = scmp.eq.s32.totalorder %s35, 1
      %p373 = por %p371, %p372
      %p374 = scmp.ne.s32.totalorder %s365, %s366
      %p375 = scmp.eq.s32.totalorder %s35, 0
      %p376 = por %p374, %p375
      %p377 = scmp.ne.s32.totalorder %s365, %s366
      %p378 = scmp.eq.s32.totalorder %s36, 1
      %p379 = por %p377, %p378
      %p381 = scmp.ne.s32.totalorder %s366, %s380
      %p382 = scmp.eq.s32.totalorder %s36, 0
      %p383 = por %p381, %p382
      %s385 = sadd.s32 %s384, 1
      %p388 = scmp.eq.s32.totalorder %s30, 1
      %p389 = scmp.ne.s32.totalorder %s384, %s386
      %p390 = scmp.eq.s32.totalorder %s30, 0
      %p391 = por %p389, %p390
      %p392 = scmp.ne.s32.totalorder %s384, %s386
      %p393 = scmp.eq.s32.totalorder %s35, 1
      %p394 = por %p392, %p393
      %p395 = scmp.ne.s32.totalorder %s386, %s387
      %p396 = scmp.eq.s32.totalorder %s35, 0
      %p397 = por %p395, %p396
      %p398 = scmp.ne.s32.totalorder %s386, %s387
      %p399 = scmp.eq.s32.totalorder %s36, 1
      %p400 = por %p398, %p399
      %p402 = scmp.ne.s32.totalorder %s387, %s401
      %p403 = scmp.eq.s32.totalorder %s36, 0
      %p404 = por %p402, %p403
      %s406 = sadd.s32 %s405, 1
      %p409 = scmp.eq.s32.totalorder %s30, 1
      %p410 = scmp.ne.s32.totalorder %s405, %s407
      %p411 = scmp.eq.s32.totalorder %s30, 0
      %p412 = por %p410, %p411
      %p413 = scmp.ne.s32.totalorder %s405, %s407
      %p414 = scmp.eq.s32.totalorder %s35, 1
      %p415 = por %p413, %p414
      %p416 = scmp.ne.s32.totalorder %s407, %s408
      %p417 = scmp.eq.s32.totalorder %s35, 0
      %p418 = por %p416, %p417
      %p419 = scmp.ne.s32.totalorder %s407, %s408
      %p420 = scmp.eq.s32.totalorder %s36, 1
      %p421 = por %p419, %p420
      %p423 = scmp.ne.s32.totalorder %s408, %s422
      %p424 = scmp.eq.s32.totalorder %s36, 0
      %p425 = por %p423, %p424
      %s427 = sadd.s32 %s426, 1
      %p430 = scmp.eq.s32.totalorder %s30, 1
      %p431 = scmp.ne.s32.totalorder %s426, %s428
      %p432 = scmp.eq.s32.totalorder %s30, 0
      %p433 = por %p431, %p432
      %p434 = scmp.ne.s32.totalorder %s426, %s428
      %p435 = scmp.eq.s32.totalorder %s35, 1
      %p436 = por %p434, %p435
      %p437 = scmp.ne.s32.totalorder %s428, %s429
      %p438 = scmp.eq.s32.totalorder %s35, 0
      %p439 = por %p437, %p438
      %p440 = scmp.ne.s32.totalorder %s428, %s429
      %p441 = scmp.eq.s32.totalorder %s36, 1
      %p442 = por %p440, %p441
      %p444 = scmp.ne.s32.totalorder %s429, %s443
      %p445 = scmp.eq.s32.totalorder %s36, 0
      %p446 = por %p444, %p445
      %s448 = sadd.s32 %s447, 1
      %p451 = scmp.eq.s32.totalorder %s30, 1
      %p452 = scmp.ne.s32.totalorder %s447, %s449
      %p453 = scmp.eq.s32.totalorder %s30, 0
      %p454 = por %p452, %p453
      %p455 = scmp.ne.s32.totalorder %s447, %s449
      %p456 = scmp.eq.s32.totalorder %s35, 1
      %p457 = por %p455, %p456
      %p458 = scmp.ne.s32.totalorder %s449, %s450
      %p459 = scmp.eq.s32.totalorder %s35, 0
      %p460 = por %p458, %p459
      %p461 = scmp.ne.s32.totalorder %s449, %s450
      %p462 = scmp.eq.s32.totalorder %s36, 1
      %p463 = por %p461, %p462
      %p465 = scmp.ne.s32.totalorder %s450, %s464
      %p466 = scmp.eq.s32.totalorder %s36, 0
      %p467 = por %p465, %p466
      %s469 = sadd.s32 %s468, 1
      %p472 = scmp.eq.s32.totalorder %s30, 1
      %p473 = scmp.ne.s32.totalorder %s468, %s470
      %p474 = scmp.eq.s32.totalorder %s30, 0
      %p475 = por %p473, %p474
      %p476 = scmp.ne.s32.totalorder %s468, %s470
      %p477 = scmp.eq.s32.totalorder %s35, 1
      %p478 = por %p476, %p477
      %p479 = scmp.ne.s32.totalorder %s470, %s471
      %p480 = scmp.eq.s32.totalorder %s35, 0
      %p481 = por %p479, %p480
      %p482 = scmp.ne.s32.totalorder %s470, %s471
      %p483 = scmp.eq.s32.totalorder %s36, 1
      %p484 = por %p482, %p483
      %p486 = scmp.ne.s32.totalorder %s471, %s485
      %p487 = scmp.eq.s32.totalorder %s36, 0
      %p488 = por %p486, %p487
      %s489 = ssub.s32 %s30, %s37
      %p490 = scmp.eq.s32.totalorder %s489, 0
      %s492 = sadd.s32 %s491, 1
      %s493 = scalar_select %p490, %s491, %s492
      %p496 = pneg %p490
      %p497 = scmp.eq.s32.totalorder %s30, 1
      %p498 = por %p496, %p497
      %p499 = scmp.ne.s32.totalorder %s491, %s494
      %p500 = scmp.eq.s32.totalorder %s30, 0
      %p501 = por %p499, %p500
      %p502 = scmp.ne.s32.totalorder %s491, %s494
      %p503 = scmp.eq.s32.totalorder %s35, 1
      %p504 = por %p502, %p503
      %p505 = scmp.ne.s32.totalorder %s494, %s495
      %p506 = scmp.eq.s32.totalorder %s35, 0
      %p507 = por %p505, %p506
      %p508 = scmp.ne.s32.totalorder %s494, %s495
      %p509 = scmp.eq.s32.totalorder %s36, 1
      %p510 = por %p508, %p509
      %p512 = scmp.ne.s32.totalorder %s495, %s511
      %p513 = scmp.eq.s32.totalorder %s36, 0
      %p514 = por %p512, %p513
      %p515 = scmp.le.s32.totalorder 1, %s30
      %p516 = scmp.lt.s32.totalorder %s30, 3
      %p517 = pnand %p515, %p516
      %p518 = pneg %p517
      // Predicated region
      $region9: #{tpu_custom_call.1} parent=5 // pred_check
        _
      $region10: #{tpu_custom_call.1} parent=5 // pred_check_branch
        %520 = sbr.rel (%p517) target = $region12
      $region11: #{tpu_custom_call.1} parent=5 // pred_region
        %s521 = ssub.s32 %s30, 1
        // Predicated region
        $region13: #{tpu_custom_call.1} parent=11 // pred_check
          %p522 = pneg %p103
        $region14: #{tpu_custom_call.1} parent=11 // pred_check_branch
          %524 = sbr.rel (%p522) target = $region16
        $region15: #{tpu_custom_call.1} parent=11 // pred_region
          _
        $region16: #{tpu_custom_call.1} parent=11 // pred_fallthru
          _
        // Predicated region
        $region17: #{tpu_custom_call.1} parent=11 // pred_check
          %p525 = pneg %p124
        $region18: #{tpu_custom_call.1} parent=11 // pred_check_branch
          %527 = sbr.rel (%p525) target = $region20
        $region19: #{tpu_custom_call.1} parent=11 // pred_region
          _
        $region20: #{tpu_custom_call.1} parent=11 // pred_fallthru
          _
        // Predicated region
        $region21: #{tpu_custom_call.1} parent=11 // pred_check
          %p528 = pneg %p145
        $region22: #{tpu_custom_call.1} parent=11 // pred_check_branch
          %530 = sbr.rel (%p528) target = $region24
        $region23: #{tpu_custom_call.1} parent=11 // pred_region
          _
        $region24: #{tpu_custom_call.1} parent=11 // pred_fallthru
          _
        // Predicated region
        $region25: #{tpu_custom_call.1} parent=11 // pred_check
          %p531 = pneg %p166
        $region26: #{tpu_custom_call.1} parent=11 // pred_check_branch
          %533 = sbr.rel (%p531) target = $region28
        $region27: #{tpu_custom_call.1} parent=11 // pred_region
          _
        $region28: #{tpu_custom_call.1} parent=11 // pred_fallthru
          _
        // Predicated region
        $region29: #{tpu_custom_call.1} parent=11 // pred_check
          %p534 = pneg %p187
        $region30: #{tpu_custom_call.1} parent=11 // pred_check_branch
          %536 = sbr.rel (%p534) target = $region32
        $region31: #{tpu_custom_call.1} parent=11 // pred_region
          _
        $region32: #{tpu_custom_call.1} parent=11 // pred_fallthru
          _
        // Predicated region
        $region33: #{tpu_custom_call.1} parent=11 // pred_check
          %p537 = pneg %p208
        $region34: #{tpu_custom_call.1} parent=11 // pred_check_branch
          %539 = sbr.rel (%p537) target = $region36
        $region35: #{tpu_custom_call.1} parent=11 // pred_region
          _
        $region36: #{tpu_custom_call.1} parent=11 // pred_fallthru
          _
        // Predicated region
        $region37: #{tpu_custom_call.1} parent=11 // pred_check
          %p540 = pneg %p229
        $region38: #{tpu_custom_call.1} parent=11 // pred_check_branch
          %542 = sbr.rel (%p540) target = $region40
        $region39: #{tpu_custom_call.1} parent=11 // pred_region
          _
        $region40: #{tpu_custom_call.1} parent=11 // pred_fallthru
          _
        // Predicated region
        $region41: #{tpu_custom_call.1} parent=11 // pred_check
          %p543 = pneg %p250
        $region42: #{tpu_custom_call.1} parent=11 // pred_check_branch
          %545 = sbr.rel (%p543) target = $region44
        $region43: #{tpu_custom_call.1} parent=11 // pred_region
          _
        $region44: #{tpu_custom_call.1} parent=11 // pred_fallthru
          _
        // Predicated region
        $region45: #{tpu_custom_call.1} parent=11 // pred_check
          %p546 = pneg %p271
        $region46: #{tpu_custom_call.1} parent=11 // pred_check_branch
          %548 = sbr.rel (%p546) target = $region48
        $region47: #{tpu_custom_call.1} parent=11 // pred_region
          _
        $region48: #{tpu_custom_call.1} parent=11 // pred_fallthru
          _
        // Predicated region
        $region49: #{tpu_custom_call.1} parent=11 // pred_check
          %p549 = pneg %p292
        $region50: #{tpu_custom_call.1} parent=11 // pred_check_branch
          %551 = sbr.rel (%p549) target = $region52
        $region51: #{tpu_custom_call.1} parent=11 // pred_region
          _
        $region52: #{tpu_custom_call.1} parent=11 // pred_fallthru
          _
        // Predicated region
        $region53: #{tpu_custom_call.1} parent=11 // pred_check
          %p552 = pneg %p313
        $region54: #{tpu_custom_call.1} parent=11 // pred_check_branch
          %554 = sbr.rel (%p552) target = $region56
        $region55: #{tpu_custom_call.1} parent=11 // pred_region
          _
        $region56: #{tpu_custom_call.1} parent=11 // pred_fallthru
          _
        // Predicated region
        $region57: #{tpu_custom_call.1} parent=11 // pred_check
          %p555 = pneg %p334
        $region58: #{tpu_custom_call.1} parent=11 // pred_check_branch
          %557 = sbr.rel (%p555) target = $region60
        $region59: #{tpu_custom_call.1} parent=11 // pred_region
          _
        $region60: #{tpu_custom_call.1} parent=11 // pred_fallthru
          _
        // Predicated region
        $region61: #{tpu_custom_call.1} parent=11 // pred_check
          %p558 = pneg %p355
        $region62: #{tpu_custom_call.1} parent=11 // pred_check_branch
          %560 = sbr.rel (%p558) target = $region64
        $region63: #{tpu_custom_call.1} parent=11 // pred_region
          _
        $region64: #{tpu_custom_call.1} parent=11 // pred_fallthru
          _
        // Predicated region
        $region65: #{tpu_custom_call.1} parent=11 // pred_check
          %p561 = pneg %p376
        $region66: #{tpu_custom_call.1} parent=11 // pred_check_branch
          %563 = sbr.rel (%p561) target = $region68
        $region67: #{tpu_custom_call.1} parent=11 // pred_region
          _
        $region68: #{tpu_custom_call.1} parent=11 // pred_fallthru
          _
        // Predicated region
        $region69: #{tpu_custom_call.1} parent=11 // pred_check
          %p564 = pneg %p397
        $region70: #{tpu_custom_call.1} parent=11 // pred_check_branch
          %566 = sbr.rel (%p564) target = $region72
        $region71: #{tpu_custom_call.1} parent=11 // pred_region
          _
        $region72: #{tpu_custom_call.1} parent=11 // pred_fallthru
          _
        // Predicated region
        $region73: #{tpu_custom_call.1} parent=11 // pred_check
          %p567 = pneg %p418
        $region74: #{tpu_custom_call.1} parent=11 // pred_check_branch
          %569 = sbr.rel (%p567) target = $region76
        $region75: #{tpu_custom_call.1} parent=11 // pred_region
          _
        $region76: #{tpu_custom_call.1} parent=11 // pred_fallthru
          _
        // Predicated region
        $region77: #{tpu_custom_call.1} parent=11 // pred_check
          %p570 = pneg %p439
        $region78: #{tpu_custom_call.1} parent=11 // pred_check_branch
          %572 = sbr.rel (%p570) target = $region80
        $region79: #{tpu_custom_call.1} parent=11 // pred_region
          _
        $region80: #{tpu_custom_call.1} parent=11 // pred_fallthru
          _
        // Predicated region
        $region81: #{tpu_custom_call.1} parent=11 // pred_check
          %p573 = pneg %p460
        $region82: #{tpu_custom_call.1} parent=11 // pred_check_branch
          %575 = sbr.rel (%p573) target = $region84
        $region83: #{tpu_custom_call.1} parent=11 // pred_region
          _
        $region84: #{tpu_custom_call.1} parent=11 // pred_fallthru
          _
        // Predicated region
        $region85: #{tpu_custom_call.1} parent=11 // pred_check
          %p576 = pneg %p481
        $region86: #{tpu_custom_call.1} parent=11 // pred_check_branch
          %578 = sbr.rel (%p576) target = $region88
        $region87: #{tpu_custom_call.1} parent=11 // pred_region
          _
        $region88: #{tpu_custom_call.1} parent=11 // pred_fallthru
          _
      $region12: #{tpu_custom_call.1} parent=5 // pred_fallthru
        _
      %p579 = scmp.lt.s32.totalorder %s30, 2
      // Predicated region
      $region89: #{tpu_custom_call.1} parent=5 // pred_check
        %p580 = pneg %p579
      $region90: #{tpu_custom_call.1} parent=5 // pred_check_branch
        %582 = sbr.rel (%p580) target = $region92
      $region91: #{tpu_custom_call.1} parent=5 // pred_region
        // Predicated region
        $region93: #{tpu_custom_call.1} parent=91 // pred_check
          %p583 = pneg %p50
        $region94: #{tpu_custom_call.1} parent=91 // pred_check_branch
          %585 = sbr.rel (%p583) target = $region96
        $region95: #{tpu_custom_call.1} parent=91 // pred_region
          %p586 = scmp.lt.s32.totalorder %s30, 1
          %s587 = scalar_select %p586, %s30, 1
          %s588 = smul.addr %s587, 8
          %s589 = smul.addr %s588, 8
          %s590 = scalar_lea.vmem %s0, %s589
        $region96: #{tpu_custom_call.1} parent=91 // pred_fallthru
          _
        // Predicated region
        $region97: #{tpu_custom_call.1} parent=91 // pred_check
          %p591 = pneg %p76
        $region98: #{tpu_custom_call.1} parent=91 // pred_check_branch
          %593 = sbr.rel (%p591) target = $region100
        $region99: #{tpu_custom_call.1} parent=91 // pred_region
          %p594 = scmp.lt.s32.totalorder %s30, 1
          %s595 = scalar_select %p594, %s30, 1
          %s596 = smul.addr %s595, 32
          %s597 = smul.addr %s596, 8
          %s598 = scalar_lea.vmem %s1, %s597
        $region100: #{tpu_custom_call.1} parent=91 // pred_fallthru
          _
      $region92: #{tpu_custom_call.1} parent=5 // pred_fallthru
        _
      %p599 = scmp.le.s32.totalorder 1, %s30
      %p600 = scmp.lt.s32.totalorder %s30, 3
      %p601 = pnand %p599, %p600
      %p602 = pneg %p601
      // Predicated region
      $region101: #{tpu_custom_call.1} parent=5 // pred_check
        _
      $region102: #{tpu_custom_call.1} parent=5 // pred_check_branch
        %604 = sbr.rel (%p601) target = $region104
      $region103: #{tpu_custom_call.1} parent=5 // pred_region
        %s605 = ssub.s32 %s30, 1
        %p606 = scmp.lt.s32.totalorder %s35, 1
        %s607 = scalar_select %p606, %s35, 1
        %s608 = smul.addr %s607, 8
        %s609 = smul.addr %s608, 8
        %s610 = scalar_lea.vmem %s0, %s609
        %p611 = pneg %p56
        %p612 = pneg %p53
        %p613 = scmp.lt.s32.totalorder %s35, 1
        %s614 = scalar_select %p613, %s35, 1
        %s615 = smul.addr %s614, 32
        %s616 = smul.addr %s615, 8
        %s617 = scalar_lea.vmem %s1, %s616
        %p618 = pneg %p82
        %p619 = pneg %p79
        %p620 = pneg %p103
        %p621 = pneg %p100
        %p622 = pneg %p124
        %p623 = pneg %p121
        %p624 = pneg %p145
        %p625 = pneg %p142
        %p626 = pneg %p166
        %p627 = pneg %p163
        %p628 = pneg %p187
        %p629 = pneg %p184
        %p630 = pneg %p208
        %p631 = pneg %p205
        %p632 = pneg %p229
        %p633 = pneg %p226
        %p634 = pneg %p250
        %p635 = pneg %p247
        %p636 = pneg %p271
        %p637 = pneg %p268
        %p638 = pneg %p292
        %p639 = pneg %p289
        %p640 = pneg %p313
        %p641 = pneg %p310
        %p642 = pneg %p334
        %p643 = pneg %p331
        %p644 = pneg %p355
        %p645 = pneg %p352
        %p646 = pneg %p376
        %p647 = pneg %p373
        %p648 = pneg %p397
        %p649 = pneg %p394
        %p650 = pneg %p418
        %p651 = pneg %p415
        %p652 = pneg %p439
        %p653 = pneg %p436
        %p654 = pneg %p460
        %p655 = pneg %p457
        %p656 = pneg %p481
        %p657 = pneg %p478
        %p658 = pneg %p507
        %p659 = pneg %p504
        %s660 = sand.u32 %s494, 1
        %s661 = scalar_lea.sflag [#allocation3], %s660
        %s662 = sand.u32 %s494, 1
        %s663 = smul.addr %s662, 64
        %s664 = scalar_lea.vmem [#allocation2], %s663
        %p665 = scmp.lt.s32.totalorder %s35, 1
        %s666 = scalar_select %p665, %s35, 1
        %s667 = smul.addr %s666, 8
        %s668 = smul.addr %s667, 8
        %s669 = scalar_lea.vmem %s0, %s668
        %p670 = scmp.lt.s32.totalorder %s35, 1
        %s671 = scalar_select %p670, %s35, 1
        %s672 = smul.addr %s671, 32
        %s673 = smul.addr %s672, 8
        %s674 = scalar_lea.vmem %s1, %s673
        %v676 = vld [vmem:[%s669] sm:$0xff]
        %v677 = vld [vmem:[%s669 + $0x8] sm:$0xff]
        %v678 = vld [vmem:[%s669 + $0x10] sm:$0xff]
        %v679 = vld [vmem:[%s669 + $0x18] sm:$0xff]
        %v680 = vld [vmem:[%s669 + $0x20] sm:$0xff]
        %v681 = vld [vmem:[%s669 + $0x28] sm:$0xff]
        %v682 = vld [vmem:[%s669 + $0x30] sm:$0xff]
        %v683 = vld [vmem:[%s669 + $0x38] sm:$0xff]
        %v684 = vld [vmem:[%s2] sm:$0xff]
        %v685 = vld [vmem:[%s2 + $0x8] sm:$0xff]
        %v686 = vld [vmem:[%s2 + $0x10] sm:$0xff]
        %v687 = vld [vmem:[%s2 + $0x18] sm:$0xff]
        %v688 = vlaneseq
        %v689 = vand.u32 %v688, 127
        %v690 = vadd.s32 %v689, 128
        %v691 = vand.u32 %v689, 15
        %v692 = vand.u32 %v690, 15
        %693 = vrot.lane.b32.xlu0 %v676, 17
        %v694 = vpop.permute.xlu0 %693
        %695 = vrot.lane.b32.xlu0 %v678, 17
        %v696 = vpop.permute.xlu0 %695
        %697 = vrot.lane.b32.xlu0 %v680, 17
        %v698 = vpop.permute.xlu0 %697
        %699 = vrot.lane.b32.xlu0 %v682, 17
        %v700 = vpop.permute.xlu0 %699
        %701 = vrot.lane.b32.xlu0 %v677, 17
        %v702 = vpop.permute.xlu0 %701
        %703 = vrot.lane.b32.xlu0 %v679, 17
        %v704 = vpop.permute.xlu0 %703
        %705 = vrot.lane.b32.xlu0 %v681, 17
        %v706 = vpop.permute.xlu0 %705
        %707 = vrot.lane.b32.xlu0 %v683, 17
        %v708 = vpop.permute.xlu0 %707
        %vm709 = vcmp.lt.s32.totalorder %v689, 17
        %v710 = vsel %vm709, %v694, %v702
        %v711 = vsel %vm709, %v696, %v704
        %v712 = vsel %vm709, %v698, %v706
        %v713 = vsel %vm709, %v700, %v708
        %v714 = vsel %vm709, %v702, %v694
        %v715 = vsel %vm709, %v704, %v696
        %v716 = vsel %vm709, %v706, %v698
        %v717 = vsel %vm709, %v708, %v700
        %vm718 = vcmp.ge.s32.totalorder %v689, 16
        %vm719 = vcmp.ge.s32.totalorder %v690, 16
        %vm720 = vcmp.ge.s32.totalorder %v691, 1
        %vm721 = vcmp.ge.s32.totalorder %v692, 1
        %vm722 = vmand %vm718, %vm720
        %vm723 = vmand %vm719, %vm721
        %v724 = vsel %vm722, 1, 0
        %v725 = vsel %vm723, 1, 0
        %vm726 = vcmp.eq.s32.totalorder %v724, 1
        %vm727 = vcmp.eq.s32.totalorder %v725, 1
        %v728 = vsel %vm726, %v714, 0.0
        %v729 = vsel %vm727, %v710, 0.0
        %v730 = vsel %vm726, %v715, 0.0
        %v731 = vsel %vm727, %v711, 0.0
        %v732 = vsel %vm726, %v716, 0.0
        %v733 = vsel %vm727, %v712, 0.0
        %v734 = vsel %vm726, %v717, 0.0
        %v735 = vsel %vm727, %v713, 0.0
        %737 = vset.pattern.permute.xlu0 0
        %738 = vperm.xlu0 %737, %v684
        %v739 = vpop.permute.xlu0 %738
        %742 = vset.pattern.permute.xlu0 0
        %743 = vperm.xlu0 %742, %v685
        %v744 = vpop.permute.xlu0 %743
        %747 = vset.pattern.permute.xlu0 0
        %748 = vperm.xlu0 %747, %v686
        %v749 = vpop.permute.xlu0 %748
        %752 = vset.pattern.permute.xlu0 0
        %753 = vperm.xlu0 %752, %v687
        %v754 = vpop.permute.xlu0 %753
        %v756 = vmul.f32 %v728, %v739
        %v757 = vmul.f32 %v729, %v739
        %v758 = vmul.f32 %v730, %v744
        %v759 = vmul.f32 %v731, %v744
        %v760 = vmul.f32 %v732, %v749
        %v761 = vmul.f32 %v733, %v749
        %v762 = vmul.f32 %v734, %v754
        %v763 = vmul.f32 %v735, %v754
        %v764 = vadd.f32 %v756, 0.0
        %v765 = vadd.f32 %v757, 0.0
        %v766 = vadd.f32 %v758, 0.0
        %v767 = vadd.f32 %v759, 0.0
        %v768 = vadd.f32 %v760, 0.0
        %v769 = vadd.f32 %v761, 0.0
        %v770 = vadd.f32 %v762, 0.0
        %v771 = vadd.f32 %v763, 0.0
        %772 = vrot.lane.b32.xlu0 %v676, 16
        %v773 = vpop.permute.xlu0 %772
        %774 = vrot.lane.b32.xlu0 %v678, 16
        %v775 = vpop.permute.xlu0 %774
        %776 = vrot.lane.b32.xlu0 %v680, 16
        %v777 = vpop.permute.xlu0 %776
        %778 = vrot.lane.b32.xlu0 %v682, 16
        %v779 = vpop.permute.xlu0 %778
        %780 = vrot.lane.b32.xlu0 %v677, 16
        %v781 = vpop.permute.xlu0 %780
        %782 = vrot.lane.b32.xlu0 %v679, 16
        %v783 = vpop.permute.xlu0 %782
        %784 = vrot.lane.b32.xlu0 %v681, 16
        %v785 = vpop.permute.xlu0 %784
        %786 = vrot.lane.b32.xlu0 %v683, 16
        %v787 = vpop.permute.xlu0 %786
        %vm788 = vcmp.lt.s32.totalorder %v689, 16
        %v789 = vsel %vm788, %v773, %v781
        %v790 = vsel %vm788, %v775, %v783
        %v791 = vsel %vm788, %v777, %v785
        %v792 = vsel %vm788, %v779, %v787
        %v793 = vsel %vm788, %v781, %v773
        %v794 = vsel %vm788, %v783, %v775
        %v795 = vsel %vm788, %v785, %v777
        %v796 = vsel %vm788, %v787, %v779
        %v797 = vsel %vm718, 1, 0
        %v798 = vsel %vm719, 1, 0
        %vm799 = vcmp.eq.s32.totalorder %v797, 1
        %vm800 = vcmp.eq.s32.totalorder %v798, 1
        %v801 = vsel %vm799, %v793, 0.0
        %v802 = vsel %vm800, %v789, 0.0
        %v803 = vsel %vm799, %v794, 0.0
        %v804 = vsel %vm800, %v790, 0.0
        %v805 = vsel %vm799, %v795, 0.0
        %v806 = vsel %vm800, %v791, 0.0
        %v807 = vsel %vm799, %v796, 0.0
        %v808 = vsel %vm800, %v792, 0.0
        %809 = vset.pattern.permute.xlu0 1
        %810 = vperm.xlu0 %809, %v684
        %v811 = vpop.permute.xlu0 %810
        %813 = vset.pattern.permute.xlu0 1
        %814 = vperm.xlu0 %813, %v685
        %v815 = vpop.permute.xlu0 %814
        %817 = vset.pattern.permute.xlu0 1
        %818 = vperm.xlu0 %817, %v686
        %v819 = vpop.permute.xlu0 %818
        %821 = vset.pattern.permute.xlu0 1
        %822 = vperm.xlu0 %821, %v687
        %v823 = vpop.permute.xlu0 %822
        %v825 = vmul.f32 %v801, %v811
        %v826 = vmul.f32 %v802, %v811
        %v827 = vmul.f32 %v803, %v815
        %v828 = vmul.f32 %v804, %v815
        %v829 = vmul.f32 %v805, %v819
        %v830 = vmul.f32 %v806, %v819
        %v831 = vmul.f32 %v807, %v823
        %v832 = vmul.f32 %v808, %v823
        %v833 = vadd.f32 %v764, %v825
        %v834 = vadd.f32 %v765, %v826
        %v835 = vadd.f32 %v766, %v827
        %v836 = vadd.f32 %v767, %v828
        %v837 = vadd.f32 %v768, %v829
        %v838 = vadd.f32 %v769, %v830
        %v839 = vadd.f32 %v770, %v831
        %v840 = vadd.f32 %v771, %v832
        %841 = vrot.lane.b32.xlu0 %v676, 15
        %v842 = vpop.permute.xlu0 %841
        %843 = vrot.lane.b32.xlu0 %v678, 15
        %v844 = vpop.permute.xlu0 %843
        %845 = vrot.lane.b32.xlu0 %v680, 15
        %v846 = vpop.permute.xlu0 %845
        %847 = vrot.lane.b32.xlu0 %v682, 15
        %v848 = vpop.permute.xlu0 %847
        %849 = vrot.lane.b32.xlu0 %v677, 15
        %v850 = vpop.permute.xlu0 %849
        %851 = vrot.lane.b32.xlu0 %v679, 15
        %v852 = vpop.permute.xlu0 %851
        %853 = vrot.lane.b32.xlu0 %v681, 15
        %v854 = vpop.permute.xlu0 %853
        %855 = vrot.lane.b32.xlu0 %v683, 15
        %v856 = vpop.permute.xlu0 %855
        %vm857 = vcmp.lt.s32.totalorder %v689, 15
        %v858 = vsel %vm857, %v842, %v850
        %v859 = vsel %vm857, %v844, %v852
        %v860 = vsel %vm857, %v846, %v854
        %v861 = vsel %vm857, %v848, %v856
        %v862 = vsel %vm857, %v850, %v842
        %v863 = vsel %vm857, %v852, %v844
        %v864 = vsel %vm857, %v854, %v846
        %v865 = vsel %vm857, %v856, %v848
        %vm866 = vcmp.le.s32.totalorder %v691, 14
        %vm867 = vcmp.le.s32.totalorder %v692, 14
        %vm868 = vmand %vm718, %vm866
        %vm869 = vmand %vm719, %vm867
        %v870 = vsel %vm868, 1, 0
        %v871 = vsel %vm869, 1, 0
        %vm872 = vcmp.eq.s32.totalorder %v870, 1
        %vm873 = vcmp.eq.s32.totalorder %v871, 1
        %v874 = vsel %vm872, %v862, 0.0
        %v875 = vsel %vm873, %v858, 0.0
        %v876 = vsel %vm872, %v863, 0.0
        %v877 = vsel %vm873, %v859, 0.0
        %v878 = vsel %vm872, %v864, 0.0
        %v879 = vsel %vm873, %v860, 0.0
        %v880 = vsel %vm872, %v865, 0.0
        %v881 = vsel %vm873, %v861, 0.0
        %882 = vset.pattern.permute.xlu0 2
        %883 = vperm.xlu0 %882, %v684
        %v884 = vpop.permute.xlu0 %883
        %886 = vset.pattern.permute.xlu0 2
        %887 = vperm.xlu0 %886, %v685
        %v888 = vpop.permute.xlu0 %887
        %890 = vset.pattern.permute.xlu0 2
        %891 = vperm.xlu0 %890, %v686
        %v892 = vpop.permute.xlu0 %891
        %894 = vset.pattern.permute.xlu0 2
        %895 = vperm.xlu0 %894, %v687
        %v896 = vpop.permute.xlu0 %895
        %v898 = vmul.f32 %v874, %v884
        %v899 = vmul.f32 %v875, %v884
        %v900 = vmul.f32 %v876, %v888
        %v901 = vmul.f32 %v877, %v888
        %v902 = vmul.f32 %v878, %v892
        %v903 = vmul.f32 %v879, %v892
        %v904 = vmul.f32 %v880, %v896
        %v905 = vmul.f32 %v881, %v896
        %v906 = vadd.f32 %v833, %v898
        %v907 = vadd.f32 %v834, %v899
        %v908 = vadd.f32 %v835, %v900
        %v909 = vadd.f32 %v836, %v901
        %v910 = vadd.f32 %v837, %v902
        %v911 = vadd.f32 %v838, %v903
        %v912 = vadd.f32 %v839, %v904
        %v913 = vadd.f32 %v840, %v905
        %914 = vrot.lane.b32.xlu0 %v676, 1
        %v915 = vpop.permute.xlu0 %914
        %916 = vrot.lane.b32.xlu0 %v678, 1
        %v917 = vpop.permute.xlu0 %916
        %918 = vrot.lane.b32.xlu0 %v680, 1
        %v919 = vpop.permute.xlu0 %918
        %920 = vrot.lane.b32.xlu0 %v682, 1
        %v921 = vpop.permute.xlu0 %920
        %922 = vrot.lane.b32.xlu0 %v677, 1
        %v923 = vpop.permute.xlu0 %922
        %924 = vrot.lane.b32.xlu0 %v679, 1
        %v925 = vpop.permute.xlu0 %924
        %926 = vrot.lane.b32.xlu0 %v681, 1
        %v927 = vpop.permute.xlu0 %926
        %928 = vrot.lane.b32.xlu0 %v683, 1
        %v929 = vpop.permute.xlu0 %928
        %vm930 = vcmp.lt.s32.totalorder %v689, 1
        %v931 = vsel %vm930, %v915, %v923
        %v932 = vsel %vm930, %v917, %v925
        %v933 = vsel %vm930, %v919, %v927
        %v934 = vsel %vm930, %v921, %v929
        %v935 = vsel %vm930, %v923, %v915
        %v936 = vsel %vm930, %v925, %v917
        %v937 = vsel %vm930, %v927, %v919
        %v938 = vsel %vm930, %v929, %v921
        %v939 = vsel %vm720, 1, 0
        %v940 = vsel %vm721, 1, 0
        %vm941 = vcmp.eq.s32.totalorder %v939, 1
        %vm942 = vcmp.eq.s32.totalorder %v940, 1
        %v943 = vsel %vm941, %v935, 0.0
        %v944 = vsel %vm942, %v931, 0.0
        %v945 = vsel %vm941, %v936, 0.0
        %v946 = vsel %vm942, %v932, 0.0
        %v947 = vsel %vm941, %v937, 0.0
        %v948 = vsel %vm942, %v933, 0.0
        %v949 = vsel %vm941, %v938, 0.0
        %v950 = vsel %vm942, %v934, 0.0
        %951 = vset.pattern.permute.xlu0 3
        %952 = vperm.xlu0 %951, %v684
        %v953 = vpop.permute.xlu0 %952
        %955 = vset.pattern.permute.xlu0 3
        %956 = vperm.xlu0 %955, %v685
        %v957 = vpop.permute.xlu0 %956
        %959 = vset.pattern.permute.xlu0 3
        %960 = vperm.xlu0 %959, %v686
        %v961 = vpop.permute.xlu0 %960
        %963 = vset.pattern.permute.xlu0 3
        %964 = vperm.xlu0 %963, %v687
        %v965 = vpop.permute.xlu0 %964
        %v967 = vmul.f32 %v943, %v953
        %v968 = vmul.f32 %v944, %v953
        %v969 = vmul.f32 %v945, %v957
        %v970 = vmul.f32 %v946, %v957
        %v971 = vmul.f32 %v947, %v961
        %v972 = vmul.f32 %v948, %v961
        %v973 = vmul.f32 %v949, %v965
        %v974 = vmul.f32 %v950, %v965
        %v975 = vadd.f32 %v906, %v967
        %v976 = vadd.f32 %v907, %v968
        %v977 = vadd.f32 %v908, %v969
        %v978 = vadd.f32 %v909, %v970
        %v979 = vadd.f32 %v910, %v971
        %v980 = vadd.f32 %v911, %v972
        %v981 = vadd.f32 %v912, %v973
        %v982 = vadd.f32 %v913, %v974
        %983 = vset.pattern.permute.xlu0 4
        %984 = vperm.xlu0 %983, %v684
        %v985 = vpop.permute.xlu0 %984
        %987 = vset.pattern.permute.xlu0 4
        %988 = vperm.xlu0 %987, %v685
        %v989 = vpop.permute.xlu0 %988
        %991 = vset.pattern.permute.xlu0 4
        %992 = vperm.xlu0 %991, %v686
        %v993 = vpop.permute.xlu0 %992
        %995 = vset.pattern.permute.xlu0 4
        %996 = vperm.xlu0 %995, %v687
        %v997 = vpop.permute.xlu0 %996
        %v999 = vmul.f32 %v676, %v985
        %v1000 = vmul.f32 %v677, %v985
        %v1001 = vmul.f32 %v678, %v989
        %v1002 = vmul.f32 %v679, %v989
        %v1003 = vmul.f32 %v680, %v993
        %v1004 = vmul.f32 %v681, %v993
        %v1005 = vmul.f32 %v682, %v997
        %v1006 = vmul.f32 %v683, %v997
        %v1007 = vadd.f32 %v975, %v999
        %v1008 = vadd.f32 %v976, %v1000
        %v1009 = vadd.f32 %v977, %v1001
        %v1010 = vadd.f32 %v978, %v1002
        %v1011 = vadd.f32 %v979, %v1003
        %v1012 = vadd.f32 %v980, %v1004
        %v1013 = vadd.f32 %v981, %v1005
        %v1014 = vadd.f32 %v982, %v1006
        %1015 = vrot.lane.b32.xlu0 %v676, 127
        %v1016 = vpop.permute.xlu0 %1015
        %1017 = vrot.lane.b32.xlu0 %v678, 127
        %v1018 = vpop.permute.xlu0 %1017
        %1019 = vrot.lane.b32.xlu0 %v680, 127
        %v1020 = vpop.permute.xlu0 %1019
        %1021 = vrot.lane.b32.xlu0 %v682, 127
        %v1022 = vpop.permute.xlu0 %1021
        %1023 = vrot.lane.b32.xlu0 %v677, 127
        %v1024 = vpop.permute.xlu0 %1023
        %1025 = vrot.lane.b32.xlu0 %v679, 127
        %v1026 = vpop.permute.xlu0 %1025
        %1027 = vrot.lane.b32.xlu0 %v681, 127
        %v1028 = vpop.permute.xlu0 %1027
        %1029 = vrot.lane.b32.xlu0 %v683, 127
        %v1030 = vpop.permute.xlu0 %1029
        %vm1031 = vcmp.lt.s32.totalorder %v689, 127
        %v1032 = vsel %vm1031, %v1016, %v1024
        %v1033 = vsel %vm1031, %v1018, %v1026
        %v1034 = vsel %vm1031, %v1020, %v1028
        %v1035 = vsel %vm1031, %v1022, %v1030
        %v1036 = vsel %vm1031, %v1024, %v1016
        %v1037 = vsel %vm1031, %v1026, %v1018
        %v1038 = vsel %vm1031, %v1028, %v1020
        %v1039 = vsel %vm1031, %v1030, %v1022
        %v1040 = vsel %vm866, 1, 0
        %v1041 = vsel %vm867, 1, 0
        %vm1042 = vcmp.eq.s32.totalorder %v1040, 1
        %vm1043 = vcmp.eq.s32.totalorder %v1041, 1
        %v1044 = vsel %vm1042, %v1032, 0.0
        %v1045 = vsel %vm1043, %v1036, 0.0
        %v1046 = vsel %vm1042, %v1033, 0.0
        %v1047 = vsel %vm1043, %v1037, 0.0
        %v1048 = vsel %vm1042, %v1034, 0.0
        %v1049 = vsel %vm1043, %v1038, 0.0
        %v1050 = vsel %vm1042, %v1035, 0.0
        %v1051 = vsel %vm1043, %v1039, 0.0
        %1052 = vset.pattern.permute.xlu0 5
        %1053 = vperm.xlu0 %1052, %v684
        %v1054 = vpop.permute.xlu0 %1053
        %1056 = vset.pattern.permute.xlu0 5
        %1057 = vperm.xlu0 %1056, %v685
        %v1058 = vpop.permute.xlu0 %1057
        %1060 = vset.pattern.permute.xlu0 5
        %1061 = vperm.xlu0 %1060, %v686
        %v1062 = vpop.permute.xlu0 %1061
        %1064 = vset.pattern.permute.xlu0 5
        %1065 = vperm.xlu0 %1064, %v687
        %v1066 = vpop.permute.xlu0 %1065
        %v1068 = vmul.f32 %v1044, %v1054
        %v1069 = vmul.f32 %v1045, %v1054
        %v1070 = vmul.f32 %v1046, %v1058
        %v1071 = vmul.f32 %v1047, %v1058
        %v1072 = vmul.f32 %v1048, %v1062
        %v1073 = vmul.f32 %v1049, %v1062
        %v1074 = vmul.f32 %v1050, %v1066
        %v1075 = vmul.f32 %v1051, %v1066
        %v1076 = vadd.f32 %v1007, %v1068
        %v1077 = vadd.f32 %v1008, %v1069
        %v1078 = vadd.f32 %v1009, %v1070
        %v1079 = vadd.f32 %v1010, %v1071
        %v1080 = vadd.f32 %v1011, %v1072
        %v1081 = vadd.f32 %v1012, %v1073
        %v1082 = vadd.f32 %v1013, %v1074
        %v1083 = vadd.f32 %v1014, %v1075
        %1084 = vrot.lane.b32.xlu0 %v676, 113
        %v1085 = vpop.permute.xlu0 %1084
        %1086 = vrot.lane.b32.xlu0 %v678, 113
        %v1087 = vpop.permute.xlu0 %1086
        %1088 = vrot.lane.b32.xlu0 %v680, 113
        %v1089 = vpop.permute.xlu0 %1088
        %1090 = vrot.lane.b32.xlu0 %v682, 113
        %v1091 = vpop.permute.xlu0 %1090
        %1092 = vrot.lane.b32.xlu0 %v677, 113
        %v1093 = vpop.permute.xlu0 %1092
        %1094 = vrot.lane.b32.xlu0 %v679, 113
        %v1095 = vpop.permute.xlu0 %1094
        %1096 = vrot.lane.b32.xlu0 %v681, 113
        %v1097 = vpop.permute.xlu0 %1096
        %1098 = vrot.lane.b32.xlu0 %v683, 113
        %v1099 = vpop.permute.xlu0 %1098
        %vm1100 = vcmp.lt.s32.totalorder %v689, 113
        %v1101 = vsel %vm1100, %v1085, %v1093
        %v1102 = vsel %vm1100, %v1087, %v1095
        %v1103 = vsel %vm1100, %v1089, %v1097
        %v1104 = vsel %vm1100, %v1091, %v1099
        %v1105 = vsel %vm1100, %v1093, %v1085
        %v1106 = vsel %vm1100, %v1095, %v1087
        %v1107 = vsel %vm1100, %v1097, %v1089
        %v1108 = vsel %vm1100, %v1099, %v1091
        %vm1109 = vcmp.lt.s32.totalorder %v689, 240
        %vm1110 = vcmp.lt.s32.totalorder %v690, 240
        %vm1111 = vmand %vm1109, %vm720
        %vm1112 = vmand %vm1110, %vm721
        %v1113 = vsel %vm1111, 1, 0
        %v1114 = vsel %vm1112, 1, 0
        %vm1115 = vcmp.eq.s32.totalorder %v1113, 1
        %vm1116 = vcmp.eq.s32.totalorder %v1114, 1
        %v1117 = vsel %vm1115, %v1101, 0.0
        %v1118 = vsel %vm1116, %v1105, 0.0
        %v1119 = vsel %vm1115, %v1102, 0.0
        %v1120 = vsel %vm1116, %v1106, 0.0
        %v1121 = vsel %vm1115, %v1103, 0.0
        %v1122 = vsel %vm1116, %v1107, 0.0
        %v1123 = vsel %vm1115, %v1104, 0.0
        %v1124 = vsel %vm1116, %v1108, 0.0
        %1125 = vset.pattern.permute.xlu0 6
        %1126 = vperm.xlu0 %1125, %v684
        %v1127 = vpop.permute.xlu0 %1126
        %1129 = vset.pattern.permute.xlu0 6
        %1130 = vperm.xlu0 %1129, %v685
        %v1131 = vpop.permute.xlu0 %1130
        %1133 = vset.pattern.permute.xlu0 6
        %1134 = vperm.xlu0 %1133, %v686
        %v1135 = vpop.permute.xlu0 %1134
        %1137 = vset.pattern.permute.xlu0 6
        %1138 = vperm.xlu0 %1137, %v687
        %v1139 = vpop.permute.xlu0 %1138
        %v1141 = vmul.f32 %v1117, %v1127
        %v1142 = vmul.f32 %v1118, %v1127
        %v1143 = vmul.f32 %v1119, %v1131
        %v1144 = vmul.f32 %v1120, %v1131
        %v1145 = vmul.f32 %v1121, %v1135
        %v1146 = vmul.f32 %v1122, %v1135
        %v1147 = vmul.f32 %v1123, %v1139
        %v1148 = vmul.f32 %v1124, %v1139
        %v1149 = vadd.f32 %v1076, %v1141
        %v1150 = vadd.f32 %v1077, %v1142
        %v1151 = vadd.f32 %v1078, %v1143
        %v1152 = vadd.f32 %v1079, %v1144
        %v1153 = vadd.f32 %v1080, %v1145
        %v1154 = vadd.f32 %v1081, %v1146
        %v1155 = vadd.f32 %v1082, %v1147
        %v1156 = vadd.f32 %v1083, %v1148
        %1157 = vrot.lane.b32.xlu0 %v676, 112
        %v1158 = vpop.permute.xlu0 %1157
        %1159 = vrot.lane.b32.xlu0 %v678, 112
        %v1160 = vpop.permute.xlu0 %1159
        %1161 = vrot.lane.b32.xlu0 %v680, 112
        %v1162 = vpop.permute.xlu0 %1161
        %1163 = vrot.lane.b32.xlu0 %v682, 112
        %v1164 = vpop.permute.xlu0 %1163
        %1165 = vrot.lane.b32.xlu0 %v677, 112
        %v1166 = vpop.permute.xlu0 %1165
        %1167 = vrot.lane.b32.xlu0 %v679, 112
        %v1168 = vpop.permute.xlu0 %1167
        %1169 = vrot.lane.b32.xlu0 %v681, 112
        %v1170 = vpop.permute.xlu0 %1169
        %1171 = vrot.lane.b32.xlu0 %v683, 112
        %v1172 = vpop.permute.xlu0 %1171
        %vm1173 = vcmp.lt.s32.totalorder %v689, 112
        %v1174 = vsel %vm1173, %v1158, %v1166
        %v1175 = vsel %vm1173, %v1160, %v1168
        %v1176 = vsel %vm1173, %v1162, %v1170
        %v1177 = vsel %vm1173, %v1164, %v1172
        %v1178 = vsel %vm1173, %v1166, %v1158
        %v1179 = vsel %vm1173, %v1168, %v1160
        %v1180 = vsel %vm1173, %v1170, %v1162
        %v1181 = vsel %vm1173, %v1172, %v1164
        %v1182 = vsel %vm1109, 1, 0
        %v1183 = vsel %vm1110, 1, 0
        %vm1184 = vcmp.eq.s32.totalorder %v1182, 1
        %vm1185 = vcmp.eq.s32.totalorder %v1183, 1
        %v1186 = vsel %vm1184, %v1174, 0.0
        %v1187 = vsel %vm1185, %v1178, 0.0
        %v1188 = vsel %vm1184, %v1175, 0.0
        %v1189 = vsel %vm1185, %v1179, 0.0
        %v1190 = vsel %vm1184, %v1176, 0.0
        %v1191 = vsel %vm1185, %v1180, 0.0
        %v1192 = vsel %vm1184, %v1177, 0.0
        %v1193 = vsel %vm1185, %v1181, 0.0
        %1194 = vset.pattern.permute.xlu0 7
        %1195 = vperm.xlu0 %1194, %v684
        %v1196 = vpop.permute.xlu0 %1195
        %1198 = vset.pattern.permute.xlu0 7
        %1199 = vperm.xlu0 %1198, %v685
        %v1200 = vpop.permute.xlu0 %1199
        %1202 = vset.pattern.permute.xlu0 7
        %1203 = vperm.xlu0 %1202, %v686
        %v1204 = vpop.permute.xlu0 %1203
        %1206 = vset.pattern.permute.xlu0 7
        %1207 = vperm.xlu0 %1206, %v687
        %v1208 = vpop.permute.xlu0 %1207
        %v1210 = vmul.f32 %v1186, %v1196
        %v1211 = vmul.f32 %v1187, %v1196
        %v1212 = vmul.f32 %v1188, %v1200
        %v1213 = vmul.f32 %v1189, %v1200
        %v1214 = vmul.f32 %v1190, %v1204
        %v1215 = vmul.f32 %v1191, %v1204
        %v1216 = vmul.f32 %v1192, %v1208
        %v1217 = vmul.f32 %v1193, %v1208
        %v1218 = vadd.f32 %v1149, %v1210
        %v1219 = vadd.f32 %v1150, %v1211
        %v1220 = vadd.f32 %v1151, %v1212
        %v1221 = vadd.f32 %v1152, %v1213
        %v1222 = vadd.f32 %v1153, %v1214
        %v1223 = vadd.f32 %v1154, %v1215
        %v1224 = vadd.f32 %v1155, %v1216
        %v1225 = vadd.f32 %v1156, %v1217
        %1226 = vrot.lane.b32.xlu0 %v676, 111
        %v1227 = vpop.permute.xlu0 %1226
        %1228 = vrot.lane.b32.xlu0 %v678, 111
        %v1229 = vpop.permute.xlu0 %1228
        %1230 = vrot.lane.b32.xlu0 %v680, 111
        %v1231 = vpop.permute.xlu0 %1230
        %1232 = vrot.lane.b32.xlu0 %v682, 111
        %v1233 = vpop.permute.xlu0 %1232
        %1234 = vrot.lane.b32.xlu0 %v677, 111
        %v1235 = vpop.permute.xlu0 %1234
        %1236 = vrot.lane.b32.xlu0 %v679, 111
        %v1237 = vpop.permute.xlu0 %1236
        %1238 = vrot.lane.b32.xlu0 %v681, 111
        %v1239 = vpop.permute.xlu0 %1238
        %1240 = vrot.lane.b32.xlu0 %v683, 111
        %v1241 = vpop.permute.xlu0 %1240
        %vm1242 = vcmp.lt.s32.totalorder %v689, 111
        %v1243 = vsel %vm1242, %v1227, %v1235
        %v1244 = vsel %vm1242, %v1229, %v1237
        %v1245 = vsel %vm1242, %v1231, %v1239
        %v1246 = vsel %vm1242, %v1233, %v1241
        %v1247 = vsel %vm1242, %v1235, %v1227
        %v1248 = vsel %vm1242, %v1237, %v1229
        %v1249 = vsel %vm1242, %v1239, %v1231
        %v1250 = vsel %vm1242, %v1241, %v1233
        %vm1251 = vmand %vm1109, %vm866
        %vm1252 = vmand %vm1110, %vm867
        %v1253 = vsel %vm1251, 1, 0
        %v1254 = vsel %vm1252, 1, 0
        %vm1255 = vcmp.eq.s32.totalorder %v1253, 1
        %vm1256 = vcmp.eq.s32.totalorder %v1254, 1
        %v1257 = vsel %vm1255, %v1243, 0.0
        %v1258 = vsel %vm1256, %v1247, 0.0
        %v1259 = vsel %vm1255, %v1244, 0.0
        %v1260 = vsel %vm1256, %v1248, 0.0
        %v1261 = vsel %vm1255, %v1245, 0.0
        %v1262 = vsel %vm1256, %v1249, 0.0
        %v1263 = vsel %vm1255, %v1246, 0.0
        %v1264 = vsel %vm1256, %v1250, 0.0
        %1265 = vset.pattern.permute.xlu0 8
        %1266 = vperm.xlu0 %1265, %v684
        %v1267 = vpop.permute.xlu0 %1266
        %1269 = vset.pattern.permute.xlu0 8
        %1270 = vperm.xlu0 %1269, %v685
        %v1271 = vpop.permute.xlu0 %1270
        %1273 = vset.pattern.permute.xlu0 8
        %1274 = vperm.xlu0 %1273, %v686
        %v1275 = vpop.permute.xlu0 %1274
        %1277 = vset.pattern.permute.xlu0 8
        %1278 = vperm.xlu0 %1277, %v687
        %v1279 = vpop.permute.xlu0 %1278
        %v1281 = vmul.f32 %v1257, %v1267
        %v1282 = vmul.f32 %v1258, %v1267
        %v1283 = vmul.f32 %v1259, %v1271
        %v1284 = vmul.f32 %v1260, %v1271
        %v1285 = vmul.f32 %v1261, %v1275
        %v1286 = vmul.f32 %v1262, %v1275
        %v1287 = vmul.f32 %v1263, %v1279
        %v1288 = vmul.f32 %v1264, %v1279
        %v1289 = vadd.f32 %v1218, %v1281
        %v1290 = vadd.f32 %v1219, %v1282
        %v1291 = vadd.f32 %v1220, %v1283
        %v1292 = vadd.f32 %v1221, %v1284
        %v1293 = vadd.f32 %v1222, %v1285
        %v1294 = vadd.f32 %v1223, %v1286
        %v1295 = vadd.f32 %v1224, %v1287
        %v1296 = vadd.f32 %v1225, %v1288
        %v1297 = vld [vmem:[%s3] sm:$0xff]
        %v1298 = vld [vmem:[%s3 + $0x8] sm:$0xff]
        %v1299 = vld [vmem:[%s3 + $0x10] sm:$0xff]
        %v1300 = vld [vmem:[%s3 + $0x18] sm:$0xff]
        %1302 = vset.pattern.permute.xlu0 0
        %1303 = vperm.xlu0 %1302, %v1297
        %v1304 = vpop.permute.xlu0 %1303
        %1307 = vset.pattern.permute.xlu0 0
        %1308 = vperm.xlu0 %1307, %v1298
        %v1309 = vpop.permute.xlu0 %1308
        %1312 = vset.pattern.permute.xlu0 0
        %1313 = vperm.xlu0 %1312, %v1299
        %v1314 = vpop.permute.xlu0 %1313
        %1317 = vset.pattern.permute.xlu0 0
        %1318 = vperm.xlu0 %1317, %v1300
        %v1319 = vpop.permute.xlu0 %1318
        %v1321 = vmul.f32 %v1289, %v1304
        %v1322 = vmul.f32 %v1290, %v1304
        %v1323 = vmul.f32 %v1291, %v1309
        %v1324 = vmul.f32 %v1292, %v1309
        %v1325 = vmul.f32 %v1293, %v1314
        %v1326 = vmul.f32 %v1294, %v1314
        %v1327 = vmul.f32 %v1295, %v1319
        %v1328 = vmul.f32 %v1296, %v1319
        %v1329 = vld [vmem:[%s4] sm:$0xff]
        %v1330 = vld [vmem:[%s4 + $0x8] sm:$0xff]
        %v1331 = vld [vmem:[%s4 + $0x10] sm:$0xff]
        %v1332 = vld [vmem:[%s4 + $0x18] sm:$0xff]
        %1334 = vset.pattern.permute.xlu0 0
        %1335 = vperm.xlu0 %1334, %v1329
        %v1336 = vpop.permute.xlu0 %1335
        %1339 = vset.pattern.permute.xlu0 0
        %1340 = vperm.xlu0 %1339, %v1330
        %v1341 = vpop.permute.xlu0 %1340
        %1344 = vset.pattern.permute.xlu0 0
        %1345 = vperm.xlu0 %1344, %v1331
        %v1346 = vpop.permute.xlu0 %1345
        %1349 = vset.pattern.permute.xlu0 0
        %1350 = vperm.xlu0 %1349, %v1332
        %v1351 = vpop.permute.xlu0 %1350
        %v1353 = vadd.f32 %v1321, %v1336
        %v1354 = vadd.f32 %v1322, %v1336
        %v1355 = vadd.f32 %v1323, %v1341
        %v1356 = vadd.f32 %v1324, %v1341
        %v1357 = vadd.f32 %v1325, %v1346
        %v1358 = vadd.f32 %v1326, %v1346
        %v1359 = vadd.f32 %v1327, %v1351
        %v1360 = vadd.f32 %v1328, %v1351
        %v1361 = vmax.f32 %v1353, 0.0
        %v1362 = vmax.f32 %v1354, 0.0
        %v1363 = vmax.f32 %v1355, 0.0
        %v1364 = vmax.f32 %v1356, 0.0
        %v1365 = vmax.f32 %v1357, 0.0
        %v1366 = vmax.f32 %v1358, 0.0
        %v1367 = vmax.f32 %v1359, 0.0
        %v1368 = vmax.f32 %v1360, 0.0
        %1369 = vxpose.xlu0.b32.start [1/16] %v1361, 128
        %1370 = vxpose.xlu0.b32.cont [2/16] %v1363, 128
        %1371 = vxpose.xlu0.b32.cont [3/16] %v1365, 128
        %1372 = vxpose.xlu0.b32.cont [4/16] %v1367, 128
        %1373 = vxpose.xlu0.b32.cont [5/16] 0.0, 128
        %1374 = vxpose.xlu0.b32.cont [6/16] 0.0, 128
        %1375 = vxpose.xlu0.b32.cont [7/16] 0.0, 128
        %1376 = vxpose.xlu0.b32.cont [8/16] 0.0, 128
        %1377 = vxpose.xlu0.b32.cont [9/16] 0.0, 128
        %1378 = vxpose.xlu0.b32.cont [10/16] 0.0, 128
        %1379 = vxpose.xlu0.b32.cont [11/16] 0.0, 128
        %1380 = vxpose.xlu0.b32.cont [12/16] 0.0, 128
        %1381 = vxpose.xlu0.b32.cont [13/16] 0.0, 128
        %1382 = vxpose.xlu0.b32.cont [14/16] 0.0, 128
        %1383 = vxpose.xlu0.b32.cont [15/16] 0.0, 128
        %1384 = vxpose.xlu0.b32.end [16/16] 0.0, 128
        %v1385 = vpop.trf.xlu0
        %v1386 = vpop.trf.xlu0
        %v1387 = vpop.trf.xlu0
        %v1388 = vpop.trf.xlu0
        %v1389 = vpop.trf.xlu0
        %v1390 = vpop.trf.xlu0
        %v1391 = vpop.trf.xlu0
        %v1392 = vpop.trf.xlu0
        %v1393 = vpop.trf.xlu0
        %v1394 = vpop.trf.xlu0
        %v1395 = vpop.trf.xlu0
        %v1396 = vpop.trf.xlu0
        %v1397 = vpop.trf.xlu0
        %v1398 = vpop.trf.xlu0
        %v1399 = vpop.trf.xlu0
        %v1400 = vpop.trf.xlu0
        %1401 = vxpose.xlu0.b32.start [1/16] %v1362, 128
        %1402 = vxpose.xlu0.b32.cont [2/16] %v1364, 128
        %1403 = vxpose.xlu0.b32.cont [3/16] %v1366, 128
        %1404 = vxpose.xlu0.b32.cont [4/16] %v1368, 128
        %1405 = vxpose.xlu0.b32.cont [5/16] 0.0, 128
        %1406 = vxpose.xlu0.b32.cont [6/16] 0.0, 128
        %1407 = vxpose.xlu0.b32.cont [7/16] 0.0, 128
        %1408 = vxpose.xlu0.b32.cont [8/16] 0.0, 128
        %1409 = vxpose.xlu0.b32.cont [9/16] 0.0, 128
        %1410 = vxpose.xlu0.b32.cont [10/16] 0.0, 128
        %1411 = vxpose.xlu0.b32.cont [11/16] 0.0, 128
        %1412 = vxpose.xlu0.b32.cont [12/16] 0.0, 128
        %1413 = vxpose.xlu0.b32.cont [13/16] 0.0, 128
        %1414 = vxpose.xlu0.b32.cont [14/16] 0.0, 128
        %1415 = vxpose.xlu0.b32.cont [15/16] 0.0, 128
        %1416 = vxpose.xlu0.b32.end [16/16] 0.0, 128
        %v1417 = vpop.trf.xlu0
        %v1418 = vpop.trf.xlu0
        %v1419 = vpop.trf.xlu0
        %v1420 = vpop.trf.xlu0
        %v1421 = vpop.trf.xlu0
        %v1422 = vpop.trf.xlu0
        %v1423 = vpop.trf.xlu0
        %v1424 = vpop.trf.xlu0
        %v1425 = vpop.trf.xlu0
        %v1426 = vpop.trf.xlu0
        %v1427 = vpop.trf.xlu0
        %v1428 = vpop.trf.xlu0
        %v1429 = vpop.trf.xlu0
        %v1430 = vpop.trf.xlu0
        %v1431 = vpop.trf.xlu0
        %v1432 = vpop.trf.xlu0
        %v1433 = vld [vmem:[%s674] sm:$0xff]
        %v1434 = vld [vmem:[%s674 + $0x8] sm:$0xff]
        %v1435 = vld [vmem:[%s674 + $0x10] sm:$0xff]
        %v1436 = vld [vmem:[%s674 + $0x18] sm:$0xff]
        %v1437 = vld [vmem:[%s674 + $0x20] sm:$0xff]
        %v1438 = vld [vmem:[%s674 + $0x28] sm:$0xff]
        %v1439 = vld [vmem:[%s674 + $0x30] sm:$0xff]
        %v1440 = vld [vmem:[%s674 + $0x38] sm:$0xff]
        %v1441 = vld [vmem:[%s674 + $0x40] sm:$0xff]
        %v1442 = vld [vmem:[%s674 + $0x48] sm:$0xff]
        %v1443 = vld [vmem:[%s674 + $0x50] sm:$0xff]
        %v1444 = vld [vmem:[%s674 + $0x58] sm:$0xff]
        %v1445 = vld [vmem:[%s674 + $0x60] sm:$0xff]
        %v1446 = vld [vmem:[%s674 + $0x68] sm:$0xff]
        %v1447 = vld [vmem:[%s674 + $0x70] sm:$0xff]
        %v1448 = vld [vmem:[%s674 + $0x78] sm:$0xff]
        %v1449 = vld [vmem:[%s674 + $0x80] sm:$0xff]
        %v1450 = vld [vmem:[%s674 + $0x88] sm:$0xff]
        %v1451 = vld [vmem:[%s674 + $0x90] sm:$0xff]
        %v1452 = vld [vmem:[%s674 + $0x98] sm:$0xff]
        %v1453 = vld [vmem:[%s674 + $0xa0] sm:$0xff]
        %v1454 = vld [vmem:[%s674 + $0xa8] sm:$0xff]
        %v1455 = vld [vmem:[%s674 + $0xb0] sm:$0xff]
        %v1456 = vld [vmem:[%s674 + $0xb8] sm:$0xff]
        %v1457 = vld [vmem:[%s674 + $0xc0] sm:$0xff]
        %v1458 = vld [vmem:[%s674 + $0xc8] sm:$0xff]
        %v1459 = vld [vmem:[%s674 + $0xd0] sm:$0xff]
        %v1460 = vld [vmem:[%s674 + $0xd8] sm:$0xff]
        %v1461 = vld [vmem:[%s674 + $0xe0] sm:$0xff]
        %v1462 = vld [vmem:[%s674 + $0xe8] sm:$0xff]
        %v1463 = vld [vmem:[%s674 + $0xf0] sm:$0xff]
        %v1464 = vld [vmem:[%s674 + $0xf8] sm:$0xff]
        %v1465 = vadd.f32 %v1385, %v1433
        %v1466 = vadd.f32 %v1386, %v1434
        %v1467 = vadd.f32 %v1387, %v1435
        %v1468 = vadd.f32 %v1388, %v1436
        %v1469 = vadd.f32 %v1389, %v1437
        %v1470 = vadd.f32 %v1390, %v1438
        %v1471 = vadd.f32 %v1391, %v1439
        %v1472 = vadd.f32 %v1392, %v1440
        %v1473 = vadd.f32 %v1393, %v1441
        %v1474 = vadd.f32 %v1394, %v1442
        %v1475 = vadd.f32 %v1395, %v1443
        %v1476 = vadd.f32 %v1396, %v1444
        %v1477 = vadd.f32 %v1397, %v1445
        %v1478 = vadd.f32 %v1398, %v1446
        %v1479 = vadd.f32 %v1399, %v1447
        %v1480 = vadd.f32 %v1400, %v1448
        %v1481 = vadd.f32 %v1417, %v1449
        %v1482 = vadd.f32 %v1418, %v1450
        %v1483 = vadd.f32 %v1419, %v1451
        %v1484 = vadd.f32 %v1420, %v1452
        %v1485 = vadd.f32 %v1421, %v1453
        %v1486 = vadd.f32 %v1422, %v1454
        %v1487 = vadd.f32 %v1423, %v1455
        %v1488 = vadd.f32 %v1424, %v1456
        %v1489 = vadd.f32 %v1425, %v1457
        %v1490 = vadd.f32 %v1426, %v1458
        %v1491 = vadd.f32 %v1427, %v1459
        %v1492 = vadd.f32 %v1428, %v1460
        %v1493 = vadd.f32 %v1429, %v1461
        %v1494 = vadd.f32 %v1430, %v1462
        %v1495 = vadd.f32 %v1431, %v1463
        %v1496 = vadd.f32 %v1432, %v1464
        %v1497 = vpack.c.bf16 %v1466, %v1465
        %v1498 = vpack.c.bf16 %v1468, %v1467
        %v1499 = vpack.c.bf16 %v1470, %v1469
        %v1500 = vpack.c.bf16 %v1472, %v1471
        %v1501 = vpack.c.bf16 %v1474, %v1473
        %v1502 = vpack.c.bf16 %v1476, %v1475
        %v1503 = vpack.c.bf16 %v1478, %v1477
        %v1504 = vpack.c.bf16 %v1480, %v1479
        %v1505 = vpack.c.bf16 %v1482, %v1481
        %v1506 = vpack.c.bf16 %v1484, %v1483
        %v1507 = vpack.c.bf16 %v1486, %v1485
        %v1508 = vpack.c.bf16 %v1488, %v1487
        %v1509 = vpack.c.bf16 %v1490, %v1489
        %v1510 = vpack.c.bf16 %v1492, %v1491
        %v1511 = vpack.c.bf16 %v1494, %v1493
        %v1512 = vpack.c.bf16 %v1496, %v1495
        %v1513 = vpack.c.bf16 %v1386, %v1385
        %v1514 = vpack.c.bf16 %v1388, %v1387
        %v1515 = vpack.c.bf16 %v1390, %v1389
        %v1516 = vpack.c.bf16 %v1392, %v1391
        %v1517 = vpack.c.bf16 %v1394, %v1393
        %v1518 = vpack.c.bf16 %v1396, %v1395
        %v1519 = vpack.c.bf16 %v1398, %v1397
        %v1520 = vpack.c.bf16 %v1400, %v1399
        %v1521 = vpack.c.bf16 %v1418, %v1417
        %v1522 = vpack.c.bf16 %v1420, %v1419
        %v1523 = vpack.c.bf16 %v1422, %v1421
        %v1524 = vpack.c.bf16 %v1424, %v1423
        %v1525 = vpack.c.bf16 %v1426, %v1425
        %v1526 = vpack.c.bf16 %v1428, %v1427
        %v1527 = vpack.c.bf16 %v1430, %v1429
        %v1528 = vpack.c.bf16 %v1432, %v1431
        %v1529 = vld [vmem:[%s5] sm:$0xf]
        %v1530 = vld [vmem:[%s5 + $0x4] sm:$0xf]
        %v1531 = vld [vmem:[%s5 + $0x8] sm:$0xf]
        %v1532 = vld [vmem:[%s5 + $0xc] sm:$0xf]
        %v1533 = vld [vmem:[%s8] sm:$0x1]
        %v1535 = vlaneseq
        %v1536 = vshrl.u32 %v1535, 7
        %v1537 = vsub.s32 0, %v1536
        %v1538 = vrot.slane %v1533, %v1537
        %v1544 = vunpack.c.l.b16 %v1529
        %v1545 = vunpack.c.l.b16 %v1530
        %v1546 = vunpack.c.l.b16 %v1531
        %v1547 = vunpack.c.l.b16 %v1532
        %v1548 = vpack.c.b16 %v1545, %v1544
        %v1549 = vpack.c.b16 %v1547, %v1546
        %vm1552 = vcmask 261120
        %v1554 = vsel %vm1552, %v1497, 0
        %v1557 = vsel %vm1552, %v1498, 0
        %v1560 = vsel %vm1552, %v1499, 0
        %v1563 = vsel %vm1552, %v1500, 0
        %v1566 = vsel %vm1552, %v1501, 0
        %v1569 = vsel %vm1552, %v1502, 0
        %v1572 = vsel %vm1552, %v1503, 0
        %v1575 = vsel %vm1552, %v1504, 0
        %v1578 = vsel %vm1552, %v1505, 0
        %v1581 = vsel %vm1552, %v1506, 0
        %v1584 = vsel %vm1552, %v1507, 0
        %v1587 = vsel %vm1552, %v1508, 0
        %v1590 = vsel %vm1552, %v1509, 0
        %v1593 = vsel %vm1552, %v1510, 0
        %v1596 = vsel %vm1552, %v1511, 0
        %v1599 = vsel %vm1552, %v1512, 0
        %1601 = vmatprep.subr.bf16.mxu0 0
        %1602 = vmatpush1.bf16.msra.mxu0 %v1548
        %1603 = vmatprep.subr.bf16.mxu0 0
        %1604 = vmatpush1.bf16.msra.mxu0 %v1549
        %1605 = vmatprep.subr.bf16.mxu0 0
        %1606 = vmatpush1.bf16.msra.mxu0 0
        %1607 = vmatprep.subr.bf16.mxu0 0
        %1608 = vmatpush1.bf16.msra.mxu0 0
        %1609 = vmatprep.subr.bf16.mxu0 0
        %1610 = vmatpush1.bf16.msra.mxu0 0
        %1611 = vmatprep.subr.bf16.mxu0 0
        %1612 = vmatpush1.bf16.msra.mxu0 0
        %1613 = vmatprep.subr.bf16.mxu0 0
        %1614 = vmatpush1.bf16.msra.mxu0 0
        %1615 = vmatprep.subr.bf16.mxu0 0
        %1616 = vmatpush1.bf16.msra.mxu0 0
        %1617 = vmatprep.subr.bf16.mxu0 0
        %1618 = vmatpush1.bf16.msra.mxu0 0
        %1619 = vmatprep.subr.bf16.mxu0 0
        %1620 = vmatpush1.bf16.msra.mxu0 0
        %1621 = vmatprep.subr.bf16.mxu0 0
        %1622 = vmatpush1.bf16.msra.mxu0 0
        %1623 = vmatprep.subr.bf16.mxu0 0
        %1624 = vmatpush1.bf16.msra.mxu0 0
        %1625 = vmatprep.subr.bf16.mxu0 0
        %1626 = vmatpush1.bf16.msra.mxu0 0
        %1627 = vmatprep.subr.bf16.mxu0 0
        %1628 = vmatpush1.bf16.msra.mxu0 0
        %1629 = vmatprep.subr.bf16.mxu0 0
        %1630 = vmatpush1.bf16.msra.mxu0 0
        %1631 = vmatprep.subr.bf16.mxu0 0
        %1632 = vmatpush1.bf16.msra.mxu0 0
        %1633 = vmatprep.mubr.bf16.mxu0 0
        %1634 = vmatmul.mubr.bf16.gmra.mrb[0].mxu0 %v1554
        %v1635 = vpop.f32.mrb[0].mxu0
        %v1636 = vadd.f32 %v1538, %v1635
        %v1637 = vpop.f32.mrb[0].mxu0
        %v1638 = vpop.f32.mrb[0].mxu0
        %v1639 = vadd.f32 %v1538, %v1638
        %v1640 = vpop.f32.mrb[0].mxu0
        %1641 = vmatprep.mubr.bf16.mxu0 0
        %1642 = vmatmul.mubr.bf16.gmra.mrb[0].mxu0 %v1557
        %v1643 = vpop.f32.mrb[0].mxu0
        %v1644 = vadd.f32 %v1538, %v1643
        %v1645 = vpop.f32.mrb[0].mxu0
        %v1646 = vpop.f32.mrb[0].mxu0
        %v1647 = vadd.f32 %v1538, %v1646
        %v1648 = vpop.f32.mrb[0].mxu0
        %1649 = vmatprep.mubr.bf16.mxu0 0
        %1650 = vmatmul.mubr.bf16.gmra.mrb[0].mxu0 %v1560
        %v1651 = vpop.f32.mrb[0].mxu0
        %v1652 = vadd.f32 %v1538, %v1651
        %v1653 = vpop.f32.mrb[0].mxu0
        %v1654 = vpop.f32.mrb[0].mxu0
        %v1655 = vadd.f32 %v1538, %v1654
        %v1656 = vpop.f32.mrb[0].mxu0
        %1657 = vmatprep.mubr.bf16.mxu0 0
        %1658 = vmatmul.mubr.bf16.gmra.mrb[0].mxu0 %v1563
        %v1659 = vpop.f32.mrb[0].mxu0
        %v1660 = vadd.f32 %v1538, %v1659
        %v1661 = vpop.f32.mrb[0].mxu0
        %v1662 = vpop.f32.mrb[0].mxu0
        %v1663 = vadd.f32 %v1538, %v1662
        %v1664 = vpop.f32.mrb[0].mxu0
        %1665 = vmatprep.mubr.bf16.mxu0 0
        %1666 = vmatmul.mubr.bf16.gmra.mrb[0].mxu0 %v1566
        %v1667 = vpop.f32.mrb[0].mxu0
        %v1668 = vadd.f32 %v1538, %v1667
        %v1669 = vpop.f32.mrb[0].mxu0
        %v1670 = vpop.f32.mrb[0].mxu0
        %v1671 = vadd.f32 %v1538, %v1670
        %v1672 = vpop.f32.mrb[0].mxu0
        %1673 = vmatprep.mubr.bf16.mxu0 0
        %1674 = vmatmul.mubr.bf16.gmra.mrb[0].mxu0 %v1569
        %v1675 = vpop.f32.mrb[0].mxu0
        %v1676 = vadd.f32 %v1538, %v1675
        %v1677 = vpop.f32.mrb[0].mxu0
        %v1678 = vpop.f32.mrb[0].mxu0
        %v1679 = vadd.f32 %v1538, %v1678
        %v1680 = vpop.f32.mrb[0].mxu0
        %1681 = vmatprep.mubr.bf16.mxu0 0
        %1682 = vmatmul.mubr.bf16.gmra.mrb[0].mxu0 %v1572
        %v1683 = vpop.f32.mrb[0].mxu0
        %v1684 = vadd.f32 %v1538, %v1683
        %v1685 = vpop.f32.mrb[0].mxu0
        %v1686 = vpop.f32.mrb[0].mxu0
        %v1687 = vadd.f32 %v1538, %v1686
        %v1688 = vpop.f32.mrb[0].mxu0
        %1689 = vmatprep.mubr.bf16.mxu0 0
        %1690 = vmatmul.mubr.bf16.gmra.mrb[0].mxu0 %v1575
        %v1691 = vpop.f32.mrb[0].mxu0
        %v1692 = vadd.f32 %v1538, %v1691
        %v1693 = vpop.f32.mrb[0].mxu0
        %v1694 = vpop.f32.mrb[0].mxu0
        %v1695 = vadd.f32 %v1538, %v1694
        %v1696 = vpop.f32.mrb[0].mxu0
        %1697 = vmatprep.mubr.bf16.mxu0 0
        %1698 = vmatmul.mubr.bf16.gmra.mrb[0].mxu0 %v1578
        %v1699 = vpop.f32.mrb[0].mxu0
        %v1700 = vadd.f32 %v1538, %v1699
        %v1701 = vpop.f32.mrb[0].mxu0
        %v1702 = vpop.f32.mrb[0].mxu0
        %v1703 = vadd.f32 %v1538, %v1702
        %v1704 = vpop.f32.mrb[0].mxu0
        %1705 = vmatprep.mubr.bf16.mxu0 0
        %1706 = vmatmul.mubr.bf16.gmra.mrb[0].mxu0 %v1581
        %v1707 = vpop.f32.mrb[0].mxu0
        %v1708 = vadd.f32 %v1538, %v1707
        %v1709 = vpop.f32.mrb[0].mxu0
        %v1710 = vpop.f32.mrb[0].mxu0
        %v1711 = vadd.f32 %v1538, %v1710
        %v1712 = vpop.f32.mrb[0].mxu0
        %1713 = vmatprep.mubr.bf16.mxu0 0
        %1714 = vmatmul.mubr.bf16.gmra.mrb[0].mxu0 %v1584
        %v1715 = vpop.f32.mrb[0].mxu0
        %v1716 = vadd.f32 %v1538, %v1715
        %v1717 = vpop.f32.mrb[0].mxu0
        %v1718 = vpop.f32.mrb[0].mxu0
        %v1719 = vadd.f32 %v1538, %v1718
        %v1720 = vpop.f32.mrb[0].mxu0
        %1721 = vmatprep.mubr.bf16.mxu0 0
        %1722 = vmatmul.mubr.bf16.gmra.mrb[0].mxu0 %v1587
        %v1723 = vpop.f32.mrb[0].mxu0
        %v1724 = vadd.f32 %v1538, %v1723
        %v1725 = vpop.f32.mrb[0].mxu0
        %v1726 = vpop.f32.mrb[0].mxu0
        %v1727 = vadd.f32 %v1538, %v1726
        %v1728 = vpop.f32.mrb[0].mxu0
        %1729 = vmatprep.mubr.bf16.mxu0 0
        %1730 = vmatmul.mubr.bf16.gmra.mrb[0].mxu0 %v1590
        %v1731 = vpop.f32.mrb[0].mxu0
        %v1732 = vadd.f32 %v1538, %v1731
        %v1733 = vpop.f32.mrb[0].mxu0
        %v1734 = vpop.f32.mrb[0].mxu0
        %v1735 = vadd.f32 %v1538, %v1734
        %v1736 = vpop.f32.mrb[0].mxu0
        %1737 = vmatprep.mubr.bf16.mxu0 0
        %1738 = vmatmul.mubr.bf16.gmra.mrb[0].mxu0 %v1593
        %v1739 = vpop.f32.mrb[0].mxu0
        %v1740 = vadd.f32 %v1538, %v1739
        %v1741 = vpop.f32.mrb[0].mxu0
        %v1742 = vpop.f32.mrb[0].mxu0
        %v1743 = vadd.f32 %v1538, %v1742
        %v1744 = vpop.f32.mrb[0].mxu0
        %1745 = vmatprep.mubr.bf16.mxu0 0
        %1746 = vmatmul.mubr.bf16.gmra.mrb[0].mxu0 %v1596
        %v1747 = vpop.f32.mrb[0].mxu0
        %v1748 = vadd.f32 %v1538, %v1747
        %v1749 = vpop.f32.mrb[0].mxu0
        %v1750 = vpop.f32.mrb[0].mxu0
        %v1751 = vadd.f32 %v1538, %v1750
        %v1752 = vpop.f32.mrb[0].mxu0
        %1753 = vmatprep.mubr.bf16.mxu0 0
        %1754 = vmatmul.mubr.bf16.gmra.mrb[0].mxu0 %v1599
        %v1755 = vpop.f32.mrb[0].mxu0
        %v1756 = vadd.f32 %v1538, %v1755
        %v1757 = vpop.f32.mrb[0].mxu0
        %v1758 = vpop.f32.mrb[0].mxu0
        %v1759 = vadd.f32 %v1538, %v1758
        %v1760 = vpop.f32.mrb[0].mxu0
        %1761 = vdwg.mxu0
        %v1762 = vld [vmem:[%s6] sm:$0xf]
        %v1763 = vld [vmem:[%s6 + $0x4] sm:$0xf]
        %v1764 = vld [vmem:[%s6 + $0x8] sm:$0xf]
        %v1765 = vld [vmem:[%s6 + $0xc] sm:$0xf]
        %v1766 = vld [vmem:[%s9] sm:$0x1]
        %v1768 = vlaneseq
        %v1769 = vshrl.u32 %v1768, 7
        %v1770 = vsub.s32 0, %v1769
        %v1771 = vrot.slane %v1766, %v1770
        %v1777 = vunpack.c.l.b16 %v1762
        %v1778 = vunpack.c.l.b16 %v1763
        %v1779 = vunpack.c.l.b16 %v1764
        %v1780 = vunpack.c.l.b16 %v1765
        %v1781 = vpack.c.b16 %v1778, %v1777
        %v1782 = vpack.c.b16 %v1780, %v1779
        %1785 = vmatprep.subr.bf16.mxu0 0
        %1786 = vmatpush1.bf16.msra.mxu0 %v1781
        %1787 = vmatprep.subr.bf16.mxu0 0
        %1788 = vmatpush1.bf16.msra.mxu0 %v1782
        %1789 = vmatprep.subr.bf16.mxu0 0
        %1790 = vmatpush1.bf16.msra.mxu0 0
        %1791 = vmatprep.subr.bf16.mxu0 0
        %1792 = vmatpush1.bf16.msra.mxu0 0
        %1793 = vmatprep.subr.bf16.mxu0 0
        %1794 = vmatpush1.bf16.msra.mxu0 0
        %1795 = vmatprep.subr.bf16.mxu0 0
        %1796 = vmatpush1.bf16.msra.mxu0 0
        %1797 = vmatprep.subr.bf16.mxu0 0
        %1798 = vmatpush1.bf16.msra.mxu0 0
        %1799 = vmatprep.subr.bf16.mxu0 0
        %1800 = vmatpush1.bf16.msra.mxu0 0
        %1801 = vmatprep.subr.bf16.mxu0 0
        %1802 = vmatpush1.bf16.msra.mxu0 0
        %1803 = vmatprep.subr.bf16.mxu0 0
        %1804 = vmatpush1.bf16.msra.mxu0 0
        %1805 = vmatprep.subr.bf16.mxu0 0
        %1806 = vmatpush1.bf16.msra.mxu0 0
        %1807 = vmatprep.subr.bf16.mxu0 0
        %1808 = vmatpush1.bf16.msra.mxu0 0
        %1809 = vmatprep.subr.bf16.mxu0 0
        %1810 = vmatpush1.bf16.msra.mxu0 0
        %1811 = vmatprep.subr.bf16.mxu0 0
        %1812 = vmatpush1.bf16.msra.mxu0 0
        %1813 = vmatprep.subr.bf16.mxu0 0
        %1814 = vmatpush1.bf16.msra.mxu0 0
        %1815 = vmatprep.subr.bf16.mxu0 0
        %1816 = vmatpush1.bf16.msra.mxu0 0
        %1817 = vmatprep.mubr.bf16.mxu0 0
        %1818 = vmatmul.mubr.bf16.gmra.mrb[0].mxu0 %v1554
        %v1819 = vpop.f32.mrb[0].mxu0
        %v1820 = vadd.f32 %v1771, %v1819
        %v1821 = vpop.f32.mrb[0].mxu0
        %v1822 = vpop.f32.mrb[0].mxu0
        %v1823 = vadd.f32 %v1771, %v1822
        %v1824 = vpop.f32.mrb[0].mxu0
        %1825 = vmatprep.mubr.bf16.mxu0 0
        %1826 = vmatmul.mubr.bf16.gmra.mrb[0].mxu0 %v1557
        %v1827 = vpop.f32.mrb[0].mxu0
        %v1828 = vadd.f32 %v1771, %v1827
        %v1829 = vpop.f32.mrb[0].mxu0
        %v1830 = vpop.f32.mrb[0].mxu0
        %v1831 = vadd.f32 %v1771, %v1830
        %v1832 = vpop.f32.mrb[0].mxu0
        %1833 = vmatprep.mubr.bf16.mxu0 0
        %1834 = vmatmul.mubr.bf16.gmra.mrb[0].mxu0 %v1560
        %v1835 = vpop.f32.mrb[0].mxu0
        %v1836 = vadd.f32 %v1771, %v1835
        %v1837 = vpop.f32.mrb[0].mxu0
        %v1838 = vpop.f32.mrb[0].mxu0
        %v1839 = vadd.f32 %v1771, %v1838
        %v1840 = vpop.f32.mrb[0].mxu0
        %1841 = vmatprep.mubr.bf16.mxu0 0
        %1842 = vmatmul.mubr.bf16.gmra.mrb[0].mxu0 %v1563
        %v1843 = vpop.f32.mrb[0].mxu0
        %v1844 = vadd.f32 %v1771, %v1843
        %v1845 = vpop.f32.mrb[0].mxu0
        %v1846 = vpop.f32.mrb[0].mxu0
        %v1847 = vadd.f32 %v1771, %v1846
        %v1848 = vpop.f32.mrb[0].mxu0
        %1849 = vmatprep.mubr.bf16.mxu0 0
        %1850 = vmatmul.mubr.bf16.gmra.mrb[0].mxu0 %v1566
        %v1851 = vpop.f32.mrb[0].mxu0
        %v1852 = vadd.f32 %v1771, %v1851
        %v1853 = vpop.f32.mrb[0].mxu0
        %v1854 = vpop.f32.mrb[0].mxu0
        %v1855 = vadd.f32 %v1771, %v1854
        %v1856 = vpop.f32.mrb[0].mxu0
        %1857 = vmatprep.mubr.bf16.mxu0 0
        %1858 = vmatmul.mubr.bf16.gmra.mrb[0].mxu0 %v1569
        %v1859 = vpop.f32.mrb[0].mxu0
        %v1860 = vadd.f32 %v1771, %v1859
        %v1861 = vpop.f32.mrb[0].mxu0
        %v1862 = vpop.f32.mrb[0].mxu0
        %v1863 = vadd.f32 %v1771, %v1862
        %v1864 = vpop.f32.mrb[0].mxu0
        %1865 = vmatprep.mubr.bf16.mxu0 0
        %1866 = vmatmul.mubr.bf16.gmra.mrb[0].mxu0 %v1572
        %v1867 = vpop.f32.mrb[0].mxu0
        %v1868 = vadd.f32 %v1771, %v1867
        %v1869 = vpop.f32.mrb[0].mxu0
        %v1870 = vpop.f32.mrb[0].mxu0
        %v1871 = vadd.f32 %v1771, %v1870
        %v1872 = vpop.f32.mrb[0].mxu0
        %1873 = vmatprep.mubr.bf16.mxu0 0
        %1874 = vmatmul.mubr.bf16.gmra.mrb[0].mxu0 %v1575
        %v1875 = vpop.f32.mrb[0].mxu0
        %v1876 = vadd.f32 %v1771, %v1875
        %v1877 = vpop.f32.mrb[0].mxu0
        %v1878 = vpop.f32.mrb[0].mxu0
        %v1879 = vadd.f32 %v1771, %v1878
        %v1880 = vpop.f32.mrb[0].mxu0
        %1881 = vmatprep.mubr.bf16.mxu0 0
        %1882 = vmatmul.mubr.bf16.gmra.mrb[0].mxu0 %v1578
        %v1883 = vpop.f32.mrb[0].mxu0
        %v1884 = vadd.f32 %v1771, %v1883
        %v1885 = vpop.f32.mrb[0].mxu0
        %v1886 = vpop.f32.mrb[0].mxu0
        %v1887 = vadd.f32 %v1771, %v1886
        %v1888 = vpop.f32.mrb[0].mxu0
        %1889 = vmatprep.mubr.bf16.mxu0 0
        %1890 = vmatmul.mubr.bf16.gmra.mrb[0].mxu0 %v1581
        %v1891 = vpop.f32.mrb[0].mxu0
        %v1892 = vadd.f32 %v1771, %v1891
        %v1893 = vpop.f32.mrb[0].mxu0
        %v1894 = vpop.f32.mrb[0].mxu0
        %v1895 = vadd.f32 %v1771, %v1894
        %v1896 = vpop.f32.mrb[0].mxu0
        %1897 = vmatprep.mubr.bf16.mxu0 0
        %1898 = vmatmul.mubr.bf16.gmra.mrb[0].mxu0 %v1584
        %v1899 = vpop.f32.mrb[0].mxu0
        %v1900 = vadd.f32 %v1771, %v1899
        %v1901 = vpop.f32.mrb[0].mxu0
        %v1902 = vpop.f32.mrb[0].mxu0
        %v1903 = vadd.f32 %v1771, %v1902
        %v1904 = vpop.f32.mrb[0].mxu0
        %1905 = vmatprep.mubr.bf16.mxu0 0
        %1906 = vmatmul.mubr.bf16.gmra.mrb[0].mxu0 %v1587
        %v1907 = vpop.f32.mrb[0].mxu0
        %v1908 = vadd.f32 %v1771, %v1907
        %v1909 = vpop.f32.mrb[0].mxu0
        %v1910 = vpop.f32.mrb[0].mxu0
        %v1911 = vadd.f32 %v1771, %v1910
        %v1912 = vpop.f32.mrb[0].mxu0
        %1913 = vmatprep.mubr.bf16.mxu0 0
        %1914 = vmatmul.mubr.bf16.gmra.mrb[0].mxu0 %v1590
        %v1915 = vpop.f32.mrb[0].mxu0
        %v1916 = vadd.f32 %v1771, %v1915
        %v1917 = vpop.f32.mrb[0].mxu0
        %v1918 = vpop.f32.mrb[0].mxu0
        %v1919 = vadd.f32 %v1771, %v1918
        %v1920 = vpop.f32.mrb[0].mxu0
        %1921 = vmatprep.mubr.bf16.mxu0 0
        %1922 = vmatmul.mubr.bf16.gmra.mrb[0].mxu0 %v1593
        %v1923 = vpop.f32.mrb[0].mxu0
        %v1924 = vadd.f32 %v1771, %v1923
        %v1925 = vpop.f32.mrb[0].mxu0
        %v1926 = vpop.f32.mrb[0].mxu0
        %v1927 = vadd.f32 %v1771, %v1926
        %v1928 = vpop.f32.mrb[0].mxu0
        %1929 = vmatprep.mubr.bf16.mxu0 0
        %1930 = vmatmul.mubr.bf16.gmra.mrb[0].mxu0 %v1596
        %v1931 = vpop.f32.mrb[0].mxu0
        %v1932 = vadd.f32 %v1771, %v1931
        %v1933 = vpop.f32.mrb[0].mxu0
        %v1934 = vpop.f32.mrb[0].mxu0
        %v1935 = vadd.f32 %v1771, %v1934
        %v1936 = vpop.f32.mrb[0].mxu0
        %1937 = vmatprep.mubr.bf16.mxu0 0
        %1938 = vmatmul.mubr.bf16.gmra.mrb[0].mxu0 %v1599
        %v1939 = vpop.f32.mrb[0].mxu0
        %v1940 = vadd.f32 %v1771, %v1939
        %v1941 = vpop.f32.mrb[0].mxu0
        %v1942 = vpop.f32.mrb[0].mxu0
        %v1943 = vadd.f32 %v1771, %v1942
        %v1944 = vpop.f32.mrb[0].mxu0
        %1945 = vdwg.mxu0
        %v1946 = vld [vmem:[%s7] sm:$0xf]
        %v1947 = vld [vmem:[%s7 + $0x4] sm:$0xf]
        %v1948 = vld [vmem:[%s7 + $0x8] sm:$0xf]
        %v1949 = vld [vmem:[%s7 + $0xc] sm:$0xf]
        %v1950 = vld [vmem:[%s10] sm:$0x1]
        %v1952 = vlaneseq
        %v1953 = vshrl.u32 %v1952, 7
        %v1954 = vsub.s32 0, %v1953
        %v1955 = vrot.slane %v1950, %v1954
        %v1961 = vunpack.c.l.b16 %v1946
        %v1962 = vunpack.c.l.b16 %v1947
        %v1963 = vunpack.c.l.b16 %v1948
        %v1964 = vunpack.c.l.b16 %v1949
        %v1965 = vpack.c.b16 %v1962, %v1961
        %v1966 = vpack.c.b16 %v1964, %v1963
        %v1970 = vsel %vm1552, %v1513, 0
        %v1973 = vsel %vm1552, %v1514, 0
        %v1976 = vsel %vm1552, %v1515, 0
        %v1979 = vsel %vm1552, %v1516, 0
        %v1982 = vsel %vm1552, %v1517, 0
        %v1985 = vsel %vm1552, %v1518, 0
        %v1988 = vsel %vm1552, %v1519, 0
        %v1991 = vsel %vm1552, %v1520, 0
        %v1994 = vsel %vm1552, %v1521, 0
        %v1997 = vsel %vm1552, %v1522, 0
        %v2000 = vsel %vm1552, %v1523, 0
        %v2003 = vsel %vm1552, %v1524, 0
        %v2006 = vsel %vm1552, %v1525, 0
        %v2009 = vsel %vm1552, %v1526, 0
        %v2012 = vsel %vm1552, %v1527, 0
        %v2015 = vsel %vm1552, %v1528, 0
        %2017 = vmatprep.subr.bf16.mxu0 0
        %2018 = vmatpush1.bf16.msra.mxu0 %v1965
        %2019 = vmatprep.subr.bf16.mxu0 0
        %2020 = vmatpush1.bf16.msra.mxu0 %v1966
        %2021 = vmatprep.subr.bf16.mxu0 0
        %2022 = vmatpush1.bf16.msra.mxu0 0
        %2023 = vmatprep.subr.bf16.mxu0 0
        %2024 = vmatpush1.bf16.msra.mxu0 0
        %2025 = vmatprep.subr.bf16.mxu0 0
        %2026 = vmatpush1.bf16.msra.mxu0 0
        %2027 = vmatprep.subr.bf16.mxu0 0
        %2028 = vmatpush1.bf16.msra.mxu0 0
        %2029 = vmatprep.subr.bf16.mxu0 0
        %2030 = vmatpush1.bf16.msra.mxu0 0
        %2031 = vmatprep.subr.bf16.mxu0 0
        %2032 = vmatpush1.bf16.msra.mxu0 0
        %2033 = vmatprep.subr.bf16.mxu0 0
        %2034 = vmatpush1.bf16.msra.mxu0 0
        %2035 = vmatprep.subr.bf16.mxu0 0
        %2036 = vmatpush1.bf16.msra.mxu0 0
        %2037 = vmatprep.subr.bf16.mxu0 0
        %2038 = vmatpush1.bf16.msra.mxu0 0
        %2039 = vmatprep.subr.bf16.mxu0 0
        %2040 = vmatpush1.bf16.msra.mxu0 0
        %2041 = vmatprep.subr.bf16.mxu0 0
        %2042 = vmatpush1.bf16.msra.mxu0 0
        %2043 = vmatprep.subr.bf16.mxu0 0
        %2044 = vmatpush1.bf16.msra.mxu0 0
        %2045 = vmatprep.subr.bf16.mxu0 0
        %2046 = vmatpush1.bf16.msra.mxu0 0
        %2047 = vmatprep.subr.bf16.mxu0 0
        %2048 = vmatpush1.bf16.msra.mxu0 0
        %2049 = vmatprep.mubr.bf16.mxu0 0
        %2050 = vmatmul.mubr.bf16.gmra.mrb[0].mxu0 %v1970
        %v2051 = vpop.f32.mrb[0].mxu0
        %v2052 = vadd.f32 %v1955, %v2051
        %v2053 = vpop.f32.mrb[0].mxu0
        %v2054 = vpop.f32.mrb[0].mxu0
        %v2055 = vadd.f32 %v1955, %v2054
        %v2056 = vpop.f32.mrb[0].mxu0
        %2057 = vmatprep.mubr.bf16.mxu0 0
        %2058 = vmatmul.mubr.bf16.gmra.mrb[0].mxu0 %v1973
        %v2059 = vpop.f32.mrb[0].mxu0
        %v2060 = vadd.f32 %v1955, %v2059
        %v2061 = vpop.f32.mrb[0].mxu0
        %v2062 = vpop.f32.mrb[0].mxu0
        %v2063 = vadd.f32 %v1955, %v2062
        %v2064 = vpop.f32.mrb[0].mxu0
        %2065 = vmatprep.mubr.bf16.mxu0 0
        %2066 = vmatmul.mubr.bf16.gmra.mrb[0].mxu0 %v1976
        %v2067 = vpop.f32.mrb[0].mxu0
        %v2068 = vadd.f32 %v1955, %v2067
        %v2069 = vpop.f32.mrb[0].mxu0
        %v2070 = vpop.f32.mrb[0].mxu0
        %v2071 = vadd.f32 %v1955, %v2070
        %v2072 = vpop.f32.mrb[0].mxu0
        %2073 = vmatprep.mubr.bf16.mxu0 0
        %2074 = vmatmul.mubr.bf16.gmra.mrb[0].mxu0 %v1979
        %v2075 = vpop.f32.mrb[0].mxu0
        %v2076 = vadd.f32 %v1955, %v2075
        %v2077 = vpop.f32.mrb[0].mxu0
        %v2078 = vpop.f32.mrb[0].mxu0
        %v2079 = vadd.f32 %v1955, %v2078
        %v2080 = vpop.f32.mrb[0].mxu0
        %2081 = vmatprep.mubr.bf16.mxu0 0
        %2082 = vmatmul.mubr.bf16.gmra.mrb[0].mxu0 %v1982
        %v2083 = vpop.f32.mrb[0].mxu0
        %v2084 = vadd.f32 %v1955, %v2083
        %v2085 = vpop.f32.mrb[0].mxu0
        %v2086 = vpop.f32.mrb[0].mxu0
        %v2087 = vadd.f32 %v1955, %v2086
        %v2088 = vpop.f32.mrb[0].mxu0
        %2089 = vmatprep.mubr.bf16.mxu0 0
        %2090 = vmatmul.mubr.bf16.gmra.mrb[0].mxu0 %v1985
        %v2091 = vpop.f32.mrb[0].mxu0
        %v2092 = vadd.f32 %v1955, %v2091
        %v2093 = vpop.f32.mrb[0].mxu0
        %v2094 = vpop.f32.mrb[0].mxu0
        %v2095 = vadd.f32 %v1955, %v2094
        %v2096 = vpop.f32.mrb[0].mxu0
        %2097 = vmatprep.mubr.bf16.mxu0 0
        %2098 = vmatmul.mubr.bf16.gmra.mrb[0].mxu0 %v1988
        %v2099 = vpop.f32.mrb[0].mxu0
        %v2100 = vadd.f32 %v1955, %v2099
        %v2101 = vpop.f32.mrb[0].mxu0
        %v2102 = vpop.f32.mrb[0].mxu0
        %v2103 = vadd.f32 %v1955, %v2102
        %v2104 = vpop.f32.mrb[0].mxu0
        %2105 = vmatprep.mubr.bf16.mxu0 0
        %2106 = vmatmul.mubr.bf16.gmra.mrb[0].mxu0 %v1991
        %v2107 = vpop.f32.mrb[0].mxu0
        %v2108 = vadd.f32 %v1955, %v2107
        %v2109 = vpop.f32.mrb[0].mxu0
        %v2110 = vpop.f32.mrb[0].mxu0
        %v2111 = vadd.f32 %v1955, %v2110
        %v2112 = vpop.f32.mrb[0].mxu0
        %2113 = vmatprep.mubr.bf16.mxu0 0
        %2114 = vmatmul.mubr.bf16.gmra.mrb[0].mxu0 %v1994
        %v2115 = vpop.f32.mrb[0].mxu0
        %v2116 = vadd.f32 %v1955, %v2115
        %v2117 = vpop.f32.mrb[0].mxu0
        %v2118 = vpop.f32.mrb[0].mxu0
        %v2119 = vadd.f32 %v1955, %v2118
        %v2120 = vpop.f32.mrb[0].mxu0
        %2121 = vmatprep.mubr.bf16.mxu0 0
        %2122 = vmatmul.mubr.bf16.gmra.mrb[0].mxu0 %v1997
        %v2123 = vpop.f32.mrb[0].mxu0
        %v2124 = vadd.f32 %v1955, %v2123
        %v2125 = vpop.f32.mrb[0].mxu0
        %v2126 = vpop.f32.mrb[0].mxu0
        %v2127 = vadd.f32 %v1955, %v2126
        %v2128 = vpop.f32.mrb[0].mxu0
        %2129 = vmatprep.mubr.bf16.mxu0 0
        %2130 = vmatmul.mubr.bf16.gmra.mrb[0].mxu0 %v2000
        %v2131 = vpop.f32.mrb[0].mxu0
        %v2132 = vadd.f32 %v1955, %v2131
        %v2133 = vpop.f32.mrb[0].mxu0
        %v2134 = vpop.f32.mrb[0].mxu0
        %v2135 = vadd.f32 %v1955, %v2134
        %v2136 = vpop.f32.mrb[0].mxu0
        %2137 = vmatprep.mubr.bf16.mxu0 0
        %2138 = vmatmul.mubr.bf16.gmra.mrb[0].mxu0 %v2003
        %v2139 = vpop.f32.mrb[0].mxu0
        %v2140 = vadd.f32 %v1955, %v2139
        %v2141 = vpop.f32.mrb[0].mxu0
        %v2142 = vpop.f32.mrb[0].mxu0
        %v2143 = vadd.f32 %v1955, %v2142
        %v2144 = vpop.f32.mrb[0].mxu0
        %2145 = vmatprep.mubr.bf16.mxu0 0
        %2146 = vmatmul.mubr.bf16.gmra.mrb[0].mxu0 %v2006
        %v2147 = vpop.f32.mrb[0].mxu0
        %v2148 = vadd.f32 %v1955, %v2147
        %v2149 = vpop.f32.mrb[0].mxu0
        %v2150 = vpop.f32.mrb[0].mxu0
        %v2151 = vadd.f32 %v1955, %v2150
        %v2152 = vpop.f32.mrb[0].mxu0
        %2153 = vmatprep.mubr.bf16.mxu0 0
        %2154 = vmatmul.mubr.bf16.gmra.mrb[0].mxu0 %v2009
        %v2155 = vpop.f32.mrb[0].mxu0
        %v2156 = vadd.f32 %v1955, %v2155
        %v2157 = vpop.f32.mrb[0].mxu0
        %v2158 = vpop.f32.mrb[0].mxu0
        %v2159 = vadd.f32 %v1955, %v2158
        %v2160 = vpop.f32.mrb[0].mxu0
        %2161 = vmatprep.mubr.bf16.mxu0 0
        %2162 = vmatmul.mubr.bf16.gmra.mrb[0].mxu0 %v2012
        %v2163 = vpop.f32.mrb[0].mxu0
        %v2164 = vadd.f32 %v1955, %v2163
        %v2165 = vpop.f32.mrb[0].mxu0
        %v2166 = vpop.f32.mrb[0].mxu0
        %v2167 = vadd.f32 %v1955, %v2166
        %v2168 = vpop.f32.mrb[0].mxu0
        %2169 = vmatprep.mubr.bf16.mxu0 0
        %2170 = vmatmul.mubr.bf16.gmra.mrb[0].mxu0 %v2015
        %v2171 = vpop.f32.mrb[0].mxu0
        %v2172 = vadd.f32 %v1955, %v2171
        %v2173 = vpop.f32.mrb[0].mxu0
        %v2174 = vpop.f32.mrb[0].mxu0
        %v2175 = vadd.f32 %v1955, %v2174
        %v2176 = vpop.f32.mrb[0].mxu0
        %2177 = vdwg.mxu0
        %v2178 = vld [vmem:[%s11] sm:$0xf]
        %v2179 = vld [vmem:[%s11 + $0x4] sm:$0xf]
        %v2180 = vld [vmem:[%s11 + $0x8] sm:$0xf]
        %v2181 = vld [vmem:[%s11 + $0xc] sm:$0xf]
        %v2182 = vpack.c.bf16 %v1639, %v1636
        %v2183 = vpack.c.bf16 %v1647, %v1644
        %v2184 = vpack.c.bf16 %v1655, %v1652
        %v2185 = vpack.c.bf16 %v1663, %v1660
        %v2186 = vpack.c.bf16 %v1671, %v1668
        %v2187 = vpack.c.bf16 %v1679, %v1676
        %v2188 = vpack.c.bf16 %v1687, %v1684
        %v2189 = vpack.c.bf16 %v1695, %v1692
        %v2190 = vpack.c.bf16 %v1703, %v1700
        %v2191 = vpack.c.bf16 %v1711, %v1708
        %v2192 = vpack.c.bf16 %v1719, %v1716
        %v2193 = vpack.c.bf16 %v1727, %v1724
        %v2194 = vpack.c.bf16 %v1735, %v1732
        %v2195 = vpack.c.bf16 %v1743, %v1740
        %v2196 = vpack.c.bf16 %v1751, %v1748
        %v2197 = vpack.c.bf16 %v1759, %v1756
        %v2198 = vpack.c.bf16 %v1823, %v1820
        %v2199 = vpack.c.bf16 %v1831, %v1828
        %v2200 = vpack.c.bf16 %v1839, %v1836
        %v2201 = vpack.c.bf16 %v1847, %v1844
        %v2202 = vpack.c.bf16 %v1855, %v1852
        %v2203 = vpack.c.bf16 %v1863, %v1860
        %v2204 = vpack.c.bf16 %v1871, %v1868
        %v2205 = vpack.c.bf16 %v1879, %v1876
        %v2206 = vpack.c.bf16 %v1887, %v1884
        %v2207 = vpack.c.bf16 %v1895, %v1892
        %v2208 = vpack.c.bf16 %v1903, %v1900
        %v2209 = vpack.c.bf16 %v1911, %v1908
        %v2210 = vpack.c.bf16 %v1919, %v1916
        %v2211 = vpack.c.bf16 %v1927, %v1924
        %v2212 = vpack.c.bf16 %v1935, %v1932
        %v2213 = vpack.c.bf16 %v1943, %v1940
        %v2214 = vpack.c.bf16 %v2055, %v2052
        %v2215 = vpack.c.bf16 %v2063, %v2060
        %v2216 = vpack.c.bf16 %v2071, %v2068
        %v2217 = vpack.c.bf16 %v2079, %v2076
        %v2218 = vpack.c.bf16 %v2087, %v2084
        %v2219 = vpack.c.bf16 %v2095, %v2092
        %v2220 = vpack.c.bf16 %v2103, %v2100
        %v2221 = vpack.c.bf16 %v2111, %v2108
        %v2222 = vpack.c.bf16 %v2119, %v2116
        %v2223 = vpack.c.bf16 %v2127, %v2124
        %v2224 = vpack.c.bf16 %v2135, %v2132
        %v2225 = vpack.c.bf16 %v2143, %v2140
        %v2226 = vpack.c.bf16 %v2151, %v2148
        %v2227 = vpack.c.bf16 %v2159, %v2156
        %v2228 = vpack.c.bf16 %v2167, %v2164
        %v2229 = vpack.c.bf16 %v2175, %v2172
        %vm2230 = vcmask 64512
        %v2232 = vsel %vm2230, %v2182, 0
        %v2235 = vsel %vm2230, %v2183, 0
        %v2238 = vsel %vm2230, %v2184, 0
        %v2241 = vsel %vm2230, %v2185, 0
        %v2244 = vsel %vm2230, %v2186, 0
        %v2247 = vsel %vm2230, %v2187, 0
        %v2250 = vsel %vm2230, %v2188, 0
        %v2253 = vsel %vm2230, %v2189, 0
        %v2256 = vsel %vm2230, %v2190, 0
        %v2259 = vsel %vm2230, %v2191, 0
        %v2262 = vsel %vm2230, %v2192, 0
        %v2265 = vsel %vm2230, %v2193, 0
        %v2268 = vsel %vm2230, %v2194, 0
        %v2271 = vsel %vm2230, %v2195, 0
        %v2274 = vsel %vm2230, %v2196, 0
        %v2277 = vsel %vm2230, %v2197, 0
        %v2280 = vsel %vm2230, %v2198, 0
        %v2283 = vsel %vm2230, %v2199, 0
        %v2286 = vsel %vm2230, %v2200, 0
        %v2289 = vsel %vm2230, %v2201, 0
        %v2292 = vsel %vm2230, %v2202, 0
        %v2295 = vsel %vm2230, %v2203, 0
        %v2298 = vsel %vm2230, %v2204, 0
        %v2301 = vsel %vm2230, %v2205, 0
        %v2304 = vsel %vm2230, %v2206, 0
        %v2307 = vsel %vm2230, %v2207, 0
        %v2310 = vsel %vm2230, %v2208, 0
        %v2313 = vsel %vm2230, %v2209, 0
        %v2316 = vsel %vm2230, %v2210, 0
        %v2319 = vsel %vm2230, %v2211, 0
        %v2322 = vsel %vm2230, %v2212, 0
        %v2325 = vsel %vm2230, %v2213, 0
        %2327 = vmatprep.subr.bf16.mxu0 0
        %2328 = vmatpush1.bf16.xpose.msra.mxu0 %v2280
        %2329 = vmatprep.subr.bf16.mxu0 0
        %2330 = vmatpush1.bf16.xpose.msra.mxu0 %v2283
        %2331 = vmatprep.subr.bf16.mxu0 0
        %2332 = vmatpush1.bf16.xpose.msra.mxu0 %v2286
        %2333 = vmatprep.subr.bf16.mxu0 0
        %2334 = vmatpush1.bf16.xpose.msra.mxu0 %v2289
        %2335 = vmatprep.subr.bf16.mxu0 0
        %2336 = vmatpush1.bf16.xpose.msra.mxu0 %v2292
        %2337 = vmatprep.subr.bf16.mxu0 0
        %2338 = vmatpush1.bf16.xpose.msra.mxu0 %v2295
        %2339 = vmatprep.subr.bf16.mxu0 0
        %2340 = vmatpush1.bf16.xpose.msra.mxu0 %v2298
        %2341 = vmatprep.subr.bf16.mxu0 0
        %2342 = vmatpush1.bf16.xpose.msra.mxu0 %v2301
        %2343 = vmatprep.subr.bf16.mxu0 0
        %2344 = vmatpush1.bf16.xpose.msra.mxu0 %v2304
        %2345 = vmatprep.subr.bf16.mxu0 0
        %2346 = vmatpush1.bf16.xpose.msra.mxu0 %v2307
        %2347 = vmatprep.subr.bf16.mxu0 0
        %2348 = vmatpush1.bf16.xpose.msra.mxu0 %v2310
        %2349 = vmatprep.subr.bf16.mxu0 0
        %2350 = vmatpush1.bf16.xpose.msra.mxu0 %v2313
        %2351 = vmatprep.subr.bf16.mxu0 0
        %2352 = vmatpush1.bf16.xpose.msra.mxu0 %v2316
        %2353 = vmatprep.subr.bf16.mxu0 0
        %2354 = vmatpush1.bf16.xpose.msra.mxu0 %v2319
        %2355 = vmatprep.subr.bf16.mxu0 0
        %2356 = vmatpush1.bf16.xpose.msra.mxu0 %v2322
        %2357 = vmatprep.subr.bf16.mxu0 0
        %2358 = vmatpush1.bf16.xpose.msra.mxu0 %v2325
        %2359 = vmatprep.mubr.bf16.mxu0 0
        %2360 = vmatmul.mubr.bf16.gmra.mrb[0].mxu0 %v2232
        %v2361 = vpop.f32.mrb[0].mxu0
        %v2362 = vadd.f32 0.0, %v2361
        %v2363 = vpop.f32.mrb[0].mxu0
        %v2364 = vadd.f32 0.0, %v2363
        %v2365 = vpop.f32.mrb[0].mxu0
        %v2366 = vadd.f32 0.0, %v2365
        %v2367 = vpop.f32.mrb[0].mxu0
        %v2368 = vadd.f32 0.0, %v2367
        %2369 = vmatprep.mubr.bf16.mxu0 0
        %2370 = vmatmul.mubr.bf16.gmra.mrb[0].mxu0 %v2235
        %v2371 = vpop.f32.mrb[0].mxu0
        %v2372 = vadd.f32 0.0, %v2371
        %v2373 = vpop.f32.mrb[0].mxu0
        %v2374 = vadd.f32 0.0, %v2373
        %v2375 = vpop.f32.mrb[0].mxu0
        %v2376 = vadd.f32 0.0, %v2375
        %v2377 = vpop.f32.mrb[0].mxu0
        %v2378 = vadd.f32 0.0, %v2377
        %2379 = vmatprep.mubr.bf16.mxu0 0
        %2380 = vmatmul.mubr.bf16.gmra.mrb[0].mxu0 %v2238
        %v2381 = vpop.f32.mrb[0].mxu0
        %v2382 = vadd.f32 0.0, %v2381
        %v2383 = vpop.f32.mrb[0].mxu0
        %v2384 = vadd.f32 0.0, %v2383
        %v2385 = vpop.f32.mrb[0].mxu0
        %v2386 = vadd.f32 0.0, %v2385
        %v2387 = vpop.f32.mrb[0].mxu0
        %v2388 = vadd.f32 0.0, %v2387
        %2389 = vmatprep.mubr.bf16.mxu0 0
        %2390 = vmatmul.mubr.bf16.gmra.mrb[0].mxu0 %v2241
        %v2391 = vpop.f32.mrb[0].mxu0
        %v2392 = vadd.f32 0.0, %v2391
        %v2393 = vpop.f32.mrb[0].mxu0
        %v2394 = vadd.f32 0.0, %v2393
        %v2395 = vpop.f32.mrb[0].mxu0
        %v2396 = vadd.f32 0.0, %v2395
        %v2397 = vpop.f32.mrb[0].mxu0
        %v2398 = vadd.f32 0.0, %v2397
        %2399 = vmatprep.mubr.bf16.mxu0 0
        %2400 = vmatmul.mubr.bf16.gmra.mrb[0].mxu0 %v2244
        %v2401 = vpop.f32.mrb[0].mxu0
        %v2402 = vadd.f32 0.0, %v2401
        %v2403 = vpop.f32.mrb[0].mxu0
        %v2404 = vadd.f32 0.0, %v2403
        %v2405 = vpop.f32.mrb[0].mxu0
        %v2406 = vadd.f32 0.0, %v2405
        %v2407 = vpop.f32.mrb[0].mxu0
        %v2408 = vadd.f32 0.0, %v2407
        %2409 = vmatprep.mubr.bf16.mxu0 0
        %2410 = vmatmul.mubr.bf16.gmra.mrb[0].mxu0 %v2247
        %v2411 = vpop.f32.mrb[0].mxu0
        %v2412 = vadd.f32 0.0, %v2411
        %v2413 = vpop.f32.mrb[0].mxu0
        %v2414 = vadd.f32 0.0, %v2413
        %v2415 = vpop.f32.mrb[0].mxu0
        %v2416 = vadd.f32 0.0, %v2415
        %v2417 = vpop.f32.mrb[0].mxu0
        %v2418 = vadd.f32 0.0, %v2417
        %2419 = vmatprep.mubr.bf16.mxu0 0
        %2420 = vmatmul.mubr.bf16.gmra.mrb[0].mxu0 %v2250
        %v2421 = vpop.f32.mrb[0].mxu0
        %v2422 = vadd.f32 0.0, %v2421
        %v2423 = vpop.f32.mrb[0].mxu0
        %v2424 = vadd.f32 0.0, %v2423
        %v2425 = vpop.f32.mrb[0].mxu0
        %v2426 = vadd.f32 0.0, %v2425
        %v2427 = vpop.f32.mrb[0].mxu0
        %v2428 = vadd.f32 0.0, %v2427
        %2429 = vmatprep.mubr.bf16.mxu0 0
        %2430 = vmatmul.mubr.bf16.gmra.mrb[0].mxu0 %v2253
        %v2431 = vpop.f32.mrb[0].mxu0
        %v2432 = vadd.f32 0.0, %v2431
        %v2433 = vpop.f32.mrb[0].mxu0
        %v2434 = vadd.f32 0.0, %v2433
        %v2435 = vpop.f32.mrb[0].mxu0
        %v2436 = vadd.f32 0.0, %v2435
        %v2437 = vpop.f32.mrb[0].mxu0
        %v2438 = vadd.f32 0.0, %v2437
        %2439 = vmatprep.mubr.bf16.mxu0 0
        %2440 = vmatmul.mubr.bf16.gmra.mrb[0].mxu0 %v2256
        %v2441 = vpop.f32.mrb[0].mxu0
        %v2442 = vadd.f32 0.0, %v2441
        %v2443 = vpop.f32.mrb[0].mxu0
        %v2444 = vadd.f32 0.0, %v2443
        %v2445 = vpop.f32.mrb[0].mxu0
        %v2446 = vadd.f32 0.0, %v2445
        %v2447 = vpop.f32.mrb[0].mxu0
        %v2448 = vadd.f32 0.0, %v2447
        %2449 = vmatprep.mubr.bf16.mxu0 0
        %2450 = vmatmul.mubr.bf16.gmra.mrb[0].mxu0 %v2259
        %v2451 = vpop.f32.mrb[0].mxu0
        %v2452 = vadd.f32 0.0, %v2451
        %v2453 = vpop.f32.mrb[0].mxu0
        %v2454 = vadd.f32 0.0, %v2453
        %v2455 = vpop.f32.mrb[0].mxu0
        %v2456 = vadd.f32 0.0, %v2455
        %v2457 = vpop.f32.mrb[0].mxu0
        %v2458 = vadd.f32 0.0, %v2457
        %2459 = vmatprep.mubr.bf16.mxu0 0
        %2460 = vmatmul.mubr.bf16.gmra.mrb[0].mxu0 %v2262
        %v2461 = vpop.f32.mrb[0].mxu0
        %v2462 = vadd.f32 0.0, %v2461
        %v2463 = vpop.f32.mrb[0].mxu0
        %v2464 = vadd.f32 0.0, %v2463
        %v2465 = vpop.f32.mrb[0].mxu0
        %v2466 = vadd.f32 0.0, %v2465
        %v2467 = vpop.f32.mrb[0].mxu0
        %v2468 = vadd.f32 0.0, %v2467
        %2469 = vmatprep.mubr.bf16.mxu0 0
        %2470 = vmatmul.mubr.bf16.gmra.mrb[0].mxu0 %v2265
        %v2471 = vpop.f32.mrb[0].mxu0
        %v2472 = vadd.f32 0.0, %v2471
        %v2473 = vpop.f32.mrb[0].mxu0
        %v2474 = vadd.f32 0.0, %v2473
        %v2475 = vpop.f32.mrb[0].mxu0
        %v2476 = vadd.f32 0.0, %v2475
        %v2477 = vpop.f32.mrb[0].mxu0
        %v2478 = vadd.f32 0.0, %v2477
        %2479 = vmatprep.mubr.bf16.mxu0 0
        %2480 = vmatmul.mubr.bf16.gmra.mrb[0].mxu0 %v2268
        %v2481 = vpop.f32.mrb[0].mxu0
        %v2482 = vadd.f32 0.0, %v2481
        %v2483 = vpop.f32.mrb[0].mxu0
        %v2484 = vadd.f32 0.0, %v2483
        %v2485 = vpop.f32.mrb[0].mxu0
        %v2486 = vadd.f32 0.0, %v2485
        %v2487 = vpop.f32.mrb[0].mxu0
        %v2488 = vadd.f32 0.0, %v2487
        %2489 = vmatprep.mubr.bf16.mxu0 0
        %2490 = vmatmul.mubr.bf16.gmra.mrb[0].mxu0 %v2271
        %v2491 = vpop.f32.mrb[0].mxu0
        %v2492 = vadd.f32 0.0, %v2491
        %v2493 = vpop.f32.mrb[0].mxu0
        %v2494 = vadd.f32 0.0, %v2493
        %v2495 = vpop.f32.mrb[0].mxu0
        %v2496 = vadd.f32 0.0, %v2495
        %v2497 = vpop.f32.mrb[0].mxu0
        %v2498 = vadd.f32 0.0, %v2497
        %2499 = vmatprep.mubr.bf16.mxu0 0
        %2500 = vmatmul.mubr.bf16.gmra.mrb[0].mxu0 %v2274
        %v2501 = vpop.f32.mrb[0].mxu0
        %v2502 = vadd.f32 0.0, %v2501
        %v2503 = vpop.f32.mrb[0].mxu0
        %v2504 = vadd.f32 0.0, %v2503
        %v2505 = vpop.f32.mrb[0].mxu0
        %v2506 = vadd.f32 0.0, %v2505
        %v2507 = vpop.f32.mrb[0].mxu0
        %v2508 = vadd.f32 0.0, %v2507
        %2509 = vmatprep.mubr.bf16.mxu0 0
        %2510 = vmatmul.mubr.bf16.gmra.mrb[0].mxu0 %v2277
        %v2511 = vpop.f32.mrb[0].mxu0
        %v2512 = vadd.f32 0.0, %v2511
        %v2513 = vpop.f32.mrb[0].mxu0
        %v2514 = vadd.f32 0.0, %v2513
        %v2515 = vpop.f32.mrb[0].mxu0
        %v2516 = vadd.f32 0.0, %v2515
        %v2517 = vpop.f32.mrb[0].mxu0
        %v2518 = vadd.f32 0.0, %v2517
        %2519 = vdwg.mxu0
        %v2520 = vmax.f32 %v2362, %v2364
        %2521 = vmax.xlane.f32.xlu0 %v2520
        %v2522 = vpop.xlane.xlu0 %2521
        %v2523 = vmax.f32 %v2366, %v2368
        %2524 = vmax.xlane.f32.xlu0 %v2523
        %v2525 = vpop.xlane.xlu0 %2524
        %v2526 = vmax.f32 %v2372, %v2374
        %2527 = vmax.xlane.f32.xlu0 %v2526
        %v2528 = vpop.xlane.xlu0 %2527
        %v2529 = vmax.f32 %v2376, %v2378
        %2530 = vmax.xlane.f32.xlu0 %v2529
        %v2531 = vpop.xlane.xlu0 %2530
        %v2532 = vmax.f32 %v2382, %v2384
        %2533 = vmax.xlane.f32.xlu0 %v2532
        %v2534 = vpop.xlane.xlu0 %2533
        %v2535 = vmax.f32 %v2386, %v2388
        %2536 = vmax.xlane.f32.xlu0 %v2535
        %v2537 = vpop.xlane.xlu0 %2536
        %v2538 = vmax.f32 %v2392, %v2394
        %2539 = vmax.xlane.f32.xlu0 %v2538
        %v2540 = vpop.xlane.xlu0 %2539
        %v2541 = vmax.f32 %v2396, %v2398
        %2542 = vmax.xlane.f32.xlu0 %v2541
        %v2543 = vpop.xlane.xlu0 %2542
        %v2544 = vmax.f32 %v2402, %v2404
        %2545 = vmax.xlane.f32.xlu0 %v2544
        %v2546 = vpop.xlane.xlu0 %2545
        %v2547 = vmax.f32 %v2406, %v2408
        %2548 = vmax.xlane.f32.xlu0 %v2547
        %v2549 = vpop.xlane.xlu0 %2548
        %v2550 = vmax.f32 %v2412, %v2414
        %2551 = vmax.xlane.f32.xlu0 %v2550
        %v2552 = vpop.xlane.xlu0 %2551
        %v2553 = vmax.f32 %v2416, %v2418
        %2554 = vmax.xlane.f32.xlu0 %v2553
        %v2555 = vpop.xlane.xlu0 %2554
        %v2556 = vmax.f32 %v2422, %v2424
        %2557 = vmax.xlane.f32.xlu0 %v2556
        %v2558 = vpop.xlane.xlu0 %2557
        %v2559 = vmax.f32 %v2426, %v2428
        %2560 = vmax.xlane.f32.xlu0 %v2559
        %v2561 = vpop.xlane.xlu0 %2560
        %v2562 = vmax.f32 %v2432, %v2434
        %2563 = vmax.xlane.f32.xlu0 %v2562
        %v2564 = vpop.xlane.xlu0 %2563
        %v2565 = vmax.f32 %v2436, %v2438
        %2566 = vmax.xlane.f32.xlu0 %v2565
        %v2567 = vpop.xlane.xlu0 %2566
        %v2568 = vmax.f32 %v2442, %v2444
        %2569 = vmax.xlane.f32.xlu0 %v2568
        %v2570 = vpop.xlane.xlu0 %2569
        %v2571 = vmax.f32 %v2446, %v2448
        %2572 = vmax.xlane.f32.xlu0 %v2571
        %v2573 = vpop.xlane.xlu0 %2572
        %v2574 = vmax.f32 %v2452, %v2454
        %2575 = vmax.xlane.f32.xlu0 %v2574
        %v2576 = vpop.xlane.xlu0 %2575
        %v2577 = vmax.f32 %v2456, %v2458
        %2578 = vmax.xlane.f32.xlu0 %v2577
        %v2579 = vpop.xlane.xlu0 %2578
        %v2580 = vmax.f32 %v2462, %v2464
        %2581 = vmax.xlane.f32.xlu0 %v2580
        %v2582 = vpop.xlane.xlu0 %2581
        %v2583 = vmax.f32 %v2466, %v2468
        %2584 = vmax.xlane.f32.xlu0 %v2583
        %v2585 = vpop.xlane.xlu0 %2584
        %v2586 = vmax.f32 %v2472, %v2474
        %2587 = vmax.xlane.f32.xlu0 %v2586
        %v2588 = vpop.xlane.xlu0 %2587
        %v2589 = vmax.f32 %v2476, %v2478
        %2590 = vmax.xlane.f32.xlu0 %v2589
        %v2591 = vpop.xlane.xlu0 %2590
        %v2592 = vmax.f32 %v2482, %v2484
        %2593 = vmax.xlane.f32.xlu0 %v2592
        %v2594 = vpop.xlane.xlu0 %2593
        %v2595 = vmax.f32 %v2486, %v2488
        %2596 = vmax.xlane.f32.xlu0 %v2595
        %v2597 = vpop.xlane.xlu0 %2596
        %v2598 = vmax.f32 %v2492, %v2494
        %2599 = vmax.xlane.f32.xlu0 %v2598
        %v2600 = vpop.xlane.xlu0 %2599
        %v2601 = vmax.f32 %v2496, %v2498
        %2602 = vmax.xlane.f32.xlu0 %v2601
        %v2603 = vpop.xlane.xlu0 %2602
        %v2604 = vmax.f32 %v2502, %v2504
        %2605 = vmax.xlane.f32.xlu0 %v2604
        %v2606 = vpop.xlane.xlu0 %2605
        %v2607 = vmax.f32 %v2506, %v2508
        %2608 = vmax.xlane.f32.xlu0 %v2607
        %v2609 = vpop.xlane.xlu0 %2608
        %v2610 = vmax.f32 %v2512, %v2514
        %2611 = vmax.xlane.f32.xlu0 %v2610
        %v2612 = vpop.xlane.xlu0 %2611
        %v2613 = vmax.f32 %v2516, %v2518
        %2614 = vmax.xlane.f32.xlu0 %v2613
        %v2615 = vpop.xlane.xlu0 %2614
        %v2616 = vsub.f32 %v2362, %v2522
        %v2617 = vsub.f32 %v2364, %v2522
        %v2618 = vsub.f32 %v2366, %v2525
        %v2619 = vsub.f32 %v2368, %v2525
        %v2620 = vsub.f32 %v2372, %v2528
        %v2621 = vsub.f32 %v2374, %v2528
        %v2622 = vsub.f32 %v2376, %v2531
        %v2623 = vsub.f32 %v2378, %v2531
        %v2624 = vsub.f32 %v2382, %v2534
        %v2625 = vsub.f32 %v2384, %v2534
        %v2626 = vsub.f32 %v2386, %v2537
        %v2627 = vsub.f32 %v2388, %v2537
        %v2628 = vsub.f32 %v2392, %v2540
        %v2629 = vsub.f32 %v2394, %v2540
        %v2630 = vsub.f32 %v2396, %v2543
        %v2631 = vsub.f32 %v2398, %v2543
        %v2632 = vsub.f32 %v2402, %v2546
        %v2633 = vsub.f32 %v2404, %v2546
        %v2634 = vsub.f32 %v2406, %v2549
        %v2635 = vsub.f32 %v2408, %v2549
        %v2636 = vsub.f32 %v2412, %v2552
        %v2637 = vsub.f32 %v2414, %v2552
        %v2638 = vsub.f32 %v2416, %v2555
        %v2639 = vsub.f32 %v2418, %v2555
        %v2640 = vsub.f32 %v2422, %v2558
        %v2641 = vsub.f32 %v2424, %v2558
        %v2642 = vsub.f32 %v2426, %v2561
        %v2643 = vsub.f32 %v2428, %v2561
        %v2644 = vsub.f32 %v2432, %v2564
        %v2645 = vsub.f32 %v2434, %v2564
        %v2646 = vsub.f32 %v2436, %v2567
        %v2647 = vsub.f32 %v2438, %v2567
        %v2648 = vsub.f32 %v2442, %v2570
        %v2649 = vsub.f32 %v2444, %v2570
        %v2650 = vsub.f32 %v2446, %v2573
        %v2651 = vsub.f32 %v2448, %v2573
        %v2652 = vsub.f32 %v2452, %v2576
        %v2653 = vsub.f32 %v2454, %v2576
        %v2654 = vsub.f32 %v2456, %v2579
        %v2655 = vsub.f32 %v2458, %v2579
        %v2656 = vsub.f32 %v2462, %v2582
        %v2657 = vsub.f32 %v2464, %v2582
        %v2658 = vsub.f32 %v2466, %v2585
        %v2659 = vsub.f32 %v2468, %v2585
        %v2660 = vsub.f32 %v2472, %v2588
        %v2661 = vsub.f32 %v2474, %v2588
        %v2662 = vsub.f32 %v2476, %v2591
        %v2663 = vsub.f32 %v2478, %v2591
        %v2664 = vsub.f32 %v2482, %v2594
        %v2665 = vsub.f32 %v2484, %v2594
        %v2666 = vsub.f32 %v2486, %v2597
        %v2667 = vsub.f32 %v2488, %v2597
        %v2668 = vsub.f32 %v2492, %v2600
        %v2669 = vsub.f32 %v2494, %v2600
        %v2670 = vsub.f32 %v2496, %v2603
        %v2671 = vsub.f32 %v2498, %v2603
        %v2672 = vsub.f32 %v2502, %v2606
        %v2673 = vsub.f32 %v2504, %v2606
        %v2674 = vsub.f32 %v2506, %v2609
        %v2675 = vsub.f32 %v2508, %v2609
        %v2676 = vsub.f32 %v2512, %v2612
        %v2677 = vsub.f32 %v2514, %v2612
        %v2678 = vsub.f32 %v2516, %v2615
        %v2679 = vsub.f32 %v2518, %v2615
        %v2680 = vmul.f32 %v2616, 1.442695
        %v2681 = vpow.pop %v2680
        %v2682 = vmul.f32 %v2617, 1.442695
        %v2683 = vpow.pop %v2682
        %v2684 = vmul.f32 %v2618, 1.442695
        %v2685 = vpow.pop %v2684
        %v2686 = vmul.f32 %v2619, 1.442695
        %v2687 = vpow.pop %v2686
        %v2688 = vmul.f32 %v2620, 1.442695
        %v2689 = vpow.pop %v2688
        %v2690 = vmul.f32 %v2621, 1.442695
        %v2691 = vpow.pop %v2690
        %v2692 = vmul.f32 %v2622, 1.442695
        %v2693 = vpow.pop %v2692
        %v2694 = vmul.f32 %v2623, 1.442695
        %v2695 = vpow.pop %v2694
        %v2696 = vmul.f32 %v2624, 1.442695
        %v2697 = vpow.pop %v2696
        %v2698 = vmul.f32 %v2625, 1.442695
        %v2699 = vpow.pop %v2698
        %v2700 = vmul.f32 %v2626, 1.442695
        %v2701 = vpow.pop %v2700
        %v2702 = vmul.f32 %v2627, 1.442695
        %v2703 = vpow.pop %v2702
        %v2704 = vmul.f32 %v2628, 1.442695
        %v2705 = vpow.pop %v2704
        %v2706 = vmul.f32 %v2629, 1.442695
        %v2707 = vpow.pop %v2706
        %v2708 = vmul.f32 %v2630, 1.442695
        %v2709 = vpow.pop %v2708
        %v2710 = vmul.f32 %v2631, 1.442695
        %v2711 = vpow.pop %v2710
        %v2712 = vmul.f32 %v2632, 1.442695
        %v2713 = vpow.pop %v2712
        %v2714 = vmul.f32 %v2633, 1.442695
        %v2715 = vpow.pop %v2714
        %v2716 = vmul.f32 %v2634, 1.442695
        %v2717 = vpow.pop %v2716
        %v2718 = vmul.f32 %v2635, 1.442695
        %v2719 = vpow.pop %v2718
        %v2720 = vmul.f32 %v2636, 1.442695
        %v2721 = vpow.pop %v2720
        %v2722 = vmul.f32 %v2637, 1.442695
        %v2723 = vpow.pop %v2722
        %v2724 = vmul.f32 %v2638, 1.442695
        %v2725 = vpow.pop %v2724
        %v2726 = vmul.f32 %v2639, 1.442695
        %v2727 = vpow.pop %v2726
        %v2728 = vmul.f32 %v2640, 1.442695
        %v2729 = vpow.pop %v2728
        %v2730 = vmul.f32 %v2641, 1.442695
        %v2731 = vpow.pop %v2730
        %v2732 = vmul.f32 %v2642, 1.442695
        %v2733 = vpow.pop %v2732
        %v2734 = vmul.f32 %v2643, 1.442695
        %v2735 = vpow.pop %v2734
        %v2736 = vmul.f32 %v2644, 1.442695
        %v2737 = vpow.pop %v2736
        %v2738 = vmul.f32 %v2645, 1.442695
        %v2739 = vpow.pop %v2738
        %v2740 = vmul.f32 %v2646, 1.442695
        %v2741 = vpow.pop %v2740
        %v2742 = vmul.f32 %v2647, 1.442695
        %v2743 = vpow.pop %v2742
        %v2744 = vmul.f32 %v2648, 1.442695
        %v2745 = vpow.pop %v2744
        %v2746 = vmul.f32 %v2649, 1.442695
        %v2747 = vpow.pop %v2746
        %v2748 = vmul.f32 %v2650, 1.442695
        %v2749 = vpow.pop %v2748
        %v2750 = vmul.f32 %v2651, 1.442695
        %v2751 = vpow.pop %v2750
        %v2752 = vmul.f32 %v2652, 1.442695
        %v2753 = vpow.pop %v2752
        %v2754 = vmul.f32 %v2653, 1.442695
        %v2755 = vpow.pop %v2754
        %v2756 = vmul.f32 %v2654, 1.442695
        %v2757 = vpow.pop %v2756
        %v2758 = vmul.f32 %v2655, 1.442695
        %v2759 = vpow.pop %v2758
        %v2760 = vmul.f32 %v2656, 1.442695
        %v2761 = vpow.pop %v2760
        %v2762 = vmul.f32 %v2657, 1.442695
        %v2763 = vpow.pop %v2762
        %v2764 = vmul.f32 %v2658, 1.442695
        %v2765 = vpow.pop %v2764
        %v2766 = vmul.f32 %v2659, 1.442695
        %v2767 = vpow.pop %v2766
        %v2768 = vmul.f32 %v2660, 1.442695
        %v2769 = vpow.pop %v2768
        %v2770 = vmul.f32 %v2661, 1.442695
        %v2771 = vpow.pop %v2770
        %v2772 = vmul.f32 %v2662, 1.442695
        %v2773 = vpow.pop %v2772
        %v2774 = vmul.f32 %v2663, 1.442695
        %v2775 = vpow.pop %v2774
        %v2776 = vmul.f32 %v2664, 1.442695
        %v2777 = vpow.pop %v2776
        %v2778 = vmul.f32 %v2665, 1.442695
        %v2779 = vpow.pop %v2778
        %v2780 = vmul.f32 %v2666, 1.442695
        %v2781 = vpow.pop %v2780
        %v2782 = vmul.f32 %v2667, 1.442695
        %v2783 = vpow.pop %v2782
        %v2784 = vmul.f32 %v2668, 1.442695
        %v2785 = vpow.pop %v2784
        %v2786 = vmul.f32 %v2669, 1.442695
        %v2787 = vpow.pop %v2786
        %v2788 = vmul.f32 %v2670, 1.442695
        %v2789 = vpow.pop %v2788
        %v2790 = vmul.f32 %v2671, 1.442695
        %v2791 = vpow.pop %v2790
        %v2792 = vmul.f32 %v2672, 1.442695
        %v2793 = vpow.pop %v2792
        %v2794 = vmul.f32 %v2673, 1.442695
        %v2795 = vpow.pop %v2794
        %v2796 = vmul.f32 %v2674, 1.442695
        %v2797 = vpow.pop %v2796
        %v2798 = vmul.f32 %v2675, 1.442695
        %v2799 = vpow.pop %v2798
        %v2800 = vmul.f32 %v2676, 1.442695
        %v2801 = vpow.pop %v2800
        %v2802 = vmul.f32 %v2677, 1.442695
        %v2803 = vpow.pop %v2802
        %v2804 = vmul.f32 %v2678, 1.442695
        %v2805 = vpow.pop %v2804
        %v2806 = vmul.f32 %v2679, 1.442695
        %v2807 = vpow.pop %v2806
        %v2808 = vadd.f32 %v2681, %v2683
        %2809 = vadd.xlane.f32.xlu0 %v2808
        %v2810 = vpop.xlane.xlu0 %2809
        %v2811 = vadd.f32 %v2685, %v2687
        %2812 = vadd.xlane.f32.xlu0 %v2811
        %v2813 = vpop.xlane.xlu0 %2812
        %v2814 = vadd.f32 %v2689, %v2691
        %2815 = vadd.xlane.f32.xlu0 %v2814
        %v2816 = vpop.xlane.xlu0 %2815
        %v2817 = vadd.f32 %v2693, %v2695
        %2818 = vadd.xlane.f32.xlu0 %v2817
        %v2819 = vpop.xlane.xlu0 %2818
        %v2820 = vadd.f32 %v2697, %v2699
        %2821 = vadd.xlane.f32.xlu0 %v2820
        %v2822 = vpop.xlane.xlu0 %2821
        %v2823 = vadd.f32 %v2701, %v2703
        %2824 = vadd.xlane.f32.xlu0 %v2823
        %v2825 = vpop.xlane.xlu0 %2824
        %v2826 = vadd.f32 %v2705, %v2707
        %2827 = vadd.xlane.f32.xlu0 %v2826
        %v2828 = vpop.xlane.xlu0 %2827
        %v2829 = vadd.f32 %v2709, %v2711
        %2830 = vadd.xlane.f32.xlu0 %v2829
        %v2831 = vpop.xlane.xlu0 %2830
        %v2832 = vadd.f32 %v2713, %v2715
        %2833 = vadd.xlane.f32.xlu0 %v2832
        %v2834 = vpop.xlane.xlu0 %2833
        %v2835 = vadd.f32 %v2717, %v2719
        %2836 = vadd.xlane.f32.xlu0 %v2835
        %v2837 = vpop.xlane.xlu0 %2836
        %v2838 = vadd.f32 %v2721, %v2723
        %2839 = vadd.xlane.f32.xlu0 %v2838
        %v2840 = vpop.xlane.xlu0 %2839
        %v2841 = vadd.f32 %v2725, %v2727
        %2842 = vadd.xlane.f32.xlu0 %v2841
        %v2843 = vpop.xlane.xlu0 %2842
        %v2844 = vadd.f32 %v2729, %v2731
        %2845 = vadd.xlane.f32.xlu0 %v2844
        %v2846 = vpop.xlane.xlu0 %2845
        %v2847 = vadd.f32 %v2733, %v2735
        %2848 = vadd.xlane.f32.xlu0 %v2847
        %v2849 = vpop.xlane.xlu0 %2848
        %v2850 = vadd.f32 %v2737, %v2739
        %2851 = vadd.xlane.f32.xlu0 %v2850
        %v2852 = vpop.xlane.xlu0 %2851
        %v2853 = vadd.f32 %v2741, %v2743
        %2854 = vadd.xlane.f32.xlu0 %v2853
        %v2855 = vpop.xlane.xlu0 %2854
        %v2856 = vadd.f32 %v2745, %v2747
        %2857 = vadd.xlane.f32.xlu0 %v2856
        %v2858 = vpop.xlane.xlu0 %2857
        %v2859 = vadd.f32 %v2749, %v2751
        %2860 = vadd.xlane.f32.xlu0 %v2859
        %v2861 = vpop.xlane.xlu0 %2860
        %v2862 = vadd.f32 %v2753, %v2755
        %2863 = vadd.xlane.f32.xlu0 %v2862
        %v2864 = vpop.xlane.xlu0 %2863
        %v2865 = vadd.f32 %v2757, %v2759
        %2866 = vadd.xlane.f32.xlu0 %v2865
        %v2867 = vpop.xlane.xlu0 %2866
        %v2868 = vadd.f32 %v2761, %v2763
        %2869 = vadd.xlane.f32.xlu0 %v2868
        %v2870 = vpop.xlane.xlu0 %2869
        %v2871 = vadd.f32 %v2765, %v2767
        %2872 = vadd.xlane.f32.xlu0 %v2871
        %v2873 = vpop.xlane.xlu0 %2872
        %v2874 = vadd.f32 %v2769, %v2771
        %2875 = vadd.xlane.f32.xlu0 %v2874
        %v2876 = vpop.xlane.xlu0 %2875
        %v2877 = vadd.f32 %v2773, %v2775
        %2878 = vadd.xlane.f32.xlu0 %v2877
        %v2879 = vpop.xlane.xlu0 %2878
        %v2880 = vadd.f32 %v2777, %v2779
        %2881 = vadd.xlane.f32.xlu0 %v2880
        %v2882 = vpop.xlane.xlu0 %2881
        %v2883 = vadd.f32 %v2781, %v2783
        %2884 = vadd.xlane.f32.xlu0 %v2883
        %v2885 = vpop.xlane.xlu0 %2884
        %v2886 = vadd.f32 %v2785, %v2787
        %2887 = vadd.xlane.f32.xlu0 %v2886
        %v2888 = vpop.xlane.xlu0 %2887
        %v2889 = vadd.f32 %v2789, %v2791
        %2890 = vadd.xlane.f32.xlu0 %v2889
        %v2891 = vpop.xlane.xlu0 %2890
        %v2892 = vadd.f32 %v2793, %v2795
        %2893 = vadd.xlane.f32.xlu0 %v2892
        %v2894 = vpop.xlane.xlu0 %2893
        %v2895 = vadd.f32 %v2797, %v2799
        %2896 = vadd.xlane.f32.xlu0 %v2895
        %v2897 = vpop.xlane.xlu0 %2896
        %v2898 = vadd.f32 %v2801, %v2803
        %2899 = vadd.xlane.f32.xlu0 %v2898
        %v2900 = vpop.xlane.xlu0 %2899
        %v2901 = vadd.f32 %v2805, %v2807
        %2902 = vadd.xlane.f32.xlu0 %v2901
        %v2903 = vpop.xlane.xlu0 %2902
        %v2904 = vrcp.pop %v2810
        %v2905 = vrcp.pop %v2813
        %v2906 = vrcp.pop %v2816
        %v2907 = vrcp.pop %v2819
        %v2908 = vrcp.pop %v2822
        %v2909 = vrcp.pop %v2825
        %v2910 = vrcp.pop %v2828
        %v2911 = vrcp.pop %v2831
        %v2912 = vrcp.pop %v2834
        %v2913 = vrcp.pop %v2837
        %v2914 = vrcp.pop %v2840
        %v2915 = vrcp.pop %v2843
        %v2916 = vrcp.pop %v2846
        %v2917 = vrcp.pop %v2849
        %v2918 = vrcp.pop %v2852
        %v2919 = vrcp.pop %v2855
        %v2920 = vrcp.pop %v2858
        %v2921 = vrcp.pop %v2861
        %v2922 = vrcp.pop %v2864
        %v2923 = vrcp.pop %v2867
        %v2924 = vrcp.pop %v2870
        %v2925 = vrcp.pop %v2873
        %v2926 = vrcp.pop %v2876
        %v2927 = vrcp.pop %v2879
        %v2928 = vrcp.pop %v2882
        %v2929 = vrcp.pop %v2885
        %v2930 = vrcp.pop %v2888
        %v2931 = vrcp.pop %v2891
        %v2932 = vrcp.pop %v2894
        %v2933 = vrcp.pop %v2897
        %v2934 = vrcp.pop %v2900
        %v2935 = vrcp.pop %v2903
        %v2936 = vmul.f32 %v2681, %v2904
        %v2937 = vmul.f32 %v2683, %v2904
        %v2938 = vmul.f32 %v2685, %v2905
        %v2939 = vmul.f32 %v2687, %v2905
        %v2940 = vmul.f32 %v2689, %v2906
        %v2941 = vmul.f32 %v2691, %v2906
        %v2942 = vmul.f32 %v2693, %v2907
        %v2943 = vmul.f32 %v2695, %v2907
        %v2944 = vmul.f32 %v2697, %v2908
        %v2945 = vmul.f32 %v2699, %v2908
        %v2946 = vmul.f32 %v2701, %v2909
        %v2947 = vmul.f32 %v2703, %v2909
        %v2948 = vmul.f32 %v2705, %v2910
        %v2949 = vmul.f32 %v2707, %v2910
        %v2950 = vmul.f32 %v2709, %v2911
        %v2951 = vmul.f32 %v2711, %v2911
        %v2952 = vmul.f32 %v2713, %v2912
        %v2953 = vmul.f32 %v2715, %v2912
        %v2954 = vmul.f32 %v2717, %v2913
        %v2955 = vmul.f32 %v2719, %v2913
        %v2956 = vmul.f32 %v2721, %v2914
        %v2957 = vmul.f32 %v2723, %v2914
        %v2958 = vmul.f32 %v2725, %v2915
        %v2959 = vmul.f32 %v2727, %v2915
        %v2960 = vmul.f32 %v2729, %v2916
        %v2961 = vmul.f32 %v2731, %v2916
        %v2962 = vmul.f32 %v2733, %v2917
        %v2963 = vmul.f32 %v2735, %v2917
        %v2964 = vmul.f32 %v2737, %v2918
        %v2965 = vmul.f32 %v2739, %v2918
        %v2966 = vmul.f32 %v2741, %v2919
        %v2967 = vmul.f32 %v2743, %v2919
        %v2968 = vmul.f32 %v2745, %v2920
        %v2969 = vmul.f32 %v2747, %v2920
        %v2970 = vmul.f32 %v2749, %v2921
        %v2971 = vmul.f32 %v2751, %v2921
        %v2972 = vmul.f32 %v2753, %v2922
        %v2973 = vmul.f32 %v2755, %v2922
        %v2974 = vmul.f32 %v2757, %v2923
        %v2975 = vmul.f32 %v2759, %v2923
        %v2976 = vmul.f32 %v2761, %v2924
        %v2977 = vmul.f32 %v2763, %v2924
        %v2978 = vmul.f32 %v2765, %v2925
        %v2979 = vmul.f32 %v2767, %v2925
        %v2980 = vmul.f32 %v2769, %v2926
        %v2981 = vmul.f32 %v2771, %v2926
        %v2982 = vmul.f32 %v2773, %v2927
        %v2983 = vmul.f32 %v2775, %v2927
        %v2984 = vmul.f32 %v2777, %v2928
        %v2985 = vmul.f32 %v2779, %v2928
        %v2986 = vmul.f32 %v2781, %v2929
        %v2987 = vmul.f32 %v2783, %v2929
        %v2988 = vmul.f32 %v2785, %v2930
        %v2989 = vmul.f32 %v2787, %v2930
        %v2990 = vmul.f32 %v2789, %v2931
        %v2991 = vmul.f32 %v2791, %v2931
        %v2992 = vmul.f32 %v2793, %v2932
        %v2993 = vmul.f32 %v2795, %v2932
        %v2994 = vmul.f32 %v2797, %v2933
        %v2995 = vmul.f32 %v2799, %v2933
        %v2996 = vmul.f32 %v2801, %v2934
        %v2997 = vmul.f32 %v2803, %v2934
        %v2998 = vmul.f32 %v2805, %v2935
        %v2999 = vmul.f32 %v2807, %v2935
        %v3000 = vpack.c.bf16 %v2938, %v2936
        %v3001 = vpack.c.bf16 %v2939, %v2937
        %v3002 = vpack.c.bf16 %v2942, %v2940
        %v3003 = vpack.c.bf16 %v2943, %v2941
        %v3004 = vpack.c.bf16 %v2946, %v2944
        %v3005 = vpack.c.bf16 %v2947, %v2945
        %v3006 = vpack.c.bf16 %v2950, %v2948
        %v3007 = vpack.c.bf16 %v2951, %v2949
        %v3008 = vpack.c.bf16 %v2954, %v2952
        %v3009 = vpack.c.bf16 %v2955, %v2953
        %v3010 = vpack.c.bf16 %v2958, %v2956
        %v3011 = vpack.c.bf16 %v2959, %v2957
        %v3012 = vpack.c.bf16 %v2962, %v2960
        %v3013 = vpack.c.bf16 %v2963, %v2961
        %v3014 = vpack.c.bf16 %v2966, %v2964
        %v3015 = vpack.c.bf16 %v2967, %v2965
        %v3016 = vpack.c.bf16 %v2970, %v2968
        %v3017 = vpack.c.bf16 %v2971, %v2969
        %v3018 = vpack.c.bf16 %v2974, %v2972
        %v3019 = vpack.c.bf16 %v2975, %v2973
        %v3020 = vpack.c.bf16 %v2978, %v2976
        %v3021 = vpack.c.bf16 %v2979, %v2977
        %v3022 = vpack.c.bf16 %v2982, %v2980
        %v3023 = vpack.c.bf16 %v2983, %v2981
        %v3024 = vpack.c.bf16 %v2986, %v2984
        %v3025 = vpack.c.bf16 %v2987, %v2985
        %v3026 = vpack.c.bf16 %v2990, %v2988
        %v3027 = vpack.c.bf16 %v2991, %v2989
        %v3028 = vpack.c.bf16 %v2994, %v2992
        %v3029 = vpack.c.bf16 %v2995, %v2993
        %v3030 = vpack.c.bf16 %v2998, %v2996
        %v3031 = vpack.c.bf16 %v2999, %v2997
        %3032 = vmatprep.subr.bf16.mxu0 0
        %3033 = vmatpush1.bf16.msra.mxu0 %v2214
        %3034 = vmatprep.subr.bf16.mxu0 0
        %3035 = vmatpush1.bf16.msra.mxu0 %v2215
        %3036 = vmatprep.subr.bf16.mxu0 0
        %3037 = vmatpush1.bf16.msra.mxu0 %v2216
        %3038 = vmatprep.subr.bf16.mxu0 0
        %3039 = vmatpush1.bf16.msra.mxu0 %v2217
        %3040 = vmatprep.subr.bf16.mxu0 0
        %3041 = vmatpush1.bf16.msra.mxu0 %v2218
        %3042 = vmatprep.subr.bf16.mxu0 0
        %3043 = vmatpush1.bf16.msra.mxu0 %v2219
        %3044 = vmatprep.subr.bf16.mxu0 0
        %3045 = vmatpush1.bf16.msra.mxu0 %v2220
        %3046 = vmatprep.subr.bf16.mxu0 0
        %3047 = vmatpush1.bf16.msra.mxu0 %v2221
        %3048 = vmatprep.subr.bf16.mxu0 0
        %3049 = vmatpush1.bf16.msra.mxu0 %v2222
        %3050 = vmatprep.subr.bf16.mxu0 0
        %3051 = vmatpush1.bf16.msra.mxu0 %v2223
        %3052 = vmatprep.subr.bf16.mxu0 0
        %3053 = vmatpush1.bf16.msra.mxu0 %v2224
        %3054 = vmatprep.subr.bf16.mxu0 0
        %3055 = vmatpush1.bf16.msra.mxu0 %v2225
        %3056 = vmatprep.subr.bf16.mxu0 0
        %3057 = vmatpush1.bf16.msra.mxu0 %v2226
        %3058 = vmatprep.subr.bf16.mxu0 0
        %3059 = vmatpush1.bf16.msra.mxu0 %v2227
        %3060 = vmatprep.subr.bf16.mxu0 0
        %3061 = vmatpush1.bf16.msra.mxu0 %v2228
        %3062 = vmatprep.subr.bf16.mxu0 0
        %3063 = vmatpush1.bf16.msra.mxu0 %v2229
        %3064 = vmatprep.mubr.bf16.mxu0 %v3001
        %3065 = vmatmul.mubr.bf16.gmra.mrb[0].mxu0 %v3000
        %v3066 = vpop.f32.mrb[0].mxu0
        %v3067 = vadd.f32 0.0, %v3066
        %v3068 = vpop.f32.mrb[0].mxu0
        %v3069 = vpop.f32.mrb[0].mxu0
        %v3070 = vadd.f32 0.0, %v3069
        %v3071 = vpop.f32.mrb[0].mxu0
        %3072 = vmatprep.mubr.bf16.mxu0 %v3003
        %3073 = vmatmul.mubr.bf16.gmra.mrb[0].mxu0 %v3002
        %v3074 = vpop.f32.mrb[0].mxu0
        %v3075 = vadd.f32 0.0, %v3074
        %v3076 = vpop.f32.mrb[0].mxu0
        %v3077 = vpop.f32.mrb[0].mxu0
        %v3078 = vadd.f32 0.0, %v3077
        %v3079 = vpop.f32.mrb[0].mxu0
        %3080 = vmatprep.mubr.bf16.mxu0 %v3005
        %3081 = vmatmul.mubr.bf16.gmra.mrb[0].mxu0 %v3004
        %v3082 = vpop.f32.mrb[0].mxu0
        %v3083 = vadd.f32 0.0, %v3082
        %v3084 = vpop.f32.mrb[0].mxu0
        %v3085 = vpop.f32.mrb[0].mxu0
        %v3086 = vadd.f32 0.0, %v3085
        %v3087 = vpop.f32.mrb[0].mxu0
        %3088 = vmatprep.mubr.bf16.mxu0 %v3007
        %3089 = vmatmul.mubr.bf16.gmra.mrb[0].mxu0 %v3006
        %v3090 = vpop.f32.mrb[0].mxu0
        %v3091 = vadd.f32 0.0, %v3090
        %v3092 = vpop.f32.mrb[0].mxu0
        %v3093 = vpop.f32.mrb[0].mxu0
        %v3094 = vadd.f32 0.0, %v3093
        %v3095 = vpop.f32.mrb[0].mxu0
        %3096 = vmatprep.mubr.bf16.mxu0 %v3009
        %3097 = vmatmul.mubr.bf16.gmra.mrb[0].mxu0 %v3008
        %v3098 = vpop.f32.mrb[0].mxu0
        %v3099 = vadd.f32 0.0, %v3098
        %v3100 = vpop.f32.mrb[0].mxu0
        %v3101 = vpop.f32.mrb[0].mxu0
        %v3102 = vadd.f32 0.0, %v3101
        %v3103 = vpop.f32.mrb[0].mxu0
        %3104 = vmatprep.mubr.bf16.mxu0 %v3011
        %3105 = vmatmul.mubr.bf16.gmra.mrb[0].mxu0 %v3010
        %v3106 = vpop.f32.mrb[0].mxu0
        %v3107 = vadd.f32 0.0, %v3106
        %v3108 = vpop.f32.mrb[0].mxu0
        %v3109 = vpop.f32.mrb[0].mxu0
        %v3110 = vadd.f32 0.0, %v3109
        %v3111 = vpop.f32.mrb[0].mxu0
        %3112 = vmatprep.mubr.bf16.mxu0 %v3013
        %3113 = vmatmul.mubr.bf16.gmra.mrb[0].mxu0 %v3012
        %v3114 = vpop.f32.mrb[0].mxu0
        %v3115 = vadd.f32 0.0, %v3114
        %v3116 = vpop.f32.mrb[0].mxu0
        %v3117 = vpop.f32.mrb[0].mxu0
        %v3118 = vadd.f32 0.0, %v3117
        %v3119 = vpop.f32.mrb[0].mxu0
        %3120 = vmatprep.mubr.bf16.mxu0 %v3015
        %3121 = vmatmul.mubr.bf16.gmra.mrb[0].mxu0 %v3014
        %v3122 = vpop.f32.mrb[0].mxu0
        %v3123 = vadd.f32 0.0, %v3122
        %v3124 = vpop.f32.mrb[0].mxu0
        %v3125 = vpop.f32.mrb[0].mxu0
        %v3126 = vadd.f32 0.0, %v3125
        %v3127 = vpop.f32.mrb[0].mxu0
        %3128 = vmatprep.mubr.bf16.mxu0 %v3017
        %3129 = vmatmul.mubr.bf16.gmra.mrb[0].mxu0 %v3016
        %v3130 = vpop.f32.mrb[0].mxu0
        %v3131 = vadd.f32 0.0, %v3130
        %v3132 = vpop.f32.mrb[0].mxu0
        %v3133 = vpop.f32.mrb[0].mxu0
        %v3134 = vadd.f32 0.0, %v3133
        %v3135 = vpop.f32.mrb[0].mxu0
        %3136 = vmatprep.mubr.bf16.mxu0 %v3019
        %3137 = vmatmul.mubr.bf16.gmra.mrb[0].mxu0 %v3018
        %v3138 = vpop.f32.mrb[0].mxu0
        %v3139 = vadd.f32 0.0, %v3138
        %v3140 = vpop.f32.mrb[0].mxu0
        %v3141 = vpop.f32.mrb[0].mxu0
        %v3142 = vadd.f32 0.0, %v3141
        %v3143 = vpop.f32.mrb[0].mxu0
        %3144 = vmatprep.mubr.bf16.mxu0 %v3021
        %3145 = vmatmul.mubr.bf16.gmra.mrb[0].mxu0 %v3020
        %v3146 = vpop.f32.mrb[0].mxu0
        %v3147 = vadd.f32 0.0, %v3146
        %v3148 = vpop.f32.mrb[0].mxu0
        %v3149 = vpop.f32.mrb[0].mxu0
        %v3150 = vadd.f32 0.0, %v3149
        %v3151 = vpop.f32.mrb[0].mxu0
        %3152 = vmatprep.mubr.bf16.mxu0 %v3023
        %3153 = vmatmul.mubr.bf16.gmra.mrb[0].mxu0 %v3022
        %v3154 = vpop.f32.mrb[0].mxu0
        %v3155 = vadd.f32 0.0, %v3154
        %v3156 = vpop.f32.mrb[0].mxu0
        %v3157 = vpop.f32.mrb[0].mxu0
        %v3158 = vadd.f32 0.0, %v3157
        %v3159 = vpop.f32.mrb[0].mxu0
        %3160 = vmatprep.mubr.bf16.mxu0 %v3025
        %3161 = vmatmul.mubr.bf16.gmra.mrb[0].mxu0 %v3024
        %v3162 = vpop.f32.mrb[0].mxu0
        %v3163 = vadd.f32 0.0, %v3162
        %v3164 = vpop.f32.mrb[0].mxu0
        %v3165 = vpop.f32.mrb[0].mxu0
        %v3166 = vadd.f32 0.0, %v3165
        %v3167 = vpop.f32.mrb[0].mxu0
        %3168 = vmatprep.mubr.bf16.mxu0 %v3027
        %3169 = vmatmul.mubr.bf16.gmra.mrb[0].mxu0 %v3026
        %v3170 = vpop.f32.mrb[0].mxu0
        %v3171 = vadd.f32 0.0, %v3170
        %v3172 = vpop.f32.mrb[0].mxu0
        %v3173 = vpop.f32.mrb[0].mxu0
        %v3174 = vadd.f32 0.0, %v3173
        %v3175 = vpop.f32.mrb[0].mxu0
        %3176 = vmatprep.mubr.bf16.mxu0 %v3029
        %3177 = vmatmul.mubr.bf16.gmra.mrb[0].mxu0 %v3028
        %v3178 = vpop.f32.mrb[0].mxu0
        %v3179 = vadd.f32 0.0, %v3178
        %v3180 = vpop.f32.mrb[0].mxu0
        %v3181 = vpop.f32.mrb[0].mxu0
        %v3182 = vadd.f32 0.0, %v3181
        %v3183 = vpop.f32.mrb[0].mxu0
        %3184 = vmatprep.mubr.bf16.mxu0 %v3031
        %3185 = vmatmul.mubr.bf16.gmra.mrb[0].mxu0 %v3030
        %v3186 = vpop.f32.mrb[0].mxu0
        %v3187 = vadd.f32 0.0, %v3186
        %v3188 = vpop.f32.mrb[0].mxu0
        %v3189 = vpop.f32.mrb[0].mxu0
        %v3190 = vadd.f32 0.0, %v3189
        %v3191 = vpop.f32.mrb[0].mxu0
        %3192 = vdwg.mxu0
        %v3193 = vpack.c.bf16 %v3070, %v3067
        %v3194 = vpack.c.bf16 %v3078, %v3075
        %v3195 = vpack.c.bf16 %v3086, %v3083
        %v3196 = vpack.c.bf16 %v3094, %v3091
        %v3197 = vpack.c.bf16 %v3102, %v3099
        %v3198 = vpack.c.bf16 %v3110, %v3107
        %v3199 = vpack.c.bf16 %v3118, %v3115
        %v3200 = vpack.c.bf16 %v3126, %v3123
        %v3201 = vpack.c.bf16 %v3134, %v3131
        %v3202 = vpack.c.bf16 %v3142, %v3139
        %v3203 = vpack.c.bf16 %v3150, %v3147
        %v3204 = vpack.c.bf16 %v3158, %v3155
        %v3205 = vpack.c.bf16 %v3166, %v3163
        %v3206 = vpack.c.bf16 %v3174, %v3171
        %v3207 = vpack.c.bf16 %v3182, %v3179
        %v3208 = vpack.c.bf16 %v3190, %v3187
        %3225 = vrot.lane.b32.xlu0 %v2182, 120
        %v3226 = vpop.permute.xlu0 %3225
        %3227 = vrot.lane.b32.xlu0 %v2183, 120
        %v3228 = vpop.permute.xlu0 %3227
        %3229 = vrot.lane.b32.xlu0 %v2184, 120
        %v3230 = vpop.permute.xlu0 %3229
        %3231 = vrot.lane.b32.xlu0 %v2185, 120
        %v3232 = vpop.permute.xlu0 %3231
        %3233 = vrot.lane.b32.xlu0 %v2186, 120
        %v3234 = vpop.permute.xlu0 %3233
        %3235 = vrot.lane.b32.xlu0 %v2187, 120
        %v3236 = vpop.permute.xlu0 %3235
        %3237 = vrot.lane.b32.xlu0 %v2188, 120
        %v3238 = vpop.permute.xlu0 %3237
        %3239 = vrot.lane.b32.xlu0 %v2189, 120
        %v3240 = vpop.permute.xlu0 %3239
        %3241 = vrot.lane.b32.xlu0 %v2190, 120
        %v3242 = vpop.permute.xlu0 %3241
        %3243 = vrot.lane.b32.xlu0 %v2191, 120
        %v3244 = vpop.permute.xlu0 %3243
        %3245 = vrot.lane.b32.xlu0 %v2192, 120
        %v3246 = vpop.permute.xlu0 %3245
        %3247 = vrot.lane.b32.xlu0 %v2193, 120
        %v3248 = vpop.permute.xlu0 %3247
        %3249 = vrot.lane.b32.xlu0 %v2194, 120
        %v3250 = vpop.permute.xlu0 %3249
        %3251 = vrot.lane.b32.xlu0 %v2195, 120
        %v3252 = vpop.permute.xlu0 %3251
        %3253 = vrot.lane.b32.xlu0 %v2196, 120
        %v3254 = vpop.permute.xlu0 %3253
        %3255 = vrot.lane.b32.xlu0 %v2197, 120
        %v3256 = vpop.permute.xlu0 %3255
        %3273 = vrot.lane.b32.xlu0 %v2198, 120
        %v3274 = vpop.permute.xlu0 %3273
        %3275 = vrot.lane.b32.xlu0 %v2199, 120
        %v3276 = vpop.permute.xlu0 %3275
        %3277 = vrot.lane.b32.xlu0 %v2200, 120
        %v3278 = vpop.permute.xlu0 %3277
        %3279 = vrot.lane.b32.xlu0 %v2201, 120
        %v3280 = vpop.permute.xlu0 %3279
        %3281 = vrot.lane.b32.xlu0 %v2202, 120
        %v3282 = vpop.permute.xlu0 %3281
        %3283 = vrot.lane.b32.xlu0 %v2203, 120
        %v3284 = vpop.permute.xlu0 %3283
        %3285 = vrot.lane.b32.xlu0 %v2204, 120
        %v3286 = vpop.permute.xlu0 %3285
        %3287 = vrot.lane.b32.xlu0 %v2205, 120
        %v3288 = vpop.permute.xlu0 %3287
        %3289 = vrot.lane.b32.xlu0 %v2206, 120
        %v3290 = vpop.permute.xlu0 %3289
        %3291 = vrot.lane.b32.xlu0 %v2207, 120
        %v3292 = vpop.permute.xlu0 %3291
        %3293 = vrot.lane.b32.xlu0 %v2208, 120
        %v3294 = vpop.permute.xlu0 %3293
        %3295 = vrot.lane.b32.xlu0 %v2209, 120
        %v3296 = vpop.permute.xlu0 %3295
        %3297 = vrot.lane.b32.xlu0 %v2210, 120
        %v3298 = vpop.permute.xlu0 %3297
        %3299 = vrot.lane.b32.xlu0 %v2211, 120
        %v3300 = vpop.permute.xlu0 %3299
        %3301 = vrot.lane.b32.xlu0 %v2212, 120
        %v3302 = vpop.permute.xlu0 %3301
        %3303 = vrot.lane.b32.xlu0 %v2213, 120
        %v3304 = vpop.permute.xlu0 %3303
        %v3306 = vsel %vm2230, %v3226, 0
        %v3309 = vsel %vm2230, %v3228, 0
        %v3312 = vsel %vm2230, %v3230, 0
        %v3315 = vsel %vm2230, %v3232, 0
        %v3318 = vsel %vm2230, %v3234, 0
        %v3321 = vsel %vm2230, %v3236, 0
        %v3324 = vsel %vm2230, %v3238, 0
        %v3327 = vsel %vm2230, %v3240, 0
        %v3330 = vsel %vm2230, %v3242, 0
        %v3333 = vsel %vm2230, %v3244, 0
        %v3336 = vsel %vm2230, %v3246, 0
        %v3339 = vsel %vm2230, %v3248, 0
        %v3342 = vsel %vm2230, %v3250, 0
        %v3345 = vsel %vm2230, %v3252, 0
        %v3348 = vsel %vm2230, %v3254, 0
        %v3351 = vsel %vm2230, %v3256, 0
        %v3354 = vsel %vm2230, %v3274, 0
        %v3357 = vsel %vm2230, %v3276, 0
        %v3360 = vsel %vm2230, %v3278, 0
        %v3363 = vsel %vm2230, %v3280, 0
        %v3366 = vsel %vm2230, %v3282, 0
        %v3369 = vsel %vm2230, %v3284, 0
        %v3372 = vsel %vm2230, %v3286, 0
        %v3375 = vsel %vm2230, %v3288, 0
        %v3378 = vsel %vm2230, %v3290, 0
        %v3381 = vsel %vm2230, %v3292, 0
        %v3384 = vsel %vm2230, %v3294, 0
        %v3387 = vsel %vm2230, %v3296, 0
        %v3390 = vsel %vm2230, %v3298, 0
        %v3393 = vsel %vm2230, %v3300, 0
        %v3396 = vsel %vm2230, %v3302, 0
        %v3399 = vsel %vm2230, %v3304, 0
        %3401 = vmatprep.subr.bf16.mxu0 0
        %3402 = vmatpush1.bf16.xpose.msra.mxu0 %v3354
        %3403 = vmatprep.subr.bf16.mxu0 0
        %3404 = vmatpush1.bf16.xpose.msra.mxu0 %v3357
        %3405 = vmatprep.subr.bf16.mxu0 0
        %3406 = vmatpush1.bf16.xpose.msra.mxu0 %v3360
        %3407 = vmatprep.subr.bf16.mxu0 0
        %3408 = vmatpush1.bf16.xpose.msra.mxu0 %v3363
        %3409 = vmatprep.subr.bf16.mxu0 0
        %3410 = vmatpush1.bf16.xpose.msra.mxu0 %v3366
        %3411 = vmatprep.subr.bf16.mxu0 0
        %3412 = vmatpush1.bf16.xpose.msra.mxu0 %v3369
        %3413 = vmatprep.subr.bf16.mxu0 0
        %3414 = vmatpush1.bf16.xpose.msra.mxu0 %v3372
        %3415 = vmatprep.subr.bf16.mxu0 0
        %3416 = vmatpush1.bf16.xpose.msra.mxu0 %v3375
        %3417 = vmatprep.subr.bf16.mxu0 0
        %3418 = vmatpush1.bf16.xpose.msra.mxu0 %v3378
        %3419 = vmatprep.subr.bf16.mxu0 0
        %3420 = vmatpush1.bf16.xpose.msra.mxu0 %v3381
        %3421 = vmatprep.subr.bf16.mxu0 0
        %3422 = vmatpush1.bf16.xpose.msra.mxu0 %v3384
        %3423 = vmatprep.subr.bf16.mxu0 0
        %3424 = vmatpush1.bf16.xpose.msra.mxu0 %v3387
        %3425 = vmatprep.subr.bf16.mxu0 0
        %3426 = vmatpush1.bf16.xpose.msra.mxu0 %v3390
        %3427 = vmatprep.subr.bf16.mxu0 0
        %3428 = vmatpush1.bf16.xpose.msra.mxu0 %v3393
        %3429 = vmatprep.subr.bf16.mxu0 0
        %3430 = vmatpush1.bf16.xpose.msra.mxu0 %v3396
        %3431 = vmatprep.subr.bf16.mxu0 0
        %3432 = vmatpush1.bf16.xpose.msra.mxu0 %v3399
        %3433 = vmatprep.mubr.bf16.mxu0 0
        %3434 = vmatmul.mubr.bf16.gmra.mrb[0].mxu0 %v3306
        %v3435 = vpop.f32.mrb[0].mxu0
        %v3436 = vadd.f32 0.0, %v3435
        %v3437 = vpop.f32.mrb[0].mxu0
        %v3438 = vadd.f32 0.0, %v3437
        %v3439 = vpop.f32.mrb[0].mxu0
        %v3440 = vadd.f32 0.0, %v3439
        %v3441 = vpop.f32.mrb[0].mxu0
        %v3442 = vadd.f32 0.0, %v3441
        %3443 = vmatprep.mubr.bf16.mxu0 0
        %3444 = vmatmul.mubr.bf16.gmra.mrb[0].mxu0 %v3309
        %v3445 = vpop.f32.mrb[0].mxu0
        %v3446 = vadd.f32 0.0, %v3445
        %v3447 = vpop.f32.mrb[0].mxu0
        %v3448 = vadd.f32 0.0, %v3447
        %v3449 = vpop.f32.mrb[0].mxu0
        %v3450 = vadd.f32 0.0, %v3449
        %v3451 = vpop.f32.mrb[0].mxu0
        %v3452 = vadd.f32 0.0, %v3451
        %3453 = vmatprep.mubr.bf16.mxu0 0
        %3454 = vmatmul.mubr.bf16.gmra.mrb[0].mxu0 %v3312
        %v3455 = vpop.f32.mrb[0].mxu0
        %v3456 = vadd.f32 0.0, %v3455
        %v3457 = vpop.f32.mrb[0].mxu0
        %v3458 = vadd.f32 0.0, %v3457
        %v3459 = vpop.f32.mrb[0].mxu0
        %v3460 = vadd.f32 0.0, %v3459
        %v3461 = vpop.f32.mrb[0].mxu0
        %v3462 = vadd.f32 0.0, %v3461
        %3463 = vmatprep.mubr.bf16.mxu0 0
        %3464 = vmatmul.mubr.bf16.gmra.mrb[0].mxu0 %v3315
        %v3465 = vpop.f32.mrb[0].mxu0
        %v3466 = vadd.f32 0.0, %v3465
        %v3467 = vpop.f32.mrb[0].mxu0
        %v3468 = vadd.f32 0.0, %v3467
        %v3469 = vpop.f32.mrb[0].mxu0
        %v3470 = vadd.f32 0.0, %v3469
        %v3471 = vpop.f32.mrb[0].mxu0
        %v3472 = vadd.f32 0.0, %v3471
        %3473 = vmatprep.mubr.bf16.mxu0 0
        %3474 = vmatmul.mubr.bf16.gmra.mrb[0].mxu0 %v3318
        %v3475 = vpop.f32.mrb[0].mxu0
        %v3476 = vadd.f32 0.0, %v3475
        %v3477 = vpop.f32.mrb[0].mxu0
        %v3478 = vadd.f32 0.0, %v3477
        %v3479 = vpop.f32.mrb[0].mxu0
        %v3480 = vadd.f32 0.0, %v3479
        %v3481 = vpop.f32.mrb[0].mxu0
        %v3482 = vadd.f32 0.0, %v3481
        %3483 = vmatprep.mubr.bf16.mxu0 0
        %3484 = vmatmul.mubr.bf16.gmra.mrb[0].mxu0 %v3321
        %v3485 = vpop.f32.mrb[0].mxu0
        %v3486 = vadd.f32 0.0, %v3485
        %v3487 = vpop.f32.mrb[0].mxu0
        %v3488 = vadd.f32 0.0, %v3487
        %v3489 = vpop.f32.mrb[0].mxu0
        %v3490 = vadd.f32 0.0, %v3489
        %v3491 = vpop.f32.mrb[0].mxu0
        %v3492 = vadd.f32 0.0, %v3491
        %3493 = vmatprep.mubr.bf16.mxu0 0
        %3494 = vmatmul.mubr.bf16.gmra.mrb[0].mxu0 %v3324
        %v3495 = vpop.f32.mrb[0].mxu0
        %v3496 = vadd.f32 0.0, %v3495
        %v3497 = vpop.f32.mrb[0].mxu0
        %v3498 = vadd.f32 0.0, %v3497
        %v3499 = vpop.f32.mrb[0].mxu0
        %v3500 = vadd.f32 0.0, %v3499
        %v3501 = vpop.f32.mrb[0].mxu0
        %v3502 = vadd.f32 0.0, %v3501
        %3503 = vmatprep.mubr.bf16.mxu0 0
        %3504 = vmatmul.mubr.bf16.gmra.mrb[0].mxu0 %v3327
        %v3505 = vpop.f32.mrb[0].mxu0
        %v3506 = vadd.f32 0.0, %v3505
        %v3507 = vpop.f32.mrb[0].mxu0
        %v3508 = vadd.f32 0.0, %v3507
        %v3509 = vpop.f32.mrb[0].mxu0
        %v3510 = vadd.f32 0.0, %v3509
        %v3511 = vpop.f32.mrb[0].mxu0
        %v3512 = vadd.f32 0.0, %v3511
        %3513 = vmatprep.mubr.bf16.mxu0 0
        %3514 = vmatmul.mubr.bf16.gmra.mrb[0].mxu0 %v3330
        %v3515 = vpop.f32.mrb[0].mxu0
        %v3516 = vadd.f32 0.0, %v3515
        %v3517 = vpop.f32.mrb[0].mxu0
        %v3518 = vadd.f32 0.0, %v3517
        %v3519 = vpop.f32.mrb[0].mxu0
        %v3520 = vadd.f32 0.0, %v3519
        %v3521 = vpop.f32.mrb[0].mxu0
        %v3522 = vadd.f32 0.0, %v3521
        %3523 = vmatprep.mubr.bf16.mxu0 0
        %3524 = vmatmul.mubr.bf16.gmra.mrb[0].mxu0 %v3333
        %v3525 = vpop.f32.mrb[0].mxu0
        %v3526 = vadd.f32 0.0, %v3525
        %v3527 = vpop.f32.mrb[0].mxu0
        %v3528 = vadd.f32 0.0, %v3527
        %v3529 = vpop.f32.mrb[0].mxu0
        %v3530 = vadd.f32 0.0, %v3529
        %v3531 = vpop.f32.mrb[0].mxu0
        %v3532 = vadd.f32 0.0, %v3531
        %3533 = vmatprep.mubr.bf16.mxu0 0
        %3534 = vmatmul.mubr.bf16.gmra.mrb[0].mxu0 %v3336
        %v3535 = vpop.f32.mrb[0].mxu0
        %v3536 = vadd.f32 0.0, %v3535
        %v3537 = vpop.f32.mrb[0].mxu0
        %v3538 = vadd.f32 0.0, %v3537
        %v3539 = vpop.f32.mrb[0].mxu0
        %v3540 = vadd.f32 0.0, %v3539
        %v3541 = vpop.f32.mrb[0].mxu0
        %v3542 = vadd.f32 0.0, %v3541
        %3543 = vmatprep.mubr.bf16.mxu0 0
        %3544 = vmatmul.mubr.bf16.gmra.mrb[0].mxu0 %v3339
        %v3545 = vpop.f32.mrb[0].mxu0
        %v3546 = vadd.f32 0.0, %v3545
        %v3547 = vpop.f32.mrb[0].mxu0
        %v3548 = vadd.f32 0.0, %v3547
        %v3549 = vpop.f32.mrb[0].mxu0
        %v3550 = vadd.f32 0.0, %v3549
        %v3551 = vpop.f32.mrb[0].mxu0
        %v3552 = vadd.f32 0.0, %v3551
        %3553 = vmatprep.mubr.bf16.mxu0 0
        %3554 = vmatmul.mubr.bf16.gmra.mrb[0].mxu0 %v3342
        %v3555 = vpop.f32.mrb[0].mxu0
        %v3556 = vadd.f32 0.0, %v3555
        %v3557 = vpop.f32.mrb[0].mxu0
        %v3558 = vadd.f32 0.0, %v3557
        %v3559 = vpop.f32.mrb[0].mxu0
        %v3560 = vadd.f32 0.0, %v3559
        %v3561 = vpop.f32.mrb[0].mxu0
        %v3562 = vadd.f32 0.0, %v3561
        %3563 = vmatprep.mubr.bf16.mxu0 0
        %3564 = vmatmul.mubr.bf16.gmra.mrb[0].mxu0 %v3345
        %v3565 = vpop.f32.mrb[0].mxu0
        %v3566 = vadd.f32 0.0, %v3565
        %v3567 = vpop.f32.mrb[0].mxu0
        %v3568 = vadd.f32 0.0, %v3567
        %v3569 = vpop.f32.mrb[0].mxu0
        %v3570 = vadd.f32 0.0, %v3569
        %v3571 = vpop.f32.mrb[0].mxu0
        %v3572 = vadd.f32 0.0, %v3571
        %3573 = vmatprep.mubr.bf16.mxu0 0
        %3574 = vmatmul.mubr.bf16.gmra.mrb[0].mxu0 %v3348
        %v3575 = vpop.f32.mrb[0].mxu0
        %v3576 = vadd.f32 0.0, %v3575
        %v3577 = vpop.f32.mrb[0].mxu0
        %v3578 = vadd.f32 0.0, %v3577
        %v3579 = vpop.f32.mrb[0].mxu0
        %v3580 = vadd.f32 0.0, %v3579
        %v3581 = vpop.f32.mrb[0].mxu0
        %v3582 = vadd.f32 0.0, %v3581
        %3583 = vmatprep.mubr.bf16.mxu0 0
        %3584 = vmatmul.mubr.bf16.gmra.mrb[0].mxu0 %v3351
        %v3585 = vpop.f32.mrb[0].mxu0
        %v3586 = vadd.f32 0.0, %v3585
        %v3587 = vpop.f32.mrb[0].mxu0
        %v3588 = vadd.f32 0.0, %v3587
        %v3589 = vpop.f32.mrb[0].mxu0
        %v3590 = vadd.f32 0.0, %v3589
        %v3591 = vpop.f32.mrb[0].mxu0
        %v3592 = vadd.f32 0.0, %v3591
        %3593 = vdwg.mxu0
        %v3594 = vmax.f32 %v3436, %v3438
        %3595 = vmax.xlane.f32.xlu0 %v3594
        %v3596 = vpop.xlane.xlu0 %3595
        %v3597 = vmax.f32 %v3440, %v3442
        %3598 = vmax.xlane.f32.xlu0 %v3597
        %v3599 = vpop.xlane.xlu0 %3598
        %v3600 = vmax.f32 %v3446, %v3448
        %3601 = vmax.xlane.f32.xlu0 %v3600
        %v3602 = vpop.xlane.xlu0 %3601
        %v3603 = vmax.f32 %v3450, %v3452
        %3604 = vmax.xlane.f32.xlu0 %v3603
        %v3605 = vpop.xlane.xlu0 %3604
        %v3606 = vmax.f32 %v3456, %v3458
        %3607 = vmax.xlane.f32.xlu0 %v3606
        %v3608 = vpop.xlane.xlu0 %3607
        %v3609 = vmax.f32 %v3460, %v3462
        %3610 = vmax.xlane.f32.xlu0 %v3609
        %v3611 = vpop.xlane.xlu0 %3610
        %v3612 = vmax.f32 %v3466, %v3468
        %3613 = vmax.xlane.f32.xlu0 %v3612
        %v3614 = vpop.xlane.xlu0 %3613
        %v3615 = vmax.f32 %v3470, %v3472
        %3616 = vmax.xlane.f32.xlu0 %v3615
        %v3617 = vpop.xlane.xlu0 %3616
        %v3618 = vmax.f32 %v3476, %v3478
        %3619 = vmax.xlane.f32.xlu0 %v3618
        %v3620 = vpop.xlane.xlu0 %3619
        %v3621 = vmax.f32 %v3480, %v3482
        %3622 = vmax.xlane.f32.xlu0 %v3621
        %v3623 = vpop.xlane.xlu0 %3622
        %v3624 = vmax.f32 %v3486, %v3488
        %3625 = vmax.xlane.f32.xlu0 %v3624
        %v3626 = vpop.xlane.xlu0 %3625
        %v3627 = vmax.f32 %v3490, %v3492
        %3628 = vmax.xlane.f32.xlu0 %v3627
        %v3629 = vpop.xlane.xlu0 %3628
        %v3630 = vmax.f32 %v3496, %v3498
        %3631 = vmax.xlane.f32.xlu0 %v3630
        %v3632 = vpop.xlane.xlu0 %3631
        %v3633 = vmax.f32 %v3500, %v3502
        %3634 = vmax.xlane.f32.xlu0 %v3633
        %v3635 = vpop.xlane.xlu0 %3634
        %v3636 = vmax.f32 %v3506, %v3508
        %3637 = vmax.xlane.f32.xlu0 %v3636
        %v3638 = vpop.xlane.xlu0 %3637
        %v3639 = vmax.f32 %v3510, %v3512
        %3640 = vmax.xlane.f32.xlu0 %v3639
        %v3641 = vpop.xlane.xlu0 %3640
        %v3642 = vmax.f32 %v3516, %v3518
        %3643 = vmax.xlane.f32.xlu0 %v3642
        %v3644 = vpop.xlane.xlu0 %3643
        %v3645 = vmax.f32 %v3520, %v3522
        %3646 = vmax.xlane.f32.xlu0 %v3645
        %v3647 = vpop.xlane.xlu0 %3646
        %v3648 = vmax.f32 %v3526, %v3528
        %3649 = vmax.xlane.f32.xlu0 %v3648
        %v3650 = vpop.xlane.xlu0 %3649
        %v3651 = vmax.f32 %v3530, %v3532
        %3652 = vmax.xlane.f32.xlu0 %v3651
        %v3653 = vpop.xlane.xlu0 %3652
        %v3654 = vmax.f32 %v3536, %v3538
        %3655 = vmax.xlane.f32.xlu0 %v3654
        %v3656 = vpop.xlane.xlu0 %3655
        %v3657 = vmax.f32 %v3540, %v3542
        %3658 = vmax.xlane.f32.xlu0 %v3657
        %v3659 = vpop.xlane.xlu0 %3658
        %v3660 = vmax.f32 %v3546, %v3548
        %3661 = vmax.xlane.f32.xlu0 %v3660
        %v3662 = vpop.xlane.xlu0 %3661
        %v3663 = vmax.f32 %v3550, %v3552
        %3664 = vmax.xlane.f32.xlu0 %v3663
        %v3665 = vpop.xlane.xlu0 %3664
        %v3666 = vmax.f32 %v3556, %v3558
        %3667 = vmax.xlane.f32.xlu0 %v3666
        %v3668 = vpop.xlane.xlu0 %3667
        %v3669 = vmax.f32 %v3560, %v3562
        %3670 = vmax.xlane.f32.xlu0 %v3669
        %v3671 = vpop.xlane.xlu0 %3670
        %v3672 = vmax.f32 %v3566, %v3568
        %3673 = vmax.xlane.f32.xlu0 %v3672
        %v3674 = vpop.xlane.xlu0 %3673
        %v3675 = vmax.f32 %v3570, %v3572
        %3676 = vmax.xlane.f32.xlu0 %v3675
        %v3677 = vpop.xlane.xlu0 %3676
        %v3678 = vmax.f32 %v3576, %v3578
        %3679 = vmax.xlane.f32.xlu0 %v3678
        %v3680 = vpop.xlane.xlu0 %3679
        %v3681 = vmax.f32 %v3580, %v3582
        %3682 = vmax.xlane.f32.xlu0 %v3681
        %v3683 = vpop.xlane.xlu0 %3682
        %v3684 = vmax.f32 %v3586, %v3588
        %3685 = vmax.xlane.f32.xlu0 %v3684
        %v3686 = vpop.xlane.xlu0 %3685
        %v3687 = vmax.f32 %v3590, %v3592
        %3688 = vmax.xlane.f32.xlu0 %v3687
        %v3689 = vpop.xlane.xlu0 %3688
        %v3690 = vsub.f32 %v3436, %v3596
        %v3691 = vsub.f32 %v3438, %v3596
        %v3692 = vsub.f32 %v3440, %v3599
        %v3693 = vsub.f32 %v3442, %v3599
        %v3694 = vsub.f32 %v3446, %v3602
        %v3695 = vsub.f32 %v3448, %v3602
        %v3696 = vsub.f32 %v3450, %v3605
        %v3697 = vsub.f32 %v3452, %v3605
        %v3698 = vsub.f32 %v3456, %v3608
        %v3699 = vsub.f32 %v3458, %v3608
        %v3700 = vsub.f32 %v3460, %v3611
        %v3701 = vsub.f32 %v3462, %v3611
        %v3702 = vsub.f32 %v3466, %v3614
        %v3703 = vsub.f32 %v3468, %v3614
        %v3704 = vsub.f32 %v3470, %v3617
        %v3705 = vsub.f32 %v3472, %v3617
        %v3706 = vsub.f32 %v3476, %v3620
        %v3707 = vsub.f32 %v3478, %v3620
        %v3708 = vsub.f32 %v3480, %v3623
        %v3709 = vsub.f32 %v3482, %v3623
        %v3710 = vsub.f32 %v3486, %v3626
        %v3711 = vsub.f32 %v3488, %v3626
        %v3712 = vsub.f32 %v3490, %v3629
        %v3713 = vsub.f32 %v3492, %v3629
        %v3714 = vsub.f32 %v3496, %v3632
        %v3715 = vsub.f32 %v3498, %v3632
        %v3716 = vsub.f32 %v3500, %v3635
        %v3717 = vsub.f32 %v3502, %v3635
        %v3718 = vsub.f32 %v3506, %v3638
        %v3719 = vsub.f32 %v3508, %v3638
        %v3720 = vsub.f32 %v3510, %v3641
        %v3721 = vsub.f32 %v3512, %v3641
        %v3722 = vsub.f32 %v3516, %v3644
        %v3723 = vsub.f32 %v3518, %v3644
        %v3724 = vsub.f32 %v3520, %v3647
        %v3725 = vsub.f32 %v3522, %v3647
        %v3726 = vsub.f32 %v3526, %v3650
        %v3727 = vsub.f32 %v3528, %v3650
        %v3728 = vsub.f32 %v3530, %v3653
        %v3729 = vsub.f32 %v3532, %v3653
        %v3730 = vsub.f32 %v3536, %v3656
        %v3731 = vsub.f32 %v3538, %v3656
        %v3732 = vsub.f32 %v3540, %v3659
        %v3733 = vsub.f32 %v3542, %v3659
        %v3734 = vsub.f32 %v3546, %v3662
        %v3735 = vsub.f32 %v3548, %v3662
        %v3736 = vsub.f32 %v3550, %v3665
        %v3737 = vsub.f32 %v3552, %v3665
        %v3738 = vsub.f32 %v3556, %v3668
        %v3739 = vsub.f32 %v3558, %v3668
        %v3740 = vsub.f32 %v3560, %v3671
        %v3741 = vsub.f32 %v3562, %v3671
        %v3742 = vsub.f32 %v3566, %v3674
        %v3743 = vsub.f32 %v3568, %v3674
        %v3744 = vsub.f32 %v3570, %v3677
        %v3745 = vsub.f32 %v3572, %v3677
        %v3746 = vsub.f32 %v3576, %v3680
        %v3747 = vsub.f32 %v3578, %v3680
        %v3748 = vsub.f32 %v3580, %v3683
        %v3749 = vsub.f32 %v3582, %v3683
        %v3750 = vsub.f32 %v3586, %v3686
        %v3751 = vsub.f32 %v3588, %v3686
        %v3752 = vsub.f32 %v3590, %v3689
        %v3753 = vsub.f32 %v3592, %v3689
        %v3754 = vmul.f32 %v3690, 1.442695
        %v3755 = vpow.pop %v3754
        %v3756 = vmul.f32 %v3691, 1.442695
        %v3757 = vpow.pop %v3756
        %v3758 = vmul.f32 %v3692, 1.442695
        %v3759 = vpow.pop %v3758
        %v3760 = vmul.f32 %v3693, 1.442695
        %v3761 = vpow.pop %v3760
        %v3762 = vmul.f32 %v3694, 1.442695
        %v3763 = vpow.pop %v3762
        %v3764 = vmul.f32 %v3695, 1.442695
        %v3765 = vpow.pop %v3764
        %v3766 = vmul.f32 %v3696, 1.442695
        %v3767 = vpow.pop %v3766
        %v3768 = vmul.f32 %v3697, 1.442695
        %v3769 = vpow.pop %v3768
        %v3770 = vmul.f32 %v3698, 1.442695
        %v3771 = vpow.pop %v3770
        %v3772 = vmul.f32 %v3699, 1.442695
        %v3773 = vpow.pop %v3772
        %v3774 = vmul.f32 %v3700, 1.442695
        %v3775 = vpow.pop %v3774
        %v3776 = vmul.f32 %v3701, 1.442695
        %v3777 = vpow.pop %v3776
        %v3778 = vmul.f32 %v3702, 1.442695
        %v3779 = vpow.pop %v3778
        %v3780 = vmul.f32 %v3703, 1.442695
        %v3781 = vpow.pop %v3780
        %v3782 = vmul.f32 %v3704, 1.442695
        %v3783 = vpow.pop %v3782
        %v3784 = vmul.f32 %v3705, 1.442695
        %v3785 = vpow.pop %v3784
        %v3786 = vmul.f32 %v3706, 1.442695
        %v3787 = vpow.pop %v3786
        %v3788 = vmul.f32 %v3707, 1.442695
        %v3789 = vpow.pop %v3788
        %v3790 = vmul.f32 %v3708, 1.442695
        %v3791 = vpow.pop %v3790
        %v3792 = vmul.f32 %v3709, 1.442695
        %v3793 = vpow.pop %v3792
        %v3794 = vmul.f32 %v3710, 1.442695
        %v3795 = vpow.pop %v3794
        %v3796 = vmul.f32 %v3711, 1.442695
        %v3797 = vpow.pop %v3796
        %v3798 = vmul.f32 %v3712, 1.442695
        %v3799 = vpow.pop %v3798
        %v3800 = vmul.f32 %v3713, 1.442695
        %v3801 = vpow.pop %v3800
        %v3802 = vmul.f32 %v3714, 1.442695
        %v3803 = vpow.pop %v3802
        %v3804 = vmul.f32 %v3715, 1.442695
        %v3805 = vpow.pop %v3804
        %v3806 = vmul.f32 %v3716, 1.442695
        %v3807 = vpow.pop %v3806
        %v3808 = vmul.f32 %v3717, 1.442695
        %v3809 = vpow.pop %v3808
        %v3810 = vmul.f32 %v3718, 1.442695
        %v3811 = vpow.pop %v3810
        %v3812 = vmul.f32 %v3719, 1.442695
        %v3813 = vpow.pop %v3812
        %v3814 = vmul.f32 %v3720, 1.442695
        %v3815 = vpow.pop %v3814
        %v3816 = vmul.f32 %v3721, 1.442695
        %v3817 = vpow.pop %v3816
        %v3818 = vmul.f32 %v3722, 1.442695
        %v3819 = vpow.pop %v3818
        %v3820 = vmul.f32 %v3723, 1.442695
        %v3821 = vpow.pop %v3820
        %v3822 = vmul.f32 %v3724, 1.442695
        %v3823 = vpow.pop %v3822
        %v3824 = vmul.f32 %v3725, 1.442695
        %v3825 = vpow.pop %v3824
        %v3826 = vmul.f32 %v3726, 1.442695
        %v3827 = vpow.pop %v3826
        %v3828 = vmul.f32 %v3727, 1.442695
        %v3829 = vpow.pop %v3828
        %v3830 = vmul.f32 %v3728, 1.442695
        %v3831 = vpow.pop %v3830
        %v3832 = vmul.f32 %v3729, 1.442695
        %v3833 = vpow.pop %v3832
        %v3834 = vmul.f32 %v3730, 1.442695
        %v3835 = vpow.pop %v3834
        %v3836 = vmul.f32 %v3731, 1.442695
        %v3837 = vpow.pop %v3836
        %v3838 = vmul.f32 %v3732, 1.442695
        %v3839 = vpow.pop %v3838
        %v3840 = vmul.f32 %v3733, 1.442695
        %v3841 = vpow.pop %v3840
        %v3842 = vmul.f32 %v3734, 1.442695
        %v3843 = vpow.pop %v3842
        %v3844 = vmul.f32 %v3735, 1.442695
        %v3845 = vpow.pop %v3844
        %v3846 = vmul.f32 %v3736, 1.442695
        %v3847 = vpow.pop %v3846
        %v3848 = vmul.f32 %v3737, 1.442695
        %v3849 = vpow.pop %v3848
        %v3850 = vmul.f32 %v3738, 1.442695
        %v3851 = vpow.pop %v3850
        %v3852 = vmul.f32 %v3739, 1.442695
        %v3853 = vpow.pop %v3852
        %v3854 = vmul.f32 %v3740, 1.442695
        %v3855 = vpow.pop %v3854
        %v3856 = vmul.f32 %v3741, 1.442695
        %v3857 = vpow.pop %v3856
        %v3858 = vmul.f32 %v3742, 1.442695
        %v3859 = vpow.pop %v3858
        %v3860 = vmul.f32 %v3743, 1.442695
        %v3861 = vpow.pop %v3860
        %v3862 = vmul.f32 %v3744, 1.442695
        %v3863 = vpow.pop %v3862
        %v3864 = vmul.f32 %v3745, 1.442695
        %v3865 = vpow.pop %v3864
        %v3866 = vmul.f32 %v3746, 1.442695
        %v3867 = vpow.pop %v3866
        %v3868 = vmul.f32 %v3747, 1.442695
        %v3869 = vpow.pop %v3868
        %v3870 = vmul.f32 %v3748, 1.442695
        %v3871 = vpow.pop %v3870
        %v3872 = vmul.f32 %v3749, 1.442695
        %v3873 = vpow.pop %v3872
        %v3874 = vmul.f32 %v3750, 1.442695
        %v3875 = vpow.pop %v3874
        %v3876 = vmul.f32 %v3751, 1.442695
        %v3877 = vpow.pop %v3876
        %v3878 = vmul.f32 %v3752, 1.442695
        %v3879 = vpow.pop %v3878
        %v3880 = vmul.f32 %v3753, 1.442695
        %v3881 = vpow.pop %v3880
        %v3882 = vadd.f32 %v3755, %v3757
        %3883 = vadd.xlane.f32.xlu0 %v3882
        %v3884 = vpop.xlane.xlu0 %3883
        %v3885 = vadd.f32 %v3759, %v3761
        %3886 = vadd.xlane.f32.xlu0 %v3885
        %v3887 = vpop.xlane.xlu0 %3886
        %v3888 = vadd.f32 %v3763, %v3765
        %3889 = vadd.xlane.f32.xlu0 %v3888
        %v3890 = vpop.xlane.xlu0 %3889
        %v3891 = vadd.f32 %v3767, %v3769
        %3892 = vadd.xlane.f32.xlu0 %v3891
        %v3893 = vpop.xlane.xlu0 %3892
        %v3894 = vadd.f32 %v3771, %v3773
        %3895 = vadd.xlane.f32.xlu0 %v3894
        %v3896 = vpop.xlane.xlu0 %3895
        %v3897 = vadd.f32 %v3775, %v3777
        %3898 = vadd.xlane.f32.xlu0 %v3897
        %v3899 = vpop.xlane.xlu0 %3898
        %v3900 = vadd.f32 %v3779, %v3781
        %3901 = vadd.xlane.f32.xlu0 %v3900
        %v3902 = vpop.xlane.xlu0 %3901
        %v3903 = vadd.f32 %v3783, %v3785
        %3904 = vadd.xlane.f32.xlu0 %v3903
        %v3905 = vpop.xlane.xlu0 %3904
        %v3906 = vadd.f32 %v3787, %v3789
        %3907 = vadd.xlane.f32.xlu0 %v3906
        %v3908 = vpop.xlane.xlu0 %3907
        %v3909 = vadd.f32 %v3791, %v3793
        %3910 = vadd.xlane.f32.xlu0 %v3909
        %v3911 = vpop.xlane.xlu0 %3910
        %v3912 = vadd.f32 %v3795, %v3797
        %3913 = vadd.xlane.f32.xlu0 %v3912
        %v3914 = vpop.xlane.xlu0 %3913
        %v3915 = vadd.f32 %v3799, %v3801
        %3916 = vadd.xlane.f32.xlu0 %v3915
        %v3917 = vpop.xlane.xlu0 %3916
        %v3918 = vadd.f32 %v3803, %v3805
        %3919 = vadd.xlane.f32.xlu0 %v3918
        %v3920 = vpop.xlane.xlu0 %3919
        %v3921 = vadd.f32 %v3807, %v3809
        %3922 = vadd.xlane.f32.xlu0 %v3921
        %v3923 = vpop.xlane.xlu0 %3922
        %v3924 = vadd.f32 %v3811, %v3813
        %3925 = vadd.xlane.f32.xlu0 %v3924
        %v3926 = vpop.xlane.xlu0 %3925
        %v3927 = vadd.f32 %v3815, %v3817
        %3928 = vadd.xlane.f32.xlu0 %v3927
        %v3929 = vpop.xlane.xlu0 %3928
        %v3930 = vadd.f32 %v3819, %v3821
        %3931 = vadd.xlane.f32.xlu0 %v3930
        %v3932 = vpop.xlane.xlu0 %3931
        %v3933 = vadd.f32 %v3823, %v3825
        %3934 = vadd.xlane.f32.xlu0 %v3933
        %v3935 = vpop.xlane.xlu0 %3934
        %v3936 = vadd.f32 %v3827, %v3829
        %3937 = vadd.xlane.f32.xlu0 %v3936
        %v3938 = vpop.xlane.xlu0 %3937
        %v3939 = vadd.f32 %v3831, %v3833
        %3940 = vadd.xlane.f32.xlu0 %v3939
        %v3941 = vpop.xlane.xlu0 %3940
        %v3942 = vadd.f32 %v3835, %v3837
        %3943 = vadd.xlane.f32.xlu0 %v3942
        %v3944 = vpop.xlane.xlu0 %3943
        %v3945 = vadd.f32 %v3839, %v3841
        %3946 = vadd.xlane.f32.xlu0 %v3945
        %v3947 = vpop.xlane.xlu0 %3946
        %v3948 = vadd.f32 %v3843, %v3845
        %3949 = vadd.xlane.f32.xlu0 %v3948
        %v3950 = vpop.xlane.xlu0 %3949
        %v3951 = vadd.f32 %v3847, %v3849
        %3952 = vadd.xlane.f32.xlu0 %v3951
        %v3953 = vpop.xlane.xlu0 %3952
        %v3954 = vadd.f32 %v3851, %v3853
        %3955 = vadd.xlane.f32.xlu0 %v3954
        %v3956 = vpop.xlane.xlu0 %3955
        %v3957 = vadd.f32 %v3855, %v3857
        %3958 = vadd.xlane.f32.xlu0 %v3957
        %v3959 = vpop.xlane.xlu0 %3958
        %v3960 = vadd.f32 %v3859, %v3861
        %3961 = vadd.xlane.f32.xlu0 %v3960
        %v3962 = vpop.xlane.xlu0 %3961
        %v3963 = vadd.f32 %v3863, %v3865
        %3964 = vadd.xlane.f32.xlu0 %v3963
        %v3965 = vpop.xlane.xlu0 %3964
        %v3966 = vadd.f32 %v3867, %v3869
        %3967 = vadd.xlane.f32.xlu0 %v3966
        %v3968 = vpop.xlane.xlu0 %3967
        %v3969 = vadd.f32 %v3871, %v3873
        %3970 = vadd.xlane.f32.xlu0 %v3969
        %v3971 = vpop.xlane.xlu0 %3970
        %v3972 = vadd.f32 %v3875, %v3877
        %3973 = vadd.xlane.f32.xlu0 %v3972
        %v3974 = vpop.xlane.xlu0 %3973
        %v3975 = vadd.f32 %v3879, %v3881
        %3976 = vadd.xlane.f32.xlu0 %v3975
        %v3977 = vpop.xlane.xlu0 %3976
        %v3978 = vrcp.pop %v3884
        %v3979 = vrcp.pop %v3887
        %v3980 = vrcp.pop %v3890
        %v3981 = vrcp.pop %v3893
        %v3982 = vrcp.pop %v3896
        %v3983 = vrcp.pop %v3899
        %v3984 = vrcp.pop %v3902
        %v3985 = vrcp.pop %v3905
        %v3986 = vrcp.pop %v3908
        %v3987 = vrcp.pop %v3911
        %v3988 = vrcp.pop %v3914
        %v3989 = vrcp.pop %v3917
        %v3990 = vrcp.pop %v3920
        %v3991 = vrcp.pop %v3923
        %v3992 = vrcp.pop %v3926
        %v3993 = vrcp.pop %v3929
        %v3994 = vrcp.pop %v3932
        %v3995 = vrcp.pop %v3935
        %v3996 = vrcp.pop %v3938
        %v3997 = vrcp.pop %v3941
        %v3998 = vrcp.pop %v3944
        %v3999 = vrcp.pop %v3947
        %v4000 = vrcp.pop %v3950
        %v4001 = vrcp.pop %v3953
        %v4002 = vrcp.pop %v3956
        %v4003 = vrcp.pop %v3959
        %v4004 = vrcp.pop %v3962
        %v4005 = vrcp.pop %v3965
        %v4006 = vrcp.pop %v3968
        %v4007 = vrcp.pop %v3971
        %v4008 = vrcp.pop %v3974
        %v4009 = vrcp.pop %v3977
        %v4010 = vmul.f32 %v3755, %v3978
        %v4011 = vmul.f32 %v3757, %v3978
        %v4012 = vmul.f32 %v3759, %v3979
        %v4013 = vmul.f32 %v3761, %v3979
        %v4014 = vmul.f32 %v3763, %v3980
        %v4015 = vmul.f32 %v3765, %v3980
        %v4016 = vmul.f32 %v3767, %v3981
        %v4017 = vmul.f32 %v3769, %v3981
        %v4018 = vmul.f32 %v3771, %v3982
        %v4019 = vmul.f32 %v3773, %v3982
        %v4020 = vmul.f32 %v3775, %v3983
        %v4021 = vmul.f32 %v3777, %v3983
        %v4022 = vmul.f32 %v3779, %v3984
        %v4023 = vmul.f32 %v3781, %v3984
        %v4024 = vmul.f32 %v3783, %v3985
        %v4025 = vmul.f32 %v3785, %v3985
        %v4026 = vmul.f32 %v3787, %v3986
        %v4027 = vmul.f32 %v3789, %v3986
        %v4028 = vmul.f32 %v3791, %v3987
        %v4029 = vmul.f32 %v3793, %v3987
        %v4030 = vmul.f32 %v3795, %v3988
        %v4031 = vmul.f32 %v3797, %v3988
        %v4032 = vmul.f32 %v3799, %v3989
        %v4033 = vmul.f32 %v3801, %v3989
        %v4034 = vmul.f32 %v3803, %v3990
        %v4035 = vmul.f32 %v3805, %v3990
        %v4036 = vmul.f32 %v3807, %v3991
        %v4037 = vmul.f32 %v3809, %v3991
        %v4038 = vmul.f32 %v3811, %v3992
        %v4039 = vmul.f32 %v3813, %v3992
        %v4040 = vmul.f32 %v3815, %v3993
        %v4041 = vmul.f32 %v3817, %v3993
        %v4042 = vmul.f32 %v3819, %v3994
        %v4043 = vmul.f32 %v3821, %v3994
        %v4044 = vmul.f32 %v3823, %v3995
        %v4045 = vmul.f32 %v3825, %v3995
        %v4046 = vmul.f32 %v3827, %v3996
        %v4047 = vmul.f32 %v3829, %v3996
        %v4048 = vmul.f32 %v3831, %v3997
        %v4049 = vmul.f32 %v3833, %v3997
        %v4050 = vmul.f32 %v3835, %v3998
        %v4051 = vmul.f32 %v3837, %v3998
        %v4052 = vmul.f32 %v3839, %v3999
        %v4053 = vmul.f32 %v3841, %v3999
        %v4054 = vmul.f32 %v3843, %v4000
        %v4055 = vmul.f32 %v3845, %v4000
        %v4056 = vmul.f32 %v3847, %v4001
        %v4057 = vmul.f32 %v3849, %v4001
        %v4058 = vmul.f32 %v3851, %v4002
        %v4059 = vmul.f32 %v3853, %v4002
        %v4060 = vmul.f32 %v3855, %v4003
        %v4061 = vmul.f32 %v3857, %v4003
        %v4062 = vmul.f32 %v3859, %v4004
        %v4063 = vmul.f32 %v3861, %v4004
        %v4064 = vmul.f32 %v3863, %v4005
        %v4065 = vmul.f32 %v3865, %v4005
        %v4066 = vmul.f32 %v3867, %v4006
        %v4067 = vmul.f32 %v3869, %v4006
        %v4068 = vmul.f32 %v3871, %v4007
        %v4069 = vmul.f32 %v3873, %v4007
        %v4070 = vmul.f32 %v3875, %v4008
        %v4071 = vmul.f32 %v3877, %v4008
        %v4072 = vmul.f32 %v3879, %v4009
        %v4073 = vmul.f32 %v3881, %v4009
        %v4074 = vpack.c.bf16 %v4012, %v4010
        %v4075 = vpack.c.bf16 %v4013, %v4011
        %v4076 = vpack.c.bf16 %v4016, %v4014
        %v4077 = vpack.c.bf16 %v4017, %v4015
        %v4078 = vpack.c.bf16 %v4020, %v4018
        %v4079 = vpack.c.bf16 %v4021, %v4019
        %v4080 = vpack.c.bf16 %v4024, %v4022
        %v4081 = vpack.c.bf16 %v4025, %v4023
        %v4082 = vpack.c.bf16 %v4028, %v4026
        %v4083 = vpack.c.bf16 %v4029, %v4027
        %v4084 = vpack.c.bf16 %v4032, %v4030
        %v4085 = vpack.c.bf16 %v4033, %v4031
        %v4086 = vpack.c.bf16 %v4036, %v4034
        %v4087 = vpack.c.bf16 %v4037, %v4035
        %v4088 = vpack.c.bf16 %v4040, %v4038
        %v4089 = vpack.c.bf16 %v4041, %v4039
        %v4090 = vpack.c.bf16 %v4044, %v4042
        %v4091 = vpack.c.bf16 %v4045, %v4043
        %v4092 = vpack.c.bf16 %v4048, %v4046
        %v4093 = vpack.c.bf16 %v4049, %v4047
        %v4094 = vpack.c.bf16 %v4052, %v4050
        %v4095 = vpack.c.bf16 %v4053, %v4051
        %v4096 = vpack.c.bf16 %v4056, %v4054
        %v4097 = vpack.c.bf16 %v4057, %v4055
        %v4098 = vpack.c.bf16 %v4060, %v4058
        %v4099 = vpack.c.bf16 %v4061, %v4059
        %v4100 = vpack.c.bf16 %v4064, %v4062
        %v4101 = vpack.c.bf16 %v4065, %v4063
        %v4102 = vpack.c.bf16 %v4068, %v4066
        %v4103 = vpack.c.bf16 %v4069, %v4067
        %v4104 = vpack.c.bf16 %v4072, %v4070
        %v4105 = vpack.c.bf16 %v4073, %v4071
        %4122 = vrot.lane.b32.xlu0 %v2214, 120
        %v4123 = vpop.permute.xlu0 %4122
        %4124 = vrot.lane.b32.xlu0 %v2215, 120
        %v4125 = vpop.permute.xlu0 %4124
        %4126 = vrot.lane.b32.xlu0 %v2216, 120
        %v4127 = vpop.permute.xlu0 %4126
        %4128 = vrot.lane.b32.xlu0 %v2217, 120
        %v4129 = vpop.permute.xlu0 %4128
        %4130 = vrot.lane.b32.xlu0 %v2218, 120
        %v4131 = vpop.permute.xlu0 %4130
        %4132 = vrot.lane.b32.xlu0 %v2219, 120
        %v4133 = vpop.permute.xlu0 %4132
        %4134 = vrot.lane.b32.xlu0 %v2220, 120
        %v4135 = vpop.permute.xlu0 %4134
        %4136 = vrot.lane.b32.xlu0 %v2221, 120
        %v4137 = vpop.permute.xlu0 %4136
        %4138 = vrot.lane.b32.xlu0 %v2222, 120
        %v4139 = vpop.permute.xlu0 %4138
        %4140 = vrot.lane.b32.xlu0 %v2223, 120
        %v4141 = vpop.permute.xlu0 %4140
        %4142 = vrot.lane.b32.xlu0 %v2224, 120
        %v4143 = vpop.permute.xlu0 %4142
        %4144 = vrot.lane.b32.xlu0 %v2225, 120
        %v4145 = vpop.permute.xlu0 %4144
        %4146 = vrot.lane.b32.xlu0 %v2226, 120
        %v4147 = vpop.permute.xlu0 %4146
        %4148 = vrot.lane.b32.xlu0 %v2227, 120
        %v4149 = vpop.permute.xlu0 %4148
        %4150 = vrot.lane.b32.xlu0 %v2228, 120
        %v4151 = vpop.permute.xlu0 %4150
        %4152 = vrot.lane.b32.xlu0 %v2229, 120
        %v4153 = vpop.permute.xlu0 %4152
        %4170 = vmatprep.subr.bf16.mxu0 0
        %4171 = vmatpush1.bf16.msra.mxu0 %v4123
        %4172 = vmatprep.subr.bf16.mxu0 0
        %4173 = vmatpush1.bf16.msra.mxu0 %v4125
        %4174 = vmatprep.subr.bf16.mxu0 0
        %4175 = vmatpush1.bf16.msra.mxu0 %v4127
        %4176 = vmatprep.subr.bf16.mxu0 0
        %4177 = vmatpush1.bf16.msra.mxu0 %v4129
        %4178 = vmatprep.subr.bf16.mxu0 0
        %4179 = vmatpush1.bf16.msra.mxu0 %v4131
        %4180 = vmatprep.subr.bf16.mxu0 0
        %4181 = vmatpush1.bf16.msra.mxu0 %v4133
        %4182 = vmatprep.subr.bf16.mxu0 0
        %4183 = vmatpush1.bf16.msra.mxu0 %v4135
        %4184 = vmatprep.subr.bf16.mxu0 0
        %4185 = vmatpush1.bf16.msra.mxu0 %v4137
        %4186 = vmatprep.subr.bf16.mxu0 0
        %4187 = vmatpush1.bf16.msra.mxu0 %v4139
        %4188 = vmatprep.subr.bf16.mxu0 0
        %4189 = vmatpush1.bf16.msra.mxu0 %v4141
        %4190 = vmatprep.subr.bf16.mxu0 0
        %4191 = vmatpush1.bf16.msra.mxu0 %v4143
        %4192 = vmatprep.subr.bf16.mxu0 0
        %4193 = vmatpush1.bf16.msra.mxu0 %v4145
        %4194 = vmatprep.subr.bf16.mxu0 0
        %4195 = vmatpush1.bf16.msra.mxu0 %v4147
        %4196 = vmatprep.subr.bf16.mxu0 0
        %4197 = vmatpush1.bf16.msra.mxu0 %v4149
        %4198 = vmatprep.subr.bf16.mxu0 0
        %4199 = vmatpush1.bf16.msra.mxu0 %v4151
        %4200 = vmatprep.subr.bf16.mxu0 0
        %4201 = vmatpush1.bf16.msra.mxu0 %v4153
        %4202 = vmatprep.mubr.bf16.mxu0 %v4075
        %4203 = vmatmul.mubr.bf16.gmra.mrb[0].mxu0 %v4074
        %v4204 = vpop.f32.mrb[0].mxu0
        %v4205 = vadd.f32 0.0, %v4204
        %v4206 = vpop.f32.mrb[0].mxu0
        %v4207 = vpop.f32.mrb[0].mxu0
        %v4208 = vadd.f32 0.0, %v4207
        %v4209 = vpop.f32.mrb[0].mxu0
        %4210 = vmatprep.mubr.bf16.mxu0 %v4077
        %4211 = vmatmul.mubr.bf16.gmra.mrb[0].mxu0 %v4076
        %v4212 = vpop.f32.mrb[0].mxu0
        %v4213 = vadd.f32 0.0, %v4212
        %v4214 = vpop.f32.mrb[0].mxu0
        %v4215 = vpop.f32.mrb[0].mxu0
        %v4216 = vadd.f32 0.0, %v4215
        %v4217 = vpop.f32.mrb[0].mxu0
        %4218 = vmatprep.mubr.bf16.mxu0 %v4079
        %4219 = vmatmul.mubr.bf16.gmra.mrb[0].mxu0 %v4078
        %v4220 = vpop.f32.mrb[0].mxu0
        %v4221 = vadd.f32 0.0, %v4220
        %v4222 = vpop.f32.mrb[0].mxu0
        %v4223 = vpop.f32.mrb[0].mxu0
        %v4224 = vadd.f32 0.0, %v4223
        %v4225 = vpop.f32.mrb[0].mxu0
        %4226 = vmatprep.mubr.bf16.mxu0 %v4081
        %4227 = vmatmul.mubr.bf16.gmra.mrb[0].mxu0 %v4080
        %v4228 = vpop.f32.mrb[0].mxu0
        %v4229 = vadd.f32 0.0, %v4228
        %v4230 = vpop.f32.mrb[0].mxu0
        %v4231 = vpop.f32.mrb[0].mxu0
        %v4232 = vadd.f32 0.0, %v4231
        %v4233 = vpop.f32.mrb[0].mxu0
        %4234 = vmatprep.mubr.bf16.mxu0 %v4083
        %4235 = vmatmul.mubr.bf16.gmra.mrb[0].mxu0 %v4082
        %v4236 = vpop.f32.mrb[0].mxu0
        %v4237 = vadd.f32 0.0, %v4236
        %v4238 = vpop.f32.mrb[0].mxu0
        %v4239 = vpop.f32.mrb[0].mxu0
        %v4240 = vadd.f32 0.0, %v4239
        %v4241 = vpop.f32.mrb[0].mxu0
        %4242 = vmatprep.mubr.bf16.mxu0 %v4085
        %4243 = vmatmul.mubr.bf16.gmra.mrb[0].mxu0 %v4084
        %v4244 = vpop.f32.mrb[0].mxu0
        %v4245 = vadd.f32 0.0, %v4244
        %v4246 = vpop.f32.mrb[0].mxu0
        %v4247 = vpop.f32.mrb[0].mxu0
        %v4248 = vadd.f32 0.0, %v4247
        %v4249 = vpop.f32.mrb[0].mxu0
        %4250 = vmatprep.mubr.bf16.mxu0 %v4087
        %4251 = vmatmul.mubr.bf16.gmra.mrb[0].mxu0 %v4086
        %v4252 = vpop.f32.mrb[0].mxu0
        %v4253 = vadd.f32 0.0, %v4252
        %v4254 = vpop.f32.mrb[0].mxu0
        %v4255 = vpop.f32.mrb[0].mxu0
        %v4256 = vadd.f32 0.0, %v4255
        %v4257 = vpop.f32.mrb[0].mxu0
        %4258 = vmatprep.mubr.bf16.mxu0 %v4089
        %4259 = vmatmul.mubr.bf16.gmra.mrb[0].mxu0 %v4088
        %v4260 = vpop.f32.mrb[0].mxu0
        %v4261 = vadd.f32 0.0, %v4260
        %v4262 = vpop.f32.mrb[0].mxu0
        %v4263 = vpop.f32.mrb[0].mxu0
        %v4264 = vadd.f32 0.0, %v4263
        %v4265 = vpop.f32.mrb[0].mxu0
        %4266 = vmatprep.mubr.bf16.mxu0 %v4091
        %4267 = vmatmul.mubr.bf16.gmra.mrb[0].mxu0 %v4090
        %v4268 = vpop.f32.mrb[0].mxu0
        %v4269 = vadd.f32 0.0, %v4268
        %v4270 = vpop.f32.mrb[0].mxu0
        %v4271 = vpop.f32.mrb[0].mxu0
        %v4272 = vadd.f32 0.0, %v4271
        %v4273 = vpop.f32.mrb[0].mxu0
        %4274 = vmatprep.mubr.bf16.mxu0 %v4093
        %4275 = vmatmul.mubr.bf16.gmra.mrb[0].mxu0 %v4092
        %v4276 = vpop.f32.mrb[0].mxu0
        %v4277 = vadd.f32 0.0, %v4276
        %v4278 = vpop.f32.mrb[0].mxu0
        %v4279 = vpop.f32.mrb[0].mxu0
        %v4280 = vadd.f32 0.0, %v4279
        %v4281 = vpop.f32.mrb[0].mxu0
        %4282 = vmatprep.mubr.bf16.mxu0 %v4095
        %4283 = vmatmul.mubr.bf16.gmra.mrb[0].mxu0 %v4094
        %v4284 = vpop.f32.mrb[0].mxu0
        %v4285 = vadd.f32 0.0, %v4284
        %v4286 = vpop.f32.mrb[0].mxu0
        %v4287 = vpop.f32.mrb[0].mxu0
        %v4288 = vadd.f32 0.0, %v4287
        %v4289 = vpop.f32.mrb[0].mxu0
        %4290 = vmatprep.mubr.bf16.mxu0 %v4097
        %4291 = vmatmul.mubr.bf16.gmra.mrb[0].mxu0 %v4096
        %v4292 = vpop.f32.mrb[0].mxu0
        %v4293 = vadd.f32 0.0, %v4292
        %v4294 = vpop.f32.mrb[0].mxu0
        %v4295 = vpop.f32.mrb[0].mxu0
        %v4296 = vadd.f32 0.0, %v4295
        %v4297 = vpop.f32.mrb[0].mxu0
        %4298 = vmatprep.mubr.bf16.mxu0 %v4099
        %4299 = vmatmul.mubr.bf16.gmra.mrb[0].mxu0 %v4098
        %v4300 = vpop.f32.mrb[0].mxu0
        %v4301 = vadd.f32 0.0, %v4300
        %v4302 = vpop.f32.mrb[0].mxu0
        %v4303 = vpop.f32.mrb[0].mxu0
        %v4304 = vadd.f32 0.0, %v4303
        %v4305 = vpop.f32.mrb[0].mxu0
        %4306 = vmatprep.mubr.bf16.mxu0 %v4101
        %4307 = vmatmul.mubr.bf16.gmra.mrb[0].mxu0 %v4100
        %v4308 = vpop.f32.mrb[0].mxu0
        %v4309 = vadd.f32 0.0, %v4308
        %v4310 = vpop.f32.mrb[0].mxu0
        %v4311 = vpop.f32.mrb[0].mxu0
        %v4312 = vadd.f32 0.0, %v4311
        %v4313 = vpop.f32.mrb[0].mxu0
        %4314 = vmatprep.mubr.bf16.mxu0 %v4103
        %4315 = vmatmul.mubr.bf16.gmra.mrb[0].mxu0 %v4102
        %v4316 = vpop.f32.mrb[0].mxu0
        %v4317 = vadd.f32 0.0, %v4316
        %v4318 = vpop.f32.mrb[0].mxu0
        %v4319 = vpop.f32.mrb[0].mxu0
        %v4320 = vadd.f32 0.0, %v4319
        %v4321 = vpop.f32.mrb[0].mxu0
        %4322 = vmatprep.mubr.bf16.mxu0 %v4105
        %4323 = vmatmul.mubr.bf16.gmra.mrb[0].mxu0 %v4104
        %v4324 = vpop.f32.mrb[0].mxu0
        %v4325 = vadd.f32 0.0, %v4324
        %v4326 = vpop.f32.mrb[0].mxu0
        %v4327 = vpop.f32.mrb[0].mxu0
        %v4328 = vadd.f32 0.0, %v4327
        %v4329 = vpop.f32.mrb[0].mxu0
        %4330 = vdwg.mxu0
        %v4331 = vpack.c.bf16 %v4208, %v4205
        %v4332 = vpack.c.bf16 %v4216, %v4213
        %v4333 = vpack.c.bf16 %v4224, %v4221
        %v4334 = vpack.c.bf16 %v4232, %v4229
        %v4335 = vpack.c.bf16 %v4240, %v4237
        %v4336 = vpack.c.bf16 %v4248, %v4245
        %v4337 = vpack.c.bf16 %v4256, %v4253
        %v4338 = vpack.c.bf16 %v4264, %v4261
        %v4339 = vpack.c.bf16 %v4272, %v4269
        %v4340 = vpack.c.bf16 %v4280, %v4277
        %v4341 = vpack.c.bf16 %v4288, %v4285
        %v4342 = vpack.c.bf16 %v4296, %v4293
        %v4343 = vpack.c.bf16 %v4304, %v4301
        %v4344 = vpack.c.bf16 %v4312, %v4309
        %v4345 = vpack.c.bf16 %v4320, %v4317
        %v4346 = vpack.c.bf16 %v4328, %v4325
        %v4348 = vsel %vm2230, %v4331, 0
        %v4351 = vsel %vm2230, %v4332, 0
        %v4354 = vsel %vm2230, %v4333, 0
        %v4357 = vsel %vm2230, %v4334, 0
        %v4360 = vsel %vm2230, %v4335, 0
        %v4363 = vsel %vm2230, %v4336, 0
        %v4366 = vsel %vm2230, %v4337, 0
        %v4369 = vsel %vm2230, %v4338, 0
        %v4372 = vsel %vm2230, %v4339, 0
        %v4375 = vsel %vm2230, %v4340, 0
        %v4378 = vsel %vm2230, %v4341, 0
        %v4381 = vsel %vm2230, %v4342, 0
        %v4384 = vsel %vm2230, %v4343, 0
        %v4387 = vsel %vm2230, %v4344, 0
        %v4390 = vsel %vm2230, %v4345, 0
        %v4393 = vsel %vm2230, %v4346, 0
        %vm4395 = vcmask 1043456
        %v4397 = vsel %vm4395, %v2179, 0
        %4399 = vmatprep.subr.bf16.mxu0 0
        %4400 = vmatpush1.bf16.msra.mxu0 %v4397
        %4401 = vmatprep.subr.bf16.mxu0 0
        %4402 = vmatpush1.bf16.msra.mxu0 0
        %4403 = vmatprep.subr.bf16.mxu0 0
        %4404 = vmatpush1.bf16.msra.mxu0 0
        %4405 = vmatprep.subr.bf16.mxu0 0
        %4406 = vmatpush1.bf16.msra.mxu0 0
        %4407 = vmatprep.subr.bf16.mxu0 0
        %4408 = vmatpush1.bf16.msra.mxu0 0
        %4409 = vmatprep.subr.bf16.mxu0 0
        %4410 = vmatpush1.bf16.msra.mxu0 0
        %4411 = vmatprep.subr.bf16.mxu0 0
        %4412 = vmatpush1.bf16.msra.mxu0 0
        %4413 = vmatprep.subr.bf16.mxu0 0
        %4414 = vmatpush1.bf16.msra.mxu0 0
        %4415 = vmatprep.subr.bf16.mxu0 0
        %4416 = vmatpush1.bf16.msra.mxu0 0
        %4417 = vmatprep.subr.bf16.mxu0 0
        %4418 = vmatpush1.bf16.msra.mxu0 0
        %4419 = vmatprep.subr.bf16.mxu0 0
        %4420 = vmatpush1.bf16.msra.mxu0 0
        %4421 = vmatprep.subr.bf16.mxu0 0
        %4422 = vmatpush1.bf16.msra.mxu0 0
        %4423 = vmatprep.subr.bf16.mxu0 0
        %4424 = vmatpush1.bf16.msra.mxu0 0
        %4425 = vmatprep.subr.bf16.mxu0 0
        %4426 = vmatpush1.bf16.msra.mxu0 0
        %4427 = vmatprep.subr.bf16.mxu0 0
        %4428 = vmatpush1.bf16.msra.mxu0 0
        %4429 = vmatprep.subr.bf16.mxu0 0
        %4430 = vmatpush1.bf16.msra.mxu0 0
        %4431 = vmatprep.mubr.bf16.mxu0 0
        %4432 = vmatmul.mubr.bf16.gmra.mrb[0].mxu0 %v4348
        %v4433 = vpop.f32.mrb[0].mxu0
        %v4434 = vadd.f32 0.0, %v4433
        %v4435 = vpop.f32.mrb[0].mxu0
        %v4436 = vpop.f32.mrb[0].mxu0
        %v4437 = vadd.f32 0.0, %v4436
        %v4438 = vpop.f32.mrb[0].mxu0
        %4439 = vmatprep.mubr.bf16.mxu0 0
        %4440 = vmatmul.mubr.bf16.gmra.mrb[0].mxu0 %v4351
        %v4441 = vpop.f32.mrb[0].mxu0
        %v4442 = vadd.f32 0.0, %v4441
        %v4443 = vpop.f32.mrb[0].mxu0
        %v4444 = vpop.f32.mrb[0].mxu0
        %v4445 = vadd.f32 0.0, %v4444
        %v4446 = vpop.f32.mrb[0].mxu0
        %4447 = vmatprep.mubr.bf16.mxu0 0
        %4448 = vmatmul.mubr.bf16.gmra.mrb[0].mxu0 %v4354
        %v4449 = vpop.f32.mrb[0].mxu0
        %v4450 = vadd.f32 0.0, %v4449
        %v4451 = vpop.f32.mrb[0].mxu0
        %v4452 = vpop.f32.mrb[0].mxu0
        %v4453 = vadd.f32 0.0, %v4452
        %v4454 = vpop.f32.mrb[0].mxu0
        %4455 = vmatprep.mubr.bf16.mxu0 0
        %4456 = vmatmul.mubr.bf16.gmra.mrb[0].mxu0 %v4357
        %v4457 = vpop.f32.mrb[0].mxu0
        %v4458 = vadd.f32 0.0, %v4457
        %v4459 = vpop.f32.mrb[0].mxu0
        %v4460 = vpop.f32.mrb[0].mxu0
        %v4461 = vadd.f32 0.0, %v4460
        %v4462 = vpop.f32.mrb[0].mxu0
        %4463 = vmatprep.mubr.bf16.mxu0 0
        %4464 = vmatmul.mubr.bf16.gmra.mrb[0].mxu0 %v4360
        %v4465 = vpop.f32.mrb[0].mxu0
        %v4466 = vadd.f32 0.0, %v4465
        %v4467 = vpop.f32.mrb[0].mxu0
        %v4468 = vpop.f32.mrb[0].mxu0
        %v4469 = vadd.f32 0.0, %v4468
        %v4470 = vpop.f32.mrb[0].mxu0
        %4471 = vmatprep.mubr.bf16.mxu0 0
        %4472 = vmatmul.mubr.bf16.gmra.mrb[0].mxu0 %v4363
        %v4473 = vpop.f32.mrb[0].mxu0
        %v4474 = vadd.f32 0.0, %v4473
        %v4475 = vpop.f32.mrb[0].mxu0
        %v4476 = vpop.f32.mrb[0].mxu0
        %v4477 = vadd.f32 0.0, %v4476
        %v4478 = vpop.f32.mrb[0].mxu0
        %4479 = vmatprep.mubr.bf16.mxu0 0
        %4480 = vmatmul.mubr.bf16.gmra.mrb[0].mxu0 %v4366
        %v4481 = vpop.f32.mrb[0].mxu0
        %v4482 = vadd.f32 0.0, %v4481
        %v4483 = vpop.f32.mrb[0].mxu0
        %v4484 = vpop.f32.mrb[0].mxu0
        %v4485 = vadd.f32 0.0, %v4484
        %v4486 = vpop.f32.mrb[0].mxu0
        %4487 = vmatprep.mubr.bf16.mxu0 0
        %4488 = vmatmul.mubr.bf16.gmra.mrb[0].mxu0 %v4369
        %v4489 = vpop.f32.mrb[0].mxu0
        %v4490 = vadd.f32 0.0, %v4489
        %v4491 = vpop.f32.mrb[0].mxu0
        %v4492 = vpop.f32.mrb[0].mxu0
        %v4493 = vadd.f32 0.0, %v4492
        %v4494 = vpop.f32.mrb[0].mxu0
        %4495 = vmatprep.mubr.bf16.mxu0 0
        %4496 = vmatmul.mubr.bf16.gmra.mrb[0].mxu0 %v4372
        %v4497 = vpop.f32.mrb[0].mxu0
        %v4498 = vadd.f32 0.0, %v4497
        %v4499 = vpop.f32.mrb[0].mxu0
        %v4500 = vpop.f32.mrb[0].mxu0
        %v4501 = vadd.f32 0.0, %v4500
        %v4502 = vpop.f32.mrb[0].mxu0
        %4503 = vmatprep.mubr.bf16.mxu0 0
        %4504 = vmatmul.mubr.bf16.gmra.mrb[0].mxu0 %v4375
        %v4505 = vpop.f32.mrb[0].mxu0
        %v4506 = vadd.f32 0.0, %v4505
        %v4507 = vpop.f32.mrb[0].mxu0
        %v4508 = vpop.f32.mrb[0].mxu0
        %v4509 = vadd.f32 0.0, %v4508
        %v4510 = vpop.f32.mrb[0].mxu0
        %4511 = vmatprep.mubr.bf16.mxu0 0
        %4512 = vmatmul.mubr.bf16.gmra.mrb[0].mxu0 %v4378
        %v4513 = vpop.f32.mrb[0].mxu0
        %v4514 = vadd.f32 0.0, %v4513
        %v4515 = vpop.f32.mrb[0].mxu0
        %v4516 = vpop.f32.mrb[0].mxu0
        %v4517 = vadd.f32 0.0, %v4516
        %v4518 = vpop.f32.mrb[0].mxu0
        %4519 = vmatprep.mubr.bf16.mxu0 0
        %4520 = vmatmul.mubr.bf16.gmra.mrb[0].mxu0 %v4381
        %v4521 = vpop.f32.mrb[0].mxu0
        %v4522 = vadd.f32 0.0, %v4521
        %v4523 = vpop.f32.mrb[0].mxu0
        %v4524 = vpop.f32.mrb[0].mxu0
        %v4525 = vadd.f32 0.0, %v4524
        %v4526 = vpop.f32.mrb[0].mxu0
        %4527 = vmatprep.mubr.bf16.mxu0 0
        %4528 = vmatmul.mubr.bf16.gmra.mrb[0].mxu0 %v4384
        %v4529 = vpop.f32.mrb[0].mxu0
        %v4530 = vadd.f32 0.0, %v4529
        %v4531 = vpop.f32.mrb[0].mxu0
        %v4532 = vpop.f32.mrb[0].mxu0
        %v4533 = vadd.f32 0.0, %v4532
        %v4534 = vpop.f32.mrb[0].mxu0
        %4535 = vmatprep.mubr.bf16.mxu0 0
        %4536 = vmatmul.mubr.bf16.gmra.mrb[0].mxu0 %v4387
        %v4537 = vpop.f32.mrb[0].mxu0
        %v4538 = vadd.f32 0.0, %v4537
        %v4539 = vpop.f32.mrb[0].mxu0
        %v4540 = vpop.f32.mrb[0].mxu0
        %v4541 = vadd.f32 0.0, %v4540
        %v4542 = vpop.f32.mrb[0].mxu0
        %4543 = vmatprep.mubr.bf16.mxu0 0
        %4544 = vmatmul.mubr.bf16.gmra.mrb[0].mxu0 %v4390
        %v4545 = vpop.f32.mrb[0].mxu0
        %v4546 = vadd.f32 0.0, %v4545
        %v4547 = vpop.f32.mrb[0].mxu0
        %v4548 = vpop.f32.mrb[0].mxu0
        %v4549 = vadd.f32 0.0, %v4548
        %v4550 = vpop.f32.mrb[0].mxu0
        %4551 = vmatprep.mubr.bf16.mxu0 0
        %4552 = vmatmul.mubr.bf16.gmra.mrb[0].mxu0 %v4393
        %v4553 = vpop.f32.mrb[0].mxu0
        %v4554 = vadd.f32 0.0, %v4553
        %v4555 = vpop.f32.mrb[0].mxu0
        %v4556 = vpop.f32.mrb[0].mxu0
        %v4557 = vadd.f32 0.0, %v4556
        %v4558 = vpop.f32.mrb[0].mxu0
        %4559 = vdwg.mxu0
        %v4561 = vsel %vm2230, %v3193, 0
        %v4564 = vsel %vm2230, %v3194, 0
        %v4567 = vsel %vm2230, %v3195, 0
        %v4570 = vsel %vm2230, %v3196, 0
        %v4573 = vsel %vm2230, %v3197, 0
        %v4576 = vsel %vm2230, %v3198, 0
        %v4579 = vsel %vm2230, %v3199, 0
        %v4582 = vsel %vm2230, %v3200, 0
        %v4585 = vsel %vm2230, %v3201, 0
        %v4588 = vsel %vm2230, %v3202, 0
        %v4591 = vsel %vm2230, %v3203, 0
        %v4594 = vsel %vm2230, %v3204, 0
        %v4597 = vsel %vm2230, %v3205, 0
        %v4600 = vsel %vm2230, %v3206, 0
        %v4603 = vsel %vm2230, %v3207, 0
        %v4606 = vsel %vm2230, %v3208, 0
        %v4609 = vsel %vm4395, %v2178, 0
        %4611 = vmatprep.subr.bf16.mxu0 0
        %4612 = vmatpush1.bf16.msra.mxu0 %v4609
        %4613 = vmatprep.subr.bf16.mxu0 0
        %4614 = vmatpush1.bf16.msra.mxu0 0
        %4615 = vmatprep.subr.bf16.mxu0 0
        %4616 = vmatpush1.bf16.msra.mxu0 0
        %4617 = vmatprep.subr.bf16.mxu0 0
        %4618 = vmatpush1.bf16.msra.mxu0 0
        %4619 = vmatprep.subr.bf16.mxu0 0
        %4620 = vmatpush1.bf16.msra.mxu0 0
        %4621 = vmatprep.subr.bf16.mxu0 0
        %4622 = vmatpush1.bf16.msra.mxu0 0
        %4623 = vmatprep.subr.bf16.mxu0 0
        %4624 = vmatpush1.bf16.msra.mxu0 0
        %4625 = vmatprep.subr.bf16.mxu0 0
        %4626 = vmatpush1.bf16.msra.mxu0 0
        %4627 = vmatprep.subr.bf16.mxu0 0
        %4628 = vmatpush1.bf16.msra.mxu0 0
        %4629 = vmatprep.subr.bf16.mxu0 0
        %4630 = vmatpush1.bf16.msra.mxu0 0
        %4631 = vmatprep.subr.bf16.mxu0 0
        %4632 = vmatpush1.bf16.msra.mxu0 0
        %4633 = vmatprep.subr.bf16.mxu0 0
        %4634 = vmatpush1.bf16.msra.mxu0 0
        %4635 = vmatprep.subr.bf16.mxu0 0
        %4636 = vmatpush1.bf16.msra.mxu0 0
        %4637 = vmatprep.subr.bf16.mxu0 0
        %4638 = vmatpush1.bf16.msra.mxu0 0
        %4639 = vmatprep.subr.bf16.mxu0 0
        %4640 = vmatpush1.bf16.msra.mxu0 0
        %4641 = vmatprep.subr.bf16.mxu0 0
        %4642 = vmatpush1.bf16.msra.mxu0 0
        %4643 = vmatprep.mubr.bf16.mxu0 0
        %4644 = vmatmul.mubr.bf16.gmra.mrb[0].mxu0 %v4561
        %v4645 = vpop.f32.mrb[0].mxu0
        %v4646 = vadd.f32 %v4434, %v4645
        %v4647 = vpop.f32.mrb[0].mxu0
        %v4648 = vpop.f32.mrb[0].mxu0
        %v4649 = vadd.f32 %v4437, %v4648
        %v4650 = vpop.f32.mrb[0].mxu0
        %4651 = vmatprep.mubr.bf16.mxu0 0
        %4652 = vmatmul.mubr.bf16.gmra.mrb[0].mxu0 %v4564
        %v4653 = vpop.f32.mrb[0].mxu0
        %v4654 = vadd.f32 %v4442, %v4653
        %v4655 = vpop.f32.mrb[0].mxu0
        %v4656 = vpop.f32.mrb[0].mxu0
        %v4657 = vadd.f32 %v4445, %v4656
        %v4658 = vpop.f32.mrb[0].mxu0
        %4659 = vmatprep.mubr.bf16.mxu0 0
        %4660 = vmatmul.mubr.bf16.gmra.mrb[0].mxu0 %v4567
        %v4661 = vpop.f32.mrb[0].mxu0
        %v4662 = vadd.f32 %v4450, %v4661
        %v4663 = vpop.f32.mrb[0].mxu0
        %v4664 = vpop.f32.mrb[0].mxu0
        %v4665 = vadd.f32 %v4453, %v4664
        %v4666 = vpop.f32.mrb[0].mxu0
        %4667 = vmatprep.mubr.bf16.mxu0 0
        %4668 = vmatmul.mubr.bf16.gmra.mrb[0].mxu0 %v4570
        %v4669 = vpop.f32.mrb[0].mxu0
        %v4670 = vadd.f32 %v4458, %v4669
        %v4671 = vpop.f32.mrb[0].mxu0
        %v4672 = vpop.f32.mrb[0].mxu0
        %v4673 = vadd.f32 %v4461, %v4672
        %v4674 = vpop.f32.mrb[0].mxu0
        %4675 = vmatprep.mubr.bf16.mxu0 0
        %4676 = vmatmul.mubr.bf16.gmra.mrb[0].mxu0 %v4573
        %v4677 = vpop.f32.mrb[0].mxu0
        %v4678 = vadd.f32 %v4466, %v4677
        %v4679 = vpop.f32.mrb[0].mxu0
        %v4680 = vpop.f32.mrb[0].mxu0
        %v4681 = vadd.f32 %v4469, %v4680
        %v4682 = vpop.f32.mrb[0].mxu0
        %4683 = vmatprep.mubr.bf16.mxu0 0
        %4684 = vmatmul.mubr.bf16.gmra.mrb[0].mxu0 %v4576
        %v4685 = vpop.f32.mrb[0].mxu0
        %v4686 = vadd.f32 %v4474, %v4685
        %v4687 = vpop.f32.mrb[0].mxu0
        %v4688 = vpop.f32.mrb[0].mxu0
        %v4689 = vadd.f32 %v4477, %v4688
        %v4690 = vpop.f32.mrb[0].mxu0
        %4691 = vmatprep.mubr.bf16.mxu0 0
        %4692 = vmatmul.mubr.bf16.gmra.mrb[0].mxu0 %v4579
        %v4693 = vpop.f32.mrb[0].mxu0
        %v4694 = vadd.f32 %v4482, %v4693
        %v4695 = vpop.f32.mrb[0].mxu0
        %v4696 = vpop.f32.mrb[0].mxu0
        %v4697 = vadd.f32 %v4485, %v4696
        %v4698 = vpop.f32.mrb[0].mxu0
        %4699 = vmatprep.mubr.bf16.mxu0 0
        %4700 = vmatmul.mubr.bf16.gmra.mrb[0].mxu0 %v4582
        %v4701 = vpop.f32.mrb[0].mxu0
        %v4702 = vadd.f32 %v4490, %v4701
        %v4703 = vpop.f32.mrb[0].mxu0
        %v4704 = vpop.f32.mrb[0].mxu0
        %v4705 = vadd.f32 %v4493, %v4704
        %v4706 = vpop.f32.mrb[0].mxu0
        %4707 = vmatprep.mubr.bf16.mxu0 0
        %4708 = vmatmul.mubr.bf16.gmra.mrb[0].mxu0 %v4585
        %v4709 = vpop.f32.mrb[0].mxu0
        %v4710 = vadd.f32 %v4498, %v4709
        %v4711 = vpop.f32.mrb[0].mxu0
        %v4712 = vpop.f32.mrb[0].mxu0
        %v4713 = vadd.f32 %v4501, %v4712
        %v4714 = vpop.f32.mrb[0].mxu0
        %4715 = vmatprep.mubr.bf16.mxu0 0
        %4716 = vmatmul.mubr.bf16.gmra.mrb[0].mxu0 %v4588
        %v4717 = vpop.f32.mrb[0].mxu0
        %v4718 = vadd.f32 %v4506, %v4717
        %v4719 = vpop.f32.mrb[0].mxu0
        %v4720 = vpop.f32.mrb[0].mxu0
        %v4721 = vadd.f32 %v4509, %v4720
        %v4722 = vpop.f32.mrb[0].mxu0
        %4723 = vmatprep.mubr.bf16.mxu0 0
        %4724 = vmatmul.mubr.bf16.gmra.mrb[0].mxu0 %v4591
        %v4725 = vpop.f32.mrb[0].mxu0
        %v4726 = vadd.f32 %v4514, %v4725
        %v4727 = vpop.f32.mrb[0].mxu0
        %v4728 = vpop.f32.mrb[0].mxu0
        %v4729 = vadd.f32 %v4517, %v4728
        %v4730 = vpop.f32.mrb[0].mxu0
        %4731 = vmatprep.mubr.bf16.mxu0 0
        %4732 = vmatmul.mubr.bf16.gmra.mrb[0].mxu0 %v4594
        %v4733 = vpop.f32.mrb[0].mxu0
        %v4734 = vadd.f32 %v4522, %v4733
        %v4735 = vpop.f32.mrb[0].mxu0
        %v4736 = vpop.f32.mrb[0].mxu0
        %v4737 = vadd.f32 %v4525, %v4736
        %v4738 = vpop.f32.mrb[0].mxu0
        %4739 = vmatprep.mubr.bf16.mxu0 0
        %4740 = vmatmul.mubr.bf16.gmra.mrb[0].mxu0 %v4597
        %v4741 = vpop.f32.mrb[0].mxu0
        %v4742 = vadd.f32 %v4530, %v4741
        %v4743 = vpop.f32.mrb[0].mxu0
        %v4744 = vpop.f32.mrb[0].mxu0
        %v4745 = vadd.f32 %v4533, %v4744
        %v4746 = vpop.f32.mrb[0].mxu0
        %4747 = vmatprep.mubr.bf16.mxu0 0
        %4748 = vmatmul.mubr.bf16.gmra.mrb[0].mxu0 %v4600
        %v4749 = vpop.f32.mrb[0].mxu0
        %v4750 = vadd.f32 %v4538, %v4749
        %v4751 = vpop.f32.mrb[0].mxu0
        %v4752 = vpop.f32.mrb[0].mxu0
        %v4753 = vadd.f32 %v4541, %v4752
        %v4754 = vpop.f32.mrb[0].mxu0
        %4755 = vmatprep.mubr.bf16.mxu0 0
        %4756 = vmatmul.mubr.bf16.gmra.mrb[0].mxu0 %v4603
        %v4757 = vpop.f32.mrb[0].mxu0
        %v4758 = vadd.f32 %v4546, %v4757
        %v4759 = vpop.f32.mrb[0].mxu0
        %v4760 = vpop.f32.mrb[0].mxu0
        %v4761 = vadd.f32 %v4549, %v4760
        %v4762 = vpop.f32.mrb[0].mxu0
        %4763 = vmatprep.mubr.bf16.mxu0 0
        %4764 = vmatmul.mubr.bf16.gmra.mrb[0].mxu0 %v4606
        %v4765 = vpop.f32.mrb[0].mxu0
        %v4766 = vadd.f32 %v4554, %v4765
        %v4767 = vpop.f32.mrb[0].mxu0
        %v4768 = vpop.f32.mrb[0].mxu0
        %v4769 = vadd.f32 %v4557, %v4768
        %v4770 = vpop.f32.mrb[0].mxu0
        %4771 = vdwg.mxu0
        %4772 = vrot.lane.b32.xlu0 %v2182, 112
        %v4773 = vpop.permute.xlu0 %4772
        %4774 = vrot.lane.b32.xlu0 %v2183, 112
        %v4775 = vpop.permute.xlu0 %4774
        %4776 = vrot.lane.b32.xlu0 %v2184, 112
        %v4777 = vpop.permute.xlu0 %4776
        %4778 = vrot.lane.b32.xlu0 %v2185, 112
        %v4779 = vpop.permute.xlu0 %4778
        %4780 = vrot.lane.b32.xlu0 %v2186, 112
        %v4781 = vpop.permute.xlu0 %4780
        %4782 = vrot.lane.b32.xlu0 %v2187, 112
        %v4783 = vpop.permute.xlu0 %4782
        %4784 = vrot.lane.b32.xlu0 %v2188, 112
        %v4785 = vpop.permute.xlu0 %4784
        %4786 = vrot.lane.b32.xlu0 %v2189, 112
        %v4787 = vpop.permute.xlu0 %4786
        %4788 = vrot.lane.b32.xlu0 %v2190, 112
        %v4789 = vpop.permute.xlu0 %4788
        %4790 = vrot.lane.b32.xlu0 %v2191, 112
        %v4791 = vpop.permute.xlu0 %4790
        %4792 = vrot.lane.b32.xlu0 %v2192, 112
        %v4793 = vpop.permute.xlu0 %4792
        %4794 = vrot.lane.b32.xlu0 %v2193, 112
        %v4795 = vpop.permute.xlu0 %4794
        %4796 = vrot.lane.b32.xlu0 %v2194, 112
        %v4797 = vpop.permute.xlu0 %4796
        %4798 = vrot.lane.b32.xlu0 %v2195, 112
        %v4799 = vpop.permute.xlu0 %4798
        %4800 = vrot.lane.b32.xlu0 %v2196, 112
        %v4801 = vpop.permute.xlu0 %4800
        %4802 = vrot.lane.b32.xlu0 %v2197, 112
        %v4803 = vpop.permute.xlu0 %4802
        %4804 = vrot.lane.b32.xlu0 %v2198, 112
        %v4805 = vpop.permute.xlu0 %4804
        %4806 = vrot.lane.b32.xlu0 %v2199, 112
        %v4807 = vpop.permute.xlu0 %4806
        %4808 = vrot.lane.b32.xlu0 %v2200, 112
        %v4809 = vpop.permute.xlu0 %4808
        %4810 = vrot.lane.b32.xlu0 %v2201, 112
        %v4811 = vpop.permute.xlu0 %4810
        %4812 = vrot.lane.b32.xlu0 %v2202, 112
        %v4813 = vpop.permute.xlu0 %4812
        %4814 = vrot.lane.b32.xlu0 %v2203, 112
        %v4815 = vpop.permute.xlu0 %4814
        %4816 = vrot.lane.b32.xlu0 %v2204, 112
        %v4817 = vpop.permute.xlu0 %4816
        %4818 = vrot.lane.b32.xlu0 %v2205, 112
        %v4819 = vpop.permute.xlu0 %4818
        %4820 = vrot.lane.b32.xlu0 %v2206, 112
        %v4821 = vpop.permute.xlu0 %4820
        %4822 = vrot.lane.b32.xlu0 %v2207, 112
        %v4823 = vpop.permute.xlu0 %4822
        %4824 = vrot.lane.b32.xlu0 %v2208, 112
        %v4825 = vpop.permute.xlu0 %4824
        %4826 = vrot.lane.b32.xlu0 %v2209, 112
        %v4827 = vpop.permute.xlu0 %4826
        %4828 = vrot.lane.b32.xlu0 %v2210, 112
        %v4829 = vpop.permute.xlu0 %4828
        %4830 = vrot.lane.b32.xlu0 %v2211, 112
        %v4831 = vpop.permute.xlu0 %4830
        %4832 = vrot.lane.b32.xlu0 %v2212, 112
        %v4833 = vpop.permute.xlu0 %4832
        %4834 = vrot.lane.b32.xlu0 %v2213, 112
        %v4835 = vpop.permute.xlu0 %4834
        %v4837 = vsel %vm2230, %v4773, 0
        %v4840 = vsel %vm2230, %v4775, 0
        %v4843 = vsel %vm2230, %v4777, 0
        %v4846 = vsel %vm2230, %v4779, 0
        %v4849 = vsel %vm2230, %v4781, 0
        %v4852 = vsel %vm2230, %v4783, 0
        %v4855 = vsel %vm2230, %v4785, 0
        %v4858 = vsel %vm2230, %v4787, 0
        %v4861 = vsel %vm2230, %v4789, 0
        %v4864 = vsel %vm2230, %v4791, 0
        %v4867 = vsel %vm2230, %v4793, 0
        %v4870 = vsel %vm2230, %v4795, 0
        %v4873 = vsel %vm2230, %v4797, 0
        %v4876 = vsel %vm2230, %v4799, 0
        %v4879 = vsel %vm2230, %v4801, 0
        %v4882 = vsel %vm2230, %v4803, 0
        %v4885 = vsel %vm2230, %v4805, 0
        %v4888 = vsel %vm2230, %v4807, 0
        %v4891 = vsel %vm2230, %v4809, 0
        %v4894 = vsel %vm2230, %v4811, 0
        %v4897 = vsel %vm2230, %v4813, 0
        %v4900 = vsel %vm2230, %v4815, 0
        %v4903 = vsel %vm2230, %v4817, 0
        %v4906 = vsel %vm2230, %v4819, 0
        %v4909 = vsel %vm2230, %v4821, 0
        %v4912 = vsel %vm2230, %v4823, 0
        %v4915 = vsel %vm2230, %v4825, 0
        %v4918 = vsel %vm2230, %v4827, 0
        %v4921 = vsel %vm2230, %v4829, 0
        %v4924 = vsel %vm2230, %v4831, 0
        %v4927 = vsel %vm2230, %v4833, 0
        %v4930 = vsel %vm2230, %v4835, 0
        %4932 = vmatprep.subr.bf16.mxu0 0
        %4933 = vmatpush1.bf16.xpose.msra.mxu0 %v4885
        %4934 = vmatprep.subr.bf16.mxu0 0
        %4935 = vmatpush1.bf16.xpose.msra.mxu0 %v4888
        %4936 = vmatprep.subr.bf16.mxu0 0
        %4937 = vmatpush1.bf16.xpose.msra.mxu0 %v4891
        %4938 = vmatprep.subr.bf16.mxu0 0
        %4939 = vmatpush1.bf16.xpose.msra.mxu0 %v4894
        %4940 = vmatprep.subr.bf16.mxu0 0
        %4941 = vmatpush1.bf16.xpose.msra.mxu0 %v4897
        %4942 = vmatprep.subr.bf16.mxu0 0
        %4943 = vmatpush1.bf16.xpose.msra.mxu0 %v4900
        %4944 = vmatprep.subr.bf16.mxu0 0
        %4945 = vmatpush1.bf16.xpose.msra.mxu0 %v4903
        %4946 = vmatprep.subr.bf16.mxu0 0
        %4947 = vmatpush1.bf16.xpose.msra.mxu0 %v4906
        %4948 = vmatprep.subr.bf16.mxu0 0
        %4949 = vmatpush1.bf16.xpose.msra.mxu0 %v4909
        %4950 = vmatprep.subr.bf16.mxu0 0
        %4951 = vmatpush1.bf16.xpose.msra.mxu0 %v4912
        %4952 = vmatprep.subr.bf16.mxu0 0
        %4953 = vmatpush1.bf16.xpose.msra.mxu0 %v4915
        %4954 = vmatprep.subr.bf16.mxu0 0
        %4955 = vmatpush1.bf16.xpose.msra.mxu0 %v4918
        %4956 = vmatprep.subr.bf16.mxu0 0
        %4957 = vmatpush1.bf16.xpose.msra.mxu0 %v4921
        %4958 = vmatprep.subr.bf16.mxu0 0
        %4959 = vmatpush1.bf16.xpose.msra.mxu0 %v4924
        %4960 = vmatprep.subr.bf16.mxu0 0
        %4961 = vmatpush1.bf16.xpose.msra.mxu0 %v4927
        %4962 = vmatprep.subr.bf16.mxu0 0
        %4963 = vmatpush1.bf16.xpose.msra.mxu0 %v4930
        %4964 = vmatprep.mubr.bf16.mxu0 0
        %4965 = vmatmul.mubr.bf16.gmra.mrb[0].mxu0 %v4837
        %v4966 = vpop.f32.mrb[0].mxu0
        %v4967 = vadd.f32 0.0, %v4966
        %v4968 = vpop.f32.mrb[0].mxu0
        %v4969 = vadd.f32 0.0, %v4968
        %v4970 = vpop.f32.mrb[0].mxu0
        %v4971 = vadd.f32 0.0, %v4970
        %v4972 = vpop.f32.mrb[0].mxu0
        %v4973 = vadd.f32 0.0, %v4972
        %4974 = vmatprep.mubr.bf16.mxu0 0
        %4975 = vmatmul.mubr.bf16.gmra.mrb[0].mxu0 %v4840
        %v4976 = vpop.f32.mrb[0].mxu0
        %v4977 = vadd.f32 0.0, %v4976
        %v4978 = vpop.f32.mrb[0].mxu0
        %v4979 = vadd.f32 0.0, %v4978
        %v4980 = vpop.f32.mrb[0].mxu0
        %v4981 = vadd.f32 0.0, %v4980
        %v4982 = vpop.f32.mrb[0].mxu0
        %v4983 = vadd.f32 0.0, %v4982
        %4984 = vmatprep.mubr.bf16.mxu0 0
        %4985 = vmatmul.mubr.bf16.gmra.mrb[0].mxu0 %v4843
        %v4986 = vpop.f32.mrb[0].mxu0
        %v4987 = vadd.f32 0.0, %v4986
        %v4988 = vpop.f32.mrb[0].mxu0
        %v4989 = vadd.f32 0.0, %v4988
        %v4990 = vpop.f32.mrb[0].mxu0
        %v4991 = vadd.f32 0.0, %v4990
        %v4992 = vpop.f32.mrb[0].mxu0
        %v4993 = vadd.f32 0.0, %v4992
        %4994 = vmatprep.mubr.bf16.mxu0 0
        %4995 = vmatmul.mubr.bf16.gmra.mrb[0].mxu0 %v4846
        %v4996 = vpop.f32.mrb[0].mxu0
        %v4997 = vadd.f32 0.0, %v4996
        %v4998 = vpop.f32.mrb[0].mxu0
        %v4999 = vadd.f32 0.0, %v4998
        %v5000 = vpop.f32.mrb[0].mxu0
        %v5001 = vadd.f32 0.0, %v5000
        %v5002 = vpop.f32.mrb[0].mxu0
        %v5003 = vadd.f32 0.0, %v5002
        %5004 = vmatprep.mubr.bf16.mxu0 0
        %5005 = vmatmul.mubr.bf16.gmra.mrb[0].mxu0 %v4849
        %v5006 = vpop.f32.mrb[0].mxu0
        %v5007 = vadd.f32 0.0, %v5006
        %v5008 = vpop.f32.mrb[0].mxu0
        %v5009 = vadd.f32 0.0, %v5008
        %v5010 = vpop.f32.mrb[0].mxu0
        %v5011 = vadd.f32 0.0, %v5010
        %v5012 = vpop.f32.mrb[0].mxu0
        %v5013 = vadd.f32 0.0, %v5012
        %5014 = vmatprep.mubr.bf16.mxu0 0
        %5015 = vmatmul.mubr.bf16.gmra.mrb[0].mxu0 %v4852
        %v5016 = vpop.f32.mrb[0].mxu0
        %v5017 = vadd.f32 0.0, %v5016
        %v5018 = vpop.f32.mrb[0].mxu0
        %v5019 = vadd.f32 0.0, %v5018
        %v5020 = vpop.f32.mrb[0].mxu0
        %v5021 = vadd.f32 0.0, %v5020
        %v5022 = vpop.f32.mrb[0].mxu0
        %v5023 = vadd.f32 0.0, %v5022
        %5024 = vmatprep.mubr.bf16.mxu0 0
        %5025 = vmatmul.mubr.bf16.gmra.mrb[0].mxu0 %v4855
        %v5026 = vpop.f32.mrb[0].mxu0
        %v5027 = vadd.f32 0.0, %v5026
        %v5028 = vpop.f32.mrb[0].mxu0
        %v5029 = vadd.f32 0.0, %v5028
        %v5030 = vpop.f32.mrb[0].mxu0
        %v5031 = vadd.f32 0.0, %v5030
        %v5032 = vpop.f32.mrb[0].mxu0
        %v5033 = vadd.f32 0.0, %v5032
        %5034 = vmatprep.mubr.bf16.mxu0 0
        %5035 = vmatmul.mubr.bf16.gmra.mrb[0].mxu0 %v4858
        %v5036 = vpop.f32.mrb[0].mxu0
        %v5037 = vadd.f32 0.0, %v5036
        %v5038 = vpop.f32.mrb[0].mxu0
        %v5039 = vadd.f32 0.0, %v5038
        %v5040 = vpop.f32.mrb[0].mxu0
        %v5041 = vadd.f32 0.0, %v5040
        %v5042 = vpop.f32.mrb[0].mxu0
        %v5043 = vadd.f32 0.0, %v5042
        %5044 = vmatprep.mubr.bf16.mxu0 0
        %5045 = vmatmul.mubr.bf16.gmra.mrb[0].mxu0 %v4861
        %v5046 = vpop.f32.mrb[0].mxu0
        %v5047 = vadd.f32 0.0, %v5046
        %v5048 = vpop.f32.mrb[0].mxu0
        %v5049 = vadd.f32 0.0, %v5048
        %v5050 = vpop.f32.mrb[0].mxu0
        %v5051 = vadd.f32 0.0, %v5050
        %v5052 = vpop.f32.mrb[0].mxu0
        %v5053 = vadd.f32 0.0, %v5052
        %5054 = vmatprep.mubr.bf16.mxu0 0
        %5055 = vmatmul.mubr.bf16.gmra.mrb[0].mxu0 %v4864
        %v5056 = vpop.f32.mrb[0].mxu0
        %v5057 = vadd.f32 0.0, %v5056
        %v5058 = vpop.f32.mrb[0].mxu0
        %v5059 = vadd.f32 0.0, %v5058
        %v5060 = vpop.f32.mrb[0].mxu0
        %v5061 = vadd.f32 0.0, %v5060
        %v5062 = vpop.f32.mrb[0].mxu0
        %v5063 = vadd.f32 0.0, %v5062
        %5064 = vmatprep.mubr.bf16.mxu0 0
        %5065 = vmatmul.mubr.bf16.gmra.mrb[0].mxu0 %v4867
        %v5066 = vpop.f32.mrb[0].mxu0
        %v5067 = vadd.f32 0.0, %v5066
        %v5068 = vpop.f32.mrb[0].mxu0
        %v5069 = vadd.f32 0.0, %v5068
        %v5070 = vpop.f32.mrb[0].mxu0
        %v5071 = vadd.f32 0.0, %v5070
        %v5072 = vpop.f32.mrb[0].mxu0
        %v5073 = vadd.f32 0.0, %v5072
        %5074 = vmatprep.mubr.bf16.mxu0 0
        %5075 = vmatmul.mubr.bf16.gmra.mrb[0].mxu0 %v4870
        %v5076 = vpop.f32.mrb[0].mxu0
        %v5077 = vadd.f32 0.0, %v5076
        %v5078 = vpop.f32.mrb[0].mxu0
        %v5079 = vadd.f32 0.0, %v5078
        %v5080 = vpop.f32.mrb[0].mxu0
        %v5081 = vadd.f32 0.0, %v5080
        %v5082 = vpop.f32.mrb[0].mxu0
        %v5083 = vadd.f32 0.0, %v5082
        %5084 = vmatprep.mubr.bf16.mxu0 0
        %5085 = vmatmul.mubr.bf16.gmra.mrb[0].mxu0 %v4873
        %v5086 = vpop.f32.mrb[0].mxu0
        %v5087 = vadd.f32 0.0, %v5086
        %v5088 = vpop.f32.mrb[0].mxu0
        %v5089 = vadd.f32 0.0, %v5088
        %v5090 = vpop.f32.mrb[0].mxu0
        %v5091 = vadd.f32 0.0, %v5090
        %v5092 = vpop.f32.mrb[0].mxu0
        %v5093 = vadd.f32 0.0, %v5092
        %5094 = vmatprep.mubr.bf16.mxu0 0
        %5095 = vmatmul.mubr.bf16.gmra.mrb[0].mxu0 %v4876
        %v5096 = vpop.f32.mrb[0].mxu0
        %v5097 = vadd.f32 0.0, %v5096
        %v5098 = vpop.f32.mrb[0].mxu0
        %v5099 = vadd.f32 0.0, %v5098
        %v5100 = vpop.f32.mrb[0].mxu0
        %v5101 = vadd.f32 0.0, %v5100
        %v5102 = vpop.f32.mrb[0].mxu0
        %v5103 = vadd.f32 0.0, %v5102
        %5104 = vmatprep.mubr.bf16.mxu0 0
        %5105 = vmatmul.mubr.bf16.gmra.mrb[0].mxu0 %v4879
        %v5106 = vpop.f32.mrb[0].mxu0
        %v5107 = vadd.f32 0.0, %v5106
        %v5108 = vpop.f32.mrb[0].mxu0
        %v5109 = vadd.f32 0.0, %v5108
        %v5110 = vpop.f32.mrb[0].mxu0
        %v5111 = vadd.f32 0.0, %v5110
        %v5112 = vpop.f32.mrb[0].mxu0
        %v5113 = vadd.f32 0.0, %v5112
        %5114 = vmatprep.mubr.bf16.mxu0 0
        %5115 = vmatmul.mubr.bf16.gmra.mrb[0].mxu0 %v4882
        %v5116 = vpop.f32.mrb[0].mxu0
        %v5117 = vadd.f32 0.0, %v5116
        %v5118 = vpop.f32.mrb[0].mxu0
        %v5119 = vadd.f32 0.0, %v5118
        %v5120 = vpop.f32.mrb[0].mxu0
        %v5121 = vadd.f32 0.0, %v5120
        %v5122 = vpop.f32.mrb[0].mxu0
        %v5123 = vadd.f32 0.0, %v5122
        %5124 = vdwg.mxu0
        %v5125 = vmax.f32 %v4967, %v4969
        %5126 = vmax.xlane.f32.xlu0 %v5125
        %v5127 = vpop.xlane.xlu0 %5126
        %v5128 = vmax.f32 %v4971, %v4973
        %5129 = vmax.xlane.f32.xlu0 %v5128
        %v5130 = vpop.xlane.xlu0 %5129
        %v5131 = vmax.f32 %v4977, %v4979
        %5132 = vmax.xlane.f32.xlu0 %v5131
        %v5133 = vpop.xlane.xlu0 %5132
        %v5134 = vmax.f32 %v4981, %v4983
        %5135 = vmax.xlane.f32.xlu0 %v5134
        %v5136 = vpop.xlane.xlu0 %5135
        %v5137 = vmax.f32 %v4987, %v4989
        %5138 = vmax.xlane.f32.xlu0 %v5137
        %v5139 = vpop.xlane.xlu0 %5138
        %v5140 = vmax.f32 %v4991, %v4993
        %5141 = vmax.xlane.f32.xlu0 %v5140
        %v5142 = vpop.xlane.xlu0 %5141
        %v5143 = vmax.f32 %v4997, %v4999
        %5144 = vmax.xlane.f32.xlu0 %v5143
        %v5145 = vpop.xlane.xlu0 %5144
        %v5146 = vmax.f32 %v5001, %v5003
        %5147 = vmax.xlane.f32.xlu0 %v5146
        %v5148 = vpop.xlane.xlu0 %5147
        %v5149 = vmax.f32 %v5007, %v5009
        %5150 = vmax.xlane.f32.xlu0 %v5149
        %v5151 = vpop.xlane.xlu0 %5150
        %v5152 = vmax.f32 %v5011, %v5013
        %5153 = vmax.xlane.f32.xlu0 %v5152
        %v5154 = vpop.xlane.xlu0 %5153
        %v5155 = vmax.f32 %v5017, %v5019
        %5156 = vmax.xlane.f32.xlu0 %v5155
        %v5157 = vpop.xlane.xlu0 %5156
        %v5158 = vmax.f32 %v5021, %v5023
        %5159 = vmax.xlane.f32.xlu0 %v5158
        %v5160 = vpop.xlane.xlu0 %5159
        %v5161 = vmax.f32 %v5027, %v5029
        %5162 = vmax.xlane.f32.xlu0 %v5161
        %v5163 = vpop.xlane.xlu0 %5162
        %v5164 = vmax.f32 %v5031, %v5033
        %5165 = vmax.xlane.f32.xlu0 %v5164
        %v5166 = vpop.xlane.xlu0 %5165
        %v5167 = vmax.f32 %v5037, %v5039
        %5168 = vmax.xlane.f32.xlu0 %v5167
        %v5169 = vpop.xlane.xlu0 %5168
        %v5170 = vmax.f32 %v5041, %v5043
        %5171 = vmax.xlane.f32.xlu0 %v5170
        %v5172 = vpop.xlane.xlu0 %5171
        %v5173 = vmax.f32 %v5047, %v5049
        %5174 = vmax.xlane.f32.xlu0 %v5173
        %v5175 = vpop.xlane.xlu0 %5174
        %v5176 = vmax.f32 %v5051, %v5053
        %5177 = vmax.xlane.f32.xlu0 %v5176
        %v5178 = vpop.xlane.xlu0 %5177
        %v5179 = vmax.f32 %v5057, %v5059
        %5180 = vmax.xlane.f32.xlu0 %v5179
        %v5181 = vpop.xlane.xlu0 %5180
        %v5182 = vmax.f32 %v5061, %v5063
        %5183 = vmax.xlane.f32.xlu0 %v5182
        %v5184 = vpop.xlane.xlu0 %5183
        %v5185 = vmax.f32 %v5067, %v5069
        %5186 = vmax.xlane.f32.xlu0 %v5185
        %v5187 = vpop.xlane.xlu0 %5186
        %v5188 = vmax.f32 %v5071, %v5073
        %5189 = vmax.xlane.f32.xlu0 %v5188
        %v5190 = vpop.xlane.xlu0 %5189
        %v5191 = vmax.f32 %v5077, %v5079
        %5192 = vmax.xlane.f32.xlu0 %v5191
        %v5193 = vpop.xlane.xlu0 %5192
        %v5194 = vmax.f32 %v5081, %v5083
        %5195 = vmax.xlane.f32.xlu0 %v5194
        %v5196 = vpop.xlane.xlu0 %5195
        %v5197 = vmax.f32 %v5087, %v5089
        %5198 = vmax.xlane.f32.xlu0 %v5197
        %v5199 = vpop.xlane.xlu0 %5198
        %v5200 = vmax.f32 %v5091, %v5093
        %5201 = vmax.xlane.f32.xlu0 %v5200
        %v5202 = vpop.xlane.xlu0 %5201
        %v5203 = vmax.f32 %v5097, %v5099
        %5204 = vmax.xlane.f32.xlu0 %v5203
        %v5205 = vpop.xlane.xlu0 %5204
        %v5206 = vmax.f32 %v5101, %v5103
        %5207 = vmax.xlane.f32.xlu0 %v5206
        %v5208 = vpop.xlane.xlu0 %5207
        %v5209 = vmax.f32 %v5107, %v5109
        %5210 = vmax.xlane.f32.xlu0 %v5209
        %v5211 = vpop.xlane.xlu0 %5210
        %v5212 = vmax.f32 %v5111, %v5113
        %5213 = vmax.xlane.f32.xlu0 %v5212
        %v5214 = vpop.xlane.xlu0 %5213
        %v5215 = vmax.f32 %v5117, %v5119
        %5216 = vmax.xlane.f32.xlu0 %v5215
        %v5217 = vpop.xlane.xlu0 %5216
        %v5218 = vmax.f32 %v5121, %v5123
        %5219 = vmax.xlane.f32.xlu0 %v5218
        %v5220 = vpop.xlane.xlu0 %5219
        %v5221 = vsub.f32 %v4967, %v5127
        %v5222 = vsub.f32 %v4969, %v5127
        %v5223 = vsub.f32 %v4971, %v5130
        %v5224 = vsub.f32 %v4973, %v5130
        %v5225 = vsub.f32 %v4977, %v5133
        %v5226 = vsub.f32 %v4979, %v5133
        %v5227 = vsub.f32 %v4981, %v5136
        %v5228 = vsub.f32 %v4983, %v5136
        %v5229 = vsub.f32 %v4987, %v5139
        %v5230 = vsub.f32 %v4989, %v5139
        %v5231 = vsub.f32 %v4991, %v5142
        %v5232 = vsub.f32 %v4993, %v5142
        %v5233 = vsub.f32 %v4997, %v5145
        %v5234 = vsub.f32 %v4999, %v5145
        %v5235 = vsub.f32 %v5001, %v5148
        %v5236 = vsub.f32 %v5003, %v5148
        %v5237 = vsub.f32 %v5007, %v5151
        %v5238 = vsub.f32 %v5009, %v5151
        %v5239 = vsub.f32 %v5011, %v5154
        %v5240 = vsub.f32 %v5013, %v5154
        %v5241 = vsub.f32 %v5017, %v5157
        %v5242 = vsub.f32 %v5019, %v5157
        %v5243 = vsub.f32 %v5021, %v5160
        %v5244 = vsub.f32 %v5023, %v5160
        %v5245 = vsub.f32 %v5027, %v5163
        %v5246 = vsub.f32 %v5029, %v5163
        %v5247 = vsub.f32 %v5031, %v5166
        %v5248 = vsub.f32 %v5033, %v5166
        %v5249 = vsub.f32 %v5037, %v5169
        %v5250 = vsub.f32 %v5039, %v5169
        %v5251 = vsub.f32 %v5041, %v5172
        %v5252 = vsub.f32 %v5043, %v5172
        %v5253 = vsub.f32 %v5047, %v5175
        %v5254 = vsub.f32 %v5049, %v5175
        %v5255 = vsub.f32 %v5051, %v5178
        %v5256 = vsub.f32 %v5053, %v5178
        %v5257 = vsub.f32 %v5057, %v5181
        %v5258 = vsub.f32 %v5059, %v5181
        %v5259 = vsub.f32 %v5061, %v5184
        %v5260 = vsub.f32 %v5063, %v5184
        %v5261 = vsub.f32 %v5067, %v5187
        %v5262 = vsub.f32 %v5069, %v5187
        %v5263 = vsub.f32 %v5071, %v5190
        %v5264 = vsub.f32 %v5073, %v5190
        %v5265 = vsub.f32 %v5077, %v5193
        %v5266 = vsub.f32 %v5079, %v5193
        %v5267 = vsub.f32 %v5081, %v5196
        %v5268 = vsub.f32 %v5083, %v5196
        %v5269 = vsub.f32 %v5087, %v5199
        %v5270 = vsub.f32 %v5089, %v5199
        %v5271 = vsub.f32 %v5091, %v5202
        %v5272 = vsub.f32 %v5093, %v5202
        %v5273 = vsub.f32 %v5097, %v5205
        %v5274 = vsub.f32 %v5099, %v5205
        %v5275 = vsub.f32 %v5101, %v5208
        %v5276 = vsub.f32 %v5103, %v5208
        %v5277 = vsub.f32 %v5107, %v5211
        %v5278 = vsub.f32 %v5109, %v5211
        %v5279 = vsub.f32 %v5111, %v5214
        %v5280 = vsub.f32 %v5113, %v5214
        %v5281 = vsub.f32 %v5117, %v5217
        %v5282 = vsub.f32 %v5119, %v5217
        %v5283 = vsub.f32 %v5121, %v5220
        %v5284 = vsub.f32 %v5123, %v5220
        %v5285 = vmul.f32 %v5221, 1.442695
        %v5286 = vpow.pop %v5285
        %v5287 = vmul.f32 %v5222, 1.442695
        %v5288 = vpow.pop %v5287
        %v5289 = vmul.f32 %v5223, 1.442695
        %v5290 = vpow.pop %v5289
        %v5291 = vmul.f32 %v5224, 1.442695
        %v5292 = vpow.pop %v5291
        %v5293 = vmul.f32 %v5225, 1.442695
        %v5294 = vpow.pop %v5293
        %v5295 = vmul.f32 %v5226, 1.442695
        %v5296 = vpow.pop %v5295
        %v5297 = vmul.f32 %v5227, 1.442695
        %v5298 = vpow.pop %v5297
        %v5299 = vmul.f32 %v5228, 1.442695
        %v5300 = vpow.pop %v5299
        %v5301 = vmul.f32 %v5229, 1.442695
        %v5302 = vpow.pop %v5301
        %v5303 = vmul.f32 %v5230, 1.442695
        %v5304 = vpow.pop %v5303
        %v5305 = vmul.f32 %v5231, 1.442695
        %v5306 = vpow.pop %v5305
        %v5307 = vmul.f32 %v5232, 1.442695
        %v5308 = vpow.pop %v5307
        %v5309 = vmul.f32 %v5233, 1.442695
        %v5310 = vpow.pop %v5309
        %v5311 = vmul.f32 %v5234, 1.442695
        %v5312 = vpow.pop %v5311
        %v5313 = vmul.f32 %v5235, 1.442695
        %v5314 = vpow.pop %v5313
        %v5315 = vmul.f32 %v5236, 1.442695
        %v5316 = vpow.pop %v5315
        %v5317 = vmul.f32 %v5237, 1.442695
        %v5318 = vpow.pop %v5317
        %v5319 = vmul.f32 %v5238, 1.442695
        %v5320 = vpow.pop %v5319
        %v5321 = vmul.f32 %v5239, 1.442695
        %v5322 = vpow.pop %v5321
        %v5323 = vmul.f32 %v5240, 1.442695
        %v5324 = vpow.pop %v5323
        %v5325 = vmul.f32 %v5241, 1.442695
        %v5326 = vpow.pop %v5325
        %v5327 = vmul.f32 %v5242, 1.442695
        %v5328 = vpow.pop %v5327
        %v5329 = vmul.f32 %v5243, 1.442695
        %v5330 = vpow.pop %v5329
        %v5331 = vmul.f32 %v5244, 1.442695
        %v5332 = vpow.pop %v5331
        %v5333 = vmul.f32 %v5245, 1.442695
        %v5334 = vpow.pop %v5333
        %v5335 = vmul.f32 %v5246, 1.442695
        %v5336 = vpow.pop %v5335
        %v5337 = vmul.f32 %v5247, 1.442695
        %v5338 = vpow.pop %v5337
        %v5339 = vmul.f32 %v5248, 1.442695
        %v5340 = vpow.pop %v5339
        %v5341 = vmul.f32 %v5249, 1.442695
        %v5342 = vpow.pop %v5341
        %v5343 = vmul.f32 %v5250, 1.442695
        %v5344 = vpow.pop %v5343
        %v5345 = vmul.f32 %v5251, 1.442695
        %v5346 = vpow.pop %v5345
        %v5347 = vmul.f32 %v5252, 1.442695
        %v5348 = vpow.pop %v5347
        %v5349 = vmul.f32 %v5253, 1.442695
        %v5350 = vpow.pop %v5349
        %v5351 = vmul.f32 %v5254, 1.442695
        %v5352 = vpow.pop %v5351
        %v5353 = vmul.f32 %v5255, 1.442695
        %v5354 = vpow.pop %v5353
        %v5355 = vmul.f32 %v5256, 1.442695
        %v5356 = vpow.pop %v5355
        %v5357 = vmul.f32 %v5257, 1.442695
        %v5358 = vpow.pop %v5357
        %v5359 = vmul.f32 %v5258, 1.442695
        %v5360 = vpow.pop %v5359
        %v5361 = vmul.f32 %v5259, 1.442695
        %v5362 = vpow.pop %v5361
        %v5363 = vmul.f32 %v5260, 1.442695
        %v5364 = vpow.pop %v5363
        %v5365 = vmul.f32 %v5261, 1.442695
        %v5366 = vpow.pop %v5365
        %v5367 = vmul.f32 %v5262, 1.442695
        %v5368 = vpow.pop %v5367
        %v5369 = vmul.f32 %v5263, 1.442695
        %v5370 = vpow.pop %v5369
        %v5371 = vmul.f32 %v5264, 1.442695
        %v5372 = vpow.pop %v5371
        %v5373 = vmul.f32 %v5265, 1.442695
        %v5374 = vpow.pop %v5373
        %v5375 = vmul.f32 %v5266, 1.442695
        %v5376 = vpow.pop %v5375
        %v5377 = vmul.f32 %v5267, 1.442695
        %v5378 = vpow.pop %v5377
        %v5379 = vmul.f32 %v5268, 1.442695
        %v5380 = vpow.pop %v5379
        %v5381 = vmul.f32 %v5269, 1.442695
        %v5382 = vpow.pop %v5381
        %v5383 = vmul.f32 %v5270, 1.442695
        %v5384 = vpow.pop %v5383
        %v5385 = vmul.f32 %v5271, 1.442695
        %v5386 = vpow.pop %v5385
        %v5387 = vmul.f32 %v5272, 1.442695
        %v5388 = vpow.pop %v5387
        %v5389 = vmul.f32 %v5273, 1.442695
        %v5390 = vpow.pop %v5389
        %v5391 = vmul.f32 %v5274, 1.442695
        %v5392 = vpow.pop %v5391
        %v5393 = vmul.f32 %v5275, 1.442695
        %v5394 = vpow.pop %v5393
        %v5395 = vmul.f32 %v5276, 1.442695
        %v5396 = vpow.pop %v5395
        %v5397 = vmul.f32 %v5277, 1.442695
        %v5398 = vpow.pop %v5397
        %v5399 = vmul.f32 %v5278, 1.442695
        %v5400 = vpow.pop %v5399
        %v5401 = vmul.f32 %v5279, 1.442695
        %v5402 = vpow.pop %v5401
        %v5403 = vmul.f32 %v5280, 1.442695
        %v5404 = vpow.pop %v5403
        %v5405 = vmul.f32 %v5281, 1.442695
        %v5406 = vpow.pop %v5405
        %v5407 = vmul.f32 %v5282, 1.442695
        %v5408 = vpow.pop %v5407
        %v5409 = vmul.f32 %v5283, 1.442695
        %v5410 = vpow.pop %v5409
        %v5411 = vmul.f32 %v5284, 1.442695
        %v5412 = vpow.pop %v5411
        %v5413 = vadd.f32 %v5286, %v5288
        %5414 = vadd.xlane.f32.xlu0 %v5413
        %v5415 = vpop.xlane.xlu0 %5414
        %v5416 = vadd.f32 %v5290, %v5292
        %5417 = vadd.xlane.f32.xlu0 %v5416
        %v5418 = vpop.xlane.xlu0 %5417
        %v5419 = vadd.f32 %v5294, %v5296
        %5420 = vadd.xlane.f32.xlu0 %v5419
        %v5421 = vpop.xlane.xlu0 %5420
        %v5422 = vadd.f32 %v5298, %v5300
        %5423 = vadd.xlane.f32.xlu0 %v5422
        %v5424 = vpop.xlane.xlu0 %5423
        %v5425 = vadd.f32 %v5302, %v5304
        %5426 = vadd.xlane.f32.xlu0 %v5425
        %v5427 = vpop.xlane.xlu0 %5426
        %v5428 = vadd.f32 %v5306, %v5308
        %5429 = vadd.xlane.f32.xlu0 %v5428
        %v5430 = vpop.xlane.xlu0 %5429
        %v5431 = vadd.f32 %v5310, %v5312
        %5432 = vadd.xlane.f32.xlu0 %v5431
        %v5433 = vpop.xlane.xlu0 %5432
        %v5434 = vadd.f32 %v5314, %v5316
        %5435 = vadd.xlane.f32.xlu0 %v5434
        %v5436 = vpop.xlane.xlu0 %5435
        %v5437 = vadd.f32 %v5318, %v5320
        %5438 = vadd.xlane.f32.xlu0 %v5437
        %v5439 = vpop.xlane.xlu0 %5438
        %v5440 = vadd.f32 %v5322, %v5324
        %5441 = vadd.xlane.f32.xlu0 %v5440
        %v5442 = vpop.xlane.xlu0 %5441
        %v5443 = vadd.f32 %v5326, %v5328
        %5444 = vadd.xlane.f32.xlu0 %v5443
        %v5445 = vpop.xlane.xlu0 %5444
        %v5446 = vadd.f32 %v5330, %v5332
        %5447 = vadd.xlane.f32.xlu0 %v5446
        %v5448 = vpop.xlane.xlu0 %5447
        %v5449 = vadd.f32 %v5334, %v5336
        %5450 = vadd.xlane.f32.xlu0 %v5449
        %v5451 = vpop.xlane.xlu0 %5450
        %v5452 = vadd.f32 %v5338, %v5340
        %5453 = vadd.xlane.f32.xlu0 %v5452
        %v5454 = vpop.xlane.xlu0 %5453
        %v5455 = vadd.f32 %v5342, %v5344
        %5456 = vadd.xlane.f32.xlu0 %v5455
        %v5457 = vpop.xlane.xlu0 %5456
        %v5458 = vadd.f32 %v5346, %v5348
        %5459 = vadd.xlane.f32.xlu0 %v5458
        %v5460 = vpop.xlane.xlu0 %5459
        %v5461 = vadd.f32 %v5350, %v5352
        %5462 = vadd.xlane.f32.xlu0 %v5461
        %v5463 = vpop.xlane.xlu0 %5462
        %v5464 = vadd.f32 %v5354, %v5356
        %5465 = vadd.xlane.f32.xlu0 %v5464
        %v5466 = vpop.xlane.xlu0 %5465
        %v5467 = vadd.f32 %v5358, %v5360
        %5468 = vadd.xlane.f32.xlu0 %v5467
        %v5469 = vpop.xlane.xlu0 %5468
        %v5470 = vadd.f32 %v5362, %v5364
        %5471 = vadd.xlane.f32.xlu0 %v5470
        %v5472 = vpop.xlane.xlu0 %5471
        %v5473 = vadd.f32 %v5366, %v5368
        %5474 = vadd.xlane.f32.xlu0 %v5473
        %v5475 = vpop.xlane.xlu0 %5474
        %v5476 = vadd.f32 %v5370, %v5372
        %5477 = vadd.xlane.f32.xlu0 %v5476
        %v5478 = vpop.xlane.xlu0 %5477
        %v5479 = vadd.f32 %v5374, %v5376
        %5480 = vadd.xlane.f32.xlu0 %v5479
        %v5481 = vpop.xlane.xlu0 %5480
        %v5482 = vadd.f32 %v5378, %v5380
        %5483 = vadd.xlane.f32.xlu0 %v5482
        %v5484 = vpop.xlane.xlu0 %5483
        %v5485 = vadd.f32 %v5382, %v5384
        %5486 = vadd.xlane.f32.xlu0 %v5485
        %v5487 = vpop.xlane.xlu0 %5486
        %v5488 = vadd.f32 %v5386, %v5388
        %5489 = vadd.xlane.f32.xlu0 %v5488
        %v5490 = vpop.xlane.xlu0 %5489
        %v5491 = vadd.f32 %v5390, %v5392
        %5492 = vadd.xlane.f32.xlu0 %v5491
        %v5493 = vpop.xlane.xlu0 %5492
        %v5494 = vadd.f32 %v5394, %v5396
        %5495 = vadd.xlane.f32.xlu0 %v5494
        %v5496 = vpop.xlane.xlu0 %5495
        %v5497 = vadd.f32 %v5398, %v5400
        %5498 = vadd.xlane.f32.xlu0 %v5497
        %v5499 = vpop.xlane.xlu0 %5498
        %v5500 = vadd.f32 %v5402, %v5404
        %5501 = vadd.xlane.f32.xlu0 %v5500
        %v5502 = vpop.xlane.xlu0 %5501
        %v5503 = vadd.f32 %v5406, %v5408
        %5504 = vadd.xlane.f32.xlu0 %v5503
        %v5505 = vpop.xlane.xlu0 %5504
        %v5506 = vadd.f32 %v5410, %v5412
        %5507 = vadd.xlane.f32.xlu0 %v5506
        %v5508 = vpop.xlane.xlu0 %5507
        %v5509 = vrcp.pop %v5415
        %v5510 = vrcp.pop %v5418
        %v5511 = vrcp.pop %v5421
        %v5512 = vrcp.pop %v5424
        %v5513 = vrcp.pop %v5427
        %v5514 = vrcp.pop %v5430
        %v5515 = vrcp.pop %v5433
        %v5516 = vrcp.pop %v5436
        %v5517 = vrcp.pop %v5439
        %v5518 = vrcp.pop %v5442
        %v5519 = vrcp.pop %v5445
        %v5520 = vrcp.pop %v5448
        %v5521 = vrcp.pop %v5451
        %v5522 = vrcp.pop %v5454
        %v5523 = vrcp.pop %v5457
        %v5524 = vrcp.pop %v5460
        %v5525 = vrcp.pop %v5463
        %v5526 = vrcp.pop %v5466
        %v5527 = vrcp.pop %v5469
        %v5528 = vrcp.pop %v5472
        %v5529 = vrcp.pop %v5475
        %v5530 = vrcp.pop %v5478
        %v5531 = vrcp.pop %v5481
        %v5532 = vrcp.pop %v5484
        %v5533 = vrcp.pop %v5487
        %v5534 = vrcp.pop %v5490
        %v5535 = vrcp.pop %v5493
        %v5536 = vrcp.pop %v5496
        %v5537 = vrcp.pop %v5499
        %v5538 = vrcp.pop %v5502
        %v5539 = vrcp.pop %v5505
        %v5540 = vrcp.pop %v5508
        %v5541 = vmul.f32 %v5286, %v5509
        %v5542 = vmul.f32 %v5288, %v5509
        %v5543 = vmul.f32 %v5290, %v5510
        %v5544 = vmul.f32 %v5292, %v5510
        %v5545 = vmul.f32 %v5294, %v5511
        %v5546 = vmul.f32 %v5296, %v5511
        %v5547 = vmul.f32 %v5298, %v5512
        %v5548 = vmul.f32 %v5300, %v5512
        %v5549 = vmul.f32 %v5302, %v5513
        %v5550 = vmul.f32 %v5304, %v5513
        %v5551 = vmul.f32 %v5306, %v5514
        %v5552 = vmul.f32 %v5308, %v5514
        %v5553 = vmul.f32 %v5310, %v5515
        %v5554 = vmul.f32 %v5312, %v5515
        %v5555 = vmul.f32 %v5314, %v5516
        %v5556 = vmul.f32 %v5316, %v5516
        %v5557 = vmul.f32 %v5318, %v5517
        %v5558 = vmul.f32 %v5320, %v5517
        %v5559 = vmul.f32 %v5322, %v5518
        %v5560 = vmul.f32 %v5324, %v5518
        %v5561 = vmul.f32 %v5326, %v5519
        %v5562 = vmul.f32 %v5328, %v5519
        %v5563 = vmul.f32 %v5330, %v5520
        %v5564 = vmul.f32 %v5332, %v5520
        %v5565 = vmul.f32 %v5334, %v5521
        %v5566 = vmul.f32 %v5336, %v5521
        %v5567 = vmul.f32 %v5338, %v5522
        %v5568 = vmul.f32 %v5340, %v5522
        %v5569 = vmul.f32 %v5342, %v5523
        %v5570 = vmul.f32 %v5344, %v5523
        %v5571 = vmul.f32 %v5346, %v5524
        %v5572 = vmul.f32 %v5348, %v5524
        %v5573 = vmul.f32 %v5350, %v5525
        %v5574 = vmul.f32 %v5352, %v5525
        %v5575 = vmul.f32 %v5354, %v5526
        %v5576 = vmul.f32 %v5356, %v5526
        %v5577 = vmul.f32 %v5358, %v5527
        %v5578 = vmul.f32 %v5360, %v5527
        %v5579 = vmul.f32 %v5362, %v5528
        %v5580 = vmul.f32 %v5364, %v5528
        %v5581 = vmul.f32 %v5366, %v5529
        %v5582 = vmul.f32 %v5368, %v5529
        %v5583 = vmul.f32 %v5370, %v5530
        %v5584 = vmul.f32 %v5372, %v5530
        %v5585 = vmul.f32 %v5374, %v5531
        %v5586 = vmul.f32 %v5376, %v5531
        %v5587 = vmul.f32 %v5378, %v5532
        %v5588 = vmul.f32 %v5380, %v5532
        %v5589 = vmul.f32 %v5382, %v5533
        %v5590 = vmul.f32 %v5384, %v5533
        %v5591 = vmul.f32 %v5386, %v5534
        %v5592 = vmul.f32 %v5388, %v5534
        %v5593 = vmul.f32 %v5390, %v5535
        %v5594 = vmul.f32 %v5392, %v5535
        %v5595 = vmul.f32 %v5394, %v5536
        %v5596 = vmul.f32 %v5396, %v5536
        %v5597 = vmul.f32 %v5398, %v5537
        %v5598 = vmul.f32 %v5400, %v5537
        %v5599 = vmul.f32 %v5402, %v5538
        %v5600 = vmul.f32 %v5404, %v5538
        %v5601 = vmul.f32 %v5406, %v5539
        %v5602 = vmul.f32 %v5408, %v5539
        %v5603 = vmul.f32 %v5410, %v5540
        %v5604 = vmul.f32 %v5412, %v5540
        %v5605 = vpack.c.bf16 %v5543, %v5541
        %v5606 = vpack.c.bf16 %v5544, %v5542
        %v5607 = vpack.c.bf16 %v5547, %v5545
        %v5608 = vpack.c.bf16 %v5548, %v5546
        %v5609 = vpack.c.bf16 %v5551, %v5549
        %v5610 = vpack.c.bf16 %v5552, %v5550
        %v5611 = vpack.c.bf16 %v5555, %v5553
        %v5612 = vpack.c.bf16 %v5556, %v5554
        %v5613 = vpack.c.bf16 %v5559, %v5557
        %v5614 = vpack.c.bf16 %v5560, %v5558
        %v5615 = vpack.c.bf16 %v5563, %v5561
        %v5616 = vpack.c.bf16 %v5564, %v5562
        %v5617 = vpack.c.bf16 %v5567, %v5565
        %v5618 = vpack.c.bf16 %v5568, %v5566
        %v5619 = vpack.c.bf16 %v5571, %v5569
        %v5620 = vpack.c.bf16 %v5572, %v5570
        %v5621 = vpack.c.bf16 %v5575, %v5573
        %v5622 = vpack.c.bf16 %v5576, %v5574
        %v5623 = vpack.c.bf16 %v5579, %v5577
        %v5624 = vpack.c.bf16 %v5580, %v5578
        %v5625 = vpack.c.bf16 %v5583, %v5581
        %v5626 = vpack.c.bf16 %v5584, %v5582
        %v5627 = vpack.c.bf16 %v5587, %v5585
        %v5628 = vpack.c.bf16 %v5588, %v5586
        %v5629 = vpack.c.bf16 %v5591, %v5589
        %v5630 = vpack.c.bf16 %v5592, %v5590
        %v5631 = vpack.c.bf16 %v5595, %v5593
        %v5632 = vpack.c.bf16 %v5596, %v5594
        %v5633 = vpack.c.bf16 %v5599, %v5597
        %v5634 = vpack.c.bf16 %v5600, %v5598
        %v5635 = vpack.c.bf16 %v5603, %v5601
        %v5636 = vpack.c.bf16 %v5604, %v5602
        %5637 = vrot.lane.b32.xlu0 %v2214, 112
        %v5638 = vpop.permute.xlu0 %5637
        %5639 = vrot.lane.b32.xlu0 %v2215, 112
        %v5640 = vpop.permute.xlu0 %5639
        %5641 = vrot.lane.b32.xlu0 %v2216, 112
        %v5642 = vpop.permute.xlu0 %5641
        %5643 = vrot.lane.b32.xlu0 %v2217, 112
        %v5644 = vpop.permute.xlu0 %5643
        %5645 = vrot.lane.b32.xlu0 %v2218, 112
        %v5646 = vpop.permute.xlu0 %5645
        %5647 = vrot.lane.b32.xlu0 %v2219, 112
        %v5648 = vpop.permute.xlu0 %5647
        %5649 = vrot.lane.b32.xlu0 %v2220, 112
        %v5650 = vpop.permute.xlu0 %5649
        %5651 = vrot.lane.b32.xlu0 %v2221, 112
        %v5652 = vpop.permute.xlu0 %5651
        %5653 = vrot.lane.b32.xlu0 %v2222, 112
        %v5654 = vpop.permute.xlu0 %5653
        %5655 = vrot.lane.b32.xlu0 %v2223, 112
        %v5656 = vpop.permute.xlu0 %5655
        %5657 = vrot.lane.b32.xlu0 %v2224, 112
        %v5658 = vpop.permute.xlu0 %5657
        %5659 = vrot.lane.b32.xlu0 %v2225, 112
        %v5660 = vpop.permute.xlu0 %5659
        %5661 = vrot.lane.b32.xlu0 %v2226, 112
        %v5662 = vpop.permute.xlu0 %5661
        %5663 = vrot.lane.b32.xlu0 %v2227, 112
        %v5664 = vpop.permute.xlu0 %5663
        %5665 = vrot.lane.b32.xlu0 %v2228, 112
        %v5666 = vpop.permute.xlu0 %5665
        %5667 = vrot.lane.b32.xlu0 %v2229, 112
        %v5668 = vpop.permute.xlu0 %5667
        %5685 = vmatprep.subr.bf16.mxu0 0
        %5686 = vmatpush1.bf16.msra.mxu0 %v5638
        %5687 = vmatprep.subr.bf16.mxu0 0
        %5688 = vmatpush1.bf16.msra.mxu0 %v5640
        %5689 = vmatprep.subr.bf16.mxu0 0
        %5690 = vmatpush1.bf16.msra.mxu0 %v5642
        %5691 = vmatprep.subr.bf16.mxu0 0
        %5692 = vmatpush1.bf16.msra.mxu0 %v5644
        %5693 = vmatprep.subr.bf16.mxu0 0
        %5694 = vmatpush1.bf16.msra.mxu0 %v5646
        %5695 = vmatprep.subr.bf16.mxu0 0
        %5696 = vmatpush1.bf16.msra.mxu0 %v5648
        %5697 = vmatprep.subr.bf16.mxu0 0
        %5698 = vmatpush1.bf16.msra.mxu0 %v5650
        %5699 = vmatprep.subr.bf16.mxu0 0
        %5700 = vmatpush1.bf16.msra.mxu0 %v5652
        %5701 = vmatprep.subr.bf16.mxu0 0
        %5702 = vmatpush1.bf16.msra.mxu0 %v5654
        %5703 = vmatprep.subr.bf16.mxu0 0
        %5704 = vmatpush1.bf16.msra.mxu0 %v5656
        %5705 = vmatprep.subr.bf16.mxu0 0
        %5706 = vmatpush1.bf16.msra.mxu0 %v5658
        %5707 = vmatprep.subr.bf16.mxu0 0
        %5708 = vmatpush1.bf16.msra.mxu0 %v5660
        %5709 = vmatprep.subr.bf16.mxu0 0
        %5710 = vmatpush1.bf16.msra.mxu0 %v5662
        %5711 = vmatprep.subr.bf16.mxu0 0
        %5712 = vmatpush1.bf16.msra.mxu0 %v5664
        %5713 = vmatprep.subr.bf16.mxu0 0
        %5714 = vmatpush1.bf16.msra.mxu0 %v5666
        %5715 = vmatprep.subr.bf16.mxu0 0
        %5716 = vmatpush1.bf16.msra.mxu0 %v5668
        %5717 = vmatprep.mubr.bf16.mxu0 %v5606
        %5718 = vmatmul.mubr.bf16.gmra.mrb[0].mxu0 %v5605
        %v5719 = vpop.f32.mrb[0].mxu0
        %v5720 = vadd.f32 0.0, %v5719
        %v5721 = vpop.f32.mrb[0].mxu0
        %v5722 = vpop.f32.mrb[0].mxu0
        %v5723 = vadd.f32 0.0, %v5722
        %v5724 = vpop.f32.mrb[0].mxu0
        %5725 = vmatprep.mubr.bf16.mxu0 %v5608
        %5726 = vmatmul.mubr.bf16.gmra.mrb[0].mxu0 %v5607
        %v5727 = vpop.f32.mrb[0].mxu0
        %v5728 = vadd.f32 0.0, %v5727
        %v5729 = vpop.f32.mrb[0].mxu0
        %v5730 = vpop.f32.mrb[0].mxu0
        %v5731 = vadd.f32 0.0, %v5730
        %v5732 = vpop.f32.mrb[0].mxu0
        %5733 = vmatprep.mubr.bf16.mxu0 %v5610
        %5734 = vmatmul.mubr.bf16.gmra.mrb[0].mxu0 %v5609
        %v5735 = vpop.f32.mrb[0].mxu0
        %v5736 = vadd.f32 0.0, %v5735
        %v5737 = vpop.f32.mrb[0].mxu0
        %v5738 = vpop.f32.mrb[0].mxu0
        %v5739 = vadd.f32 0.0, %v5738
        %v5740 = vpop.f32.mrb[0].mxu0
        %5741 = vmatprep.mubr.bf16.mxu0 %v5612
        %5742 = vmatmul.mubr.bf16.gmra.mrb[0].mxu0 %v5611
        %v5743 = vpop.f32.mrb[0].mxu0
        %v5744 = vadd.f32 0.0, %v5743
        %v5745 = vpop.f32.mrb[0].mxu0
        %v5746 = vpop.f32.mrb[0].mxu0
        %v5747 = vadd.f32 0.0, %v5746
        %v5748 = vpop.f32.mrb[0].mxu0
        %5749 = vmatprep.mubr.bf16.mxu0 %v5614
        %5750 = vmatmul.mubr.bf16.gmra.mrb[0].mxu0 %v5613
        %v5751 = vpop.f32.mrb[0].mxu0
        %v5752 = vadd.f32 0.0, %v5751
        %v5753 = vpop.f32.mrb[0].mxu0
        %v5754 = vpop.f32.mrb[0].mxu0
        %v5755 = vadd.f32 0.0, %v5754
        %v5756 = vpop.f32.mrb[0].mxu0
        %5757 = vmatprep.mubr.bf16.mxu0 %v5616
        %5758 = vmatmul.mubr.bf16.gmra.mrb[0].mxu0 %v5615
        %v5759 = vpop.f32.mrb[0].mxu0
        %v5760 = vadd.f32 0.0, %v5759
        %v5761 = vpop.f32.mrb[0].mxu0
        %v5762 = vpop.f32.mrb[0].mxu0
        %v5763 = vadd.f32 0.0, %v5762
        %v5764 = vpop.f32.mrb[0].mxu0
        %5765 = vmatprep.mubr.bf16.mxu0 %v5618
        %5766 = vmatmul.mubr.bf16.gmra.mrb[0].mxu0 %v5617
        %v5767 = vpop.f32.mrb[0].mxu0
        %v5768 = vadd.f32 0.0, %v5767
        %v5769 = vpop.f32.mrb[0].mxu0
        %v5770 = vpop.f32.mrb[0].mxu0
        %v5771 = vadd.f32 0.0, %v5770
        %v5772 = vpop.f32.mrb[0].mxu0
        %5773 = vmatprep.mubr.bf16.mxu0 %v5620
        %5774 = vmatmul.mubr.bf16.gmra.mrb[0].mxu0 %v5619
        %v5775 = vpop.f32.mrb[0].mxu0
        %v5776 = vadd.f32 0.0, %v5775
        %v5777 = vpop.f32.mrb[0].mxu0
        %v5778 = vpop.f32.mrb[0].mxu0
        %v5779 = vadd.f32 0.0, %v5778
        %v5780 = vpop.f32.mrb[0].mxu0
        %5781 = vmatprep.mubr.bf16.mxu0 %v5622
        %5782 = vmatmul.mubr.bf16.gmra.mrb[0].mxu0 %v5621
        %v5783 = vpop.f32.mrb[0].mxu0
        %v5784 = vadd.f32 0.0, %v5783
        %v5785 = vpop.f32.mrb[0].mxu0
        %v5786 = vpop.f32.mrb[0].mxu0
        %v5787 = vadd.f32 0.0, %v5786
        %v5788 = vpop.f32.mrb[0].mxu0
        %5789 = vmatprep.mubr.bf16.mxu0 %v5624
        %5790 = vmatmul.mubr.bf16.gmra.mrb[0].mxu0 %v5623
        %v5791 = vpop.f32.mrb[0].mxu0
        %v5792 = vadd.f32 0.0, %v5791
        %v5793 = vpop.f32.mrb[0].mxu0
        %v5794 = vpop.f32.mrb[0].mxu0
        %v5795 = vadd.f32 0.0, %v5794
        %v5796 = vpop.f32.mrb[0].mxu0
        %5797 = vmatprep.mubr.bf16.mxu0 %v5626
        %5798 = vmatmul.mubr.bf16.gmra.mrb[0].mxu0 %v5625
        %v5799 = vpop.f32.mrb[0].mxu0
        %v5800 = vadd.f32 0.0, %v5799
        %v5801 = vpop.f32.mrb[0].mxu0
        %v5802 = vpop.f32.mrb[0].mxu0
        %v5803 = vadd.f32 0.0, %v5802
        %v5804 = vpop.f32.mrb[0].mxu0
        %5805 = vmatprep.mubr.bf16.mxu0 %v5628
        %5806 = vmatmul.mubr.bf16.gmra.mrb[0].mxu0 %v5627
        %v5807 = vpop.f32.mrb[0].mxu0
        %v5808 = vadd.f32 0.0, %v5807
        %v5809 = vpop.f32.mrb[0].mxu0
        %v5810 = vpop.f32.mrb[0].mxu0
        %v5811 = vadd.f32 0.0, %v5810
        %v5812 = vpop.f32.mrb[0].mxu0
        %5813 = vmatprep.mubr.bf16.mxu0 %v5630
        %5814 = vmatmul.mubr.bf16.gmra.mrb[0].mxu0 %v5629
        %v5815 = vpop.f32.mrb[0].mxu0
        %v5816 = vadd.f32 0.0, %v5815
        %v5817 = vpop.f32.mrb[0].mxu0
        %v5818 = vpop.f32.mrb[0].mxu0
        %v5819 = vadd.f32 0.0, %v5818
        %v5820 = vpop.f32.mrb[0].mxu0
        %5821 = vmatprep.mubr.bf16.mxu0 %v5632
        %5822 = vmatmul.mubr.bf16.gmra.mrb[0].mxu0 %v5631
        %v5823 = vpop.f32.mrb[0].mxu0
        %v5824 = vadd.f32 0.0, %v5823
        %v5825 = vpop.f32.mrb[0].mxu0
        %v5826 = vpop.f32.mrb[0].mxu0
        %v5827 = vadd.f32 0.0, %v5826
        %v5828 = vpop.f32.mrb[0].mxu0
        %5829 = vmatprep.mubr.bf16.mxu0 %v5634
        %5830 = vmatmul.mubr.bf16.gmra.mrb[0].mxu0 %v5633
        %v5831 = vpop.f32.mrb[0].mxu0
        %v5832 = vadd.f32 0.0, %v5831
        %v5833 = vpop.f32.mrb[0].mxu0
        %v5834 = vpop.f32.mrb[0].mxu0
        %v5835 = vadd.f32 0.0, %v5834
        %v5836 = vpop.f32.mrb[0].mxu0
        %5837 = vmatprep.mubr.bf16.mxu0 %v5636
        %5838 = vmatmul.mubr.bf16.gmra.mrb[0].mxu0 %v5635
        %v5839 = vpop.f32.mrb[0].mxu0
        %v5840 = vadd.f32 0.0, %v5839
        %v5841 = vpop.f32.mrb[0].mxu0
        %v5842 = vpop.f32.mrb[0].mxu0
        %v5843 = vadd.f32 0.0, %v5842
        %v5844 = vpop.f32.mrb[0].mxu0
        %5845 = vdwg.mxu0
        %v5846 = vpack.c.bf16 %v5723, %v5720
        %v5847 = vpack.c.bf16 %v5731, %v5728
        %v5848 = vpack.c.bf16 %v5739, %v5736
        %v5849 = vpack.c.bf16 %v5747, %v5744
        %v5850 = vpack.c.bf16 %v5755, %v5752
        %v5851 = vpack.c.bf16 %v5763, %v5760
        %v5852 = vpack.c.bf16 %v5771, %v5768
        %v5853 = vpack.c.bf16 %v5779, %v5776
        %v5854 = vpack.c.bf16 %v5787, %v5784
        %v5855 = vpack.c.bf16 %v5795, %v5792
        %v5856 = vpack.c.bf16 %v5803, %v5800
        %v5857 = vpack.c.bf16 %v5811, %v5808
        %v5858 = vpack.c.bf16 %v5819, %v5816
        %v5859 = vpack.c.bf16 %v5827, %v5824
        %v5860 = vpack.c.bf16 %v5835, %v5832
        %v5861 = vpack.c.bf16 %v5843, %v5840
        %v5863 = vsel %vm2230, %v5846, 0
        %v5866 = vsel %vm2230, %v5847, 0
        %v5869 = vsel %vm2230, %v5848, 0
        %v5872 = vsel %vm2230, %v5849, 0
        %v5875 = vsel %vm2230, %v5850, 0
        %v5878 = vsel %vm2230, %v5851, 0
        %v5881 = vsel %vm2230, %v5852, 0
        %v5884 = vsel %vm2230, %v5853, 0
        %v5887 = vsel %vm2230, %v5854, 0
        %v5890 = vsel %vm2230, %v5855, 0
        %v5893 = vsel %vm2230, %v5856, 0
        %v5896 = vsel %vm2230, %v5857, 0
        %v5899 = vsel %vm2230, %v5858, 0
        %v5902 = vsel %vm2230, %v5859, 0
        %v5905 = vsel %vm2230, %v5860, 0
        %v5908 = vsel %vm2230, %v5861, 0
        %v5911 = vsel %vm4395, %v2180, 0
        %5913 = vmatprep.subr.bf16.mxu0 0
        %5914 = vmatpush1.bf16.msra.mxu0 %v5911
        %5915 = vmatprep.subr.bf16.mxu0 0
        %5916 = vmatpush1.bf16.msra.mxu0 0
        %5917 = vmatprep.subr.bf16.mxu0 0
        %5918 = vmatpush1.bf16.msra.mxu0 0
        %5919 = vmatprep.subr.bf16.mxu0 0
        %5920 = vmatpush1.bf16.msra.mxu0 0
        %5921 = vmatprep.subr.bf16.mxu0 0
        %5922 = vmatpush1.bf16.msra.mxu0 0
        %5923 = vmatprep.subr.bf16.mxu0 0
        %5924 = vmatpush1.bf16.msra.mxu0 0
        %5925 = vmatprep.subr.bf16.mxu0 0
        %5926 = vmatpush1.bf16.msra.mxu0 0
        %5927 = vmatprep.subr.bf16.mxu0 0
        %5928 = vmatpush1.bf16.msra.mxu0 0
        %5929 = vmatprep.subr.bf16.mxu0 0
        %5930 = vmatpush1.bf16.msra.mxu0 0
        %5931 = vmatprep.subr.bf16.mxu0 0
        %5932 = vmatpush1.bf16.msra.mxu0 0
        %5933 = vmatprep.subr.bf16.mxu0 0
        %5934 = vmatpush1.bf16.msra.mxu0 0
        %5935 = vmatprep.subr.bf16.mxu0 0
        %5936 = vmatpush1.bf16.msra.mxu0 0
        %5937 = vmatprep.subr.bf16.mxu0 0
        %5938 = vmatpush1.bf16.msra.mxu0 0
        %5939 = vmatprep.subr.bf16.mxu0 0
        %5940 = vmatpush1.bf16.msra.mxu0 0
        %5941 = vmatprep.subr.bf16.mxu0 0
        %5942 = vmatpush1.bf16.msra.mxu0 0
        %5943 = vmatprep.subr.bf16.mxu0 0
        %5944 = vmatpush1.bf16.msra.mxu0 0
        %5945 = vmatprep.mubr.bf16.mxu0 0
        %5946 = vmatmul.mubr.bf16.gmra.mrb[0].mxu0 %v5863
        %v5947 = vpop.f32.mrb[0].mxu0
        %v5948 = vadd.f32 0.0, %v5947
        %v5949 = vpop.f32.mrb[0].mxu0
        %v5950 = vpop.f32.mrb[0].mxu0
        %v5951 = vadd.f32 0.0, %v5950
        %v5952 = vpop.f32.mrb[0].mxu0
        %5953 = vmatprep.mubr.bf16.mxu0 0
        %5954 = vmatmul.mubr.bf16.gmra.mrb[0].mxu0 %v5866
        %v5955 = vpop.f32.mrb[0].mxu0
        %v5956 = vadd.f32 0.0, %v5955
        %v5957 = vpop.f32.mrb[0].mxu0
        %v5958 = vpop.f32.mrb[0].mxu0
        %v5959 = vadd.f32 0.0, %v5958
        %v5960 = vpop.f32.mrb[0].mxu0
        %5961 = vmatprep.mubr.bf16.mxu0 0
        %5962 = vmatmul.mubr.bf16.gmra.mrb[0].mxu0 %v5869
        %v5963 = vpop.f32.mrb[0].mxu0
        %v5964 = vadd.f32 0.0, %v5963
        %v5965 = vpop.f32.mrb[0].mxu0
        %v5966 = vpop.f32.mrb[0].mxu0
        %v5967 = vadd.f32 0.0, %v5966
        %v5968 = vpop.f32.mrb[0].mxu0
        %5969 = vmatprep.mubr.bf16.mxu0 0
        %5970 = vmatmul.mubr.bf16.gmra.mrb[0].mxu0 %v5872
        %v5971 = vpop.f32.mrb[0].mxu0
        %v5972 = vadd.f32 0.0, %v5971
        %v5973 = vpop.f32.mrb[0].mxu0
        %v5974 = vpop.f32.mrb[0].mxu0
        %v5975 = vadd.f32 0.0, %v5974
        %v5976 = vpop.f32.mrb[0].mxu0
        %5977 = vmatprep.mubr.bf16.mxu0 0
        %5978 = vmatmul.mubr.bf16.gmra.mrb[0].mxu0 %v5875
        %v5979 = vpop.f32.mrb[0].mxu0
        %v5980 = vadd.f32 0.0, %v5979
        %v5981 = vpop.f32.mrb[0].mxu0
        %v5982 = vpop.f32.mrb[0].mxu0
        %v5983 = vadd.f32 0.0, %v5982
        %v5984 = vpop.f32.mrb[0].mxu0
        %5985 = vmatprep.mubr.bf16.mxu0 0
        %5986 = vmatmul.mubr.bf16.gmra.mrb[0].mxu0 %v5878
        %v5987 = vpop.f32.mrb[0].mxu0
        %v5988 = vadd.f32 0.0, %v5987
        %v5989 = vpop.f32.mrb[0].mxu0
        %v5990 = vpop.f32.mrb[0].mxu0
        %v5991 = vadd.f32 0.0, %v5990
        %v5992 = vpop.f32.mrb[0].mxu0
        %5993 = vmatprep.mubr.bf16.mxu0 0
        %5994 = vmatmul.mubr.bf16.gmra.mrb[0].mxu0 %v5881
        %v5995 = vpop.f32.mrb[0].mxu0
        %v5996 = vadd.f32 0.0, %v5995
        %v5997 = vpop.f32.mrb[0].mxu0
        %v5998 = vpop.f32.mrb[0].mxu0
        %v5999 = vadd.f32 0.0, %v5998
        %v6000 = vpop.f32.mrb[0].mxu0
        %6001 = vmatprep.mubr.bf16.mxu0 0
        %6002 = vmatmul.mubr.bf16.gmra.mrb[0].mxu0 %v5884
        %v6003 = vpop.f32.mrb[0].mxu0
        %v6004 = vadd.f32 0.0, %v6003
        %v6005 = vpop.f32.mrb[0].mxu0
        %v6006 = vpop.f32.mrb[0].mxu0
        %v6007 = vadd.f32 0.0, %v6006
        %v6008 = vpop.f32.mrb[0].mxu0
        %6009 = vmatprep.mubr.bf16.mxu0 0
        %6010 = vmatmul.mubr.bf16.gmra.mrb[0].mxu0 %v5887
        %v6011 = vpop.f32.mrb[0].mxu0
        %v6012 = vadd.f32 0.0, %v6011
        %v6013 = vpop.f32.mrb[0].mxu0
        %v6014 = vpop.f32.mrb[0].mxu0
        %v6015 = vadd.f32 0.0, %v6014
        %v6016 = vpop.f32.mrb[0].mxu0
        %6017 = vmatprep.mubr.bf16.mxu0 0
        %6018 = vmatmul.mubr.bf16.gmra.mrb[0].mxu0 %v5890
        %v6019 = vpop.f32.mrb[0].mxu0
        %v6020 = vadd.f32 0.0, %v6019
        %v6021 = vpop.f32.mrb[0].mxu0
        %v6022 = vpop.f32.mrb[0].mxu0
        %v6023 = vadd.f32 0.0, %v6022
        %v6024 = vpop.f32.mrb[0].mxu0
        %6025 = vmatprep.mubr.bf16.mxu0 0
        %6026 = vmatmul.mubr.bf16.gmra.mrb[0].mxu0 %v5893
        %v6027 = vpop.f32.mrb[0].mxu0
        %v6028 = vadd.f32 0.0, %v6027
        %v6029 = vpop.f32.mrb[0].mxu0
        %v6030 = vpop.f32.mrb[0].mxu0
        %v6031 = vadd.f32 0.0, %v6030
        %v6032 = vpop.f32.mrb[0].mxu0
        %6033 = vmatprep.mubr.bf16.mxu0 0
        %6034 = vmatmul.mubr.bf16.gmra.mrb[0].mxu0 %v5896
        %v6035 = vpop.f32.mrb[0].mxu0
        %v6036 = vadd.f32 0.0, %v6035
        %v6037 = vpop.f32.mrb[0].mxu0
        %v6038 = vpop.f32.mrb[0].mxu0
        %v6039 = vadd.f32 0.0, %v6038
        %v6040 = vpop.f32.mrb[0].mxu0
        %6041 = vmatprep.mubr.bf16.mxu0 0
        %6042 = vmatmul.mubr.bf16.gmra.mrb[0].mxu0 %v5899
        %v6043 = vpop.f32.mrb[0].mxu0
        %v6044 = vadd.f32 0.0, %v6043
        %v6045 = vpop.f32.mrb[0].mxu0
        %v6046 = vpop.f32.mrb[0].mxu0
        %v6047 = vadd.f32 0.0, %v6046
        %v6048 = vpop.f32.mrb[0].mxu0
        %6049 = vmatprep.mubr.bf16.mxu0 0
        %6050 = vmatmul.mubr.bf16.gmra.mrb[0].mxu0 %v5902
        %v6051 = vpop.f32.mrb[0].mxu0
        %v6052 = vadd.f32 0.0, %v6051
        %v6053 = vpop.f32.mrb[0].mxu0
        %v6054 = vpop.f32.mrb[0].mxu0
        %v6055 = vadd.f32 0.0, %v6054
        %v6056 = vpop.f32.mrb[0].mxu0
        %6057 = vmatprep.mubr.bf16.mxu0 0
        %6058 = vmatmul.mubr.bf16.gmra.mrb[0].mxu0 %v5905
        %v6059 = vpop.f32.mrb[0].mxu0
        %v6060 = vadd.f32 0.0, %v6059
        %v6061 = vpop.f32.mrb[0].mxu0
        %v6062 = vpop.f32.mrb[0].mxu0
        %v6063 = vadd.f32 0.0, %v6062
        %v6064 = vpop.f32.mrb[0].mxu0
        %6065 = vmatprep.mubr.bf16.mxu0 0
        %6066 = vmatmul.mubr.bf16.gmra.mrb[0].mxu0 %v5908
        %v6067 = vpop.f32.mrb[0].mxu0
        %v6068 = vadd.f32 0.0, %v6067
        %v6069 = vpop.f32.mrb[0].mxu0
        %v6070 = vpop.f32.mrb[0].mxu0
        %v6071 = vadd.f32 0.0, %v6070
        %v6072 = vpop.f32.mrb[0].mxu0
        %6073 = vdwg.mxu0
        %v6074 = vadd.f32 %v4646, %v5948
        %v6075 = vadd.f32 %v4649, %v5951
        %v6076 = vadd.f32 %v4654, %v5956
        %v6077 = vadd.f32 %v4657, %v5959
        %v6078 = vadd.f32 %v4662, %v5964
        %v6079 = vadd.f32 %v4665, %v5967
        %v6080 = vadd.f32 %v4670, %v5972
        %v6081 = vadd.f32 %v4673, %v5975
        %v6082 = vadd.f32 %v4678, %v5980
        %v6083 = vadd.f32 %v4681, %v5983
        %v6084 = vadd.f32 %v4686, %v5988
        %v6085 = vadd.f32 %v4689, %v5991
        %v6086 = vadd.f32 %v4694, %v5996
        %v6087 = vadd.f32 %v4697, %v5999
        %v6088 = vadd.f32 %v4702, %v6004
        %v6089 = vadd.f32 %v4705, %v6007
        %v6090 = vadd.f32 %v4710, %v6012
        %v6091 = vadd.f32 %v4713, %v6015
        %v6092 = vadd.f32 %v4718, %v6020
        %v6093 = vadd.f32 %v4721, %v6023
        %v6094 = vadd.f32 %v4726, %v6028
        %v6095 = vadd.f32 %v4729, %v6031
        %v6096 = vadd.f32 %v4734, %v6036
        %v6097 = vadd.f32 %v4737, %v6039
        %v6098 = vadd.f32 %v4742, %v6044
        %v6099 = vadd.f32 %v4745, %v6047
        %v6100 = vadd.f32 %v4750, %v6052
        %v6101 = vadd.f32 %v4753, %v6055
        %v6102 = vadd.f32 %v4758, %v6060
        %v6103 = vadd.f32 %v4761, %v6063
        %v6104 = vadd.f32 %v4766, %v6068
        %v6105 = vadd.f32 %v4769, %v6071
        %6106 = vrot.lane.b32.xlu0 %v2182, 104
        %v6107 = vpop.permute.xlu0 %6106
        %6108 = vrot.lane.b32.xlu0 %v2183, 104
        %v6109 = vpop.permute.xlu0 %6108
        %6110 = vrot.lane.b32.xlu0 %v2184, 104
        %v6111 = vpop.permute.xlu0 %6110
        %6112 = vrot.lane.b32.xlu0 %v2185, 104
        %v6113 = vpop.permute.xlu0 %6112
        %6114 = vrot.lane.b32.xlu0 %v2186, 104
        %v6115 = vpop.permute.xlu0 %6114
        %6116 = vrot.lane.b32.xlu0 %v2187, 104
        %v6117 = vpop.permute.xlu0 %6116
        %6118 = vrot.lane.b32.xlu0 %v2188, 104
        %v6119 = vpop.permute.xlu0 %6118
        %6120 = vrot.lane.b32.xlu0 %v2189, 104
        %v6121 = vpop.permute.xlu0 %6120
        %6122 = vrot.lane.b32.xlu0 %v2190, 104
        %v6123 = vpop.permute.xlu0 %6122
        %6124 = vrot.lane.b32.xlu0 %v2191, 104
        %v6125 = vpop.permute.xlu0 %6124
        %6126 = vrot.lane.b32.xlu0 %v2192, 104
        %v6127 = vpop.permute.xlu0 %6126
        %6128 = vrot.lane.b32.xlu0 %v2193, 104
        %v6129 = vpop.permute.xlu0 %6128
        %6130 = vrot.lane.b32.xlu0 %v2194, 104
        %v6131 = vpop.permute.xlu0 %6130
        %6132 = vrot.lane.b32.xlu0 %v2195, 104
        %v6133 = vpop.permute.xlu0 %6132
        %6134 = vrot.lane.b32.xlu0 %v2196, 104
        %v6135 = vpop.permute.xlu0 %6134
        %6136 = vrot.lane.b32.xlu0 %v2197, 104
        %v6137 = vpop.permute.xlu0 %6136
        %6138 = vrot.lane.b32.xlu0 %v2198, 104
        %v6139 = vpop.permute.xlu0 %6138
        %6140 = vrot.lane.b32.xlu0 %v2199, 104
        %v6141 = vpop.permute.xlu0 %6140
        %6142 = vrot.lane.b32.xlu0 %v2200, 104
        %v6143 = vpop.permute.xlu0 %6142
        %6144 = vrot.lane.b32.xlu0 %v2201, 104
        %v6145 = vpop.permute.xlu0 %6144
        %6146 = vrot.lane.b32.xlu0 %v2202, 104
        %v6147 = vpop.permute.xlu0 %6146
        %6148 = vrot.lane.b32.xlu0 %v2203, 104
        %v6149 = vpop.permute.xlu0 %6148
        %6150 = vrot.lane.b32.xlu0 %v2204, 104
        %v6151 = vpop.permute.xlu0 %6150
        %6152 = vrot.lane.b32.xlu0 %v2205, 104
        %v6153 = vpop.permute.xlu0 %6152
        %6154 = vrot.lane.b32.xlu0 %v2206, 104
        %v6155 = vpop.permute.xlu0 %6154
        %6156 = vrot.lane.b32.xlu0 %v2207, 104
        %v6157 = vpop.permute.xlu0 %6156
        %6158 = vrot.lane.b32.xlu0 %v2208, 104
        %v6159 = vpop.permute.xlu0 %6158
        %6160 = vrot.lane.b32.xlu0 %v2209, 104
        %v6161 = vpop.permute.xlu0 %6160
        %6162 = vrot.lane.b32.xlu0 %v2210, 104
        %v6163 = vpop.permute.xlu0 %6162
        %6164 = vrot.lane.b32.xlu0 %v2211, 104
        %v6165 = vpop.permute.xlu0 %6164
        %6166 = vrot.lane.b32.xlu0 %v2212, 104
        %v6167 = vpop.permute.xlu0 %6166
        %6168 = vrot.lane.b32.xlu0 %v2213, 104
        %v6169 = vpop.permute.xlu0 %6168
        %v6171 = vsel %vm2230, %v6107, 0
        %v6174 = vsel %vm2230, %v6109, 0
        %v6177 = vsel %vm2230, %v6111, 0
        %v6180 = vsel %vm2230, %v6113, 0
        %v6183 = vsel %vm2230, %v6115, 0
        %v6186 = vsel %vm2230, %v6117, 0
        %v6189 = vsel %vm2230, %v6119, 0
        %v6192 = vsel %vm2230, %v6121, 0
        %v6195 = vsel %vm2230, %v6123, 0
        %v6198 = vsel %vm2230, %v6125, 0
        %v6201 = vsel %vm2230, %v6127, 0
        %v6204 = vsel %vm2230, %v6129, 0
        %v6207 = vsel %vm2230, %v6131, 0
        %v6210 = vsel %vm2230, %v6133, 0
        %v6213 = vsel %vm2230, %v6135, 0
        %v6216 = vsel %vm2230, %v6137, 0
        %v6219 = vsel %vm2230, %v6139, 0
        %v6222 = vsel %vm2230, %v6141, 0
        %v6225 = vsel %vm2230, %v6143, 0
        %v6228 = vsel %vm2230, %v6145, 0
        %v6231 = vsel %vm2230, %v6147, 0
        %v6234 = vsel %vm2230, %v6149, 0
        %v6237 = vsel %vm2230, %v6151, 0
        %v6240 = vsel %vm2230, %v6153, 0
        %v6243 = vsel %vm2230, %v6155, 0
        %v6246 = vsel %vm2230, %v6157, 0
        %v6249 = vsel %vm2230, %v6159, 0
        %v6252 = vsel %vm2230, %v6161, 0
        %v6255 = vsel %vm2230, %v6163, 0
        %v6258 = vsel %vm2230, %v6165, 0
        %v6261 = vsel %vm2230, %v6167, 0
        %v6264 = vsel %vm2230, %v6169, 0
        %6266 = vmatprep.subr.bf16.mxu0 0
        %6267 = vmatpush1.bf16.xpose.msra.mxu0 %v6219
        %6268 = vmatprep.subr.bf16.mxu0 0
        %6269 = vmatpush1.bf16.xpose.msra.mxu0 %v6222
        %6270 = vmatprep.subr.bf16.mxu0 0
        %6271 = vmatpush1.bf16.xpose.msra.mxu0 %v6225
        %6272 = vmatprep.subr.bf16.mxu0 0
        %6273 = vmatpush1.bf16.xpose.msra.mxu0 %v6228
        %6274 = vmatprep.subr.bf16.mxu0 0
        %6275 = vmatpush1.bf16.xpose.msra.mxu0 %v6231
        %6276 = vmatprep.subr.bf16.mxu0 0
        %6277 = vmatpush1.bf16.xpose.msra.mxu0 %v6234
        %6278 = vmatprep.subr.bf16.mxu0 0
        %6279 = vmatpush1.bf16.xpose.msra.mxu0 %v6237
        %6280 = vmatprep.subr.bf16.mxu0 0
        %6281 = vmatpush1.bf16.xpose.msra.mxu0 %v6240
        %6282 = vmatprep.subr.bf16.mxu0 0
        %6283 = vmatpush1.bf16.xpose.msra.mxu0 %v6243
        %6284 = vmatprep.subr.bf16.mxu0 0
        %6285 = vmatpush1.bf16.xpose.msra.mxu0 %v6246
        %6286 = vmatprep.subr.bf16.mxu0 0
        %6287 = vmatpush1.bf16.xpose.msra.mxu0 %v6249
        %6288 = vmatprep.subr.bf16.mxu0 0
        %6289 = vmatpush1.bf16.xpose.msra.mxu0 %v6252
        %6290 = vmatprep.subr.bf16.mxu0 0
        %6291 = vmatpush1.bf16.xpose.msra.mxu0 %v6255
        %6292 = vmatprep.subr.bf16.mxu0 0
        %6293 = vmatpush1.bf16.xpose.msra.mxu0 %v6258
        %6294 = vmatprep.subr.bf16.mxu0 0
        %6295 = vmatpush1.bf16.xpose.msra.mxu0 %v6261
        %6296 = vmatprep.subr.bf16.mxu0 0
        %6297 = vmatpush1.bf16.xpose.msra.mxu0 %v6264
        %6298 = vmatprep.mubr.bf16.mxu0 0
        %6299 = vmatmul.mubr.bf16.gmra.mrb[0].mxu0 %v6171
        %v6300 = vpop.f32.mrb[0].mxu0
        %v6301 = vadd.f32 0.0, %v6300
        %v6302 = vpop.f32.mrb[0].mxu0
        %v6303 = vadd.f32 0.0, %v6302
        %v6304 = vpop.f32.mrb[0].mxu0
        %v6305 = vadd.f32 0.0, %v6304
        %v6306 = vpop.f32.mrb[0].mxu0
        %v6307 = vadd.f32 0.0, %v6306
        %6308 = vmatprep.mubr.bf16.mxu0 0
        %6309 = vmatmul.mubr.bf16.gmra.mrb[0].mxu0 %v6174
        %v6310 = vpop.f32.mrb[0].mxu0
        %v6311 = vadd.f32 0.0, %v6310
        %v6312 = vpop.f32.mrb[0].mxu0
        %v6313 = vadd.f32 0.0, %v6312
        %v6314 = vpop.f32.mrb[0].mxu0
        %v6315 = vadd.f32 0.0, %v6314
        %v6316 = vpop.f32.mrb[0].mxu0
        %v6317 = vadd.f32 0.0, %v6316
        %6318 = vmatprep.mubr.bf16.mxu0 0
        %6319 = vmatmul.mubr.bf16.gmra.mrb[0].mxu0 %v6177
        %v6320 = vpop.f32.mrb[0].mxu0
        %v6321 = vadd.f32 0.0, %v6320
        %v6322 = vpop.f32.mrb[0].mxu0
        %v6323 = vadd.f32 0.0, %v6322
        %v6324 = vpop.f32.mrb[0].mxu0
        %v6325 = vadd.f32 0.0, %v6324
        %v6326 = vpop.f32.mrb[0].mxu0
        %v6327 = vadd.f32 0.0, %v6326
        %6328 = vmatprep.mubr.bf16.mxu0 0
        %6329 = vmatmul.mubr.bf16.gmra.mrb[0].mxu0 %v6180
        %v6330 = vpop.f32.mrb[0].mxu0
        %v6331 = vadd.f32 0.0, %v6330
        %v6332 = vpop.f32.mrb[0].mxu0
        %v6333 = vadd.f32 0.0, %v6332
        %v6334 = vpop.f32.mrb[0].mxu0
        %v6335 = vadd.f32 0.0, %v6334
        %v6336 = vpop.f32.mrb[0].mxu0
        %v6337 = vadd.f32 0.0, %v6336
        %6338 = vmatprep.mubr.bf16.mxu0 0
        %6339 = vmatmul.mubr.bf16.gmra.mrb[0].mxu0 %v6183
        %v6340 = vpop.f32.mrb[0].mxu0
        %v6341 = vadd.f32 0.0, %v6340
        %v6342 = vpop.f32.mrb[0].mxu0
        %v6343 = vadd.f32 0.0, %v6342
        %v6344 = vpop.f32.mrb[0].mxu0
        %v6345 = vadd.f32 0.0, %v6344
        %v6346 = vpop.f32.mrb[0].mxu0
        %v6347 = vadd.f32 0.0, %v6346
        %6348 = vmatprep.mubr.bf16.mxu0 0
        %6349 = vmatmul.mubr.bf16.gmra.mrb[0].mxu0 %v6186
        %v6350 = vpop.f32.mrb[0].mxu0
        %v6351 = vadd.f32 0.0, %v6350
        %v6352 = vpop.f32.mrb[0].mxu0
        %v6353 = vadd.f32 0.0, %v6352
        %v6354 = vpop.f32.mrb[0].mxu0
        %v6355 = vadd.f32 0.0, %v6354
        %v6356 = vpop.f32.mrb[0].mxu0
        %v6357 = vadd.f32 0.0, %v6356
        %6358 = vmatprep.mubr.bf16.mxu0 0
        %6359 = vmatmul.mubr.bf16.gmra.mrb[0].mxu0 %v6189
        %v6360 = vpop.f32.mrb[0].mxu0
        %v6361 = vadd.f32 0.0, %v6360
        %v6362 = vpop.f32.mrb[0].mxu0
        %v6363 = vadd.f32 0.0, %v6362
        %v6364 = vpop.f32.mrb[0].mxu0
        %v6365 = vadd.f32 0.0, %v6364
        %v6366 = vpop.f32.mrb[0].mxu0
        %v6367 = vadd.f32 0.0, %v6366
        %6368 = vmatprep.mubr.bf16.mxu0 0
        %6369 = vmatmul.mubr.bf16.gmra.mrb[0].mxu0 %v6192
        %v6370 = vpop.f32.mrb[0].mxu0
        %v6371 = vadd.f32 0.0, %v6370
        %v6372 = vpop.f32.mrb[0].mxu0
        %v6373 = vadd.f32 0.0, %v6372
        %v6374 = vpop.f32.mrb[0].mxu0
        %v6375 = vadd.f32 0.0, %v6374
        %v6376 = vpop.f32.mrb[0].mxu0
        %v6377 = vadd.f32 0.0, %v6376
        %6378 = vmatprep.mubr.bf16.mxu0 0
        %6379 = vmatmul.mubr.bf16.gmra.mrb[0].mxu0 %v6195
        %v6380 = vpop.f32.mrb[0].mxu0
        %v6381 = vadd.f32 0.0, %v6380
        %v6382 = vpop.f32.mrb[0].mxu0
        %v6383 = vadd.f32 0.0, %v6382
        %v6384 = vpop.f32.mrb[0].mxu0
        %v6385 = vadd.f32 0.0, %v6384
        %v6386 = vpop.f32.mrb[0].mxu0
        %v6387 = vadd.f32 0.0, %v6386
        %6388 = vmatprep.mubr.bf16.mxu0 0
        %6389 = vmatmul.mubr.bf16.gmra.mrb[0].mxu0 %v6198
        %v6390 = vpop.f32.mrb[0].mxu0
        %v6391 = vadd.f32 0.0, %v6390
        %v6392 = vpop.f32.mrb[0].mxu0
        %v6393 = vadd.f32 0.0, %v6392
        %v6394 = vpop.f32.mrb[0].mxu0
        %v6395 = vadd.f32 0.0, %v6394
        %v6396 = vpop.f32.mrb[0].mxu0
        %v6397 = vadd.f32 0.0, %v6396
        %6398 = vmatprep.mubr.bf16.mxu0 0
        %6399 = vmatmul.mubr.bf16.gmra.mrb[0].mxu0 %v6201
        %v6400 = vpop.f32.mrb[0].mxu0
        %v6401 = vadd.f32 0.0, %v6400
        %v6402 = vpop.f32.mrb[0].mxu0
        %v6403 = vadd.f32 0.0, %v6402
        %v6404 = vpop.f32.mrb[0].mxu0
        %v6405 = vadd.f32 0.0, %v6404
        %v6406 = vpop.f32.mrb[0].mxu0
        %v6407 = vadd.f32 0.0, %v6406
        %6408 = vmatprep.mubr.bf16.mxu0 0
        %6409 = vmatmul.mubr.bf16.gmra.mrb[0].mxu0 %v6204
        %v6410 = vpop.f32.mrb[0].mxu0
        %v6411 = vadd.f32 0.0, %v6410
        %v6412 = vpop.f32.mrb[0].mxu0
        %v6413 = vadd.f32 0.0, %v6412
        %v6414 = vpop.f32.mrb[0].mxu0
        %v6415 = vadd.f32 0.0, %v6414
        %v6416 = vpop.f32.mrb[0].mxu0
        %v6417 = vadd.f32 0.0, %v6416
        %6418 = vmatprep.mubr.bf16.mxu0 0
        %6419 = vmatmul.mubr.bf16.gmra.mrb[0].mxu0 %v6207
        %v6420 = vpop.f32.mrb[0].mxu0
        %v6421 = vadd.f32 0.0, %v6420
        %v6422 = vpop.f32.mrb[0].mxu0
        %v6423 = vadd.f32 0.0, %v6422
        %v6424 = vpop.f32.mrb[0].mxu0
        %v6425 = vadd.f32 0.0, %v6424
        %v6426 = vpop.f32.mrb[0].mxu0
        %v6427 = vadd.f32 0.0, %v6426
        %6428 = vmatprep.mubr.bf16.mxu0 0
        %6429 = vmatmul.mubr.bf16.gmra.mrb[0].mxu0 %v6210
        %v6430 = vpop.f32.mrb[0].mxu0
        %v6431 = vadd.f32 0.0, %v6430
        %v6432 = vpop.f32.mrb[0].mxu0
        %v6433 = vadd.f32 0.0, %v6432
        %v6434 = vpop.f32.mrb[0].mxu0
        %v6435 = vadd.f32 0.0, %v6434
        %v6436 = vpop.f32.mrb[0].mxu0
        %v6437 = vadd.f32 0.0, %v6436
        %6438 = vmatprep.mubr.bf16.mxu0 0
        %6439 = vmatmul.mubr.bf16.gmra.mrb[0].mxu0 %v6213
        %v6440 = vpop.f32.mrb[0].mxu0
        %v6441 = vadd.f32 0.0, %v6440
        %v6442 = vpop.f32.mrb[0].mxu0
        %v6443 = vadd.f32 0.0, %v6442
        %v6444 = vpop.f32.mrb[0].mxu0
        %v6445 = vadd.f32 0.0, %v6444
        %v6446 = vpop.f32.mrb[0].mxu0
        %v6447 = vadd.f32 0.0, %v6446
        %6448 = vmatprep.mubr.bf16.mxu0 0
        %6449 = vmatmul.mubr.bf16.gmra.mrb[0].mxu0 %v6216
        %v6450 = vpop.f32.mrb[0].mxu0
        %v6451 = vadd.f32 0.0, %v6450
        %v6452 = vpop.f32.mrb[0].mxu0
        %v6453 = vadd.f32 0.0, %v6452
        %v6454 = vpop.f32.mrb[0].mxu0
        %v6455 = vadd.f32 0.0, %v6454
        %v6456 = vpop.f32.mrb[0].mxu0
        %v6457 = vadd.f32 0.0, %v6456
        %6458 = vdwg.mxu0
        %v6459 = vmax.f32 %v6301, %v6303
        %6460 = vmax.xlane.f32.xlu0 %v6459
        %v6461 = vpop.xlane.xlu0 %6460
        %v6462 = vmax.f32 %v6305, %v6307
        %6463 = vmax.xlane.f32.xlu0 %v6462
        %v6464 = vpop.xlane.xlu0 %6463
        %v6465 = vmax.f32 %v6311, %v6313
        %6466 = vmax.xlane.f32.xlu0 %v6465
        %v6467 = vpop.xlane.xlu0 %6466
        %v6468 = vmax.f32 %v6315, %v6317
        %6469 = vmax.xlane.f32.xlu0 %v6468
        %v6470 = vpop.xlane.xlu0 %6469
        %v6471 = vmax.f32 %v6321, %v6323
        %6472 = vmax.xlane.f32.xlu0 %v6471
        %v6473 = vpop.xlane.xlu0 %6472
        %v6474 = vmax.f32 %v6325, %v6327
        %6475 = vmax.xlane.f32.xlu0 %v6474
        %v6476 = vpop.xlane.xlu0 %6475
        %v6477 = vmax.f32 %v6331, %v6333
        %6478 = vmax.xlane.f32.xlu0 %v6477
        %v6479 = vpop.xlane.xlu0 %6478
        %v6480 = vmax.f32 %v6335, %v6337
        %6481 = vmax.xlane.f32.xlu0 %v6480
        %v6482 = vpop.xlane.xlu0 %6481
        %v6483 = vmax.f32 %v6341, %v6343
        %6484 = vmax.xlane.f32.xlu0 %v6483
        %v6485 = vpop.xlane.xlu0 %6484
        %v6486 = vmax.f32 %v6345, %v6347
        %6487 = vmax.xlane.f32.xlu0 %v6486
        %v6488 = vpop.xlane.xlu0 %6487
        %v6489 = vmax.f32 %v6351, %v6353
        %6490 = vmax.xlane.f32.xlu0 %v6489
        %v6491 = vpop.xlane.xlu0 %6490
        %v6492 = vmax.f32 %v6355, %v6357
        %6493 = vmax.xlane.f32.xlu0 %v6492
        %v6494 = vpop.xlane.xlu0 %6493
        %v6495 = vmax.f32 %v6361, %v6363
        %6496 = vmax.xlane.f32.xlu0 %v6495
        %v6497 = vpop.xlane.xlu0 %6496
        %v6498 = vmax.f32 %v6365, %v6367
        %6499 = vmax.xlane.f32.xlu0 %v6498
        %v6500 = vpop.xlane.xlu0 %6499
        %v6501 = vmax.f32 %v6371, %v6373
        %6502 = vmax.xlane.f32.xlu0 %v6501
        %v6503 = vpop.xlane.xlu0 %6502
        %v6504 = vmax.f32 %v6375, %v6377
        %6505 = vmax.xlane.f32.xlu0 %v6504
        %v6506 = vpop.xlane.xlu0 %6505
        %v6507 = vmax.f32 %v6381, %v6383
        %6508 = vmax.xlane.f32.xlu0 %v6507
        %v6509 = vpop.xlane.xlu0 %6508
        %v6510 = vmax.f32 %v6385, %v6387
        %6511 = vmax.xlane.f32.xlu0 %v6510
        %v6512 = vpop.xlane.xlu0 %6511
        %v6513 = vmax.f32 %v6391, %v6393
        %6514 = vmax.xlane.f32.xlu0 %v6513
        %v6515 = vpop.xlane.xlu0 %6514
        %v6516 = vmax.f32 %v6395, %v6397
        %6517 = vmax.xlane.f32.xlu0 %v6516
        %v6518 = vpop.xlane.xlu0 %6517
        %v6519 = vmax.f32 %v6401, %v6403
        %6520 = vmax.xlane.f32.xlu0 %v6519
        %v6521 = vpop.xlane.xlu0 %6520
        %v6522 = vmax.f32 %v6405, %v6407
        %6523 = vmax.xlane.f32.xlu0 %v6522
        %v6524 = vpop.xlane.xlu0 %6523
        %v6525 = vmax.f32 %v6411, %v6413
        %6526 = vmax.xlane.f32.xlu0 %v6525
        %v6527 = vpop.xlane.xlu0 %6526
        %v6528 = vmax.f32 %v6415, %v6417
        %6529 = vmax.xlane.f32.xlu0 %v6528
        %v6530 = vpop.xlane.xlu0 %6529
        %v6531 = vmax.f32 %v6421, %v6423
        %6532 = vmax.xlane.f32.xlu0 %v6531
        %v6533 = vpop.xlane.xlu0 %6532
        %v6534 = vmax.f32 %v6425, %v6427
        %6535 = vmax.xlane.f32.xlu0 %v6534
        %v6536 = vpop.xlane.xlu0 %6535
        %v6537 = vmax.f32 %v6431, %v6433
        %6538 = vmax.xlane.f32.xlu0 %v6537
        %v6539 = vpop.xlane.xlu0 %6538
        %v6540 = vmax.f32 %v6435, %v6437
        %6541 = vmax.xlane.f32.xlu0 %v6540
        %v6542 = vpop.xlane.xlu0 %6541
        %v6543 = vmax.f32 %v6441, %v6443
        %6544 = vmax.xlane.f32.xlu0 %v6543
        %v6545 = vpop.xlane.xlu0 %6544
        %v6546 = vmax.f32 %v6445, %v6447
        %6547 = vmax.xlane.f32.xlu0 %v6546
        %v6548 = vpop.xlane.xlu0 %6547
        %v6549 = vmax.f32 %v6451, %v6453
        %6550 = vmax.xlane.f32.xlu0 %v6549
        %v6551 = vpop.xlane.xlu0 %6550
        %v6552 = vmax.f32 %v6455, %v6457
        %6553 = vmax.xlane.f32.xlu0 %v6552
        %v6554 = vpop.xlane.xlu0 %6553
        %v6555 = vsub.f32 %v6301, %v6461
        %v6556 = vsub.f32 %v6303, %v6461
        %v6557 = vsub.f32 %v6305, %v6464
        %v6558 = vsub.f32 %v6307, %v6464
        %v6559 = vsub.f32 %v6311, %v6467
        %v6560 = vsub.f32 %v6313, %v6467
        %v6561 = vsub.f32 %v6315, %v6470
        %v6562 = vsub.f32 %v6317, %v6470
        %v6563 = vsub.f32 %v6321, %v6473
        %v6564 = vsub.f32 %v6323, %v6473
        %v6565 = vsub.f32 %v6325, %v6476
        %v6566 = vsub.f32 %v6327, %v6476
        %v6567 = vsub.f32 %v6331, %v6479
        %v6568 = vsub.f32 %v6333, %v6479
        %v6569 = vsub.f32 %v6335, %v6482
        %v6570 = vsub.f32 %v6337, %v6482
        %v6571 = vsub.f32 %v6341, %v6485
        %v6572 = vsub.f32 %v6343, %v6485
        %v6573 = vsub.f32 %v6345, %v6488
        %v6574 = vsub.f32 %v6347, %v6488
        %v6575 = vsub.f32 %v6351, %v6491
        %v6576 = vsub.f32 %v6353, %v6491
        %v6577 = vsub.f32 %v6355, %v6494
        %v6578 = vsub.f32 %v6357, %v6494
        %v6579 = vsub.f32 %v6361, %v6497
        %v6580 = vsub.f32 %v6363, %v6497
        %v6581 = vsub.f32 %v6365, %v6500
        %v6582 = vsub.f32 %v6367, %v6500
        %v6583 = vsub.f32 %v6371, %v6503
        %v6584 = vsub.f32 %v6373, %v6503
        %v6585 = vsub.f32 %v6375, %v6506
        %v6586 = vsub.f32 %v6377, %v6506
        %v6587 = vsub.f32 %v6381, %v6509
        %v6588 = vsub.f32 %v6383, %v6509
        %v6589 = vsub.f32 %v6385, %v6512
        %v6590 = vsub.f32 %v6387, %v6512
        %v6591 = vsub.f32 %v6391, %v6515
        %v6592 = vsub.f32 %v6393, %v6515
        %v6593 = vsub.f32 %v6395, %v6518
        %v6594 = vsub.f32 %v6397, %v6518
        %v6595 = vsub.f32 %v6401, %v6521
        %v6596 = vsub.f32 %v6403, %v6521
        %v6597 = vsub.f32 %v6405, %v6524
        %v6598 = vsub.f32 %v6407, %v6524
        %v6599 = vsub.f32 %v6411, %v6527
        %v6600 = vsub.f32 %v6413, %v6527
        %v6601 = vsub.f32 %v6415, %v6530
        %v6602 = vsub.f32 %v6417, %v6530
        %v6603 = vsub.f32 %v6421, %v6533
        %v6604 = vsub.f32 %v6423, %v6533
        %v6605 = vsub.f32 %v6425, %v6536
        %v6606 = vsub.f32 %v6427, %v6536
        %v6607 = vsub.f32 %v6431, %v6539
        %v6608 = vsub.f32 %v6433, %v6539
        %v6609 = vsub.f32 %v6435, %v6542
        %v6610 = vsub.f32 %v6437, %v6542
        %v6611 = vsub.f32 %v6441, %v6545
        %v6612 = vsub.f32 %v6443, %v6545
        %v6613 = vsub.f32 %v6445, %v6548
        %v6614 = vsub.f32 %v6447, %v6548
        %v6615 = vsub.f32 %v6451, %v6551
        %v6616 = vsub.f32 %v6453, %v6551
        %v6617 = vsub.f32 %v6455, %v6554
        %v6618 = vsub.f32 %v6457, %v6554
        %v6619 = vmul.f32 %v6555, 1.442695
        %v6620 = vpow.pop %v6619
        %v6621 = vmul.f32 %v6556, 1.442695
        %v6622 = vpow.pop %v6621
        %v6623 = vmul.f32 %v6557, 1.442695
        %v6624 = vpow.pop %v6623
        %v6625 = vmul.f32 %v6558, 1.442695
        %v6626 = vpow.pop %v6625
        %v6627 = vmul.f32 %v6559, 1.442695
        %v6628 = vpow.pop %v6627
        %v6629 = vmul.f32 %v6560, 1.442695
        %v6630 = vpow.pop %v6629
        %v6631 = vmul.f32 %v6561, 1.442695
        %v6632 = vpow.pop %v6631
        %v6633 = vmul.f32 %v6562, 1.442695
        %v6634 = vpow.pop %v6633
        %v6635 = vmul.f32 %v6563, 1.442695
        %v6636 = vpow.pop %v6635
        %v6637 = vmul.f32 %v6564, 1.442695
        %v6638 = vpow.pop %v6637
        %v6639 = vmul.f32 %v6565, 1.442695
        %v6640 = vpow.pop %v6639
        %v6641 = vmul.f32 %v6566, 1.442695
        %v6642 = vpow.pop %v6641
        %v6643 = vmul.f32 %v6567, 1.442695
        %v6644 = vpow.pop %v6643
        %v6645 = vmul.f32 %v6568, 1.442695
        %v6646 = vpow.pop %v6645
        %v6647 = vmul.f32 %v6569, 1.442695
        %v6648 = vpow.pop %v6647
        %v6649 = vmul.f32 %v6570, 1.442695
        %v6650 = vpow.pop %v6649
        %v6651 = vmul.f32 %v6571, 1.442695
        %v6652 = vpow.pop %v6651
        %v6653 = vmul.f32 %v6572, 1.442695
        %v6654 = vpow.pop %v6653
        %v6655 = vmul.f32 %v6573, 1.442695
        %v6656 = vpow.pop %v6655
        %v6657 = vmul.f32 %v6574, 1.442695
        %v6658 = vpow.pop %v6657
        %v6659 = vmul.f32 %v6575, 1.442695
        %v6660 = vpow.pop %v6659
        %v6661 = vmul.f32 %v6576, 1.442695
        %v6662 = vpow.pop %v6661
        %v6663 = vmul.f32 %v6577, 1.442695
        %v6664 = vpow.pop %v6663
        %v6665 = vmul.f32 %v6578, 1.442695
        %v6666 = vpow.pop %v6665
        %v6667 = vmul.f32 %v6579, 1.442695
        %v6668 = vpow.pop %v6667
        %v6669 = vmul.f32 %v6580, 1.442695
        %v6670 = vpow.pop %v6669
        %v6671 = vmul.f32 %v6581, 1.442695
        %v6672 = vpow.pop %v6671
        %v6673 = vmul.f32 %v6582, 1.442695
        %v6674 = vpow.pop %v6673
        %v6675 = vmul.f32 %v6583, 1.442695
        %v6676 = vpow.pop %v6675
        %v6677 = vmul.f32 %v6584, 1.442695
        %v6678 = vpow.pop %v6677
        %v6679 = vmul.f32 %v6585, 1.442695
        %v6680 = vpow.pop %v6679
        %v6681 = vmul.f32 %v6586, 1.442695
        %v6682 = vpow.pop %v6681
        %v6683 = vmul.f32 %v6587, 1.442695
        %v6684 = vpow.pop %v6683
        %v6685 = vmul.f32 %v6588, 1.442695
        %v6686 = vpow.pop %v6685
        %v6687 = vmul.f32 %v6589, 1.442695
        %v6688 = vpow.pop %v6687
        %v6689 = vmul.f32 %v6590, 1.442695
        %v6690 = vpow.pop %v6689
        %v6691 = vmul.f32 %v6591, 1.442695
        %v6692 = vpow.pop %v6691
        %v6693 = vmul.f32 %v6592, 1.442695
        %v6694 = vpow.pop %v6693
        %v6695 = vmul.f32 %v6593, 1.442695
        %v6696 = vpow.pop %v6695
        %v6697 = vmul.f32 %v6594, 1.442695
        %v6698 = vpow.pop %v6697
        %v6699 = vmul.f32 %v6595, 1.442695
        %v6700 = vpow.pop %v6699
        %v6701 = vmul.f32 %v6596, 1.442695
        %v6702 = vpow.pop %v6701
        %v6703 = vmul.f32 %v6597, 1.442695
        %v6704 = vpow.pop %v6703
        %v6705 = vmul.f32 %v6598, 1.442695
        %v6706 = vpow.pop %v6705
        %v6707 = vmul.f32 %v6599, 1.442695
        %v6708 = vpow.pop %v6707
        %v6709 = vmul.f32 %v6600, 1.442695
        %v6710 = vpow.pop %v6709
        %v6711 = vmul.f32 %v6601, 1.442695
        %v6712 = vpow.pop %v6711
        %v6713 = vmul.f32 %v6602, 1.442695
        %v6714 = vpow.pop %v6713
        %v6715 = vmul.f32 %v6603, 1.442695
        %v6716 = vpow.pop %v6715
        %v6717 = vmul.f32 %v6604, 1.442695
        %v6718 = vpow.pop %v6717
        %v6719 = vmul.f32 %v6605, 1.442695
        %v6720 = vpow.pop %v6719
        %v6721 = vmul.f32 %v6606, 1.442695
        %v6722 = vpow.pop %v6721
        %v6723 = vmul.f32 %v6607, 1.442695
        %v6724 = vpow.pop %v6723
        %v6725 = vmul.f32 %v6608, 1.442695
        %v6726 = vpow.pop %v6725
        %v6727 = vmul.f32 %v6609, 1.442695
        %v6728 = vpow.pop %v6727
        %v6729 = vmul.f32 %v6610, 1.442695
        %v6730 = vpow.pop %v6729
        %v6731 = vmul.f32 %v6611, 1.442695
        %v6732 = vpow.pop %v6731
        %v6733 = vmul.f32 %v6612, 1.442695
        %v6734 = vpow.pop %v6733
        %v6735 = vmul.f32 %v6613, 1.442695
        %v6736 = vpow.pop %v6735
        %v6737 = vmul.f32 %v6614, 1.442695
        %v6738 = vpow.pop %v6737
        %v6739 = vmul.f32 %v6615, 1.442695
        %v6740 = vpow.pop %v6739
        %v6741 = vmul.f32 %v6616, 1.442695
        %v6742 = vpow.pop %v6741
        %v6743 = vmul.f32 %v6617, 1.442695
        %v6744 = vpow.pop %v6743
        %v6745 = vmul.f32 %v6618, 1.442695
        %v6746 = vpow.pop %v6745
        %v6747 = vadd.f32 %v6620, %v6622
        %6748 = vadd.xlane.f32.xlu0 %v6747
        %v6749 = vpop.xlane.xlu0 %6748
        %v6750 = vadd.f32 %v6624, %v6626
        %6751 = vadd.xlane.f32.xlu0 %v6750
        %v6752 = vpop.xlane.xlu0 %6751
        %v6753 = vadd.f32 %v6628, %v6630
        %6754 = vadd.xlane.f32.xlu0 %v6753
        %v6755 = vpop.xlane.xlu0 %6754
        %v6756 = vadd.f32 %v6632, %v6634
        %6757 = vadd.xlane.f32.xlu0 %v6756
        %v6758 = vpop.xlane.xlu0 %6757
        %v6759 = vadd.f32 %v6636, %v6638
        %6760 = vadd.xlane.f32.xlu0 %v6759
        %v6761 = vpop.xlane.xlu0 %6760
        %v6762 = vadd.f32 %v6640, %v6642
        %6763 = vadd.xlane.f32.xlu0 %v6762
        %v6764 = vpop.xlane.xlu0 %6763
        %v6765 = vadd.f32 %v6644, %v6646
        %6766 = vadd.xlane.f32.xlu0 %v6765
        %v6767 = vpop.xlane.xlu0 %6766
        %v6768 = vadd.f32 %v6648, %v6650
        %6769 = vadd.xlane.f32.xlu0 %v6768
        %v6770 = vpop.xlane.xlu0 %6769
        %v6771 = vadd.f32 %v6652, %v6654
        %6772 = vadd.xlane.f32.xlu0 %v6771
        %v6773 = vpop.xlane.xlu0 %6772
        %v6774 = vadd.f32 %v6656, %v6658
        %6775 = vadd.xlane.f32.xlu0 %v6774
        %v6776 = vpop.xlane.xlu0 %6775
        %v6777 = vadd.f32 %v6660, %v6662
        %6778 = vadd.xlane.f32.xlu0 %v6777
        %v6779 = vpop.xlane.xlu0 %6778
        %v6780 = vadd.f32 %v6664, %v6666
        %6781 = vadd.xlane.f32.xlu0 %v6780
        %v6782 = vpop.xlane.xlu0 %6781
        %v6783 = vadd.f32 %v6668, %v6670
        %6784 = vadd.xlane.f32.xlu0 %v6783
        %v6785 = vpop.xlane.xlu0 %6784
        %v6786 = vadd.f32 %v6672, %v6674
        %6787 = vadd.xlane.f32.xlu0 %v6786
        %v6788 = vpop.xlane.xlu0 %6787
        %v6789 = vadd.f32 %v6676, %v6678
        %6790 = vadd.xlane.f32.xlu0 %v6789
        %v6791 = vpop.xlane.xlu0 %6790
        %v6792 = vadd.f32 %v6680, %v6682
        %6793 = vadd.xlane.f32.xlu0 %v6792
        %v6794 = vpop.xlane.xlu0 %6793
        %v6795 = vadd.f32 %v6684, %v6686
        %6796 = vadd.xlane.f32.xlu0 %v6795
        %v6797 = vpop.xlane.xlu0 %6796
        %v6798 = vadd.f32 %v6688, %v6690
        %6799 = vadd.xlane.f32.xlu0 %v6798
        %v6800 = vpop.xlane.xlu0 %6799
        %v6801 = vadd.f32 %v6692, %v6694
        %6802 = vadd.xlane.f32.xlu0 %v6801
        %v6803 = vpop.xlane.xlu0 %6802
        %v6804 = vadd.f32 %v6696, %v6698
        %6805 = vadd.xlane.f32.xlu0 %v6804
        %v6806 = vpop.xlane.xlu0 %6805
        %v6807 = vadd.f32 %v6700, %v6702
        %6808 = vadd.xlane.f32.xlu0 %v6807
        %v6809 = vpop.xlane.xlu0 %6808
        %v6810 = vadd.f32 %v6704, %v6706
        %6811 = vadd.xlane.f32.xlu0 %v6810
        %v6812 = vpop.xlane.xlu0 %6811
        %v6813 = vadd.f32 %v6708, %v6710
        %6814 = vadd.xlane.f32.xlu0 %v6813
        %v6815 = vpop.xlane.xlu0 %6814
        %v6816 = vadd.f32 %v6712, %v6714
        %6817 = vadd.xlane.f32.xlu0 %v6816
        %v6818 = vpop.xlane.xlu0 %6817
        %v6819 = vadd.f32 %v6716, %v6718
        %6820 = vadd.xlane.f32.xlu0 %v6819
        %v6821 = vpop.xlane.xlu0 %6820
        %v6822 = vadd.f32 %v6720, %v6722
        %6823 = vadd.xlane.f32.xlu0 %v6822
        %v6824 = vpop.xlane.xlu0 %6823
        %v6825 = vadd.f32 %v6724, %v6726
        %6826 = vadd.xlane.f32.xlu0 %v6825
        %v6827 = vpop.xlane.xlu0 %6826
        %v6828 = vadd.f32 %v6728, %v6730
        %6829 = vadd.xlane.f32.xlu0 %v6828
        %v6830 = vpop.xlane.xlu0 %6829
        %v6831 = vadd.f32 %v6732, %v6734
        %6832 = vadd.xlane.f32.xlu0 %v6831
        %v6833 = vpop.xlane.xlu0 %6832
        %v6834 = vadd.f32 %v6736, %v6738
        %6835 = vadd.xlane.f32.xlu0 %v6834
        %v6836 = vpop.xlane.xlu0 %6835
        %v6837 = vadd.f32 %v6740, %v6742
        %6838 = vadd.xlane.f32.xlu0 %v6837
        %v6839 = vpop.xlane.xlu0 %6838
        %v6840 = vadd.f32 %v6744, %v6746
        %6841 = vadd.xlane.f32.xlu0 %v6840
        %v6842 = vpop.xlane.xlu0 %6841
        %v6843 = vrcp.pop %v6749
        %v6844 = vrcp.pop %v6752
        %v6845 = vrcp.pop %v6755
        %v6846 = vrcp.pop %v6758
        %v6847 = vrcp.pop %v6761
        %v6848 = vrcp.pop %v6764
        %v6849 = vrcp.pop %v6767
        %v6850 = vrcp.pop %v6770
        %v6851 = vrcp.pop %v6773
        %v6852 = vrcp.pop %v6776
        %v6853 = vrcp.pop %v6779
        %v6854 = vrcp.pop %v6782
        %v6855 = vrcp.pop %v6785
        %v6856 = vrcp.pop %v6788
        %v6857 = vrcp.pop %v6791
        %v6858 = vrcp.pop %v6794
        %v6859 = vrcp.pop %v6797
        %v6860 = vrcp.pop %v6800
        %v6861 = vrcp.pop %v6803
        %v6862 = vrcp.pop %v6806
        %v6863 = vrcp.pop %v6809
        %v6864 = vrcp.pop %v6812
        %v6865 = vrcp.pop %v6815
        %v6866 = vrcp.pop %v6818
        %v6867 = vrcp.pop %v6821
        %v6868 = vrcp.pop %v6824
        %v6869 = vrcp.pop %v6827
        %v6870 = vrcp.pop %v6830
        %v6871 = vrcp.pop %v6833
        %v6872 = vrcp.pop %v6836
        %v6873 = vrcp.pop %v6839
        %v6874 = vrcp.pop %v6842
        %v6875 = vmul.f32 %v6620, %v6843
        %v6876 = vmul.f32 %v6622, %v6843
        %v6877 = vmul.f32 %v6624, %v6844
        %v6878 = vmul.f32 %v6626, %v6844
        %v6879 = vmul.f32 %v6628, %v6845
        %v6880 = vmul.f32 %v6630, %v6845
        %v6881 = vmul.f32 %v6632, %v6846
        %v6882 = vmul.f32 %v6634, %v6846
        %v6883 = vmul.f32 %v6636, %v6847
        %v6884 = vmul.f32 %v6638, %v6847
        %v6885 = vmul.f32 %v6640, %v6848
        %v6886 = vmul.f32 %v6642, %v6848
        %v6887 = vmul.f32 %v6644, %v6849
        %v6888 = vmul.f32 %v6646, %v6849
        %v6889 = vmul.f32 %v6648, %v6850
        %v6890 = vmul.f32 %v6650, %v6850
        %v6891 = vmul.f32 %v6652, %v6851
        %v6892 = vmul.f32 %v6654, %v6851
        %v6893 = vmul.f32 %v6656, %v6852
        %v6894 = vmul.f32 %v6658, %v6852
        %v6895 = vmul.f32 %v6660, %v6853
        %v6896 = vmul.f32 %v6662, %v6853
        %v6897 = vmul.f32 %v6664, %v6854
        %v6898 = vmul.f32 %v6666, %v6854
        %v6899 = vmul.f32 %v6668, %v6855
        %v6900 = vmul.f32 %v6670, %v6855
        %v6901 = vmul.f32 %v6672, %v6856
        %v6902 = vmul.f32 %v6674, %v6856
        %v6903 = vmul.f32 %v6676, %v6857
        %v6904 = vmul.f32 %v6678, %v6857
        %v6905 = vmul.f32 %v6680, %v6858
        %v6906 = vmul.f32 %v6682, %v6858
        %v6907 = vmul.f32 %v6684, %v6859
        %v6908 = vmul.f32 %v6686, %v6859
        %v6909 = vmul.f32 %v6688, %v6860
        %v6910 = vmul.f32 %v6690, %v6860
        %v6911 = vmul.f32 %v6692, %v6861
        %v6912 = vmul.f32 %v6694, %v6861
        %v6913 = vmul.f32 %v6696, %v6862
        %v6914 = vmul.f32 %v6698, %v6862
        %v6915 = vmul.f32 %v6700, %v6863
        %v6916 = vmul.f32 %v6702, %v6863
        %v6917 = vmul.f32 %v6704, %v6864
        %v6918 = vmul.f32 %v6706, %v6864
        %v6919 = vmul.f32 %v6708, %v6865
        %v6920 = vmul.f32 %v6710, %v6865
        %v6921 = vmul.f32 %v6712, %v6866
        %v6922 = vmul.f32 %v6714, %v6866
        %v6923 = vmul.f32 %v6716, %v6867
        %v6924 = vmul.f32 %v6718, %v6867
        %v6925 = vmul.f32 %v6720, %v6868
        %v6926 = vmul.f32 %v6722, %v6868
        %v6927 = vmul.f32 %v6724, %v6869
        %v6928 = vmul.f32 %v6726, %v6869
        %v6929 = vmul.f32 %v6728, %v6870
        %v6930 = vmul.f32 %v6730, %v6870
        %v6931 = vmul.f32 %v6732, %v6871
        %v6932 = vmul.f32 %v6734, %v6871
        %v6933 = vmul.f32 %v6736, %v6872
        %v6934 = vmul.f32 %v6738, %v6872
        %v6935 = vmul.f32 %v6740, %v6873
        %v6936 = vmul.f32 %v6742, %v6873
        %v6937 = vmul.f32 %v6744, %v6874
        %v6938 = vmul.f32 %v6746, %v6874
        %v6939 = vpack.c.bf16 %v6877, %v6875
        %v6940 = vpack.c.bf16 %v6878, %v6876
        %v6941 = vpack.c.bf16 %v6881, %v6879
        %v6942 = vpack.c.bf16 %v6882, %v6880
        %v6943 = vpack.c.bf16 %v6885, %v6883
        %v6944 = vpack.c.bf16 %v6886, %v6884
        %v6945 = vpack.c.bf16 %v6889, %v6887
        %v6946 = vpack.c.bf16 %v6890, %v6888
        %v6947 = vpack.c.bf16 %v6893, %v6891
        %v6948 = vpack.c.bf16 %v6894, %v6892
        %v6949 = vpack.c.bf16 %v6897, %v6895
        %v6950 = vpack.c.bf16 %v6898, %v6896
        %v6951 = vpack.c.bf16 %v6901, %v6899
        %v6952 = vpack.c.bf16 %v6902, %v6900
        %v6953 = vpack.c.bf16 %v6905, %v6903
        %v6954 = vpack.c.bf16 %v6906, %v6904
        %v6955 = vpack.c.bf16 %v6909, %v6907
        %v6956 = vpack.c.bf16 %v6910, %v6908
        %v6957 = vpack.c.bf16 %v6913, %v6911
        %v6958 = vpack.c.bf16 %v6914, %v6912
        %v6959 = vpack.c.bf16 %v6917, %v6915
        %v6960 = vpack.c.bf16 %v6918, %v6916
        %v6961 = vpack.c.bf16 %v6921, %v6919
        %v6962 = vpack.c.bf16 %v6922, %v6920
        %v6963 = vpack.c.bf16 %v6925, %v6923
        %v6964 = vpack.c.bf16 %v6926, %v6924
        %v6965 = vpack.c.bf16 %v6929, %v6927
        %v6966 = vpack.c.bf16 %v6930, %v6928
        %v6967 = vpack.c.bf16 %v6933, %v6931
        %v6968 = vpack.c.bf16 %v6934, %v6932
        %v6969 = vpack.c.bf16 %v6937, %v6935
        %v6970 = vpack.c.bf16 %v6938, %v6936
        %6971 = vrot.lane.b32.xlu0 %v2214, 104
        %v6972 = vpop.permute.xlu0 %6971
        %6973 = vrot.lane.b32.xlu0 %v2215, 104
        %v6974 = vpop.permute.xlu0 %6973
        %6975 = vrot.lane.b32.xlu0 %v2216, 104
        %v6976 = vpop.permute.xlu0 %6975
        %6977 = vrot.lane.b32.xlu0 %v2217, 104
        %v6978 = vpop.permute.xlu0 %6977
        %6979 = vrot.lane.b32.xlu0 %v2218, 104
        %v6980 = vpop.permute.xlu0 %6979
        %6981 = vrot.lane.b32.xlu0 %v2219, 104
        %v6982 = vpop.permute.xlu0 %6981
        %6983 = vrot.lane.b32.xlu0 %v2220, 104
        %v6984 = vpop.permute.xlu0 %6983
        %6985 = vrot.lane.b32.xlu0 %v2221, 104
        %v6986 = vpop.permute.xlu0 %6985
        %6987 = vrot.lane.b32.xlu0 %v2222, 104
        %v6988 = vpop.permute.xlu0 %6987
        %6989 = vrot.lane.b32.xlu0 %v2223, 104
        %v6990 = vpop.permute.xlu0 %6989
        %6991 = vrot.lane.b32.xlu0 %v2224, 104
        %v6992 = vpop.permute.xlu0 %6991
        %6993 = vrot.lane.b32.xlu0 %v2225, 104
        %v6994 = vpop.permute.xlu0 %6993
        %6995 = vrot.lane.b32.xlu0 %v2226, 104
        %v6996 = vpop.permute.xlu0 %6995
        %6997 = vrot.lane.b32.xlu0 %v2227, 104
        %v6998 = vpop.permute.xlu0 %6997
        %6999 = vrot.lane.b32.xlu0 %v2228, 104
        %v7000 = vpop.permute.xlu0 %6999
        %7001 = vrot.lane.b32.xlu0 %v2229, 104
        %v7002 = vpop.permute.xlu0 %7001
        %7019 = vmatprep.subr.bf16.mxu0 0
        %7020 = vmatpush1.bf16.msra.mxu0 %v6972
        %7021 = vmatprep.subr.bf16.mxu0 0
        %7022 = vmatpush1.bf16.msra.mxu0 %v6974
        %7023 = vmatprep.subr.bf16.mxu0 0
        %7024 = vmatpush1.bf16.msra.mxu0 %v6976
        %7025 = vmatprep.subr.bf16.mxu0 0
        %7026 = vmatpush1.bf16.msra.mxu0 %v6978
        %7027 = vmatprep.subr.bf16.mxu0 0
        %7028 = vmatpush1.bf16.msra.mxu0 %v6980
        %7029 = vmatprep.subr.bf16.mxu0 0
        %7030 = vmatpush1.bf16.msra.mxu0 %v6982
        %7031 = vmatprep.subr.bf16.mxu0 0
        %7032 = vmatpush1.bf16.msra.mxu0 %v6984
        %7033 = vmatprep.subr.bf16.mxu0 0
        %7034 = vmatpush1.bf16.msra.mxu0 %v6986
        %7035 = vmatprep.subr.bf16.mxu0 0
        %7036 = vmatpush1.bf16.msra.mxu0 %v6988
        %7037 = vmatprep.subr.bf16.mxu0 0
        %7038 = vmatpush1.bf16.msra.mxu0 %v6990
        %7039 = vmatprep.subr.bf16.mxu0 0
        %7040 = vmatpush1.bf16.msra.mxu0 %v6992
        %7041 = vmatprep.subr.bf16.mxu0 0
        %7042 = vmatpush1.bf16.msra.mxu0 %v6994
        %7043 = vmatprep.subr.bf16.mxu0 0
        %7044 = vmatpush1.bf16.msra.mxu0 %v6996
        %7045 = vmatprep.subr.bf16.mxu0 0
        %7046 = vmatpush1.bf16.msra.mxu0 %v6998
        %7047 = vmatprep.subr.bf16.mxu0 0
        %7048 = vmatpush1.bf16.msra.mxu0 %v7000
        %7049 = vmatprep.subr.bf16.mxu0 0
        %7050 = vmatpush1.bf16.msra.mxu0 %v7002
        %7051 = vmatprep.mubr.bf16.mxu0 %v6940
        %7052 = vmatmul.mubr.bf16.gmra.mrb[0].mxu0 %v6939
        %v7053 = vpop.f32.mrb[0].mxu0
        %v7054 = vadd.f32 0.0, %v7053
        %v7055 = vpop.f32.mrb[0].mxu0
        %v7056 = vpop.f32.mrb[0].mxu0
        %v7057 = vadd.f32 0.0, %v7056
        %v7058 = vpop.f32.mrb[0].mxu0
        %7059 = vmatprep.mubr.bf16.mxu0 %v6942
        %7060 = vmatmul.mubr.bf16.gmra.mrb[0].mxu0 %v6941
        %v7061 = vpop.f32.mrb[0].mxu0
        %v7062 = vadd.f32 0.0, %v7061
        %v7063 = vpop.f32.mrb[0].mxu0
        %v7064 = vpop.f32.mrb[0].mxu0
        %v7065 = vadd.f32 0.0, %v7064
        %v7066 = vpop.f32.mrb[0].mxu0
        %7067 = vmatprep.mubr.bf16.mxu0 %v6944
        %7068 = vmatmul.mubr.bf16.gmra.mrb[0].mxu0 %v6943
        %v7069 = vpop.f32.mrb[0].mxu0
        %v7070 = vadd.f32 0.0, %v7069
        %v7071 = vpop.f32.mrb[0].mxu0
        %v7072 = vpop.f32.mrb[0].mxu0
        %v7073 = vadd.f32 0.0, %v7072
        %v7074 = vpop.f32.mrb[0].mxu0
        %7075 = vmatprep.mubr.bf16.mxu0 %v6946
        %7076 = vmatmul.mubr.bf16.gmra.mrb[0].mxu0 %v6945
        %v7077 = vpop.f32.mrb[0].mxu0
        %v7078 = vadd.f32 0.0, %v7077
        %v7079 = vpop.f32.mrb[0].mxu0
        %v7080 = vpop.f32.mrb[0].mxu0
        %v7081 = vadd.f32 0.0, %v7080
        %v7082 = vpop.f32.mrb[0].mxu0
        %7083 = vmatprep.mubr.bf16.mxu0 %v6948
        %7084 = vmatmul.mubr.bf16.gmra.mrb[0].mxu0 %v6947
        %v7085 = vpop.f32.mrb[0].mxu0
        %v7086 = vadd.f32 0.0, %v7085
        %v7087 = vpop.f32.mrb[0].mxu0
        %v7088 = vpop.f32.mrb[0].mxu0
        %v7089 = vadd.f32 0.0, %v7088
        %v7090 = vpop.f32.mrb[0].mxu0
        %7091 = vmatprep.mubr.bf16.mxu0 %v6950
        %7092 = vmatmul.mubr.bf16.gmra.mrb[0].mxu0 %v6949
        %v7093 = vpop.f32.mrb[0].mxu0
        %v7094 = vadd.f32 0.0, %v7093
        %v7095 = vpop.f32.mrb[0].mxu0
        %v7096 = vpop.f32.mrb[0].mxu0
        %v7097 = vadd.f32 0.0, %v7096
        %v7098 = vpop.f32.mrb[0].mxu0
        %7099 = vmatprep.mubr.bf16.mxu0 %v6952
        %7100 = vmatmul.mubr.bf16.gmra.mrb[0].mxu0 %v6951
        %v7101 = vpop.f32.mrb[0].mxu0
        %v7102 = vadd.f32 0.0, %v7101
        %v7103 = vpop.f32.mrb[0].mxu0
        %v7104 = vpop.f32.mrb[0].mxu0
        %v7105 = vadd.f32 0.0, %v7104
        %v7106 = vpop.f32.mrb[0].mxu0
        %7107 = vmatprep.mubr.bf16.mxu0 %v6954
        %7108 = vmatmul.mubr.bf16.gmra.mrb[0].mxu0 %v6953
        %v7109 = vpop.f32.mrb[0].mxu0
        %v7110 = vadd.f32 0.0, %v7109
        %v7111 = vpop.f32.mrb[0].mxu0
        %v7112 = vpop.f32.mrb[0].mxu0
        %v7113 = vadd.f32 0.0, %v7112
        %v7114 = vpop.f32.mrb[0].mxu0
        %7115 = vmatprep.mubr.bf16.mxu0 %v6956
        %7116 = vmatmul.mubr.bf16.gmra.mrb[0].mxu0 %v6955
        %v7117 = vpop.f32.mrb[0].mxu0
        %v7118 = vadd.f32 0.0, %v7117
        %v7119 = vpop.f32.mrb[0].mxu0
        %v7120 = vpop.f32.mrb[0].mxu0
        %v7121 = vadd.f32 0.0, %v7120
        %v7122 = vpop.f32.mrb[0].mxu0
        %7123 = vmatprep.mubr.bf16.mxu0 %v6958
        %7124 = vmatmul.mubr.bf16.gmra.mrb[0].mxu0 %v6957
        %v7125 = vpop.f32.mrb[0].mxu0
        %v7126 = vadd.f32 0.0, %v7125
        %v7127 = vpop.f32.mrb[0].mxu0
        %v7128 = vpop.f32.mrb[0].mxu0
        %v7129 = vadd.f32 0.0, %v7128
        %v7130 = vpop.f32.mrb[0].mxu0
        %7131 = vmatprep.mubr.bf16.mxu0 %v6960
        %7132 = vmatmul.mubr.bf16.gmra.mrb[0].mxu0 %v6959
        %v7133 = vpop.f32.mrb[0].mxu0
        %v7134 = vadd.f32 0.0, %v7133
        %v7135 = vpop.f32.mrb[0].mxu0
        %v7136 = vpop.f32.mrb[0].mxu0
        %v7137 = vadd.f32 0.0, %v7136
        %v7138 = vpop.f32.mrb[0].mxu0
        %7139 = vmatprep.mubr.bf16.mxu0 %v6962
        %7140 = vmatmul.mubr.bf16.gmra.mrb[0].mxu0 %v6961
        %v7141 = vpop.f32.mrb[0].mxu0
        %v7142 = vadd.f32 0.0, %v7141
        %v7143 = vpop.f32.mrb[0].mxu0
        %v7144 = vpop.f32.mrb[0].mxu0
        %v7145 = vadd.f32 0.0, %v7144
        %v7146 = vpop.f32.mrb[0].mxu0
        %7147 = vmatprep.mubr.bf16.mxu0 %v6964
        %7148 = vmatmul.mubr.bf16.gmra.mrb[0].mxu0 %v6963
        %v7149 = vpop.f32.mrb[0].mxu0
        %v7150 = vadd.f32 0.0, %v7149
        %v7151 = vpop.f32.mrb[0].mxu0
        %v7152 = vpop.f32.mrb[0].mxu0
        %v7153 = vadd.f32 0.0, %v7152
        %v7154 = vpop.f32.mrb[0].mxu0
        %7155 = vmatprep.mubr.bf16.mxu0 %v6966
        %7156 = vmatmul.mubr.bf16.gmra.mrb[0].mxu0 %v6965
        %v7157 = vpop.f32.mrb[0].mxu0
        %v7158 = vadd.f32 0.0, %v7157
        %v7159 = vpop.f32.mrb[0].mxu0
        %v7160 = vpop.f32.mrb[0].mxu0
        %v7161 = vadd.f32 0.0, %v7160
        %v7162 = vpop.f32.mrb[0].mxu0
        %7163 = vmatprep.mubr.bf16.mxu0 %v6968
        %7164 = vmatmul.mubr.bf16.gmra.mrb[0].mxu0 %v6967
        %v7165 = vpop.f32.mrb[0].mxu0
        %v7166 = vadd.f32 0.0, %v7165
        %v7167 = vpop.f32.mrb[0].mxu0
        %v7168 = vpop.f32.mrb[0].mxu0
        %v7169 = vadd.f32 0.0, %v7168
        %v7170 = vpop.f32.mrb[0].mxu0
        %7171 = vmatprep.mubr.bf16.mxu0 %v6970
        %7172 = vmatmul.mubr.bf16.gmra.mrb[0].mxu0 %v6969
        %v7173 = vpop.f32.mrb[0].mxu0
        %v7174 = vadd.f32 0.0, %v7173
        %v7175 = vpop.f32.mrb[0].mxu0
        %v7176 = vpop.f32.mrb[0].mxu0
        %v7177 = vadd.f32 0.0, %v7176
        %v7178 = vpop.f32.mrb[0].mxu0
        %7179 = vdwg.mxu0
        %v7180 = vpack.c.bf16 %v7057, %v7054
        %v7181 = vpack.c.bf16 %v7065, %v7062
        %v7182 = vpack.c.bf16 %v7073, %v7070
        %v7183 = vpack.c.bf16 %v7081, %v7078
        %v7184 = vpack.c.bf16 %v7089, %v7086
        %v7185 = vpack.c.bf16 %v7097, %v7094
        %v7186 = vpack.c.bf16 %v7105, %v7102
        %v7187 = vpack.c.bf16 %v7113, %v7110
        %v7188 = vpack.c.bf16 %v7121, %v7118
        %v7189 = vpack.c.bf16 %v7129, %v7126
        %v7190 = vpack.c.bf16 %v7137, %v7134
        %v7191 = vpack.c.bf16 %v7145, %v7142
        %v7192 = vpack.c.bf16 %v7153, %v7150
        %v7193 = vpack.c.bf16 %v7161, %v7158
        %v7194 = vpack.c.bf16 %v7169, %v7166
        %v7195 = vpack.c.bf16 %v7177, %v7174
        %v7197 = vsel %vm2230, %v7180, 0
        %v7200 = vsel %vm2230, %v7181, 0
        %v7203 = vsel %vm2230, %v7182, 0
        %v7206 = vsel %vm2230, %v7183, 0
        %v7209 = vsel %vm2230, %v7184, 0
        %v7212 = vsel %vm2230, %v7185, 0
        %v7215 = vsel %vm2230, %v7186, 0
        %v7218 = vsel %vm2230, %v7187, 0
        %v7221 = vsel %vm2230, %v7188, 0
        %v7224 = vsel %vm2230, %v7189, 0
        %v7227 = vsel %vm2230, %v7190, 0
        %v7230 = vsel %vm2230, %v7191, 0
        %v7233 = vsel %vm2230, %v7192, 0
        %v7236 = vsel %vm2230, %v7193, 0
        %v7239 = vsel %vm2230, %v7194, 0
        %v7242 = vsel %vm2230, %v7195, 0
        %v7245 = vsel %vm4395, %v2181, 0
        %7247 = vmatprep.subr.bf16.mxu0 0
        %7248 = vmatpush1.bf16.msra.mxu0 %v7245
        %7249 = vmatprep.subr.bf16.mxu0 0
        %7250 = vmatpush1.bf16.msra.mxu0 0
        %7251 = vmatprep.subr.bf16.mxu0 0
        %7252 = vmatpush1.bf16.msra.mxu0 0
        %7253 = vmatprep.subr.bf16.mxu0 0
        %7254 = vmatpush1.bf16.msra.mxu0 0
        %7255 = vmatprep.subr.bf16.mxu0 0
        %7256 = vmatpush1.bf16.msra.mxu0 0
        %7257 = vmatprep.subr.bf16.mxu0 0
        %7258 = vmatpush1.bf16.msra.mxu0 0
        %7259 = vmatprep.subr.bf16.mxu0 0
        %7260 = vmatpush1.bf16.msra.mxu0 0
        %7261 = vmatprep.subr.bf16.mxu0 0
        %7262 = vmatpush1.bf16.msra.mxu0 0
        %7263 = vmatprep.subr.bf16.mxu0 0
        %7264 = vmatpush1.bf16.msra.mxu0 0
        %7265 = vmatprep.subr.bf16.mxu0 0
        %7266 = vmatpush1.bf16.msra.mxu0 0
        %7267 = vmatprep.subr.bf16.mxu0 0
        %7268 = vmatpush1.bf16.msra.mxu0 0
        %7269 = vmatprep.subr.bf16.mxu0 0
        %7270 = vmatpush1.bf16.msra.mxu0 0
        %7271 = vmatprep.subr.bf16.mxu0 0
        %7272 = vmatpush1.bf16.msra.mxu0 0
        %7273 = vmatprep.subr.bf16.mxu0 0
        %7274 = vmatpush1.bf16.msra.mxu0 0
        %7275 = vmatprep.subr.bf16.mxu0 0
        %7276 = vmatpush1.bf16.msra.mxu0 0
        %7277 = vmatprep.subr.bf16.mxu0 0
        %7278 = vmatpush1.bf16.msra.mxu0 0
        %7279 = vmatprep.mubr.bf16.mxu0 0
        %7280 = vmatmul.mubr.bf16.gmra.mrb[0].mxu0 %v7197
        %v7281 = vpop.f32.mrb[0].mxu0
        %v7282 = vadd.f32 0.0, %v7281
        %v7283 = vpop.f32.mrb[0].mxu0
        %v7284 = vpop.f32.mrb[0].mxu0
        %v7285 = vadd.f32 0.0, %v7284
        %v7286 = vpop.f32.mrb[0].mxu0
        %7287 = vmatprep.mubr.bf16.mxu0 0
        %7288 = vmatmul.mubr.bf16.gmra.mrb[0].mxu0 %v7200
        %v7289 = vpop.f32.mrb[0].mxu0
        %v7290 = vadd.f32 0.0, %v7289
        %v7291 = vpop.f32.mrb[0].mxu0
        %v7292 = vpop.f32.mrb[0].mxu0
        %v7293 = vadd.f32 0.0, %v7292
        %v7294 = vpop.f32.mrb[0].mxu0
        %7295 = vmatprep.mubr.bf16.mxu0 0
        %7296 = vmatmul.mubr.bf16.gmra.mrb[0].mxu0 %v7203
        %v7297 = vpop.f32.mrb[0].mxu0
        %v7298 = vadd.f32 0.0, %v7297
        %v7299 = vpop.f32.mrb[0].mxu0
        %v7300 = vpop.f32.mrb[0].mxu0
        %v7301 = vadd.f32 0.0, %v7300
        %v7302 = vpop.f32.mrb[0].mxu0
        %7303 = vmatprep.mubr.bf16.mxu0 0
        %7304 = vmatmul.mubr.bf16.gmra.mrb[0].mxu0 %v7206
        %v7305 = vpop.f32.mrb[0].mxu0
        %v7306 = vadd.f32 0.0, %v7305
        %v7307 = vpop.f32.mrb[0].mxu0
        %v7308 = vpop.f32.mrb[0].mxu0
        %v7309 = vadd.f32 0.0, %v7308
        %v7310 = vpop.f32.mrb[0].mxu0
        %7311 = vmatprep.mubr.bf16.mxu0 0
        %7312 = vmatmul.mubr.bf16.gmra.mrb[0].mxu0 %v7209
        %v7313 = vpop.f32.mrb[0].mxu0
        %v7314 = vadd.f32 0.0, %v7313
        %v7315 = vpop.f32.mrb[0].mxu0
        %v7316 = vpop.f32.mrb[0].mxu0
        %v7317 = vadd.f32 0.0, %v7316
        %v7318 = vpop.f32.mrb[0].mxu0
        %7319 = vmatprep.mubr.bf16.mxu0 0
        %7320 = vmatmul.mubr.bf16.gmra.mrb[0].mxu0 %v7212
        %v7321 = vpop.f32.mrb[0].mxu0
        %v7322 = vadd.f32 0.0, %v7321
        %v7323 = vpop.f32.mrb[0].mxu0
        %v7324 = vpop.f32.mrb[0].mxu0
        %v7325 = vadd.f32 0.0, %v7324
        %v7326 = vpop.f32.mrb[0].mxu0
        %7327 = vmatprep.mubr.bf16.mxu0 0
        %7328 = vmatmul.mubr.bf16.gmra.mrb[0].mxu0 %v7215
        %v7329 = vpop.f32.mrb[0].mxu0
        %v7330 = vadd.f32 0.0, %v7329
        %v7331 = vpop.f32.mrb[0].mxu0
        %v7332 = vpop.f32.mrb[0].mxu0
        %v7333 = vadd.f32 0.0, %v7332
        %v7334 = vpop.f32.mrb[0].mxu0
        %7335 = vmatprep.mubr.bf16.mxu0 0
        %7336 = vmatmul.mubr.bf16.gmra.mrb[0].mxu0 %v7218
        %v7337 = vpop.f32.mrb[0].mxu0
        %v7338 = vadd.f32 0.0, %v7337
        %v7339 = vpop.f32.mrb[0].mxu0
        %v7340 = vpop.f32.mrb[0].mxu0
        %v7341 = vadd.f32 0.0, %v7340
        %v7342 = vpop.f32.mrb[0].mxu0
        %7343 = vmatprep.mubr.bf16.mxu0 0
        %7344 = vmatmul.mubr.bf16.gmra.mrb[0].mxu0 %v7221
        %v7345 = vpop.f32.mrb[0].mxu0
        %v7346 = vadd.f32 0.0, %v7345
        %v7347 = vpop.f32.mrb[0].mxu0
        %v7348 = vpop.f32.mrb[0].mxu0
        %v7349 = vadd.f32 0.0, %v7348
        %v7350 = vpop.f32.mrb[0].mxu0
        %7351 = vmatprep.mubr.bf16.mxu0 0
        %7352 = vmatmul.mubr.bf16.gmra.mrb[0].mxu0 %v7224
        %v7353 = vpop.f32.mrb[0].mxu0
        %v7354 = vadd.f32 0.0, %v7353
        %v7355 = vpop.f32.mrb[0].mxu0
        %v7356 = vpop.f32.mrb[0].mxu0
        %v7357 = vadd.f32 0.0, %v7356
        %v7358 = vpop.f32.mrb[0].mxu0
        %7359 = vmatprep.mubr.bf16.mxu0 0
        %7360 = vmatmul.mubr.bf16.gmra.mrb[0].mxu0 %v7227
        %v7361 = vpop.f32.mrb[0].mxu0
        %v7362 = vadd.f32 0.0, %v7361
        %v7363 = vpop.f32.mrb[0].mxu0
        %v7364 = vpop.f32.mrb[0].mxu0
        %v7365 = vadd.f32 0.0, %v7364
        %v7366 = vpop.f32.mrb[0].mxu0
        %7367 = vmatprep.mubr.bf16.mxu0 0
        %7368 = vmatmul.mubr.bf16.gmra.mrb[0].mxu0 %v7230
        %v7369 = vpop.f32.mrb[0].mxu0
        %v7370 = vadd.f32 0.0, %v7369
        %v7371 = vpop.f32.mrb[0].mxu0
        %v7372 = vpop.f32.mrb[0].mxu0
        %v7373 = vadd.f32 0.0, %v7372
        %v7374 = vpop.f32.mrb[0].mxu0
        %7375 = vmatprep.mubr.bf16.mxu0 0
        %7376 = vmatmul.mubr.bf16.gmra.mrb[0].mxu0 %v7233
        %v7377 = vpop.f32.mrb[0].mxu0
        %v7378 = vadd.f32 0.0, %v7377
        %v7379 = vpop.f32.mrb[0].mxu0
        %v7380 = vpop.f32.mrb[0].mxu0
        %v7381 = vadd.f32 0.0, %v7380
        %v7382 = vpop.f32.mrb[0].mxu0
        %7383 = vmatprep.mubr.bf16.mxu0 0
        %7384 = vmatmul.mubr.bf16.gmra.mrb[0].mxu0 %v7236
        %v7385 = vpop.f32.mrb[0].mxu0
        %v7386 = vadd.f32 0.0, %v7385
        %v7387 = vpop.f32.mrb[0].mxu0
        %v7388 = vpop.f32.mrb[0].mxu0
        %v7389 = vadd.f32 0.0, %v7388
        %v7390 = vpop.f32.mrb[0].mxu0
        %7391 = vmatprep.mubr.bf16.mxu0 0
        %7392 = vmatmul.mubr.bf16.gmra.mrb[0].mxu0 %v7239
        %v7393 = vpop.f32.mrb[0].mxu0
        %v7394 = vadd.f32 0.0, %v7393
        %v7395 = vpop.f32.mrb[0].mxu0
        %v7396 = vpop.f32.mrb[0].mxu0
        %v7397 = vadd.f32 0.0, %v7396
        %v7398 = vpop.f32.mrb[0].mxu0
        %7399 = vmatprep.mubr.bf16.mxu0 0
        %7400 = vmatmul.mubr.bf16.gmra.mrb[0].mxu0 %v7242
        %v7401 = vpop.f32.mrb[0].mxu0
        %v7402 = vadd.f32 0.0, %v7401
        %v7403 = vpop.f32.mrb[0].mxu0
        %v7404 = vpop.f32.mrb[0].mxu0
        %v7405 = vadd.f32 0.0, %v7404
        %v7406 = vpop.f32.mrb[0].mxu0
        %7407 = vdwg.mxu0
        %v7408 = vadd.f32 %v6074, %v7282
        %v7409 = vadd.f32 %v6075, %v7285
        %v7410 = vadd.f32 %v6076, %v7290
        %v7411 = vadd.f32 %v6077, %v7293
        %v7412 = vadd.f32 %v6078, %v7298
        %v7413 = vadd.f32 %v6079, %v7301
        %v7414 = vadd.f32 %v6080, %v7306
        %v7415 = vadd.f32 %v6081, %v7309
        %v7416 = vadd.f32 %v6082, %v7314
        %v7417 = vadd.f32 %v6083, %v7317
        %v7418 = vadd.f32 %v6084, %v7322
        %v7419 = vadd.f32 %v6085, %v7325
        %v7420 = vadd.f32 %v6086, %v7330
        %v7421 = vadd.f32 %v6087, %v7333
        %v7422 = vadd.f32 %v6088, %v7338
        %v7423 = vadd.f32 %v6089, %v7341
        %v7424 = vadd.f32 %v6090, %v7346
        %v7425 = vadd.f32 %v6091, %v7349
        %v7426 = vadd.f32 %v6092, %v7354
        %v7427 = vadd.f32 %v6093, %v7357
        %v7428 = vadd.f32 %v6094, %v7362
        %v7429 = vadd.f32 %v6095, %v7365
        %v7430 = vadd.f32 %v6096, %v7370
        %v7431 = vadd.f32 %v6097, %v7373
        %v7432 = vadd.f32 %v6098, %v7378
        %v7433 = vadd.f32 %v6099, %v7381
        %v7434 = vadd.f32 %v6100, %v7386
        %v7435 = vadd.f32 %v6101, %v7389
        %v7436 = vadd.f32 %v6102, %v7394
        %v7437 = vadd.f32 %v6103, %v7397
        %v7438 = vadd.f32 %v6104, %v7402
        %v7439 = vadd.f32 %v6105, %v7405
        %v7440 = vld [vmem:[%s12] sm:$0x1]
        %v7442 = vlaneseq
        %v7443 = vshrl.u32 %v7442, 7
        %v7444 = vsub.s32 0, %v7443
        %v7445 = vrot.slane %v7440, %v7444
        %v7447 = vadd.f32 %v7408, %v7445
        %v7448 = vadd.f32 %v7409, %v7445
        %v7449 = vadd.f32 %v7410, %v7445
        %v7450 = vadd.f32 %v7411, %v7445
        %v7451 = vadd.f32 %v7412, %v7445
        %v7452 = vadd.f32 %v7413, %v7445
        %v7453 = vadd.f32 %v7414, %v7445
        %v7454 = vadd.f32 %v7415, %v7445
        %v7455 = vadd.f32 %v7416, %v7445
        %v7456 = vadd.f32 %v7417, %v7445
        %v7457 = vadd.f32 %v7418, %v7445
        %v7458 = vadd.f32 %v7419, %v7445
        %v7459 = vadd.f32 %v7420, %v7445
        %v7460 = vadd.f32 %v7421, %v7445
        %v7461 = vadd.f32 %v7422, %v7445
        %v7462 = vadd.f32 %v7423, %v7445
        %v7463 = vadd.f32 %v7424, %v7445
        %v7464 = vadd.f32 %v7425, %v7445
        %v7465 = vadd.f32 %v7426, %v7445
        %v7466 = vadd.f32 %v7427, %v7445
        %v7467 = vadd.f32 %v7428, %v7445
        %v7468 = vadd.f32 %v7429, %v7445
        %v7469 = vadd.f32 %v7430, %v7445
        %v7470 = vadd.f32 %v7431, %v7445
        %v7471 = vadd.f32 %v7432, %v7445
        %v7472 = vadd.f32 %v7433, %v7445
        %v7473 = vadd.f32 %v7434, %v7445
        %v7474 = vadd.f32 %v7435, %v7445
        %v7475 = vadd.f32 %v7436, %v7445
        %v7476 = vadd.f32 %v7437, %v7445
        %v7477 = vadd.f32 %v7438, %v7445
        %v7478 = vadd.f32 %v7439, %v7445
        %v7479 = vadd.f32 %v1385, %v7447
        %v7480 = vadd.f32 %v1386, %v7448
        %v7481 = vadd.f32 %v1387, %v7449
        %v7482 = vadd.f32 %v1388, %v7450
        %v7483 = vadd.f32 %v1389, %v7451
        %v7484 = vadd.f32 %v1390, %v7452
        %v7485 = vadd.f32 %v1391, %v7453
        %v7486 = vadd.f32 %v1392, %v7454
        %v7487 = vadd.f32 %v1393, %v7455
        %v7488 = vadd.f32 %v1394, %v7456
        %v7489 = vadd.f32 %v1395, %v7457
        %v7490 = vadd.f32 %v1396, %v7458
        %v7491 = vadd.f32 %v1397, %v7459
        %v7492 = vadd.f32 %v1398, %v7460
        %v7493 = vadd.f32 %v1399, %v7461
        %v7494 = vadd.f32 %v1400, %v7462
        %v7495 = vadd.f32 %v1417, %v7463
        %v7496 = vadd.f32 %v1418, %v7464
        %v7497 = vadd.f32 %v1419, %v7465
        %v7498 = vadd.f32 %v1420, %v7466
        %v7499 = vadd.f32 %v1421, %v7467
        %v7500 = vadd.f32 %v1422, %v7468
        %v7501 = vadd.f32 %v1423, %v7469
        %v7502 = vadd.f32 %v1424, %v7470
        %v7503 = vadd.f32 %v1425, %v7471
        %v7504 = vadd.f32 %v1426, %v7472
        %v7505 = vadd.f32 %v1427, %v7473
        %v7506 = vadd.f32 %v1428, %v7474
        %v7507 = vadd.f32 %v1429, %v7475
        %v7508 = vadd.f32 %v1430, %v7476
        %v7509 = vadd.f32 %v1431, %v7477
        %v7510 = vadd.f32 %v1432, %v7478
        %v7511 = vsel %vm1552, %v7479, 0.0
        %7512 = vadd.xlane.f32.xlu0 %v7511
        %v7513 = vpop.xlane.xlu0 %7512
        %v7514 = vsel %vm1552, %v7480, 0.0
        %7515 = vadd.xlane.f32.xlu0 %v7514
        %v7516 = vpop.xlane.xlu0 %7515
        %v7517 = vsel %vm1552, %v7481, 0.0
        %7518 = vadd.xlane.f32.xlu0 %v7517
        %v7519 = vpop.xlane.xlu0 %7518
        %v7520 = vsel %vm1552, %v7482, 0.0
        %7521 = vadd.xlane.f32.xlu0 %v7520
        %v7522 = vpop.xlane.xlu0 %7521
        %v7523 = vsel %vm1552, %v7483, 0.0
        %7524 = vadd.xlane.f32.xlu0 %v7523
        %v7525 = vpop.xlane.xlu0 %7524
        %v7526 = vsel %vm1552, %v7484, 0.0
        %7527 = vadd.xlane.f32.xlu0 %v7526
        %v7528 = vpop.xlane.xlu0 %7527
        %v7529 = vsel %vm1552, %v7485, 0.0
        %7530 = vadd.xlane.f32.xlu0 %v7529
        %v7531 = vpop.xlane.xlu0 %7530
        %v7532 = vsel %vm1552, %v7486, 0.0
        %7533 = vadd.xlane.f32.xlu0 %v7532
        %v7534 = vpop.xlane.xlu0 %7533
        %v7535 = vsel %vm1552, %v7487, 0.0
        %7536 = vadd.xlane.f32.xlu0 %v7535
        %v7537 = vpop.xlane.xlu0 %7536
        %v7538 = vsel %vm1552, %v7488, 0.0
        %7539 = vadd.xlane.f32.xlu0 %v7538
        %v7540 = vpop.xlane.xlu0 %7539
        %v7541 = vsel %vm1552, %v7489, 0.0
        %7542 = vadd.xlane.f32.xlu0 %v7541
        %v7543 = vpop.xlane.xlu0 %7542
        %v7544 = vsel %vm1552, %v7490, 0.0
        %7545 = vadd.xlane.f32.xlu0 %v7544
        %v7546 = vpop.xlane.xlu0 %7545
        %v7547 = vsel %vm1552, %v7491, 0.0
        %7548 = vadd.xlane.f32.xlu0 %v7547
        %v7549 = vpop.xlane.xlu0 %7548
        %v7550 = vsel %vm1552, %v7492, 0.0
        %7551 = vadd.xlane.f32.xlu0 %v7550
        %v7552 = vpop.xlane.xlu0 %7551
        %v7553 = vsel %vm1552, %v7493, 0.0
        %7554 = vadd.xlane.f32.xlu0 %v7553
        %v7555 = vpop.xlane.xlu0 %7554
        %v7556 = vsel %vm1552, %v7494, 0.0
        %7557 = vadd.xlane.f32.xlu0 %v7556
        %v7558 = vpop.xlane.xlu0 %7557
        %v7559 = vsel %vm1552, %v7495, 0.0
        %7560 = vadd.xlane.f32.xlu0 %v7559
        %v7561 = vpop.xlane.xlu0 %7560
        %v7562 = vsel %vm1552, %v7496, 0.0
        %7563 = vadd.xlane.f32.xlu0 %v7562
        %v7564 = vpop.xlane.xlu0 %7563
        %v7565 = vsel %vm1552, %v7497, 0.0
        %7566 = vadd.xlane.f32.xlu0 %v7565
        %v7567 = vpop.xlane.xlu0 %7566
        %v7568 = vsel %vm1552, %v7498, 0.0
        %7569 = vadd.xlane.f32.xlu0 %v7568
        %v7570 = vpop.xlane.xlu0 %7569
        %v7571 = vsel %vm1552, %v7499, 0.0
        %7572 = vadd.xlane.f32.xlu0 %v7571
        %v7573 = vpop.xlane.xlu0 %7572
        %v7574 = vsel %vm1552, %v7500, 0.0
        %7575 = vadd.xlane.f32.xlu0 %v7574
        %v7576 = vpop.xlane.xlu0 %7575
        %v7577 = vsel %vm1552, %v7501, 0.0
        %7578 = vadd.xlane.f32.xlu0 %v7577
        %v7579 = vpop.xlane.xlu0 %7578
        %v7580 = vsel %vm1552, %v7502, 0.0
        %7581 = vadd.xlane.f32.xlu0 %v7580
        %v7582 = vpop.xlane.xlu0 %7581
        %v7583 = vsel %vm1552, %v7503, 0.0
        %7584 = vadd.xlane.f32.xlu0 %v7583
        %v7585 = vpop.xlane.xlu0 %7584
        %v7586 = vsel %vm1552, %v7504, 0.0
        %7587 = vadd.xlane.f32.xlu0 %v7586
        %v7588 = vpop.xlane.xlu0 %7587
        %v7589 = vsel %vm1552, %v7505, 0.0
        %7590 = vadd.xlane.f32.xlu0 %v7589
        %v7591 = vpop.xlane.xlu0 %7590
        %v7592 = vsel %vm1552, %v7506, 0.0
        %7593 = vadd.xlane.f32.xlu0 %v7592
        %v7594 = vpop.xlane.xlu0 %7593
        %v7595 = vsel %vm1552, %v7507, 0.0
        %7596 = vadd.xlane.f32.xlu0 %v7595
        %v7597 = vpop.xlane.xlu0 %7596
        %v7598 = vsel %vm1552, %v7508, 0.0
        %7599 = vadd.xlane.f32.xlu0 %v7598
        %v7600 = vpop.xlane.xlu0 %7599
        %v7601 = vsel %vm1552, %v7509, 0.0
        %7602 = vadd.xlane.f32.xlu0 %v7601
        %v7603 = vpop.xlane.xlu0 %7602
        %v7604 = vsel %vm1552, %v7510, 0.0
        %7605 = vadd.xlane.f32.xlu0 %v7604
        %v7606 = vpop.xlane.xlu0 %7605
        %v7607 = vrcp.pop 32.0
        %v7608 = vmul.f32 %v7513, %v7607
        %v7609 = vmul.f32 %v7516, %v7607
        %v7610 = vmul.f32 %v7519, %v7607
        %v7611 = vmul.f32 %v7522, %v7607
        %v7612 = vmul.f32 %v7525, %v7607
        %v7613 = vmul.f32 %v7528, %v7607
        %v7614 = vmul.f32 %v7531, %v7607
        %v7615 = vmul.f32 %v7534, %v7607
        %v7616 = vmul.f32 %v7537, %v7607
        %v7617 = vmul.f32 %v7540, %v7607
        %v7618 = vmul.f32 %v7543, %v7607
        %v7619 = vmul.f32 %v7546, %v7607
        %v7620 = vmul.f32 %v7549, %v7607
        %v7621 = vmul.f32 %v7552, %v7607
        %v7622 = vmul.f32 %v7555, %v7607
        %v7623 = vmul.f32 %v7558, %v7607
        %v7624 = vmul.f32 %v7561, %v7607
        %v7625 = vmul.f32 %v7564, %v7607
        %v7626 = vmul.f32 %v7567, %v7607
        %v7627 = vmul.f32 %v7570, %v7607
        %v7628 = vmul.f32 %v7573, %v7607
        %v7629 = vmul.f32 %v7576, %v7607
        %v7630 = vmul.f32 %v7579, %v7607
        %v7631 = vmul.f32 %v7582, %v7607
        %v7632 = vmul.f32 %v7585, %v7607
        %v7633 = vmul.f32 %v7588, %v7607
        %v7634 = vmul.f32 %v7591, %v7607
        %v7635 = vmul.f32 %v7594, %v7607
        %v7636 = vmul.f32 %v7597, %v7607
        %v7637 = vmul.f32 %v7600, %v7607
        %v7638 = vmul.f32 %v7603, %v7607
        %v7639 = vmul.f32 %v7606, %v7607
        %v7640 = vsub.f32 %v7479, %v7608
        %v7641 = vsub.f32 %v7480, %v7609
        %v7642 = vsub.f32 %v7481, %v7610
        %v7643 = vsub.f32 %v7482, %v7611
        %v7644 = vsub.f32 %v7483, %v7612
        %v7645 = vsub.f32 %v7484, %v7613
        %v7646 = vsub.f32 %v7485, %v7614
        %v7647 = vsub.f32 %v7486, %v7615
        %v7648 = vsub.f32 %v7487, %v7616
        %v7649 = vsub.f32 %v7488, %v7617
        %v7650 = vsub.f32 %v7489, %v7618
        %v7651 = vsub.f32 %v7490, %v7619
        %v7652 = vsub.f32 %v7491, %v7620
        %v7653 = vsub.f32 %v7492, %v7621
        %v7654 = vsub.f32 %v7493, %v7622
        %v7655 = vsub.f32 %v7494, %v7623
        %v7656 = vsub.f32 %v7495, %v7624
        %v7657 = vsub.f32 %v7496, %v7625
        %v7658 = vsub.f32 %v7497, %v7626
        %v7659 = vsub.f32 %v7498, %v7627
        %v7660 = vsub.f32 %v7499, %v7628
        %v7661 = vsub.f32 %v7500, %v7629
        %v7662 = vsub.f32 %v7501, %v7630
        %v7663 = vsub.f32 %v7502, %v7631
        %v7664 = vsub.f32 %v7503, %v7632
        %v7665 = vsub.f32 %v7504, %v7633
        %v7666 = vsub.f32 %v7505, %v7634
        %v7667 = vsub.f32 %v7506, %v7635
        %v7668 = vsub.f32 %v7507, %v7636
        %v7669 = vsub.f32 %v7508, %v7637
        %v7670 = vsub.f32 %v7509, %v7638
        %v7671 = vsub.f32 %v7510, %v7639
        %v7672 = vmul.f32 %v7640, %v7640
        %v7673 = vmul.f32 %v7641, %v7641
        %v7674 = vmul.f32 %v7642, %v7642
        %v7675 = vmul.f32 %v7643, %v7643
        %v7676 = vmul.f32 %v7644, %v7644
        %v7677 = vmul.f32 %v7645, %v7645
        %v7678 = vmul.f32 %v7646, %v7646
        %v7679 = vmul.f32 %v7647, %v7647
        %v7680 = vmul.f32 %v7648, %v7648
        %v7681 = vmul.f32 %v7649, %v7649
        %v7682 = vmul.f32 %v7650, %v7650
        %v7683 = vmul.f32 %v7651, %v7651
        %v7684 = vmul.f32 %v7652, %v7652
        %v7685 = vmul.f32 %v7653, %v7653
        %v7686 = vmul.f32 %v7654, %v7654
        %v7687 = vmul.f32 %v7655, %v7655
        %v7688 = vmul.f32 %v7656, %v7656
        %v7689 = vmul.f32 %v7657, %v7657
        %v7690 = vmul.f32 %v7658, %v7658
        %v7691 = vmul.f32 %v7659, %v7659
        %v7692 = vmul.f32 %v7660, %v7660
        %v7693 = vmul.f32 %v7661, %v7661
        %v7694 = vmul.f32 %v7662, %v7662
        %v7695 = vmul.f32 %v7663, %v7663
        %v7696 = vmul.f32 %v7664, %v7664
        %v7697 = vmul.f32 %v7665, %v7665
        %v7698 = vmul.f32 %v7666, %v7666
        %v7699 = vmul.f32 %v7667, %v7667
        %v7700 = vmul.f32 %v7668, %v7668
        %v7701 = vmul.f32 %v7669, %v7669
        %v7702 = vmul.f32 %v7670, %v7670
        %v7703 = vmul.f32 %v7671, %v7671
        %v7704 = vsel %vm1552, %v7672, 0.0
        %7705 = vadd.xlane.f32.xlu0 %v7704
        %v7706 = vpop.xlane.xlu0 %7705
        %v7707 = vsel %vm1552, %v7673, 0.0
        %7708 = vadd.xlane.f32.xlu0 %v7707
        %v7709 = vpop.xlane.xlu0 %7708
        %v7710 = vsel %vm1552, %v7674, 0.0
        %7711 = vadd.xlane.f32.xlu0 %v7710
        %v7712 = vpop.xlane.xlu0 %7711
        %v7713 = vsel %vm1552, %v7675, 0.0
        %7714 = vadd.xlane.f32.xlu0 %v7713
        %v7715 = vpop.xlane.xlu0 %7714
        %v7716 = vsel %vm1552, %v7676, 0.0
        %7717 = vadd.xlane.f32.xlu0 %v7716
        %v7718 = vpop.xlane.xlu0 %7717
        %v7719 = vsel %vm1552, %v7677, 0.0
        %7720 = vadd.xlane.f32.xlu0 %v7719
        %v7721 = vpop.xlane.xlu0 %7720
        %v7722 = vsel %vm1552, %v7678, 0.0
        %7723 = vadd.xlane.f32.xlu0 %v7722
        %v7724 = vpop.xlane.xlu0 %7723
        %v7725 = vsel %vm1552, %v7679, 0.0
        %7726 = vadd.xlane.f32.xlu0 %v7725
        %v7727 = vpop.xlane.xlu0 %7726
        %v7728 = vsel %vm1552, %v7680, 0.0
        %7729 = vadd.xlane.f32.xlu0 %v7728
        %v7730 = vpop.xlane.xlu0 %7729
        %v7731 = vsel %vm1552, %v7681, 0.0
        %7732 = vadd.xlane.f32.xlu0 %v7731
        %v7733 = vpop.xlane.xlu0 %7732
        %v7734 = vsel %vm1552, %v7682, 0.0
        %7735 = vadd.xlane.f32.xlu0 %v7734
        %v7736 = vpop.xlane.xlu0 %7735
        %v7737 = vsel %vm1552, %v7683, 0.0
        %7738 = vadd.xlane.f32.xlu0 %v7737
        %v7739 = vpop.xlane.xlu0 %7738
        %v7740 = vsel %vm1552, %v7684, 0.0
        %7741 = vadd.xlane.f32.xlu0 %v7740
        %v7742 = vpop.xlane.xlu0 %7741
        %v7743 = vsel %vm1552, %v7685, 0.0
        %7744 = vadd.xlane.f32.xlu0 %v7743
        %v7745 = vpop.xlane.xlu0 %7744
        %v7746 = vsel %vm1552, %v7686, 0.0
        %7747 = vadd.xlane.f32.xlu0 %v7746
        %v7748 = vpop.xlane.xlu0 %7747
        %v7749 = vsel %vm1552, %v7687, 0.0
        %7750 = vadd.xlane.f32.xlu0 %v7749
        %v7751 = vpop.xlane.xlu0 %7750
        %v7752 = vsel %vm1552, %v7688, 0.0
        %7753 = vadd.xlane.f32.xlu0 %v7752
        %v7754 = vpop.xlane.xlu0 %7753
        %v7755 = vsel %vm1552, %v7689, 0.0
        %7756 = vadd.xlane.f32.xlu0 %v7755
        %v7757 = vpop.xlane.xlu0 %7756
        %v7758 = vsel %vm1552, %v7690, 0.0
        %7759 = vadd.xlane.f32.xlu0 %v7758
        %v7760 = vpop.xlane.xlu0 %7759
        %v7761 = vsel %vm1552, %v7691, 0.0
        %7762 = vadd.xlane.f32.xlu0 %v7761
        %v7763 = vpop.xlane.xlu0 %7762
        %v7764 = vsel %vm1552, %v7692, 0.0
        %7765 = vadd.xlane.f32.xlu0 %v7764
        %v7766 = vpop.xlane.xlu0 %7765
        %v7767 = vsel %vm1552, %v7693, 0.0
        %7768 = vadd.xlane.f32.xlu0 %v7767
        %v7769 = vpop.xlane.xlu0 %7768
        %v7770 = vsel %vm1552, %v7694, 0.0
        %7771 = vadd.xlane.f32.xlu0 %v7770
        %v7772 = vpop.xlane.xlu0 %7771
        %v7773 = vsel %vm1552, %v7695, 0.0
        %7774 = vadd.xlane.f32.xlu0 %v7773
        %v7775 = vpop.xlane.xlu0 %7774
        %v7776 = vsel %vm1552, %v7696, 0.0
        %7777 = vadd.xlane.f32.xlu0 %v7776
        %v7778 = vpop.xlane.xlu0 %7777
        %v7779 = vsel %vm1552, %v7697, 0.0
        %7780 = vadd.xlane.f32.xlu0 %v7779
        %v7781 = vpop.xlane.xlu0 %7780
        %v7782 = vsel %vm1552, %v7698, 0.0
        %7783 = vadd.xlane.f32.xlu0 %v7782
        %v7784 = vpop.xlane.xlu0 %7783
        %v7785 = vsel %vm1552, %v7699, 0.0
        %7786 = vadd.xlane.f32.xlu0 %v7785
        %v7787 = vpop.xlane.xlu0 %7786
        %v7788 = vsel %vm1552, %v7700, 0.0
        %7789 = vadd.xlane.f32.xlu0 %v7788
        %v7790 = vpop.xlane.xlu0 %7789
        %v7791 = vsel %vm1552, %v7701, 0.0
        %7792 = vadd.xlane.f32.xlu0 %v7791
        %v7793 = vpop.xlane.xlu0 %7792
        %v7794 = vsel %vm1552, %v7702, 0.0
        %7795 = vadd.xlane.f32.xlu0 %v7794
        %v7796 = vpop.xlane.xlu0 %7795
        %v7797 = vsel %vm1552, %v7703, 0.0
        %7798 = vadd.xlane.f32.xlu0 %v7797
        %v7799 = vpop.xlane.xlu0 %7798
        %v7800 = vmul.f32 %v7706, %v7607
        %v7801 = vmul.f32 %v7709, %v7607
        %v7802 = vmul.f32 %v7712, %v7607
        %v7803 = vmul.f32 %v7715, %v7607
        %v7804 = vmul.f32 %v7718, %v7607
        %v7805 = vmul.f32 %v7721, %v7607
        %v7806 = vmul.f32 %v7724, %v7607
        %v7807 = vmul.f32 %v7727, %v7607
        %v7808 = vmul.f32 %v7730, %v7607
        %v7809 = vmul.f32 %v7733, %v7607
        %v7810 = vmul.f32 %v7736, %v7607
        %v7811 = vmul.f32 %v7739, %v7607
        %v7812 = vmul.f32 %v7742, %v7607
        %v7813 = vmul.f32 %v7745, %v7607
        %v7814 = vmul.f32 %v7748, %v7607
        %v7815 = vmul.f32 %v7751, %v7607
        %v7816 = vmul.f32 %v7754, %v7607
        %v7817 = vmul.f32 %v7757, %v7607
        %v7818 = vmul.f32 %v7760, %v7607
        %v7819 = vmul.f32 %v7763, %v7607
        %v7820 = vmul.f32 %v7766, %v7607
        %v7821 = vmul.f32 %v7769, %v7607
        %v7822 = vmul.f32 %v7772, %v7607
        %v7823 = vmul.f32 %v7775, %v7607
        %v7824 = vmul.f32 %v7778, %v7607
        %v7825 = vmul.f32 %v7781, %v7607
        %v7826 = vmul.f32 %v7784, %v7607
        %v7827 = vmul.f32 %v7787, %v7607
        %v7828 = vmul.f32 %v7790, %v7607
        %v7829 = vmul.f32 %v7793, %v7607
        %v7830 = vmul.f32 %v7796, %v7607
        %v7831 = vmul.f32 %v7799, %v7607
        %v7832 = vadd.f32 %v7800, 1e-05
        %v7833 = vadd.f32 %v7801, 1e-05
        %v7834 = vadd.f32 %v7802, 1e-05
        %v7835 = vadd.f32 %v7803, 1e-05
        %v7836 = vadd.f32 %v7804, 1e-05
        %v7837 = vadd.f32 %v7805, 1e-05
        %v7838 = vadd.f32 %v7806, 1e-05
        %v7839 = vadd.f32 %v7807, 1e-05
        %v7840 = vadd.f32 %v7808, 1e-05
        %v7841 = vadd.f32 %v7809, 1e-05
        %v7842 = vadd.f32 %v7810, 1e-05
        %v7843 = vadd.f32 %v7811, 1e-05
        %v7844 = vadd.f32 %v7812, 1e-05
        %v7845 = vadd.f32 %v7813, 1e-05
        %v7846 = vadd.f32 %v7814, 1e-05
        %v7847 = vadd.f32 %v7815, 1e-05
        %v7848 = vadd.f32 %v7816, 1e-05
        %v7849 = vadd.f32 %v7817, 1e-05
        %v7850 = vadd.f32 %v7818, 1e-05
        %v7851 = vadd.f32 %v7819, 1e-05
        %v7852 = vadd.f32 %v7820, 1e-05
        %v7853 = vadd.f32 %v7821, 1e-05
        %v7854 = vadd.f32 %v7822, 1e-05
        %v7855 = vadd.f32 %v7823, 1e-05
        %v7856 = vadd.f32 %v7824, 1e-05
        %v7857 = vadd.f32 %v7825, 1e-05
        %v7858 = vadd.f32 %v7826, 1e-05
        %v7859 = vadd.f32 %v7827, 1e-05
        %v7860 = vadd.f32 %v7828, 1e-05
        %v7861 = vadd.f32 %v7829, 1e-05
        %v7862 = vadd.f32 %v7830, 1e-05
        %v7863 = vadd.f32 %v7831, 1e-05
        %v7864 = vrsqrt.pop %v7832
        %v7865 = vrsqrt.pop %v7833
        %v7866 = vrsqrt.pop %v7834
        %v7867 = vrsqrt.pop %v7835
        %v7868 = vrsqrt.pop %v7836
        %v7869 = vrsqrt.pop %v7837
        %v7870 = vrsqrt.pop %v7838
        %v7871 = vrsqrt.pop %v7839
        %v7872 = vrsqrt.pop %v7840
        %v7873 = vrsqrt.pop %v7841
        %v7874 = vrsqrt.pop %v7842
        %v7875 = vrsqrt.pop %v7843
        %v7876 = vrsqrt.pop %v7844
        %v7877 = vrsqrt.pop %v7845
        %v7878 = vrsqrt.pop %v7846
        %v7879 = vrsqrt.pop %v7847
        %v7880 = vrsqrt.pop %v7848
        %v7881 = vrsqrt.pop %v7849
        %v7882 = vrsqrt.pop %v7850
        %v7883 = vrsqrt.pop %v7851
        %v7884 = vrsqrt.pop %v7852
        %v7885 = vrsqrt.pop %v7853
        %v7886 = vrsqrt.pop %v7854
        %v7887 = vrsqrt.pop %v7855
        %v7888 = vrsqrt.pop %v7856
        %v7889 = vrsqrt.pop %v7857
        %v7890 = vrsqrt.pop %v7858
        %v7891 = vrsqrt.pop %v7859
        %v7892 = vrsqrt.pop %v7860
        %v7893 = vrsqrt.pop %v7861
        %v7894 = vrsqrt.pop %v7862
        %v7895 = vrsqrt.pop %v7863
        %v7896 = vmul.f32 %v7640, %v7864
        %v7897 = vmul.f32 %v7641, %v7865
        %v7898 = vmul.f32 %v7642, %v7866
        %v7899 = vmul.f32 %v7643, %v7867
        %v7900 = vmul.f32 %v7644, %v7868
        %v7901 = vmul.f32 %v7645, %v7869
        %v7902 = vmul.f32 %v7646, %v7870
        %v7903 = vmul.f32 %v7647, %v7871
        %v7904 = vmul.f32 %v7648, %v7872
        %v7905 = vmul.f32 %v7649, %v7873
        %v7906 = vmul.f32 %v7650, %v7874
        %v7907 = vmul.f32 %v7651, %v7875
        %v7908 = vmul.f32 %v7652, %v7876
        %v7909 = vmul.f32 %v7653, %v7877
        %v7910 = vmul.f32 %v7654, %v7878
        %v7911 = vmul.f32 %v7655, %v7879
        %v7912 = vmul.f32 %v7656, %v7880
        %v7913 = vmul.f32 %v7657, %v7881
        %v7914 = vmul.f32 %v7658, %v7882
        %v7915 = vmul.f32 %v7659, %v7883
        %v7916 = vmul.f32 %v7660, %v7884
        %v7917 = vmul.f32 %v7661, %v7885
        %v7918 = vmul.f32 %v7662, %v7886
        %v7919 = vmul.f32 %v7663, %v7887
        %v7920 = vmul.f32 %v7664, %v7888
        %v7921 = vmul.f32 %v7665, %v7889
        %v7922 = vmul.f32 %v7666, %v7890
        %v7923 = vmul.f32 %v7667, %v7891
        %v7924 = vmul.f32 %v7668, %v7892
        %v7925 = vmul.f32 %v7669, %v7893
        %v7926 = vmul.f32 %v7670, %v7894
        %v7927 = vmul.f32 %v7671, %v7895
        %v7928 = vld [vmem:[%s13] sm:$0x1]
        %v7930 = vlaneseq
        %v7931 = vshrl.u32 %v7930, 7
        %v7932 = vsub.s32 0, %v7931
        %v7933 = vrot.slane %v7928, %v7932
        %v7935 = vmul.f32 %v7896, %v7933
        %v7936 = vmul.f32 %v7897, %v7933
        %v7937 = vmul.f32 %v7898, %v7933
        %v7938 = vmul.f32 %v7899, %v7933
        %v7939 = vmul.f32 %v7900, %v7933
        %v7940 = vmul.f32 %v7901, %v7933
        %v7941 = vmul.f32 %v7902, %v7933
        %v7942 = vmul.f32 %v7903, %v7933
        %v7943 = vmul.f32 %v7904, %v7933
        %v7944 = vmul.f32 %v7905, %v7933
        %v7945 = vmul.f32 %v7906, %v7933
        %v7946 = vmul.f32 %v7907, %v7933
        %v7947 = vmul.f32 %v7908, %v7933
        %v7948 = vmul.f32 %v7909, %v7933
        %v7949 = vmul.f32 %v7910, %v7933
        %v7950 = vmul.f32 %v7911, %v7933
        %v7951 = vmul.f32 %v7912, %v7933
        %v7952 = vmul.f32 %v7913, %v7933
        %v7953 = vmul.f32 %v7914, %v7933
        %v7954 = vmul.f32 %v7915, %v7933
        %v7955 = vmul.f32 %v7916, %v7933
        %v7956 = vmul.f32 %v7917, %v7933
        %v7957 = vmul.f32 %v7918, %v7933
        %v7958 = vmul.f32 %v7919, %v7933
        %v7959 = vmul.f32 %v7920, %v7933
        %v7960 = vmul.f32 %v7921, %v7933
        %v7961 = vmul.f32 %v7922, %v7933
        %v7962 = vmul.f32 %v7923, %v7933
        %v7963 = vmul.f32 %v7924, %v7933
        %v7964 = vmul.f32 %v7925, %v7933
        %v7965 = vmul.f32 %v7926, %v7933
        %v7966 = vmul.f32 %v7927, %v7933
        %v7967 = vld [vmem:[%s14] sm:$0x1]
        %v7969 = vlaneseq
        %v7970 = vshrl.u32 %v7969, 7
        %v7971 = vsub.s32 0, %v7970
        %v7972 = vrot.slane %v7967, %v7971
        %v7974 = vadd.f32 %v7935, %v7972
        %v7975 = vadd.f32 %v7936, %v7972
        %v7976 = vadd.f32 %v7937, %v7972
        %v7977 = vadd.f32 %v7938, %v7972
        %v7978 = vadd.f32 %v7939, %v7972
        %v7979 = vadd.f32 %v7940, %v7972
        %v7980 = vadd.f32 %v7941, %v7972
        %v7981 = vadd.f32 %v7942, %v7972
        %v7982 = vadd.f32 %v7943, %v7972
        %v7983 = vadd.f32 %v7944, %v7972
        %v7984 = vadd.f32 %v7945, %v7972
        %v7985 = vadd.f32 %v7946, %v7972
        %v7986 = vadd.f32 %v7947, %v7972
        %v7987 = vadd.f32 %v7948, %v7972
        %v7988 = vadd.f32 %v7949, %v7972
        %v7989 = vadd.f32 %v7950, %v7972
        %v7990 = vadd.f32 %v7951, %v7972
        %v7991 = vadd.f32 %v7952, %v7972
        %v7992 = vadd.f32 %v7953, %v7972
        %v7993 = vadd.f32 %v7954, %v7972
        %v7994 = vadd.f32 %v7955, %v7972
        %v7995 = vadd.f32 %v7956, %v7972
        %v7996 = vadd.f32 %v7957, %v7972
        %v7997 = vadd.f32 %v7958, %v7972
        %v7998 = vadd.f32 %v7959, %v7972
        %v7999 = vadd.f32 %v7960, %v7972
        %v8000 = vadd.f32 %v7961, %v7972
        %v8001 = vadd.f32 %v7962, %v7972
        %v8002 = vadd.f32 %v7963, %v7972
        %v8003 = vadd.f32 %v7964, %v7972
        %v8004 = vadd.f32 %v7965, %v7972
        %v8005 = vadd.f32 %v7966, %v7972
        %v8006 = vpack.c.bf16 %v7975, %v7974
        %v8007 = vpack.c.bf16 %v7977, %v7976
        %v8008 = vpack.c.bf16 %v7979, %v7978
        %v8009 = vpack.c.bf16 %v7981, %v7980
        %v8010 = vpack.c.bf16 %v7983, %v7982
        %v8011 = vpack.c.bf16 %v7985, %v7984
        %v8012 = vpack.c.bf16 %v7987, %v7986
        %v8013 = vpack.c.bf16 %v7989, %v7988
        %v8014 = vpack.c.bf16 %v7991, %v7990
        %v8015 = vpack.c.bf16 %v7993, %v7992
        %v8016 = vpack.c.bf16 %v7995, %v7994
        %v8017 = vpack.c.bf16 %v7997, %v7996
        %v8018 = vpack.c.bf16 %v7999, %v7998
        %v8019 = vpack.c.bf16 %v8001, %v8000
        %v8020 = vpack.c.bf16 %v8003, %v8002
        %v8021 = vpack.c.bf16 %v8005, %v8004
        %v8022 = vld [vmem:[%s15] sm:$0xf]
        %v8023 = vld [vmem:[%s15 + $0x4] sm:$0xf]
        %v8024 = vld [vmem:[%s15 + $0x8] sm:$0xf]
        %v8025 = vld [vmem:[%s15 + $0xc] sm:$0xf]
        %v8026 = vld [vmem:[%s16] sm:$0x1]
        %v8028 = vlaneseq
        %v8029 = vshrl.u32 %v8028, 7
        %v8030 = vsub.s32 0, %v8029
        %v8031 = vrot.slane %v8026, %v8030
        %v8037 = vunpack.c.l.b16 %v8022
        %v8038 = vunpack.c.l.b16 %v8023
        %v8039 = vunpack.c.l.b16 %v8024
        %v8040 = vunpack.c.l.b16 %v8025
        %v8041 = vpack.c.b16 %v8038, %v8037
        %v8042 = vpack.c.b16 %v8040, %v8039
        %v8046 = vsel %vm1552, %v8006, 0
        %v8049 = vsel %vm1552, %v8007, 0
        %v8052 = vsel %vm1552, %v8008, 0
        %v8055 = vsel %vm1552, %v8009, 0
        %v8058 = vsel %vm1552, %v8010, 0
        %v8061 = vsel %vm1552, %v8011, 0
        %v8064 = vsel %vm1552, %v8012, 0
        %v8067 = vsel %vm1552, %v8013, 0
        %v8070 = vsel %vm1552, %v8014, 0
        %v8073 = vsel %vm1552, %v8015, 0
        %v8076 = vsel %vm1552, %v8016, 0
        %v8079 = vsel %vm1552, %v8017, 0
        %v8082 = vsel %vm1552, %v8018, 0
        %v8085 = vsel %vm1552, %v8019, 0
        %v8088 = vsel %vm1552, %v8020, 0
        %v8091 = vsel %vm1552, %v8021, 0
        %8093 = vmatprep.subr.bf16.mxu0 0
        %8094 = vmatpush1.bf16.msra.mxu0 %v8041
        %8095 = vmatprep.subr.bf16.mxu0 0
        %8096 = vmatpush1.bf16.msra.mxu0 %v8042
        %8097 = vmatprep.subr.bf16.mxu0 0
        %8098 = vmatpush1.bf16.msra.mxu0 0
        %8099 = vmatprep.subr.bf16.mxu0 0
        %8100 = vmatpush1.bf16.msra.mxu0 0
        %8101 = vmatprep.subr.bf16.mxu0 0
        %8102 = vmatpush1.bf16.msra.mxu0 0
        %8103 = vmatprep.subr.bf16.mxu0 0
        %8104 = vmatpush1.bf16.msra.mxu0 0
        %8105 = vmatprep.subr.bf16.mxu0 0
        %8106 = vmatpush1.bf16.msra.mxu0 0
        %8107 = vmatprep.subr.bf16.mxu0 0
        %8108 = vmatpush1.bf16.msra.mxu0 0
        %8109 = vmatprep.subr.bf16.mxu0 0
        %8110 = vmatpush1.bf16.msra.mxu0 0
        %8111 = vmatprep.subr.bf16.mxu0 0
        %8112 = vmatpush1.bf16.msra.mxu0 0
        %8113 = vmatprep.subr.bf16.mxu0 0
        %8114 = vmatpush1.bf16.msra.mxu0 0
        %8115 = vmatprep.subr.bf16.mxu0 0
        %8116 = vmatpush1.bf16.msra.mxu0 0
        %8117 = vmatprep.subr.bf16.mxu0 0
        %8118 = vmatpush1.bf16.msra.mxu0 0
        %8119 = vmatprep.subr.bf16.mxu0 0
        %8120 = vmatpush1.bf16.msra.mxu0 0
        %8121 = vmatprep.subr.bf16.mxu0 0
        %8122 = vmatpush1.bf16.msra.mxu0 0
        %8123 = vmatprep.subr.bf16.mxu0 0
        %8124 = vmatpush1.bf16.msra.mxu0 0
        %8125 = vmatprep.mubr.bf16.mxu0 0
        %8126 = vmatmul.mubr.bf16.gmra.mrb[0].mxu0 %v8046
        %v8127 = vpop.f32.mrb[0].mxu0
        %v8128 = vadd.f32 %v8031, %v8127
        %v8129 = vpop.f32.mrb[0].mxu0
        %v8130 = vpop.f32.mrb[0].mxu0
        %v8131 = vadd.f32 %v8031, %v8130
        %v8132 = vpop.f32.mrb[0].mxu0
        %8133 = vmatprep.mubr.bf16.mxu0 0
        %8134 = vmatmul.mubr.bf16.gmra.mrb[0].mxu0 %v8049
        %v8135 = vpop.f32.mrb[0].mxu0
        %v8136 = vadd.f32 %v8031, %v8135
        %v8137 = vpop.f32.mrb[0].mxu0
        %v8138 = vpop.f32.mrb[0].mxu0
        %v8139 = vadd.f32 %v8031, %v8138
        %v8140 = vpop.f32.mrb[0].mxu0
        %8141 = vmatprep.mubr.bf16.mxu0 0
        %8142 = vmatmul.mubr.bf16.gmra.mrb[0].mxu0 %v8052
        %v8143 = vpop.f32.mrb[0].mxu0
        %v8144 = vadd.f32 %v8031, %v8143
        %v8145 = vpop.f32.mrb[0].mxu0
        %v8146 = vpop.f32.mrb[0].mxu0
        %v8147 = vadd.f32 %v8031, %v8146
        %v8148 = vpop.f32.mrb[0].mxu0
        %8149 = vmatprep.mubr.bf16.mxu0 0
        %8150 = vmatmul.mubr.bf16.gmra.mrb[0].mxu0 %v8055
        %v8151 = vpop.f32.mrb[0].mxu0
        %v8152 = vadd.f32 %v8031, %v8151
        %v8153 = vpop.f32.mrb[0].mxu0
        %v8154 = vpop.f32.mrb[0].mxu0
        %v8155 = vadd.f32 %v8031, %v8154
        %v8156 = vpop.f32.mrb[0].mxu0
        %8157 = vmatprep.mubr.bf16.mxu0 0
        %8158 = vmatmul.mubr.bf16.gmra.mrb[0].mxu0 %v8058
        %v8159 = vpop.f32.mrb[0].mxu0
        %v8160 = vadd.f32 %v8031, %v8159
        %v8161 = vpop.f32.mrb[0].mxu0
        %v8162 = vpop.f32.mrb[0].mxu0
        %v8163 = vadd.f32 %v8031, %v8162
        %v8164 = vpop.f32.mrb[0].mxu0
        %8165 = vmatprep.mubr.bf16.mxu0 0
        %8166 = vmatmul.mubr.bf16.gmra.mrb[0].mxu0 %v8061
        %v8167 = vpop.f32.mrb[0].mxu0
        %v8168 = vadd.f32 %v8031, %v8167
        %v8169 = vpop.f32.mrb[0].mxu0
        %v8170 = vpop.f32.mrb[0].mxu0
        %v8171 = vadd.f32 %v8031, %v8170
        %v8172 = vpop.f32.mrb[0].mxu0
        %8173 = vmatprep.mubr.bf16.mxu0 0
        %8174 = vmatmul.mubr.bf16.gmra.mrb[0].mxu0 %v8064
        %v8175 = vpop.f32.mrb[0].mxu0
        %v8176 = vadd.f32 %v8031, %v8175
        %v8177 = vpop.f32.mrb[0].mxu0
        %v8178 = vpop.f32.mrb[0].mxu0
        %v8179 = vadd.f32 %v8031, %v8178
        %v8180 = vpop.f32.mrb[0].mxu0
        %8181 = vmatprep.mubr.bf16.mxu0 0
        %8182 = vmatmul.mubr.bf16.gmra.mrb[0].mxu0 %v8067
        %v8183 = vpop.f32.mrb[0].mxu0
        %v8184 = vadd.f32 %v8031, %v8183
        %v8185 = vpop.f32.mrb[0].mxu0
        %v8186 = vpop.f32.mrb[0].mxu0
        %v8187 = vadd.f32 %v8031, %v8186
        %v8188 = vpop.f32.mrb[0].mxu0
        %8189 = vmatprep.mubr.bf16.mxu0 0
        %8190 = vmatmul.mubr.bf16.gmra.mrb[0].mxu0 %v8070
        %v8191 = vpop.f32.mrb[0].mxu0
        %v8192 = vadd.f32 %v8031, %v8191
        %v8193 = vpop.f32.mrb[0].mxu0
        %v8194 = vpop.f32.mrb[0].mxu0
        %v8195 = vadd.f32 %v8031, %v8194
        %v8196 = vpop.f32.mrb[0].mxu0
        %8197 = vmatprep.mubr.bf16.mxu0 0
        %8198 = vmatmul.mubr.bf16.gmra.mrb[0].mxu0 %v8073
        %v8199 = vpop.f32.mrb[0].mxu0
        %v8200 = vadd.f32 %v8031, %v8199
        %v8201 = vpop.f32.mrb[0].mxu0
        %v8202 = vpop.f32.mrb[0].mxu0
        %v8203 = vadd.f32 %v8031, %v8202
        %v8204 = vpop.f32.mrb[0].mxu0
        %8205 = vmatprep.mubr.bf16.mxu0 0
        %8206 = vmatmul.mubr.bf16.gmra.mrb[0].mxu0 %v8076
        %v8207 = vpop.f32.mrb[0].mxu0
        %v8208 = vadd.f32 %v8031, %v8207
        %v8209 = vpop.f32.mrb[0].mxu0
        %v8210 = vpop.f32.mrb[0].mxu0
        %v8211 = vadd.f32 %v8031, %v8210
        %v8212 = vpop.f32.mrb[0].mxu0
        %8213 = vmatprep.mubr.bf16.mxu0 0
        %8214 = vmatmul.mubr.bf16.gmra.mrb[0].mxu0 %v8079
        %v8215 = vpop.f32.mrb[0].mxu0
        %v8216 = vadd.f32 %v8031, %v8215
        %v8217 = vpop.f32.mrb[0].mxu0
        %v8218 = vpop.f32.mrb[0].mxu0
        %v8219 = vadd.f32 %v8031, %v8218
        %v8220 = vpop.f32.mrb[0].mxu0
        %8221 = vmatprep.mubr.bf16.mxu0 0
        %8222 = vmatmul.mubr.bf16.gmra.mrb[0].mxu0 %v8082
        %v8223 = vpop.f32.mrb[0].mxu0
        %v8224 = vadd.f32 %v8031, %v8223
        %v8225 = vpop.f32.mrb[0].mxu0
        %v8226 = vpop.f32.mrb[0].mxu0
        %v8227 = vadd.f32 %v8031, %v8226
        %v8228 = vpop.f32.mrb[0].mxu0
        %8229 = vmatprep.mubr.bf16.mxu0 0
        %8230 = vmatmul.mubr.bf16.gmra.mrb[0].mxu0 %v8085
        %v8231 = vpop.f32.mrb[0].mxu0
        %v8232 = vadd.f32 %v8031, %v8231
        %v8233 = vpop.f32.mrb[0].mxu0
        %v8234 = vpop.f32.mrb[0].mxu0
        %v8235 = vadd.f32 %v8031, %v8234
        %v8236 = vpop.f32.mrb[0].mxu0
        %8237 = vmatprep.mubr.bf16.mxu0 0
        %8238 = vmatmul.mubr.bf16.gmra.mrb[0].mxu0 %v8088
        %v8239 = vpop.f32.mrb[0].mxu0
        %v8240 = vadd.f32 %v8031, %v8239
        %v8241 = vpop.f32.mrb[0].mxu0
        %v8242 = vpop.f32.mrb[0].mxu0
        %v8243 = vadd.f32 %v8031, %v8242
        %v8244 = vpop.f32.mrb[0].mxu0
        %8245 = vmatprep.mubr.bf16.mxu0 0
        %8246 = vmatmul.mubr.bf16.gmra.mrb[0].mxu0 %v8091
        %v8247 = vpop.f32.mrb[0].mxu0
        %v8248 = vadd.f32 %v8031, %v8247
        %v8249 = vpop.f32.mrb[0].mxu0
        %v8250 = vpop.f32.mrb[0].mxu0
        %v8251 = vadd.f32 %v8031, %v8250
        %v8252 = vpop.f32.mrb[0].mxu0
        %8253 = vdwg.mxu0
        %v8254 = vmax.f32 %v8128, 0.0
        %v8255 = vmax.f32 %v8131, 0.0
        %v8256 = vmax.f32 %v8136, 0.0
        %v8257 = vmax.f32 %v8139, 0.0
        %v8258 = vmax.f32 %v8144, 0.0
        %v8259 = vmax.f32 %v8147, 0.0
        %v8260 = vmax.f32 %v8152, 0.0
        %v8261 = vmax.f32 %v8155, 0.0
        %v8262 = vmax.f32 %v8160, 0.0
        %v8263 = vmax.f32 %v8163, 0.0
        %v8264 = vmax.f32 %v8168, 0.0
        %v8265 = vmax.f32 %v8171, 0.0
        %v8266 = vmax.f32 %v8176, 0.0
        %v8267 = vmax.f32 %v8179, 0.0
        %v8268 = vmax.f32 %v8184, 0.0
        %v8269 = vmax.f32 %v8187, 0.0
        %v8270 = vmax.f32 %v8192, 0.0
        %v8271 = vmax.f32 %v8195, 0.0
        %v8272 = vmax.f32 %v8200, 0.0
        %v8273 = vmax.f32 %v8203, 0.0
        %v8274 = vmax.f32 %v8208, 0.0
        %v8275 = vmax.f32 %v8211, 0.0
        %v8276 = vmax.f32 %v8216, 0.0
        %v8277 = vmax.f32 %v8219, 0.0
        %v8278 = vmax.f32 %v8224, 0.0
        %v8279 = vmax.f32 %v8227, 0.0
        %v8280 = vmax.f32 %v8232, 0.0
        %v8281 = vmax.f32 %v8235, 0.0
        %v8282 = vmax.f32 %v8240, 0.0
        %v8283 = vmax.f32 %v8243, 0.0
        %v8284 = vmax.f32 %v8248, 0.0
        %v8285 = vmax.f32 %v8251, 0.0
        %v8286 = vpack.c.bf16 %v8255, %v8254
        %v8287 = vpack.c.bf16 %v8257, %v8256
        %v8288 = vpack.c.bf16 %v8259, %v8258
        %v8289 = vpack.c.bf16 %v8261, %v8260
        %v8290 = vpack.c.bf16 %v8263, %v8262
        %v8291 = vpack.c.bf16 %v8265, %v8264
        %v8292 = vpack.c.bf16 %v8267, %v8266
        %v8293 = vpack.c.bf16 %v8269, %v8268
        %v8294 = vpack.c.bf16 %v8271, %v8270
        %v8295 = vpack.c.bf16 %v8273, %v8272
        %v8296 = vpack.c.bf16 %v8275, %v8274
        %v8297 = vpack.c.bf16 %v8277, %v8276
        %v8298 = vpack.c.bf16 %v8279, %v8278
        %v8299 = vpack.c.bf16 %v8281, %v8280
        %v8300 = vpack.c.bf16 %v8283, %v8282
        %v8301 = vpack.c.bf16 %v8285, %v8284
        %v8302 = vld [vmem:[%s17] sm:$0xf]
        %v8303 = vld [vmem:[%s17 + $0x4] sm:$0xf]
        %v8304 = vld [vmem:[%s17 + $0x8] sm:$0xf]
        %v8305 = vld [vmem:[%s17 + $0xc] sm:$0xf]
        %v8306 = vld [vmem:[%s17 + $0x10] sm:$0xf]
        %v8307 = vld [vmem:[%s17 + $0x14] sm:$0xf]
        %v8308 = vld [vmem:[%s17 + $0x18] sm:$0xf]
        %v8309 = vld [vmem:[%s17 + $0x1c] sm:$0xf]
        %v8310 = vld [vmem:[%s18] sm:$0x1]
        %v8312 = vlaneseq
        %v8313 = vshrl.u32 %v8312, 7
        %v8314 = vsub.s32 0, %v8313
        %v8315 = vrot.slane %v8310, %v8314
        %v8325 = vunpack.c.l.b16 %v8302
        %v8326 = vunpack.c.l.b16 %v8303
        %v8327 = vunpack.c.l.b16 %v8304
        %v8328 = vunpack.c.l.b16 %v8305
        %v8329 = vunpack.c.l.b16 %v8306
        %v8330 = vunpack.c.l.b16 %v8307
        %v8331 = vunpack.c.l.b16 %v8308
        %v8332 = vunpack.c.l.b16 %v8309
        %v8333 = vpack.c.b16 %v8326, %v8325
        %v8334 = vpack.c.b16 %v8328, %v8327
        %v8335 = vpack.c.b16 %v8330, %v8329
        %v8336 = vpack.c.b16 %v8332, %v8331
        %vm8341 = vcmask 523264
        %v8343 = vsel %vm8341, %v8286, 0
        %v8346 = vsel %vm8341, %v8287, 0
        %v8349 = vsel %vm8341, %v8288, 0
        %v8352 = vsel %vm8341, %v8289, 0
        %v8355 = vsel %vm8341, %v8290, 0
        %v8358 = vsel %vm8341, %v8291, 0
        %v8361 = vsel %vm8341, %v8292, 0
        %v8364 = vsel %vm8341, %v8293, 0
        %v8367 = vsel %vm8341, %v8294, 0
        %v8370 = vsel %vm8341, %v8295, 0
        %v8373 = vsel %vm8341, %v8296, 0
        %v8376 = vsel %vm8341, %v8297, 0
        %v8379 = vsel %vm8341, %v8298, 0
        %v8382 = vsel %vm8341, %v8299, 0
        %v8385 = vsel %vm8341, %v8300, 0
        %v8388 = vsel %vm8341, %v8301, 0
        %8390 = vmatprep.subr.bf16.mxu0 0
        %8391 = vmatpush1.bf16.msra.mxu0 %v8333
        %8392 = vmatprep.subr.bf16.mxu0 0
        %8393 = vmatpush1.bf16.msra.mxu0 %v8334
        %8394 = vmatprep.subr.bf16.mxu0 0
        %8395 = vmatpush1.bf16.msra.mxu0 %v8335
        %8396 = vmatprep.subr.bf16.mxu0 0
        %8397 = vmatpush1.bf16.msra.mxu0 %v8336
        %8398 = vmatprep.subr.bf16.mxu0 0
        %8399 = vmatpush1.bf16.msra.mxu0 0
        %8400 = vmatprep.subr.bf16.mxu0 0
        %8401 = vmatpush1.bf16.msra.mxu0 0
        %8402 = vmatprep.subr.bf16.mxu0 0
        %8403 = vmatpush1.bf16.msra.mxu0 0
        %8404 = vmatprep.subr.bf16.mxu0 0
        %8405 = vmatpush1.bf16.msra.mxu0 0
        %8406 = vmatprep.subr.bf16.mxu0 0
        %8407 = vmatpush1.bf16.msra.mxu0 0
        %8408 = vmatprep.subr.bf16.mxu0 0
        %8409 = vmatpush1.bf16.msra.mxu0 0
        %8410 = vmatprep.subr.bf16.mxu0 0
        %8411 = vmatpush1.bf16.msra.mxu0 0
        %8412 = vmatprep.subr.bf16.mxu0 0
        %8413 = vmatpush1.bf16.msra.mxu0 0
        %8414 = vmatprep.subr.bf16.mxu0 0
        %8415 = vmatpush1.bf16.msra.mxu0 0
        %8416 = vmatprep.subr.bf16.mxu0 0
        %8417 = vmatpush1.bf16.msra.mxu0 0
        %8418 = vmatprep.subr.bf16.mxu0 0
        %8419 = vmatpush1.bf16.msra.mxu0 0
        %8420 = vmatprep.subr.bf16.mxu0 0
        %8421 = vmatpush1.bf16.msra.mxu0 0
        %8422 = vmatprep.mubr.bf16.mxu0 0
        %8423 = vmatmul.mubr.bf16.gmra.mrb[0].mxu0 %v8343
        %v8424 = vpop.f32.mrb[0].mxu0
        %v8425 = vadd.f32 %v8315, %v8424
        %v8426 = vpop.f32.mrb[0].mxu0
        %v8427 = vpop.f32.mrb[0].mxu0
        %v8428 = vadd.f32 %v8315, %v8427
        %v8429 = vpop.f32.mrb[0].mxu0
        %8430 = vmatprep.mubr.bf16.mxu0 0
        %8431 = vmatmul.mubr.bf16.gmra.mrb[0].mxu0 %v8346
        %v8432 = vpop.f32.mrb[0].mxu0
        %v8433 = vadd.f32 %v8315, %v8432
        %v8434 = vpop.f32.mrb[0].mxu0
        %v8435 = vpop.f32.mrb[0].mxu0
        %v8436 = vadd.f32 %v8315, %v8435
        %v8437 = vpop.f32.mrb[0].mxu0
        %8438 = vmatprep.mubr.bf16.mxu0 0
        %8439 = vmatmul.mubr.bf16.gmra.mrb[0].mxu0 %v8349
        %v8440 = vpop.f32.mrb[0].mxu0
        %v8441 = vadd.f32 %v8315, %v8440
        %v8442 = vpop.f32.mrb[0].mxu0
        %v8443 = vpop.f32.mrb[0].mxu0
        %v8444 = vadd.f32 %v8315, %v8443
        %v8445 = vpop.f32.mrb[0].mxu0
        %8446 = vmatprep.mubr.bf16.mxu0 0
        %8447 = vmatmul.mubr.bf16.gmra.mrb[0].mxu0 %v8352
        %v8448 = vpop.f32.mrb[0].mxu0
        %v8449 = vadd.f32 %v8315, %v8448
        %v8450 = vpop.f32.mrb[0].mxu0
        %v8451 = vpop.f32.mrb[0].mxu0
        %v8452 = vadd.f32 %v8315, %v8451
        %v8453 = vpop.f32.mrb[0].mxu0
        %8454 = vmatprep.mubr.bf16.mxu0 0
        %8455 = vmatmul.mubr.bf16.gmra.mrb[0].mxu0 %v8355
        %v8456 = vpop.f32.mrb[0].mxu0
        %v8457 = vadd.f32 %v8315, %v8456
        %v8458 = vpop.f32.mrb[0].mxu0
        %v8459 = vpop.f32.mrb[0].mxu0
        %v8460 = vadd.f32 %v8315, %v8459
        %v8461 = vpop.f32.mrb[0].mxu0
        %8462 = vmatprep.mubr.bf16.mxu0 0
        %8463 = vmatmul.mubr.bf16.gmra.mrb[0].mxu0 %v8358
        %v8464 = vpop.f32.mrb[0].mxu0
        %v8465 = vadd.f32 %v8315, %v8464
        %v8466 = vpop.f32.mrb[0].mxu0
        %v8467 = vpop.f32.mrb[0].mxu0
        %v8468 = vadd.f32 %v8315, %v8467
        %v8469 = vpop.f32.mrb[0].mxu0
        %8470 = vmatprep.mubr.bf16.mxu0 0
        %8471 = vmatmul.mubr.bf16.gmra.mrb[0].mxu0 %v8361
        %v8472 = vpop.f32.mrb[0].mxu0
        %v8473 = vadd.f32 %v8315, %v8472
        %v8474 = vpop.f32.mrb[0].mxu0
        %v8475 = vpop.f32.mrb[0].mxu0
        %v8476 = vadd.f32 %v8315, %v8475
        %v8477 = vpop.f32.mrb[0].mxu0
        %8478 = vmatprep.mubr.bf16.mxu0 0
        %8479 = vmatmul.mubr.bf16.gmra.mrb[0].mxu0 %v8364
        %v8480 = vpop.f32.mrb[0].mxu0
        %v8481 = vadd.f32 %v8315, %v8480
        %v8482 = vpop.f32.mrb[0].mxu0
        %v8483 = vpop.f32.mrb[0].mxu0
        %v8484 = vadd.f32 %v8315, %v8483
        %v8485 = vpop.f32.mrb[0].mxu0
        %8486 = vmatprep.mubr.bf16.mxu0 0
        %8487 = vmatmul.mubr.bf16.gmra.mrb[0].mxu0 %v8367
        %v8488 = vpop.f32.mrb[0].mxu0
        %v8489 = vadd.f32 %v8315, %v8488
        %v8490 = vpop.f32.mrb[0].mxu0
        %v8491 = vpop.f32.mrb[0].mxu0
        %v8492 = vadd.f32 %v8315, %v8491
        %v8493 = vpop.f32.mrb[0].mxu0
        %8494 = vmatprep.mubr.bf16.mxu0 0
        %8495 = vmatmul.mubr.bf16.gmra.mrb[0].mxu0 %v8370
        %v8496 = vpop.f32.mrb[0].mxu0
        %v8497 = vadd.f32 %v8315, %v8496
        %v8498 = vpop.f32.mrb[0].mxu0
        %v8499 = vpop.f32.mrb[0].mxu0
        %v8500 = vadd.f32 %v8315, %v8499
        %v8501 = vpop.f32.mrb[0].mxu0
        %8502 = vmatprep.mubr.bf16.mxu0 0
        %8503 = vmatmul.mubr.bf16.gmra.mrb[0].mxu0 %v8373
        %v8504 = vpop.f32.mrb[0].mxu0
        %v8505 = vadd.f32 %v8315, %v8504
        %v8506 = vpop.f32.mrb[0].mxu0
        %v8507 = vpop.f32.mrb[0].mxu0
        %v8508 = vadd.f32 %v8315, %v8507
        %v8509 = vpop.f32.mrb[0].mxu0
        %8510 = vmatprep.mubr.bf16.mxu0 0
        %8511 = vmatmul.mubr.bf16.gmra.mrb[0].mxu0 %v8376
        %v8512 = vpop.f32.mrb[0].mxu0
        %v8513 = vadd.f32 %v8315, %v8512
        %v8514 = vpop.f32.mrb[0].mxu0
        %v8515 = vpop.f32.mrb[0].mxu0
        %v8516 = vadd.f32 %v8315, %v8515
        %v8517 = vpop.f32.mrb[0].mxu0
        %8518 = vmatprep.mubr.bf16.mxu0 0
        %8519 = vmatmul.mubr.bf16.gmra.mrb[0].mxu0 %v8379
        %v8520 = vpop.f32.mrb[0].mxu0
        %v8521 = vadd.f32 %v8315, %v8520
        %v8522 = vpop.f32.mrb[0].mxu0
        %v8523 = vpop.f32.mrb[0].mxu0
        %v8524 = vadd.f32 %v8315, %v8523
        %v8525 = vpop.f32.mrb[0].mxu0
        %8526 = vmatprep.mubr.bf16.mxu0 0
        %8527 = vmatmul.mubr.bf16.gmra.mrb[0].mxu0 %v8382
        %v8528 = vpop.f32.mrb[0].mxu0
        %v8529 = vadd.f32 %v8315, %v8528
        %v8530 = vpop.f32.mrb[0].mxu0
        %v8531 = vpop.f32.mrb[0].mxu0
        %v8532 = vadd.f32 %v8315, %v8531
        %v8533 = vpop.f32.mrb[0].mxu0
        %8534 = vmatprep.mubr.bf16.mxu0 0
        %8535 = vmatmul.mubr.bf16.gmra.mrb[0].mxu0 %v8385
        %v8536 = vpop.f32.mrb[0].mxu0
        %v8537 = vadd.f32 %v8315, %v8536
        %v8538 = vpop.f32.mrb[0].mxu0
        %v8539 = vpop.f32.mrb[0].mxu0
        %v8540 = vadd.f32 %v8315, %v8539
        %v8541 = vpop.f32.mrb[0].mxu0
        %8542 = vmatprep.mubr.bf16.mxu0 0
        %8543 = vmatmul.mubr.bf16.gmra.mrb[0].mxu0 %v8388
        %v8544 = vpop.f32.mrb[0].mxu0
        %v8545 = vadd.f32 %v8315, %v8544
        %v8546 = vpop.f32.mrb[0].mxu0
        %v8547 = vpop.f32.mrb[0].mxu0
        %v8548 = vadd.f32 %v8315, %v8547
        %v8549 = vpop.f32.mrb[0].mxu0
        %8550 = vdwg.mxu0
        %v8551 = vadd.f32 %v7974, %v8425
        %v8552 = vadd.f32 %v7975, %v8428
        %v8553 = vadd.f32 %v7976, %v8433
        %v8554 = vadd.f32 %v7977, %v8436
        %v8555 = vadd.f32 %v7978, %v8441
        %v8556 = vadd.f32 %v7979, %v8444
        %v8557 = vadd.f32 %v7980, %v8449
        %v8558 = vadd.f32 %v7981, %v8452
        %v8559 = vadd.f32 %v7982, %v8457
        %v8560 = vadd.f32 %v7983, %v8460
        %v8561 = vadd.f32 %v7984, %v8465
        %v8562 = vadd.f32 %v7985, %v8468
        %v8563 = vadd.f32 %v7986, %v8473
        %v8564 = vadd.f32 %v7987, %v8476
        %v8565 = vadd.f32 %v7988, %v8481
        %v8566 = vadd.f32 %v7989, %v8484
        %v8567 = vadd.f32 %v7990, %v8489
        %v8568 = vadd.f32 %v7991, %v8492
        %v8569 = vadd.f32 %v7992, %v8497
        %v8570 = vadd.f32 %v7993, %v8500
        %v8571 = vadd.f32 %v7994, %v8505
        %v8572 = vadd.f32 %v7995, %v8508
        %v8573 = vadd.f32 %v7996, %v8513
        %v8574 = vadd.f32 %v7997, %v8516
        %v8575 = vadd.f32 %v7998, %v8521
        %v8576 = vadd.f32 %v7999, %v8524
        %v8577 = vadd.f32 %v8000, %v8529
        %v8578 = vadd.f32 %v8001, %v8532
        %v8579 = vadd.f32 %v8002, %v8537
        %v8580 = vadd.f32 %v8003, %v8540
        %v8581 = vadd.f32 %v8004, %v8545
        %v8582 = vadd.f32 %v8005, %v8548
        %v8583 = vsel %vm1552, %v8551, 0.0
        %8584 = vadd.xlane.f32.xlu0 %v8583
        %v8585 = vpop.xlane.xlu0 %8584
        %v8586 = vsel %vm1552, %v8552, 0.0
        %8587 = vadd.xlane.f32.xlu0 %v8586
        %v8588 = vpop.xlane.xlu0 %8587
        %v8589 = vsel %vm1552, %v8553, 0.0
        %8590 = vadd.xlane.f32.xlu0 %v8589
        %v8591 = vpop.xlane.xlu0 %8590
        %v8592 = vsel %vm1552, %v8554, 0.0
        %8593 = vadd.xlane.f32.xlu0 %v8592
        %v8594 = vpop.xlane.xlu0 %8593
        %v8595 = vsel %vm1552, %v8555, 0.0
        %8596 = vadd.xlane.f32.xlu0 %v8595
        %v8597 = vpop.xlane.xlu0 %8596
        %v8598 = vsel %vm1552, %v8556, 0.0
        %8599 = vadd.xlane.f32.xlu0 %v8598
        %v8600 = vpop.xlane.xlu0 %8599
        %v8601 = vsel %vm1552, %v8557, 0.0
        %8602 = vadd.xlane.f32.xlu0 %v8601
        %v8603 = vpop.xlane.xlu0 %8602
        %v8604 = vsel %vm1552, %v8558, 0.0
        %8605 = vadd.xlane.f32.xlu0 %v8604
        %v8606 = vpop.xlane.xlu0 %8605
        %v8607 = vsel %vm1552, %v8559, 0.0
        %8608 = vadd.xlane.f32.xlu0 %v8607
        %v8609 = vpop.xlane.xlu0 %8608
        %v8610 = vsel %vm1552, %v8560, 0.0
        %8611 = vadd.xlane.f32.xlu0 %v8610
        %v8612 = vpop.xlane.xlu0 %8611
        %v8613 = vsel %vm1552, %v8561, 0.0
        %8614 = vadd.xlane.f32.xlu0 %v8613
        %v8615 = vpop.xlane.xlu0 %8614
        %v8616 = vsel %vm1552, %v8562, 0.0
        %8617 = vadd.xlane.f32.xlu0 %v8616
        %v8618 = vpop.xlane.xlu0 %8617
        %v8619 = vsel %vm1552, %v8563, 0.0
        %8620 = vadd.xlane.f32.xlu0 %v8619
        %v8621 = vpop.xlane.xlu0 %8620
        %v8622 = vsel %vm1552, %v8564, 0.0
        %8623 = vadd.xlane.f32.xlu0 %v8622
        %v8624 = vpop.xlane.xlu0 %8623
        %v8625 = vsel %vm1552, %v8565, 0.0
        %8626 = vadd.xlane.f32.xlu0 %v8625
        %v8627 = vpop.xlane.xlu0 %8626
        %v8628 = vsel %vm1552, %v8566, 0.0
        %8629 = vadd.xlane.f32.xlu0 %v8628
        %v8630 = vpop.xlane.xlu0 %8629
        %v8631 = vsel %vm1552, %v8567, 0.0
        %8632 = vadd.xlane.f32.xlu0 %v8631
        %v8633 = vpop.xlane.xlu0 %8632
        %v8634 = vsel %vm1552, %v8568, 0.0
        %8635 = vadd.xlane.f32.xlu0 %v8634
        %v8636 = vpop.xlane.xlu0 %8635
        %v8637 = vsel %vm1552, %v8569, 0.0
        %8638 = vadd.xlane.f32.xlu0 %v8637
        %v8639 = vpop.xlane.xlu0 %8638
        %v8640 = vsel %vm1552, %v8570, 0.0
        %8641 = vadd.xlane.f32.xlu0 %v8640
        %v8642 = vpop.xlane.xlu0 %8641
        %v8643 = vsel %vm1552, %v8571, 0.0
        %8644 = vadd.xlane.f32.xlu0 %v8643
        %v8645 = vpop.xlane.xlu0 %8644
        %v8646 = vsel %vm1552, %v8572, 0.0
        %8647 = vadd.xlane.f32.xlu0 %v8646
        %v8648 = vpop.xlane.xlu0 %8647
        %v8649 = vsel %vm1552, %v8573, 0.0
        %8650 = vadd.xlane.f32.xlu0 %v8649
        %v8651 = vpop.xlane.xlu0 %8650
        %v8652 = vsel %vm1552, %v8574, 0.0
        %8653 = vadd.xlane.f32.xlu0 %v8652
        %v8654 = vpop.xlane.xlu0 %8653
        %v8655 = vsel %vm1552, %v8575, 0.0
        %8656 = vadd.xlane.f32.xlu0 %v8655
        %v8657 = vpop.xlane.xlu0 %8656
        %v8658 = vsel %vm1552, %v8576, 0.0
        %8659 = vadd.xlane.f32.xlu0 %v8658
        %v8660 = vpop.xlane.xlu0 %8659
        %v8661 = vsel %vm1552, %v8577, 0.0
        %8662 = vadd.xlane.f32.xlu0 %v8661
        %v8663 = vpop.xlane.xlu0 %8662
        %v8664 = vsel %vm1552, %v8578, 0.0
        %8665 = vadd.xlane.f32.xlu0 %v8664
        %v8666 = vpop.xlane.xlu0 %8665
        %v8667 = vsel %vm1552, %v8579, 0.0
        %8668 = vadd.xlane.f32.xlu0 %v8667
        %v8669 = vpop.xlane.xlu0 %8668
        %v8670 = vsel %vm1552, %v8580, 0.0
        %8671 = vadd.xlane.f32.xlu0 %v8670
        %v8672 = vpop.xlane.xlu0 %8671
        %v8673 = vsel %vm1552, %v8581, 0.0
        %8674 = vadd.xlane.f32.xlu0 %v8673
        %v8675 = vpop.xlane.xlu0 %8674
        %v8676 = vsel %vm1552, %v8582, 0.0
        %8677 = vadd.xlane.f32.xlu0 %v8676
        %v8678 = vpop.xlane.xlu0 %8677
        %v8679 = vmul.f32 %v8585, %v7607
        %v8680 = vmul.f32 %v8588, %v7607
        %v8681 = vmul.f32 %v8591, %v7607
        %v8682 = vmul.f32 %v8594, %v7607
        %v8683 = vmul.f32 %v8597, %v7607
        %v8684 = vmul.f32 %v8600, %v7607
        %v8685 = vmul.f32 %v8603, %v7607
        %v8686 = vmul.f32 %v8606, %v7607
        %v8687 = vmul.f32 %v8609, %v7607
        %v8688 = vmul.f32 %v8612, %v7607
        %v8689 = vmul.f32 %v8615, %v7607
        %v8690 = vmul.f32 %v8618, %v7607
        %v8691 = vmul.f32 %v8621, %v7607
        %v8692 = vmul.f32 %v8624, %v7607
        %v8693 = vmul.f32 %v8627, %v7607
        %v8694 = vmul.f32 %v8630, %v7607
        %v8695 = vmul.f32 %v8633, %v7607
        %v8696 = vmul.f32 %v8636, %v7607
        %v8697 = vmul.f32 %v8639, %v7607
        %v8698 = vmul.f32 %v8642, %v7607
        %v8699 = vmul.f32 %v8645, %v7607
        %v8700 = vmul.f32 %v8648, %v7607
        %v8701 = vmul.f32 %v8651, %v7607
        %v8702 = vmul.f32 %v8654, %v7607
        %v8703 = vmul.f32 %v8657, %v7607
        %v8704 = vmul.f32 %v8660, %v7607
        %v8705 = vmul.f32 %v8663, %v7607
        %v8706 = vmul.f32 %v8666, %v7607
        %v8707 = vmul.f32 %v8669, %v7607
        %v8708 = vmul.f32 %v8672, %v7607
        %v8709 = vmul.f32 %v8675, %v7607
        %v8710 = vmul.f32 %v8678, %v7607
        %v8711 = vsub.f32 %v8551, %v8679
        %v8712 = vsub.f32 %v8552, %v8680
        %v8713 = vsub.f32 %v8553, %v8681
        %v8714 = vsub.f32 %v8554, %v8682
        %v8715 = vsub.f32 %v8555, %v8683
        %v8716 = vsub.f32 %v8556, %v8684
        %v8717 = vsub.f32 %v8557, %v8685
        %v8718 = vsub.f32 %v8558, %v8686
        %v8719 = vsub.f32 %v8559, %v8687
        %v8720 = vsub.f32 %v8560, %v8688
        %v8721 = vsub.f32 %v8561, %v8689
        %v8722 = vsub.f32 %v8562, %v8690
        %v8723 = vsub.f32 %v8563, %v8691
        %v8724 = vsub.f32 %v8564, %v8692
        %v8725 = vsub.f32 %v8565, %v8693
        %v8726 = vsub.f32 %v8566, %v8694
        %v8727 = vsub.f32 %v8567, %v8695
        %v8728 = vsub.f32 %v8568, %v8696
        %v8729 = vsub.f32 %v8569, %v8697
        %v8730 = vsub.f32 %v8570, %v8698
        %v8731 = vsub.f32 %v8571, %v8699
        %v8732 = vsub.f32 %v8572, %v8700
        %v8733 = vsub.f32 %v8573, %v8701
        %v8734 = vsub.f32 %v8574, %v8702
        %v8735 = vsub.f32 %v8575, %v8703
        %v8736 = vsub.f32 %v8576, %v8704
        %v8737 = vsub.f32 %v8577, %v8705
        %v8738 = vsub.f32 %v8578, %v8706
        %v8739 = vsub.f32 %v8579, %v8707
        %v8740 = vsub.f32 %v8580, %v8708
        %v8741 = vsub.f32 %v8581, %v8709
        %v8742 = vsub.f32 %v8582, %v8710
        %v8743 = vmul.f32 %v8711, %v8711
        %v8744 = vmul.f32 %v8712, %v8712
        %v8745 = vmul.f32 %v8713, %v8713
        %v8746 = vmul.f32 %v8714, %v8714
        %v8747 = vmul.f32 %v8715, %v8715
        %v8748 = vmul.f32 %v8716, %v8716
        %v8749 = vmul.f32 %v8717, %v8717
        %v8750 = vmul.f32 %v8718, %v8718
        %v8751 = vmul.f32 %v8719, %v8719
        %v8752 = vmul.f32 %v8720, %v8720
        %v8753 = vmul.f32 %v8721, %v8721
        %v8754 = vmul.f32 %v8722, %v8722
        %v8755 = vmul.f32 %v8723, %v8723
        %v8756 = vmul.f32 %v8724, %v8724
        %v8757 = vmul.f32 %v8725, %v8725
        %v8758 = vmul.f32 %v8726, %v8726
        %v8759 = vmul.f32 %v8727, %v8727
        %v8760 = vmul.f32 %v8728, %v8728
        %v8761 = vmul.f32 %v8729, %v8729
        %v8762 = vmul.f32 %v8730, %v8730
        %v8763 = vmul.f32 %v8731, %v8731
        %v8764 = vmul.f32 %v8732, %v8732
        %v8765 = vmul.f32 %v8733, %v8733
        %v8766 = vmul.f32 %v8734, %v8734
        %v8767 = vmul.f32 %v8735, %v8735
        %v8768 = vmul.f32 %v8736, %v8736
        %v8769 = vmul.f32 %v8737, %v8737
        %v8770 = vmul.f32 %v8738, %v8738
        %v8771 = vmul.f32 %v8739, %v8739
        %v8772 = vmul.f32 %v8740, %v8740
        %v8773 = vmul.f32 %v8741, %v8741
        %v8774 = vmul.f32 %v8742, %v8742
        %v8775 = vsel %vm1552, %v8743, 0.0
        %8776 = vadd.xlane.f32.xlu0 %v8775
        %v8777 = vpop.xlane.xlu0 %8776
        %v8778 = vsel %vm1552, %v8744, 0.0
        %8779 = vadd.xlane.f32.xlu0 %v8778
        %v8780 = vpop.xlane.xlu0 %8779
        %v8781 = vsel %vm1552, %v8745, 0.0
        %8782 = vadd.xlane.f32.xlu0 %v8781
        %v8783 = vpop.xlane.xlu0 %8782
        %v8784 = vsel %vm1552, %v8746, 0.0
        %8785 = vadd.xlane.f32.xlu0 %v8784
        %v8786 = vpop.xlane.xlu0 %8785
        %v8787 = vsel %vm1552, %v8747, 0.0
        %8788 = vadd.xlane.f32.xlu0 %v8787
        %v8789 = vpop.xlane.xlu0 %8788
        %v8790 = vsel %vm1552, %v8748, 0.0
        %8791 = vadd.xlane.f32.xlu0 %v8790
        %v8792 = vpop.xlane.xlu0 %8791
        %v8793 = vsel %vm1552, %v8749, 0.0
        %8794 = vadd.xlane.f32.xlu0 %v8793
        %v8795 = vpop.xlane.xlu0 %8794
        %v8796 = vsel %vm1552, %v8750, 0.0
        %8797 = vadd.xlane.f32.xlu0 %v8796
        %v8798 = vpop.xlane.xlu0 %8797
        %v8799 = vsel %vm1552, %v8751, 0.0
        %8800 = vadd.xlane.f32.xlu0 %v8799
        %v8801 = vpop.xlane.xlu0 %8800
        %v8802 = vsel %vm1552, %v8752, 0.0
        %8803 = vadd.xlane.f32.xlu0 %v8802
        %v8804 = vpop.xlane.xlu0 %8803
        %v8805 = vsel %vm1552, %v8753, 0.0
        %8806 = vadd.xlane.f32.xlu0 %v8805
        %v8807 = vpop.xlane.xlu0 %8806
        %v8808 = vsel %vm1552, %v8754, 0.0
        %8809 = vadd.xlane.f32.xlu0 %v8808
        %v8810 = vpop.xlane.xlu0 %8809
        %v8811 = vsel %vm1552, %v8755, 0.0
        %8812 = vadd.xlane.f32.xlu0 %v8811
        %v8813 = vpop.xlane.xlu0 %8812
        %v8814 = vsel %vm1552, %v8756, 0.0
        %8815 = vadd.xlane.f32.xlu0 %v8814
        %v8816 = vpop.xlane.xlu0 %8815
        %v8817 = vsel %vm1552, %v8757, 0.0
        %8818 = vadd.xlane.f32.xlu0 %v8817
        %v8819 = vpop.xlane.xlu0 %8818
        %v8820 = vsel %vm1552, %v8758, 0.0
        %8821 = vadd.xlane.f32.xlu0 %v8820
        %v8822 = vpop.xlane.xlu0 %8821
        %v8823 = vsel %vm1552, %v8759, 0.0
        %8824 = vadd.xlane.f32.xlu0 %v8823
        %v8825 = vpop.xlane.xlu0 %8824
        %v8826 = vsel %vm1552, %v8760, 0.0
        %8827 = vadd.xlane.f32.xlu0 %v8826
        %v8828 = vpop.xlane.xlu0 %8827
        %v8829 = vsel %vm1552, %v8761, 0.0
        %8830 = vadd.xlane.f32.xlu0 %v8829
        %v8831 = vpop.xlane.xlu0 %8830
        %v8832 = vsel %vm1552, %v8762, 0.0
        %8833 = vadd.xlane.f32.xlu0 %v8832
        %v8834 = vpop.xlane.xlu0 %8833
        %v8835 = vsel %vm1552, %v8763, 0.0
        %8836 = vadd.xlane.f32.xlu0 %v8835
        %v8837 = vpop.xlane.xlu0 %8836
        %v8838 = vsel %vm1552, %v8764, 0.0
        %8839 = vadd.xlane.f32.xlu0 %v8838
        %v8840 = vpop.xlane.xlu0 %8839
        %v8841 = vsel %vm1552, %v8765, 0.0
        %8842 = vadd.xlane.f32.xlu0 %v8841
        %v8843 = vpop.xlane.xlu0 %8842
        %v8844 = vsel %vm1552, %v8766, 0.0
        %8845 = vadd.xlane.f32.xlu0 %v8844
        %v8846 = vpop.xlane.xlu0 %8845
        %v8847 = vsel %vm1552, %v8767, 0.0
        %8848 = vadd.xlane.f32.xlu0 %v8847
        %v8849 = vpop.xlane.xlu0 %8848
        %v8850 = vsel %vm1552, %v8768, 0.0
        %8851 = vadd.xlane.f32.xlu0 %v8850
        %v8852 = vpop.xlane.xlu0 %8851
        %v8853 = vsel %vm1552, %v8769, 0.0
        %8854 = vadd.xlane.f32.xlu0 %v8853
        %v8855 = vpop.xlane.xlu0 %8854
        %v8856 = vsel %vm1552, %v8770, 0.0
        %8857 = vadd.xlane.f32.xlu0 %v8856
        %v8858 = vpop.xlane.xlu0 %8857
        %v8859 = vsel %vm1552, %v8771, 0.0
        %8860 = vadd.xlane.f32.xlu0 %v8859
        %v8861 = vpop.xlane.xlu0 %8860
        %v8862 = vsel %vm1552, %v8772, 0.0
        %8863 = vadd.xlane.f32.xlu0 %v8862
        %v8864 = vpop.xlane.xlu0 %8863
        %v8865 = vsel %vm1552, %v8773, 0.0
        %8866 = vadd.xlane.f32.xlu0 %v8865
        %v8867 = vpop.xlane.xlu0 %8866
        %v8868 = vsel %vm1552, %v8774, 0.0
        %8869 = vadd.xlane.f32.xlu0 %v8868
        %v8870 = vpop.xlane.xlu0 %8869
        %v8871 = vmul.f32 %v8777, %v7607
        %v8872 = vmul.f32 %v8780, %v7607
        %v8873 = vmul.f32 %v8783, %v7607
        %v8874 = vmul.f32 %v8786, %v7607
        %v8875 = vmul.f32 %v8789, %v7607
        %v8876 = vmul.f32 %v8792, %v7607
        %v8877 = vmul.f32 %v8795, %v7607
        %v8878 = vmul.f32 %v8798, %v7607
        %v8879 = vmul.f32 %v8801, %v7607
        %v8880 = vmul.f32 %v8804, %v7607
        %v8881 = vmul.f32 %v8807, %v7607
        %v8882 = vmul.f32 %v8810, %v7607
        %v8883 = vmul.f32 %v8813, %v7607
        %v8884 = vmul.f32 %v8816, %v7607
        %v8885 = vmul.f32 %v8819, %v7607
        %v8886 = vmul.f32 %v8822, %v7607
        %v8887 = vmul.f32 %v8825, %v7607
        %v8888 = vmul.f32 %v8828, %v7607
        %v8889 = vmul.f32 %v8831, %v7607
        %v8890 = vmul.f32 %v8834, %v7607
        %v8891 = vmul.f32 %v8837, %v7607
        %v8892 = vmul.f32 %v8840, %v7607
        %v8893 = vmul.f32 %v8843, %v7607
        %v8894 = vmul.f32 %v8846, %v7607
        %v8895 = vmul.f32 %v8849, %v7607
        %v8896 = vmul.f32 %v8852, %v7607
        %v8897 = vmul.f32 %v8855, %v7607
        %v8898 = vmul.f32 %v8858, %v7607
        %v8899 = vmul.f32 %v8861, %v7607
        %v8900 = vmul.f32 %v8864, %v7607
        %v8901 = vmul.f32 %v8867, %v7607
        %v8902 = vmul.f32 %v8870, %v7607
        %v8903 = vadd.f32 %v8871, 1e-05
        %v8904 = vadd.f32 %v8872, 1e-05
        %v8905 = vadd.f32 %v8873, 1e-05
        %v8906 = vadd.f32 %v8874, 1e-05
        %v8907 = vadd.f32 %v8875, 1e-05
        %v8908 = vadd.f32 %v8876, 1e-05
        %v8909 = vadd.f32 %v8877, 1e-05
        %v8910 = vadd.f32 %v8878, 1e-05
        %v8911 = vadd.f32 %v8879, 1e-05
        %v8912 = vadd.f32 %v8880, 1e-05
        %v8913 = vadd.f32 %v8881, 1e-05
        %v8914 = vadd.f32 %v8882, 1e-05
        %v8915 = vadd.f32 %v8883, 1e-05
        %v8916 = vadd.f32 %v8884, 1e-05
        %v8917 = vadd.f32 %v8885, 1e-05
        %v8918 = vadd.f32 %v8886, 1e-05
        %v8919 = vadd.f32 %v8887, 1e-05
        %v8920 = vadd.f32 %v8888, 1e-05
        %v8921 = vadd.f32 %v8889, 1e-05
        %v8922 = vadd.f32 %v8890, 1e-05
        %v8923 = vadd.f32 %v8891, 1e-05
        %v8924 = vadd.f32 %v8892, 1e-05
        %v8925 = vadd.f32 %v8893, 1e-05
        %v8926 = vadd.f32 %v8894, 1e-05
        %v8927 = vadd.f32 %v8895, 1e-05
        %v8928 = vadd.f32 %v8896, 1e-05
        %v8929 = vadd.f32 %v8897, 1e-05
        %v8930 = vadd.f32 %v8898, 1e-05
        %v8931 = vadd.f32 %v8899, 1e-05
        %v8932 = vadd.f32 %v8900, 1e-05
        %v8933 = vadd.f32 %v8901, 1e-05
        %v8934 = vadd.f32 %v8902, 1e-05
        %v8935 = vrsqrt.pop %v8903
        %v8936 = vrsqrt.pop %v8904
        %v8937 = vrsqrt.pop %v8905
        %v8938 = vrsqrt.pop %v8906
        %v8939 = vrsqrt.pop %v8907
        %v8940 = vrsqrt.pop %v8908
        %v8941 = vrsqrt.pop %v8909
        %v8942 = vrsqrt.pop %v8910
        %v8943 = vrsqrt.pop %v8911
        %v8944 = vrsqrt.pop %v8912
        %v8945 = vrsqrt.pop %v8913
        %v8946 = vrsqrt.pop %v8914
        %v8947 = vrsqrt.pop %v8915
        %v8948 = vrsqrt.pop %v8916
        %v8949 = vrsqrt.pop %v8917
        %v8950 = vrsqrt.pop %v8918
        %v8951 = vrsqrt.pop %v8919
        %v8952 = vrsqrt.pop %v8920
        %v8953 = vrsqrt.pop %v8921
        %v8954 = vrsqrt.pop %v8922
        %v8955 = vrsqrt.pop %v8923
        %v8956 = vrsqrt.pop %v8924
        %v8957 = vrsqrt.pop %v8925
        %v8958 = vrsqrt.pop %v8926
        %v8959 = vrsqrt.pop %v8927
        %v8960 = vrsqrt.pop %v8928
        %v8961 = vrsqrt.pop %v8929
        %v8962 = vrsqrt.pop %v8930
        %v8963 = vrsqrt.pop %v8931
        %v8964 = vrsqrt.pop %v8932
        %v8965 = vrsqrt.pop %v8933
        %v8966 = vrsqrt.pop %v8934
        %v8967 = vmul.f32 %v8711, %v8935
        %v8968 = vmul.f32 %v8712, %v8936
        %v8969 = vmul.f32 %v8713, %v8937
        %v8970 = vmul.f32 %v8714, %v8938
        %v8971 = vmul.f32 %v8715, %v8939
        %v8972 = vmul.f32 %v8716, %v8940
        %v8973 = vmul.f32 %v8717, %v8941
        %v8974 = vmul.f32 %v8718, %v8942
        %v8975 = vmul.f32 %v8719, %v8943
        %v8976 = vmul.f32 %v8720, %v8944
        %v8977 = vmul.f32 %v8721, %v8945
        %v8978 = vmul.f32 %v8722, %v8946
        %v8979 = vmul.f32 %v8723, %v8947
        %v8980 = vmul.f32 %v8724, %v8948
        %v8981 = vmul.f32 %v8725, %v8949
        %v8982 = vmul.f32 %v8726, %v8950
        %v8983 = vmul.f32 %v8727, %v8951
        %v8984 = vmul.f32 %v8728, %v8952
        %v8985 = vmul.f32 %v8729, %v8953
        %v8986 = vmul.f32 %v8730, %v8954
        %v8987 = vmul.f32 %v8731, %v8955
        %v8988 = vmul.f32 %v8732, %v8956
        %v8989 = vmul.f32 %v8733, %v8957
        %v8990 = vmul.f32 %v8734, %v8958
        %v8991 = vmul.f32 %v8735, %v8959
        %v8992 = vmul.f32 %v8736, %v8960
        %v8993 = vmul.f32 %v8737, %v8961
        %v8994 = vmul.f32 %v8738, %v8962
        %v8995 = vmul.f32 %v8739, %v8963
        %v8996 = vmul.f32 %v8740, %v8964
        %v8997 = vmul.f32 %v8741, %v8965
        %v8998 = vmul.f32 %v8742, %v8966
        %v8999 = vld [vmem:[%s19] sm:$0x1]
        %v9001 = vlaneseq
        %v9002 = vshrl.u32 %v9001, 7
        %v9003 = vsub.s32 0, %v9002
        %v9004 = vrot.slane %v8999, %v9003
        %v9006 = vmul.f32 %v8967, %v9004
        %v9007 = vmul.f32 %v8968, %v9004
        %v9008 = vmul.f32 %v8969, %v9004
        %v9009 = vmul.f32 %v8970, %v9004
        %v9010 = vmul.f32 %v8971, %v9004
        %v9011 = vmul.f32 %v8972, %v9004
        %v9012 = vmul.f32 %v8973, %v9004
        %v9013 = vmul.f32 %v8974, %v9004
        %v9014 = vmul.f32 %v8975, %v9004
        %v9015 = vmul.f32 %v8976, %v9004
        %v9016 = vmul.f32 %v8977, %v9004
        %v9017 = vmul.f32 %v8978, %v9004
        %v9018 = vmul.f32 %v8979, %v9004
        %v9019 = vmul.f32 %v8980, %v9004
        %v9020 = vmul.f32 %v8981, %v9004
        %v9021 = vmul.f32 %v8982, %v9004
        %v9022 = vmul.f32 %v8983, %v9004
        %v9023 = vmul.f32 %v8984, %v9004
        %v9024 = vmul.f32 %v8985, %v9004
        %v9025 = vmul.f32 %v8986, %v9004
        %v9026 = vmul.f32 %v8987, %v9004
        %v9027 = vmul.f32 %v8988, %v9004
        %v9028 = vmul.f32 %v8989, %v9004
        %v9029 = vmul.f32 %v8990, %v9004
        %v9030 = vmul.f32 %v8991, %v9004
        %v9031 = vmul.f32 %v8992, %v9004
        %v9032 = vmul.f32 %v8993, %v9004
        %v9033 = vmul.f32 %v8994, %v9004
        %v9034 = vmul.f32 %v8995, %v9004
        %v9035 = vmul.f32 %v8996, %v9004
        %v9036 = vmul.f32 %v8997, %v9004
        %v9037 = vmul.f32 %v8998, %v9004
        %v9038 = vld [vmem:[%s20] sm:$0x1]
        %v9040 = vlaneseq
        %v9041 = vshrl.u32 %v9040, 7
        %v9042 = vsub.s32 0, %v9041
        %v9043 = vrot.slane %v9038, %v9042
        %v9045 = vadd.f32 %v9006, %v9043
        %v9046 = vadd.f32 %v9007, %v9043
        %v9047 = vadd.f32 %v9008, %v9043
        %v9048 = vadd.f32 %v9009, %v9043
        %v9049 = vadd.f32 %v9010, %v9043
        %v9050 = vadd.f32 %v9011, %v9043
        %v9051 = vadd.f32 %v9012, %v9043
        %v9052 = vadd.f32 %v9013, %v9043
        %v9053 = vadd.f32 %v9014, %v9043
        %v9054 = vadd.f32 %v9015, %v9043
        %v9055 = vadd.f32 %v9016, %v9043
        %v9056 = vadd.f32 %v9017, %v9043
        %v9057 = vadd.f32 %v9018, %v9043
        %v9058 = vadd.f32 %v9019, %v9043
        %v9059 = vadd.f32 %v9020, %v9043
        %v9060 = vadd.f32 %v9021, %v9043
        %v9061 = vadd.f32 %v9022, %v9043
        %v9062 = vadd.f32 %v9023, %v9043
        %v9063 = vadd.f32 %v9024, %v9043
        %v9064 = vadd.f32 %v9025, %v9043
        %v9065 = vadd.f32 %v9026, %v9043
        %v9066 = vadd.f32 %v9027, %v9043
        %v9067 = vadd.f32 %v9028, %v9043
        %v9068 = vadd.f32 %v9029, %v9043
        %v9069 = vadd.f32 %v9030, %v9043
        %v9070 = vadd.f32 %v9031, %v9043
        %v9071 = vadd.f32 %v9032, %v9043
        %v9072 = vadd.f32 %v9033, %v9043
        %v9073 = vadd.f32 %v9034, %v9043
        %v9074 = vadd.f32 %v9035, %v9043
        %v9075 = vadd.f32 %v9036, %v9043
        %v9076 = vadd.f32 %v9037, %v9043
        %9077 = vxpose.xlu0.b32.start [1/16] %v9045, 128
        %9078 = vxpose.xlu0.b32.cont [2/16] %v9046, 128
        %9079 = vxpose.xlu0.b32.cont [3/16] %v9047, 128
        %9080 = vxpose.xlu0.b32.cont [4/16] %v9048, 128
        %9081 = vxpose.xlu0.b32.cont [5/16] %v9049, 128
        %9082 = vxpose.xlu0.b32.cont [6/16] %v9050, 128
        %9083 = vxpose.xlu0.b32.cont [7/16] %v9051, 128
        %9084 = vxpose.xlu0.b32.cont [8/16] %v9052, 128
        %9085 = vxpose.xlu0.b32.cont [9/16] %v9053, 128
        %9086 = vxpose.xlu0.b32.cont [10/16] %v9054, 128
        %9087 = vxpose.xlu0.b32.cont [11/16] %v9055, 128
        %9088 = vxpose.xlu0.b32.cont [12/16] %v9056, 128
        %9089 = vxpose.xlu0.b32.cont [13/16] %v9057, 128
        %9090 = vxpose.xlu0.b32.cont [14/16] %v9058, 128
        %9091 = vxpose.xlu0.b32.cont [15/16] %v9059, 128
        %9092 = vxpose.xlu0.b32.end [16/16] %v9060, 128
        %v9093 = vpop.trf.xlu0
        %v9094 = vpop.trf.xlu0
        %v9095 = vpop.trf.xlu0
        %v9096 = vpop.trf.xlu0
        %v9097 = vpop.trf.xlu0
        %v9098 = vpop.trf.xlu0
        %v9099 = vpop.trf.xlu0
        %v9100 = vpop.trf.xlu0
        %v9101 = vpop.trf.xlu0
        %v9102 = vpop.trf.xlu0
        %v9103 = vpop.trf.xlu0
        %v9104 = vpop.trf.xlu0
        %v9105 = vpop.trf.xlu0
        %v9106 = vpop.trf.xlu0
        %v9107 = vpop.trf.xlu0
        %v9108 = vpop.trf.xlu0
        %9109 = vxpose.xlu0.b32.start [1/16] %v9061, 128
        %9110 = vxpose.xlu0.b32.cont [2/16] %v9062, 128
        %9111 = vxpose.xlu0.b32.cont [3/16] %v9063, 128
        %9112 = vxpose.xlu0.b32.cont [4/16] %v9064, 128
        %9113 = vxpose.xlu0.b32.cont [5/16] %v9065, 128
        %9114 = vxpose.xlu0.b32.cont [6/16] %v9066, 128
        %9115 = vxpose.xlu0.b32.cont [7/16] %v9067, 128
        %9116 = vxpose.xlu0.b32.cont [8/16] %v9068, 128
        %9117 = vxpose.xlu0.b32.cont [9/16] %v9069, 128
        %9118 = vxpose.xlu0.b32.cont [10/16] %v9070, 128
        %9119 = vxpose.xlu0.b32.cont [11/16] %v9071, 128
        %9120 = vxpose.xlu0.b32.cont [12/16] %v9072, 128
        %9121 = vxpose.xlu0.b32.cont [13/16] %v9073, 128
        %9122 = vxpose.xlu0.b32.cont [14/16] %v9074, 128
        %9123 = vxpose.xlu0.b32.cont [15/16] %v9075, 128
        %9124 = vxpose.xlu0.b32.end [16/16] %v9076, 128
        %v9125 = vpop.trf.xlu0
        %v9126 = vpop.trf.xlu0
        %v9127 = vpop.trf.xlu0
        %v9128 = vpop.trf.xlu0
        %v9129 = vpop.trf.xlu0
        %v9130 = vpop.trf.xlu0
        %v9131 = vpop.trf.xlu0
        %v9132 = vpop.trf.xlu0
        %v9133 = vpop.trf.xlu0
        %v9134 = vpop.trf.xlu0
        %v9135 = vpop.trf.xlu0
        %v9136 = vpop.trf.xlu0
        %v9137 = vpop.trf.xlu0
        %v9138 = vpop.trf.xlu0
        %v9139 = vpop.trf.xlu0
        %v9140 = vpop.trf.xlu0
        %9141 = vst [vmem:[%s664] sm:$0xff] %v9093
        %9142 = vst [vmem:[%s664 + $0x8] sm:$0xff] %v9125
        %9143 = vst [vmem:[%s664 + $0x10] sm:$0xff] %v9094
        %9144 = vst [vmem:[%s664 + $0x18] sm:$0xff] %v9126
        %9145 = vst [vmem:[%s664 + $0x20] sm:$0xff] %v9095
        %9146 = vst [vmem:[%s664 + $0x28] sm:$0xff] %v9127
        %9147 = vst [vmem:[%s664 + $0x30] sm:$0xff] %v9096
        %9148 = vst [vmem:[%s664 + $0x38] sm:$0xff] %v9128
        %s9149 = sand.u32 %s494, 1
        %s9150 = scalar_lea.sflag [#allocation3], %s9149
        %s9151 = sand.u32 %s494, 1
        %s9152 = smul.addr %s9151, 64
        %s9153 = scalar_lea.vmem [#allocation2], %s9152
        // Predicated region
        $region105: #{tpu_custom_call.1} parent=103 // pred_check
          %p9154 = pneg %p504
        $region106: #{tpu_custom_call.1} parent=103 // pred_check_branch
          %9156 = sbr.rel (%p9154) target = $region108
        $region107: #{tpu_custom_call.1} parent=103 // pred_region
          %s9158 = ssub.s32 1024, 1024
          %9159 = vsyncadd %s9150, %s9158
          %s9160 = smul.addr %s35, 8
          %s9161 = smul.addr %s9160, 128
          %s9162 = scalar_lea.hbm %s21, %s9161
          %s9163 = sshll.u32 %s9153, 4
          %s9164 = int_to_ptr.vmem [resolvable:$true] %s9163
          %9169 = dma.vmem_to_hbm [thread:$0]  %s9164, 1024, %s9162, %s9150, 256, 256, 16
        $region108: #{tpu_custom_call.1} parent=103 // pred_fallthru
          _
      $region104: #{tpu_custom_call.1} parent=5 // pred_fallthru
        _
      %p9170 = scmp.le.s32.totalorder 2, %s30
      // Predicated region
      $region109: #{tpu_custom_call.1} parent=5 // pred_check
        %p9171 = pneg %p9170
      $region110: #{tpu_custom_call.1} parent=5 // pred_check_branch
        %9173 = sbr.rel (%p9171) target = $region112
      $region111: #{tpu_custom_call.1} parent=5 // pred_region
        %s9174 = ssub.s32 %s30, 2
        // Predicated region
        $region113: #{tpu_custom_call.1} parent=111 // pred_check
          %p9175 = pneg %p510
        $region114: #{tpu_custom_call.1} parent=111 // pred_check_branch
          %9177 = sbr.rel (%p9175) target = $region116
        $region115: #{tpu_custom_call.1} parent=111 // pred_region
          %s9178 = sand.u32 %s495, 1
          %s9179 = scalar_lea.sflag [#allocation3], %s9178
          %s9180 = sand.u32 %s495, 1
          %s9181 = smul.addr %s9180, 64
          %s9182 = scalar_lea.vmem [#allocation2], %s9181
          %9183 = dma.done %s9179, 1024
        $region116: #{tpu_custom_call.1} parent=111 // pred_fallthru
          _
      $region112: #{tpu_custom_call.1} parent=5 // pred_fallthru
        _
    $region6: #{tpu_custom_call.1} parent=1 // loop_footer
      %s34 = sadd.s32 1, %s30
    $region7: #{tpu_custom_call.1} parent=1 // loop_footer_branch
      %29 = sbr.rel target = $region3
    $region8: #{tpu_custom_call.1} parent=1 // loop_exit
      _
    %9184 = vsyncpa [#allocation3], 1
    %s9185 = scalar_lea.sflag [#allocation3], 1
    %9186 = vsyncpa %s9185, 1

</llo_original>
